<compile_context>
chip_gen: v6e
topology: v6e:2x2x1
jax: 0.10.0
libtpu: 0.0.40
codegen_flags: <defaults>
</compile_context>

<pallas_src>
import math

import jax
import jax.numpy as jnp
from jax.experimental import pallas as pl
from jax.experimental.pallas import tpu as pltpu

# ----------------------- synthetic model configuration ----------------------
NUM_CLASSES = 8
FPN_CH = 32
BB_CH = dict(stem=8, down1=16, c3=16, c4=32, c5=64)
NUM_HEAD_CONVS = 1   # shared-head tower depth (kept small for this synthetic model)

CP = 128             # channel padding = TPU lane width; all feature maps use it


# ----------------------------- Pallas GEMM kernel ----------------------------
def _make_gemm_kernel(act):
    """(TM, K) bf16 x (K, 128) bf16 -> f32 acc -> +bias -> act -> store."""
    def kernel(x_ref, w_ref, b_ref, o_ref):
        acc = jnp.dot(x_ref[...], w_ref[...], preferred_element_type=jnp.float32)
        acc = acc + b_ref[...]
        if act == "relu":
            acc = jnp.maximum(acc, 0.0)
        o_ref[...] = acc.astype(o_ref.dtype)
    return kernel


def _choose_tm(M):
    # Big tiles for big layers; always >= 2 M-tiles when the layer is large
    # enough (keeps both v7x TensorCores busy on 'parallel' M axis).
    if M >= 2048:
        return 512
    if M >= 512:
        return 256
    return 128


def pallas_gemm(col, wmat, bias, act="none", out_dtype=jnp.bfloat16):
    """col: (M, K) bf16, wmat: (K, 128) bf16, bias: (1, 128) f32 -> (M, 128)."""
    M, K = col.shape
    Np = wmat.shape[1]
    TM = _choose_tm(M)
    Mp = pl.cdiv(M, TM) * TM
    if Mp != M:
        col = jnp.pad(col, ((0, Mp - M), (0, 0)))

    out = pl.pallas_call(
        _make_gemm_kernel(act),
        out_shape=jax.ShapeDtypeStruct((Mp, Np), out_dtype),
        grid=(Mp // TM,),
        in_specs=[
            pl.BlockSpec((TM, K), lambda i: (i, 0)),
            pl.BlockSpec((K, Np), lambda i: (0, 0)),
            pl.BlockSpec((1, Np), lambda i: (0, 0)),
        ],
        out_specs=pl.BlockSpec((TM, Np), lambda i: (i, 0)),
        compiler_params=pltpu.CompilerParams(dimension_semantics=("parallel",)),
    )(col, wmat, bias)
    return out[:M] if Mp != M else out


# ------------------------------ conv via im2col ------------------------------
def im2col(x, kh, kw, stride, padding):
    """x: NHWC (C == CP). Returns ((N*Ho*Wo, kh*kw*CP), (N, Ho, Wo))."""
    N, H, W, C = x.shape
    if padding:
        x = jnp.pad(x, ((0, 0), (padding, padding), (padding, padding), (0, 0)))
    Ho = (H + 2 * padding - kh) // stride + 1
    Wo = (W + 2 * padding - kw) // stride + 1
    if kh == 1 and kw == 1 and stride == 1:
        col = x
    else:
        patches = [
            x[:,
              di:di + (Ho - 1) * stride + 1:stride,
              dj:dj + (Wo - 1) * stride + 1:stride,
              :]
            for di in range(kh) for dj in range(kw)
        ]
        col = jnp.concatenate(patches, axis=-1)
    return col.reshape(N * Ho * Wo, kh * kw * C), (N, Ho, Wo)


def conv2d(x, wb, stride=1, padding=1, act="none", out_dtype=jnp.bfloat16):
    """x: NHWC (C == CP), wb: (wmat (taps*CP, CP) bf16, bias (1, CP) f32)."""
    wmat, bias = wb
    taps = wmat.shape[0] // CP
    k = int(round(math.sqrt(taps)))
    col, (N, Ho, Wo) = im2col(x, k, k, stride, padding)
    out = pallas_gemm(col.astype(jnp.bfloat16), wmat, bias, act=act,
                      out_dtype=out_dtype)
    return out.reshape(N, Ho, Wo, CP)


def upsample2x_nearest(x):
    return jnp.repeat(jnp.repeat(x, 2, axis=1), 2, axis=2)


# ------------------------------- parameter init ------------------------------
def _init_conv(key, kh, kw, cin, cout):
    kkw, kkb = jax.random.split(key)
    fan_in = kh * kw * cin
    w = jax.random.normal(kkw, (kh, kw, cin, cout), jnp.float32) / math.sqrt(fan_in)
    b = 0.01 * jax.random.normal(kkb, (cout,), jnp.float32)
    return w, b


def init_raw_params(seed=0):
    key = jax.random.PRNGKey(seed)
    params = {}

    def add(name, kh, kw, cin, cout):
        nonlocal key
        key, sub = jax.random.split(key)
        params[name] = _init_conv(sub, kh, kw, cin, cout)

    # backbone
    add("stem", 3, 3, 3, BB_CH["stem"])
    add("down1", 3, 3, BB_CH["stem"], BB_CH["down1"])
    add("c3", 3, 3, BB_CH["down1"], BB_CH["c3"])
    add("c4", 3, 3, BB_CH["c3"], BB_CH["c4"])
    add("c5", 3, 3, BB_CH["c4"], BB_CH["c5"])
    # FPN neck
    add("lat3", 1, 1, BB_CH["c3"], FPN_CH)
    add("lat4", 1, 1, BB_CH["c4"], FPN_CH)
    add("lat5", 1, 1, BB_CH["c5"], FPN_CH)
    add("out3", 3, 3, FPN_CH, FPN_CH)
    add("out4", 3, 3, FPN_CH, FPN_CH)
    add("out5", 3, 3, FPN_CH, FPN_CH)
    add("p6", 3, 3, FPN_CH, FPN_CH)
    add("p7", 3, 3, FPN_CH, FPN_CH)
    # FCOS head (shared across P3..P7)
    for i in range(NUM_HEAD_CONVS):
        add(f"cls_conv{i}", 3, 3, FPN_CH, FPN_CH)
        add(f"reg_conv{i}", 3, 3, FPN_CH, FPN_CH)
    add("cls_pred", 3, 3, FPN_CH, NUM_CLASSES)
    add("cnt_pred", 3, 3, FPN_CH, 1)
    add("reg_pred", 3, 3, FPN_CH, 4)
    return params


# ----------------------- one-time weight packing (lane-dense) ----------------
def _pack_conv(w, b, cin_off=0, cout_off=0, wslab=None, bslab=None):
    """Place a (kh,kw,cin,cout) conv into a (taps, CP, CP) zero slab at given
    input/output channel offsets. Padded lanes are exactly zero, so the GEMM
    is exact on channel-padded activations."""
    kh, kw, cin, cout = w.shape
    taps = kh * kw
    if wslab is None:
        wslab = jnp.zeros((taps, CP, CP), jnp.float32)
    if bslab is None:
        bslab = jnp.zeros((1, CP), jnp.float32)
    wslab = wslab.at[:, cin_off:cin_off + cin, cout_off:cout_off + cout].set(
        w.reshape(taps, cin, cout))
    bslab = bslab.at[0, cout_off:cout_off + cout].set(b)
    return wslab, bslab


def _finalize(wslab, bslab):
    return wslab.reshape(-1, CP).astype(jnp.bfloat16), bslab


def pack_params(raw):
    packed = {}

    def single(name):
        w, b = raw[name]
        packed[name] = _finalize(*_pack_conv(w, b))

    for name in ["stem", "down1", "c3", "c4", "c5",
                 "lat3", "lat4", "lat5", "out3", "out4", "out5", "p6", "p7"]:
        single(name)

    # fused head tower: cls tower in output lanes [0:32], reg tower in [32:64];
    # layer 0 reads the FPN feature (lanes 0:32), later layers read their own lanes.
    tower = []
    for i in range(NUM_HEAD_CONVS):
        reg_in = 0 if i == 0 else FPN_CH
        ws, bs = _pack_conv(*raw[f"cls_conv{i}"], cin_off=0, cout_off=0)
        ws, bs = _pack_conv(*raw[f"reg_conv{i}"], cin_off=reg_in, cout_off=FPN_CH,
                            wslab=ws, bslab=bs)
        tower.append(_finalize(ws, bs))
    packed["head_tower"] = tuple(tower)

    # fused predictions: cls reads ct lanes [0:32] -> out [0:8];
    # cnt/reg read rt lanes [32:64] -> out [8] / [9:13]
    ws, bs = _pack_conv(*raw["cls_pred"], cin_off=0, cout_off=0)
    ws, bs = _pack_conv(*raw["cnt_pred"], cin_off=FPN_CH, cout_off=NUM_CLASSES,
                        wslab=ws, bslab=bs)
    ws, bs = _pack_conv(*raw["reg_pred"], cin_off=FPN_CH, cout_off=NUM_CLASSES + 1,
                        wslab=ws, bslab=bs)
    packed["head_pred"] = _finalize(ws, bs)
    return packed


# --------------------------------- forward -----------------------------------
def head_forward(packed, feats):
    """Shared FCOS head, batched across all FPN levels (one GEMM per stage)."""
    shapes = [(f.shape[0], f.shape[1], f.shape[2]) for f in feats]

    levels = feats
    for wb in packed["head_tower"]:
        cols = [im2col(f, 3, 3, 1, 1)[0] for f in levels]
        col_all = jnp.concatenate(cols, axis=0).astype(jnp.bfloat16)
        tow = pallas_gemm(col_all, wb[0], wb[1], act="relu",
                          out_dtype=jnp.bfloat16)
        levels, off = [], 0
        for (N, Ho, Wo) in shapes:
            m = N * Ho * Wo
            levels.append(tow[off:off + m].reshape(N, Ho, Wo, CP))
            off += m

    cols = [im2col(f, 3, 3, 1, 1)[0] for f in levels]
    col_all = jnp.concatenate(cols, axis=0).astype(jnp.bfloat16)
    wb = packed["head_pred"]
    pred = pallas_gemm(col_all, wb[0], wb[1], act="none", out_dtype=jnp.float32)

    cls_list, cnt_list, reg_list = [], [], []
    off = 0
    for (N, Ho, Wo) in shapes:
        m = N * Ho * Wo
        pm = pred[off:off + m].reshape(N, Ho, Wo, CP)
        off += m
        cls = pm[..., :NUM_CLASSES]
        cnt = pm[..., NUM_CLASSES:NUM_CLASSES + 1]
        reg = jnp.exp(pm[..., NUM_CLASSES + 1:NUM_CLASSES + 5])  # FCOS reg -> exp
        # back to NCHW to match the PyTorch module's output convention
        cls_list.append(jnp.transpose(cls, (0, 3, 1, 2)))
        cnt_list.append(jnp.transpose(cnt, (0, 3, 1, 2)))
        reg_list.append(jnp.transpose(reg, (0, 3, 1, 2)))
    return [cls_list, cnt_list, reg_list]


def fcos_forward(packed, x_nchw):
    x = jnp.transpose(x_nchw, (0, 2, 3, 1))          # NCHW -> NHWC
    cin = x.shape[-1]
    x = jnp.pad(x, ((0, 0), (0, 0), (0, 0), (0, CP - cin))).astype(jnp.bfloat16)

    # backbone: C3 (/8), C4 (/16), C5 (/32)
    t = conv2d(x, packed["stem"], stride=2, padding=1, act="relu")
    t = conv2d(t, packed["down1"], stride=2, padding=1, act="relu")
    c3 = conv2d(t, packed["c3"], stride=2, padding=1, act="relu")
    c4 = conv2d(c3, packed["c4"], stride=2, padding=1, act="relu")
    c5 = conv2d(c4, packed["c5"], stride=2, padding=1, act="relu")

    # FPN neck: P3..P7
    lat5 = conv2d(c5, packed["lat5"], stride=1, padding=0)
    lat4 = conv2d(c4, packed["lat4"], stride=1, padding=0)
    lat3 = conv2d(c3, packed["lat3"], stride=1, padding=0)
    p5 = lat5
    p4 = lat4 + upsample2x_nearest(p5)
    p3 = lat3 + upsample2x_nearest(p4)
    p3 = conv2d(p3, packed["out3"], stride=1, padding=1)
    p4 = conv2d(p4, packed["out4"], stride=1, padding=1)
    p5 = conv2d(p5, packed["out5"], stride=1, padding=1)
    p6 = conv2d(p5, packed["p6"], stride=2, padding=1)
    p7 = conv2d(jnp.maximum(p6, 0.0), packed["p7"], stride=2, padding=1)
    feats = [p3, p4, p5, p6, p7]

    return head_forward(packed, feats)


# ----------------------------------- main -------------------------------------
if __name__ == "__main__":
    key = jax.random.PRNGKey(0)
    x = jax.random.normal(key, (2, 3, 64, 64), jnp.float32)   # NCHW input

    raw = init_raw_params(seed=0)
    packed = pack_params(raw)

    fwd = jax.jit(fcos_forward)
    outs = fwd(packed, x)
    jax.block_until_ready(jax.tree_util.tree_leaves(outs))

    # light sanity checks on output structure / shapes / finiteness
    cls_logits, cnt_logits, reg_preds = outs
    assert len(cls_logits) == 5 and len(cnt_logits) == 5 and len(reg_preds) == 5
    expected_hw = [(8, 8), (4, 4), (2, 2), (1, 1), (1, 1)]    # P3..P7 for 64x64 input
    for lvl, (h, w) in enumerate(expected_hw):
        assert cls_logits[lvl].shape == (2, NUM_CLASSES, h, w)
        assert cnt_logits[lvl].shape == (2, 1, h, w)
        assert reg_preds[lvl].shape == (2, 4, h, w)
        assert bool(jnp.all(jnp.isfinite(cls_logits[lvl])))
        assert bool(jnp.all(reg_preds[lvl] > 0.0))            # exp output

    print("KERNEL_OK")
</pallas_src>

<mosaic_0001>
module attributes {stable_mosaic.version = 11 : i64} {
  func.func @kernel(%arg0: i32, %arg1: memref<512x1152xbf16, #tpu.memory_space<vmem>>, %arg2: memref<1152x128xbf16, #tpu.memory_space<vmem>>, %arg3: memref<1x128xf32, #tpu.memory_space<vmem>>, %arg4: memref<512x128xbf16, #tpu.memory_space<vmem>>) attributes {dimension_semantics = [#tpu.dimension_semantics<parallel>], iteration_bounds = array<i64: 4>, scalar_prefetch = 0 : i64, scratch_operands = 0 : i64, tpu.core_type = #tpu.core_type<tc>, window_params = [{transform_indices = @transform_0, window_bounds = array<i64: 512, 1152>}, {pipeline_mode = #tpu.pipeline_mode<synchronous>, transform_indices = @transform_1, window_bounds = array<i64: 1152, 128>}, {pipeline_mode = #tpu.pipeline_mode<synchronous>, transform_indices = @transform_2, window_bounds = array<i64: 1, 128>}, {transform_indices = @transform_3, window_bounds = array<i64: 512, 128>}]} {
    %c0 = arith.constant 0 : index
    %c0_0 = arith.constant 0 : index
    %0 = vector.load %arg1[%c0, %c0_0] : memref<512x1152xbf16, #tpu.memory_space<vmem>>, vector<512x1152xbf16>
    %c0_1 = arith.constant 0 : index
    %c0_2 = arith.constant 0 : index
    %1 = vector.load %arg2[%c0_1, %c0_2] : memref<1152x128xbf16, #tpu.memory_space<vmem>>, vector<1152x128xbf16>
    %cst = arith.constant dense<0.000000e+00> : vector<512x128xf32>
    %2 = tpu.matmul %0, %1, %cst {dimension_numbers = #tpu.dot_dimension_numbers<[1], [0], [0], [1], [0, 0, 1, 1], [], []>} : vector<512x1152xbf16>, vector<1152x128xbf16>, vector<512x128xf32> -> vector<512x128xf32>
    %c0_3 = arith.constant 0 : index
    %c0_4 = arith.constant 0 : index
    %3 = vector.load %arg3[%c0_3, %c0_4] : memref<1x128xf32, #tpu.memory_space<vmem>>, vector<1x128xf32>
    %4 = vector.broadcast %3 : vector<1x128xf32> to vector<512x128xf32>
    %5 = arith.addf %2, %4 : vector<512x128xf32>
    %cst_5 = arith.constant 0.000000e+00 : f32
    %6 = vector.broadcast %cst_5 : f32 to vector<512x128xf32>
    %7 = arith.maximumf %5, %6 : vector<512x128xf32>
    %8 = arith.truncf %7 : vector<512x128xf32> to vector<512x128xbf16>
    %c0_6 = arith.constant 0 : index
    %c0_7 = arith.constant 0 : index
    %9 = vector.load %arg4[%c0_6, %c0_7] : memref<512x128xbf16, #tpu.memory_space<vmem>>, vector<512x128xbf16>
    tpu.vector_store %arg4[%c0_6, %c0_7], %8 {strides = array<i32>} : memref<512x128xbf16, #tpu.memory_space<vmem>>, vector<512x128xbf16>,
    return
  }
  func.func @transform_0(%arg0: i32) -> (i32, i32) {
    %c0_i32 = arith.constant 0 : i32
    %c0_i32_0 = arith.constant 0 : i32
    return %arg0, %c0_i32 : i32, i32
  }
  func.func @transform_1(%arg0: i32) -> (i32, i32) {
    %c0_i32 = arith.constant 0 : i32
    %c0_i32_0 = arith.constant 0 : i32
    %c0_i32_1 = arith.constant 0 : i32
    return %c0_i32, %c0_i32_0 : i32, i32
  }
  func.func @transform_2(%arg0: i32) -> (i32, i32) {
    %c0_i32 = arith.constant 0 : i32
    %c0_i32_0 = arith.constant 0 : i32
    %c0_i32_1 = arith.constant 0 : i32
    return %c0_i32, %c0_i32_0 : i32, i32
  }
  func.func @transform_3(%arg0: i32) -> (i32, i32) {
    %c0_i32 = arith.constant 0 : i32
    %c0_i32_0 = arith.constant 0 : i32
    return %arg0, %c0_i32 : i32, i32
  }
}

module attributes {stable_mosaic.version = 11 : i64} {
  func.func @kernel(%arg0: i32, %arg1: memref<256x1152xbf16, #tpu.memory_space<vmem>>, %arg2: memref<1152x128xbf16, #tpu.memory_space<vmem>>, %arg3: memref<1x128xf32, #tpu.memory_space<vmem>>, %arg4: memref<256x128xbf16, #tpu.memory_space<vmem>>) attributes {dimension_semantics = [#tpu.dimension_semantics<parallel>], iteration_bounds = array<i64: 2>, scalar_prefetch = 0 : i64, scratch_operands = 0 : i64, tpu.core_type = #tpu.core_type<tc>, window_params = [{transform_indices = @transform_0, window_bounds = array<i64: 256, 1152>}, {pipeline_mode = #tpu.pipeline_mode<synchronous>, transform_indices = @transform_1, window_bounds = array<i64: 1152, 128>}, {pipeline_mode = #tpu.pipeline_mode<synchronous>, transform_indices = @transform_2, window_bounds = array<i64: 1, 128>}, {transform_indices = @transform_3, window_bounds = array<i64: 256, 128>}]} {
    %c0 = arith.constant 0 : index
    %c0_0 = arith.constant 0 : index
    %0 = vector.load %arg1[%c0, %c0_0] : memref<256x1152xbf16, #tpu.memory_space<vmem>>, vector<256x1152xbf16>
    %c0_1 = arith.constant 0 : index
    %c0_2 = arith.constant 0 : index
    %1 = vector.load %arg2[%c0_1, %c0_2] : memref<1152x128xbf16, #tpu.memory_space<vmem>>, vector<1152x128xbf16>
    %cst = arith.constant dense<0.000000e+00> : vector<256x128xf32>
    %2 = tpu.matmul %0, %1, %cst {dimension_numbers = #tpu.dot_dimension_numbers<[1], [0], [0], [1], [0, 0, 1, 1], [], []>} : vector<256x1152xbf16>, vector<1152x128xbf16>, vector<256x128xf32> -> vector<256x128xf32>
    %c0_3 = arith.constant 0 : index
    %c0_4 = arith.constant 0 : index
    %3 = vector.load %arg3[%c0_3, %c0_4] : memref<1x128xf32, #tpu.memory_space<vmem>>, vector<1x128xf32>
    %4 = vector.broadcast %3 : vector<1x128xf32> to vector<256x128xf32>
    %5 = arith.addf %2, %4 : vector<256x128xf32>
    %cst_5 = arith.constant 0.000000e+00 : f32
    %6 = vector.broadcast %cst_5 : f32 to vector<256x128xf32>
    %7 = arith.maximumf %5, %6 : vector<256x128xf32>
    %8 = arith.truncf %7 : vector<256x128xf32> to vector<256x128xbf16>
    %c0_6 = arith.constant 0 : index
    %c0_7 = arith.constant 0 : index
    %9 = vector.load %arg4[%c0_6, %c0_7] : memref<256x128xbf16, #tpu.memory_space<vmem>>, vector<256x128xbf16>
    tpu.vector_store %arg4[%c0_6, %c0_7], %8 {strides = array<i32>} : memref<256x128xbf16, #tpu.memory_space<vmem>>, vector<256x128xbf16>,
    return
  }
  func.func @transform_0(%arg0: i32) -> (i32, i32) {
    %c0_i32 = arith.constant 0 : i32
    %c0_i32_0 = arith.constant 0 : i32
    return %arg0, %c0_i32 : i32, i32
  }
  func.func @transform_1(%arg0: i32) -> (i32, i32) {
    %c0_i32 = arith.constant 0 : i32
    %c0_i32_0 = arith.constant 0 : i32
    %c0_i32_1 = arith.constant 0 : i32
    return %c0_i32, %c0_i32_0 : i32, i32
  }
  func.func @transform_2(%arg0: i32) -> (i32, i32) {
    %c0_i32 = arith.constant 0 : i32
    %c0_i32_0 = arith.constant 0 : i32
    %c0_i32_1 = arith.constant 0 : i32
    return %c0_i32, %c0_i32_0 : i32, i32
  }
  func.func @transform_3(%arg0: i32) -> (i32, i32) {
    %c0_i32 = arith.constant 0 : i32
    %c0_i32_0 = arith.constant 0 : i32
    return %arg0, %c0_i32 : i32, i32
  }
}

module attributes {stable_mosaic.version = 11 : i64} {
  func.func @kernel(%arg0: i32, %arg1: memref<128x1152xbf16, #tpu.memory_space<vmem>>, %arg2: memref<1152x128xbf16, #tpu.memory_space<vmem>>, %arg3: memref<1x128xf32, #tpu.memory_space<vmem>>, %arg4: memref<128x128xbf16, #tpu.memory_space<vmem>>) attributes {dimension_semantics = [#tpu.dimension_semantics<parallel>], iteration_bounds = array<i64: 1>, scalar_prefetch = 0 : i64, scratch_operands = 0 : i64, tpu.core_type = #tpu.core_type<tc>, window_params = [{transform_indices = @transform_0, window_bounds = array<i64: 128, 1152>}, {pipeline_mode = #tpu.pipeline_mode<synchronous>, transform_indices = @transform_1, window_bounds = array<i64: 1152, 128>}, {pipeline_mode = #tpu.pipeline_mode<synchronous>, transform_indices = @transform_2, window_bounds = array<i64: 1, 128>}, {transform_indices = @transform_3, window_bounds = array<i64: 128, 128>}]} {
    %c0 = arith.constant 0 : index
    %c0_0 = arith.constant 0 : index
    %0 = vector.load %arg1[%c0, %c0_0] : memref<128x1152xbf16, #tpu.memory_space<vmem>>, vector<128x1152xbf16>
    %c0_1 = arith.constant 0 : index
    %c0_2 = arith.constant 0 : index
    %1 = vector.load %arg2[%c0_1, %c0_2] : memref<1152x128xbf16, #tpu.memory_space<vmem>>, vector<1152x128xbf16>
    %cst = arith.constant dense<0.000000e+00> : vector<128x128xf32>
    %2 = tpu.matmul %0, %1, %cst {dimension_numbers = #tpu.dot_dimension_numbers<[1], [0], [0], [1], [0, 0, 1, 1], [], []>} : vector<128x1152xbf16>, vector<1152x128xbf16>, vector<128x128xf32> -> vector<128x128xf32>
    %c0_3 = arith.constant 0 : index
    %c0_4 = arith.constant 0 : index
    %3 = vector.load %arg3[%c0_3, %c0_4] : memref<1x128xf32, #tpu.memory_space<vmem>>, vector<1x128xf32>
    %4 = vector.broadcast %3 : vector<1x128xf32> to vector<128x128xf32>
    %5 = arith.addf %2, %4 : vector<128x128xf32>
    %cst_5 = arith.constant 0.000000e+00 : f32
    %6 = vector.broadcast %cst_5 : f32 to vector<128x128xf32>
    %7 = arith.maximumf %5, %6 : vector<128x128xf32>
    %8 = arith.truncf %7 : vector<128x128xf32> to vector<128x128xbf16>
    %c0_6 = arith.constant 0 : index
    %c0_7 = arith.constant 0 : index
    %9 = vector.load %arg4[%c0_6, %c0_7] : memref<128x128xbf16, #tpu.memory_space<vmem>>, vector<128x128xbf16>
    tpu.vector_store %arg4[%c0_6, %c0_7], %8 {strides = array<i32>} : memref<128x128xbf16, #tpu.memory_space<vmem>>, vector<128x128xbf16>,
    return
  }
  func.func @transform_0(%arg0: i32) -> (i32, i32) {
    %c0_i32 = arith.constant 0 : i32
    %c0_i32_0 = arith.constant 0 : i32
    return %arg0, %c0_i32 : i32, i32
  }
  func.func @transform_1(%arg0: i32) -> (i32, i32) {
    %c0_i32 = arith.constant 0 : i32
    %c0_i32_0 = arith.constant 0 : i32
    %c0_i32_1 = arith.constant 0 : i32
    return %c0_i32, %c0_i32_0 : i32, i32
  }
  func.func @transform_2(%arg0: i32) -> (i32, i32) {
    %c0_i32 = arith.constant 0 : i32
    %c0_i32_0 = arith.constant 0 : i32
    %c0_i32_1 = arith.constant 0 : i32
    return %c0_i32, %c0_i32_0 : i32, i32
  }
  func.func @transform_3(%arg0: i32) -> (i32, i32) {
    %c0_i32 = arith.constant 0 : i32
    %c0_i32_0 = arith.constant 0 : i32
    return %arg0, %c0_i32 : i32, i32
  }
}

module attributes {stable_mosaic.version = 11 : i64} {
  func.func @kernel(%arg0: i32, %arg1: memref<128x128xbf16, #tpu.memory_space<vmem>>, %arg2: memref<128x128xbf16, #tpu.memory_space<vmem>>, %arg3: memref<1x128xf32, #tpu.memory_space<vmem>>, %arg4: memref<128x128xbf16, #tpu.memory_space<vmem>>) attributes {dimension_semantics = [#tpu.dimension_semantics<parallel>], iteration_bounds = array<i64: 1>, scalar_prefetch = 0 : i64, scratch_operands = 0 : i64, tpu.core_type = #tpu.core_type<tc>, window_params = [{transform_indices = @transform_0, window_bounds = array<i64: 128, 128>}, {pipeline_mode = #tpu.pipeline_mode<synchronous>, transform_indices = @transform_1, window_bounds = array<i64: 128, 128>}, {pipeline_mode = #tpu.pipeline_mode<synchronous>, transform_indices = @transform_2, window_bounds = array<i64: 1, 128>}, {transform_indices = @transform_3, window_bounds = array<i64: 128, 128>}]} {
    %c0 = arith.constant 0 : index
    %c0_0 = arith.constant 0 : index
    %0 = vector.load %arg1[%c0, %c0_0] : memref<128x128xbf16, #tpu.memory_space<vmem>>, vector<128x128xbf16>
    %c0_1 = arith.constant 0 : index
    %c0_2 = arith.constant 0 : index
    %1 = vector.load %arg2[%c0_1, %c0_2] : memref<128x128xbf16, #tpu.memory_space<vmem>>, vector<128x128xbf16>
    %cst = arith.constant dense<0.000000e+00> : vector<128x128xf32>
    %2 = tpu.matmul %0, %1, %cst {dimension_numbers = #tpu.dot_dimension_numbers<[1], [0], [0], [1], [0, 0, 1, 1], [], []>} : vector<128x128xbf16>, vector<128x128xbf16>, vector<128x128xf32> -> vector<128x128xf32>
    %c0_3 = arith.constant 0 : index
    %c0_4 = arith.constant 0 : index
    %3 = vector.load %arg3[%c0_3, %c0_4] : memref<1x128xf32, #tpu.memory_space<vmem>>, vector<1x128xf32>
    %4 = vector.broadcast %3 : vector<1x128xf32> to vector<128x128xf32>
    %5 = arith.addf %2, %4 : vector<128x128xf32>
    %6 = arith.truncf %5 : vector<128x128xf32> to vector<128x128xbf16>
    %c0_5 = arith.constant 0 : index
    %c0_6 = arith.constant 0 : index
    %7 = vector.load %arg4[%c0_5, %c0_6] : memref<128x128xbf16, #tpu.memory_space<vmem>>, vector<128x128xbf16>
    tpu.vector_store %arg4[%c0_5, %c0_6], %6 {strides = array<i32>} : memref<128x128xbf16, #tpu.memory_space<vmem>>, vector<128x128xbf16>,
    return
  }
  func.func @transform_0(%arg0: i32) -> (i32, i32) {
    %c0_i32 = arith.constant 0 : i32
    %c0_i32_0 = arith.constant 0 : i32
    return %arg0, %c0_i32 : i32, i32
  }
  func.func @transform_1(%arg0: i32) -> (i32, i32) {
    %c0_i32 = arith.constant 0 : i32
    %c0_i32_0 = arith.constant 0 : i32
    %c0_i32_1 = arith.constant 0 : i32
    return %c0_i32, %c0_i32_0 : i32, i32
  }
  func.func @transform_2(%arg0: i32) -> (i32, i32) {
    %c0_i32 = arith.constant 0 : i32
    %c0_i32_0 = arith.constant 0 : i32
    %c0_i32_1 = arith.constant 0 : i32
    return %c0_i32, %c0_i32_0 : i32, i32
  }
  func.func @transform_3(%arg0: i32) -> (i32, i32) {
    %c0_i32 = arith.constant 0 : i32
    %c0_i32_0 = arith.constant 0 : i32
    return %arg0, %c0_i32 : i32, i32
  }
}

module attributes {stable_mosaic.version = 11 : i64} {
  func.func @kernel(%arg0: i32, %arg1: memref<128x1152xbf16, #tpu.memory_space<vmem>>, %arg2: memref<1152x128xbf16, #tpu.memory_space<vmem>>, %arg3: memref<1x128xf32, #tpu.memory_space<vmem>>, %arg4: memref<128x128xbf16, #tpu.memory_space<vmem>>) attributes {dimension_semantics = [#tpu.dimension_semantics<parallel>], iteration_bounds = array<i64: 1>, scalar_prefetch = 0 : i64, scratch_operands = 0 : i64, tpu.core_type = #tpu.core_type<tc>, window_params = [{transform_indices = @transform_0, window_bounds = array<i64: 128, 1152>}, {pipeline_mode = #tpu.pipeline_mode<synchronous>, transform_indices = @transform_1, window_bounds = array<i64: 1152, 128>}, {pipeline_mode = #tpu.pipeline_mode<synchronous>, transform_indices = @transform_2, window_bounds = array<i64: 1, 128>}, {transform_indices = @transform_3, window_bounds = array<i64: 128, 128>}]} {
    %c0 = arith.constant 0 : index
    %c0_0 = arith.constant 0 : index
    %0 = vector.load %arg1[%c0, %c0_0] : memref<128x1152xbf16, #tpu.memory_space<vmem>>, vector<128x1152xbf16>
    %c0_1 = arith.constant 0 : index
    %c0_2 = arith.constant 0 : index
    %1 = vector.load %arg2[%c0_1, %c0_2] : memref<1152x128xbf16, #tpu.memory_space<vmem>>, vector<1152x128xbf16>
    %cst = arith.constant dense<0.000000e+00> : vector<128x128xf32>
    %2 = tpu.matmul %0, %1, %cst {dimension_numbers = #tpu.dot_dimension_numbers<[1], [0], [0], [1], [0, 0, 1, 1], [], []>} : vector<128x1152xbf16>, vector<1152x128xbf16>, vector<128x128xf32> -> vector<128x128xf32>
    %c0_3 = arith.constant 0 : index
    %c0_4 = arith.constant 0 : index
    %3 = vector.load %arg3[%c0_3, %c0_4] : memref<1x128xf32, #tpu.memory_space<vmem>>, vector<1x128xf32>
    %4 = vector.broadcast %3 : vector<1x128xf32> to vector<128x128xf32>
    %5 = arith.addf %2, %4 : vector<128x128xf32>
    %6 = arith.truncf %5 : vector<128x128xf32> to vector<128x128xbf16>
    %c0_5 = arith.constant 0 : index
    %c0_6 = arith.constant 0 : index
    %7 = vector.load %arg4[%c0_5, %c0_6] : memref<128x128xbf16, #tpu.memory_space<vmem>>, vector<128x128xbf16>
    tpu.vector_store %arg4[%c0_5, %c0_6], %6 {strides = array<i32>} : memref<128x128xbf16, #tpu.memory_space<vmem>>, vector<128x128xbf16>,
    return
  }
  func.func @transform_0(%arg0: i32) -> (i32, i32) {
    %c0_i32 = arith.constant 0 : i32
    %c0_i32_0 = arith.constant 0 : i32
    return %arg0, %c0_i32 : i32, i32
  }
  func.func @transform_1(%arg0: i32) -> (i32, i32) {
    %c0_i32 = arith.constant 0 : i32
    %c0_i32_0 = arith.constant 0 : i32
    %c0_i32_1 = arith.constant 0 : i32
    return %c0_i32, %c0_i32_0 : i32, i32
  }
  func.func @transform_2(%arg0: i32) -> (i32, i32) {
    %c0_i32 = arith.constant 0 : i32
    %c0_i32_0 = arith.constant 0 : i32
    %c0_i32_1 = arith.constant 0 : i32
    return %c0_i32, %c0_i32_0 : i32, i32
  }
  func.func @transform_3(%arg0: i32) -> (i32, i32) {
    %c0_i32 = arith.constant 0 : i32
    %c0_i32_0 = arith.constant 0 : i32
    return %arg0, %c0_i32 : i32, i32
  }
}

module attributes {stable_mosaic.version = 11 : i64} {
  func.func @kernel(%arg0: i32, %arg1: memref<128x1152xbf16, #tpu.memory_space<vmem>>, %arg2: memref<1152x128xbf16, #tpu.memory_space<vmem>>, %arg3: memref<1x128xf32, #tpu.memory_space<vmem>>, %arg4: memref<128x128xbf16, #tpu.memory_space<vmem>>) attributes {dimension_semantics = [#tpu.dimension_semantics<parallel>], iteration_bounds = array<i64: 2>, scalar_prefetch = 0 : i64, scratch_operands = 0 : i64, tpu.core_type = #tpu.core_type<tc>, window_params = [{transform_indices = @transform_0, window_bounds = array<i64: 128, 1152>}, {pipeline_mode = #tpu.pipeline_mode<synchronous>, transform_indices = @transform_1, window_bounds = array<i64: 1152, 128>}, {pipeline_mode = #tpu.pipeline_mode<synchronous>, transform_indices = @transform_2, window_bounds = array<i64: 1, 128>}, {transform_indices = @transform_3, window_bounds = array<i64: 128, 128>}]} {
    %c0 = arith.constant 0 : index
    %c0_0 = arith.constant 0 : index
    %0 = vector.load %arg1[%c0, %c0_0] : memref<128x1152xbf16, #tpu.memory_space<vmem>>, vector<128x1152xbf16>
    %c0_1 = arith.constant 0 : index
    %c0_2 = arith.constant 0 : index
    %1 = vector.load %arg2[%c0_1, %c0_2] : memref<1152x128xbf16, #tpu.memory_space<vmem>>, vector<1152x128xbf16>
    %cst = arith.constant dense<0.000000e+00> : vector<128x128xf32>
    %2 = tpu.matmul %0, %1, %cst {dimension_numbers = #tpu.dot_dimension_numbers<[1], [0], [0], [1], [0, 0, 1, 1], [], []>} : vector<128x1152xbf16>, vector<1152x128xbf16>, vector<128x128xf32> -> vector<128x128xf32>
    %c0_3 = arith.constant 0 : index
    %c0_4 = arith.constant 0 : index
    %3 = vector.load %arg3[%c0_3, %c0_4] : memref<1x128xf32, #tpu.memory_space<vmem>>, vector<1x128xf32>
    %4 = vector.broadcast %3 : vector<1x128xf32> to vector<128x128xf32>
    %5 = arith.addf %2, %4 : vector<128x128xf32>
    %cst_5 = arith.constant 0.000000e+00 : f32
    %6 = vector.broadcast %cst_5 : f32 to vector<128x128xf32>
    %7 = arith.maximumf %5, %6 : vector<128x128xf32>
    %8 = arith.truncf %7 : vector<128x128xf32> to vector<128x128xbf16>
    %c0_6 = arith.constant 0 : index
    %c0_7 = arith.constant 0 : index
    %9 = vector.load %arg4[%c0_6, %c0_7] : memref<128x128xbf16, #tpu.memory_space<vmem>>, vector<128x128xbf16>
    tpu.vector_store %arg4[%c0_6, %c0_7], %8 {strides = array<i32>} : memref<128x128xbf16, #tpu.memory_space<vmem>>, vector<128x128xbf16>,
    return
  }
  func.func @transform_0(%arg0: i32) -> (i32, i32) {
    %c0_i32 = arith.constant 0 : i32
    %c0_i32_0 = arith.constant 0 : i32
    return %arg0, %c0_i32 : i32, i32
  }
  func.func @transform_1(%arg0: i32) -> (i32, i32) {
    %c0_i32 = arith.constant 0 : i32
    %c0_i32_0 = arith.constant 0 : i32
    %c0_i32_1 = arith.constant 0 : i32
    return %c0_i32, %c0_i32_0 : i32, i32
  }
  func.func @transform_2(%arg0: i32) -> (i32, i32) {
    %c0_i32 = arith.constant 0 : i32
    %c0_i32_0 = arith.constant 0 : i32
    %c0_i32_1 = arith.constant 0 : i32
    return %c0_i32, %c0_i32_0 : i32, i32
  }
  func.func @transform_3(%arg0: i32) -> (i32, i32) {
    %c0_i32 = arith.constant 0 : i32
    %c0_i32_0 = arith.constant 0 : i32
    return %arg0, %c0_i32 : i32, i32
  }
}

module attributes {stable_mosaic.version = 11 : i64} {
  func.func @kernel(%arg0: i32, %arg1: memref<128x1152xbf16, #tpu.memory_space<vmem>>, %arg2: memref<1152x128xbf16, #tpu.memory_space<vmem>>, %arg3: memref<1x128xf32, #tpu.memory_space<vmem>>, %arg4: memref<128x128xf32, #tpu.memory_space<vmem>>) attributes {dimension_semantics = [#tpu.dimension_semantics<parallel>], iteration_bounds = array<i64: 2>, scalar_prefetch = 0 : i64, scratch_operands = 0 : i64, tpu.core_type = #tpu.core_type<tc>, window_params = [{transform_indices = @transform_0, window_bounds = array<i64: 128, 1152>}, {pipeline_mode = #tpu.pipeline_mode<synchronous>, transform_indices = @transform_1, window_bounds = array<i64: 1152, 128>}, {pipeline_mode = #tpu.pipeline_mode<synchronous>, transform_indices = @transform_2, window_bounds = array<i64: 1, 128>}, {transform_indices = @transform_3, window_bounds = array<i64: 128, 128>}]} {
    %c0 = arith.constant 0 : index
    %c0_0 = arith.constant 0 : index
    %0 = vector.load %arg1[%c0, %c0_0] : memref<128x1152xbf16, #tpu.memory_space<vmem>>, vector<128x1152xbf16>
    %c0_1 = arith.constant 0 : index
    %c0_2 = arith.constant 0 : index
    %1 = vector.load %arg2[%c0_1, %c0_2] : memref<1152x128xbf16, #tpu.memory_space<vmem>>, vector<1152x128xbf16>
    %cst = arith.constant dense<0.000000e+00> : vector<128x128xf32>
    %2 = tpu.matmul %0, %1, %cst {dimension_numbers = #tpu.dot_dimension_numbers<[1], [0], [0], [1], [0, 0, 1, 1], [], []>} : vector<128x1152xbf16>, vector<1152x128xbf16>, vector<128x128xf32> -> vector<128x128xf32>
    %c0_3 = arith.constant 0 : index
    %c0_4 = arith.constant 0 : index
    %3 = vector.load %arg3[%c0_3, %c0_4] : memref<1x128xf32, #tpu.memory_space<vmem>>, vector<1x128xf32>
    %4 = vector.broadcast %3 : vector<1x128xf32> to vector<128x128xf32>
    %5 = arith.addf %2, %4 : vector<128x128xf32>
    %c0_5 = arith.constant 0 : index
    %c0_6 = arith.constant 0 : index
    %6 = vector.load %arg4[%c0_5, %c0_6] : memref<128x128xf32, #tpu.memory_space<vmem>>, vector<128x128xf32>
    tpu.vector_store %arg4[%c0_5, %c0_6], %5 {strides = array<i32>} : memref<128x128xf32, #tpu.memory_space<vmem>>, vector<128x128xf32>,
    return
  }
  func.func @transform_0(%arg0: i32) -> (i32, i32) {
    %c0_i32 = arith.constant 0 : i32
    %c0_i32_0 = arith.constant 0 : i32
    return %arg0, %c0_i32 : i32, i32
  }
  func.func @transform_1(%arg0: i32) -> (i32, i32) {
    %c0_i32 = arith.constant 0 : i32
    %c0_i32_0 = arith.constant 0 : i32
    %c0_i32_1 = arith.constant 0 : i32
    return %c0_i32, %c0_i32_0 : i32, i32
  }
  func.func @transform_2(%arg0: i32) -> (i32, i32) {
    %c0_i32 = arith.constant 0 : i32
    %c0_i32_0 = arith.constant 0 : i32
    %c0_i32_1 = arith.constant 0 : i32
    return %c0_i32, %c0_i32_0 : i32, i32
  }
  func.func @transform_3(%arg0: i32) -> (i32, i32) {
    %c0_i32 = arith.constant 0 : i32
    %c0_i32_0 = arith.constant 0 : i32
    return %arg0, %c0_i32 : i32, i32
  }
}

</mosaic_0001>

<llo_original>
// kernel: fcos_forward.15
$region0: #{fcos_forward.15}
  #allocation0 [shape = 'u32[]', space=smem, size = 0x4, offset = 0x4, fixed_abs, tag = 'smem constant byte address 0x4 - core index']
  #allocation1 [shape = 'u32[144,128]{1,0:T(1,128)}', space=vmem, size = 0x12000, scoped, tag = 'internal scratch']
  %s0 = inlined_call_operand.vmem [shape: bf16[2048,1152], index: 0, kind: input, shape index: {}]
  %s1 = inlined_call_operand.vmem [shape: bf16[1152,128], index: 1, kind: input, shape index: {}]
  %s2 = inlined_call_operand.vmem [shape: f32[1,128], index: 2, kind: input, shape index: {}]
  %s3 = inlined_call_operand.vmem [shape: bf16[2048,128], index: 3, kind: output, shape index: {}]
  %s4 = sld [smem:[#allocation0]]
  $region45: #{fcos_forward.15} parent=0
    _
  %s6 = ssub.s32 1, %s4
  %s7 = scalar_select 0, %s6, %s4
  loop: start=0, step=1, limit=6
  $region2: #{fcos_forward.15} parent=0 // loop_pre_header
    _
  $region3: #{fcos_forward.15} parent=0 // loop_header
    %s9 = sphi 0, %s13
    %p10 = scmp.ge.s32.totalorder %s9, 6
    %s19 = sphi 0, %s21
    %s22 = sphi 0, %s19
    %s23 = sphi 0, %s22
    %s39 = sphi 0, %s23
    %s43 = sphi 0, %s43
    %s45 = sphi 0, %s43
    %s46 = sphi 0, %s45
    %s60 = sphi 0, %s46
    %s64 = sphi 0, %s64
    %s66 = sphi 0, %s64
    %s67 = sphi 0, %s66
    %s81 = sphi 0, %s67
    %s87 = sphi 0, %s89
    %s90 = sphi 0, %s87
    %s91 = sphi 0, %s90
    %s107 = sphi 0, %s91
  $region4: #{fcos_forward.15} parent=0 // loop_header_branch
    %12 = sbr.rel (%p10) target = $region8
  $region5: #{fcos_forward.15} parent=0 // loop_body
    %s14 = ssub.s32 %s9, 1
    %s15 = ssub.s32 %s9, 2
    %s16 = sadd.s32 %s9, 1
    %s17 = ssub.s32 %s9, %s16
    %p18 = scmp.eq.s32.totalorder %s17, 0
    %s20 = sadd.s32 %s19, 1
    %s21 = scalar_select %p18, %s19, %s20
    %p24 = pneg %p18
    %p25 = scmp.eq.s32.totalorder %s9, 3
    %p26 = por %p24, %p25
    %p27 = scmp.ne.s32.totalorder %s19, %s22
    %p28 = scmp.eq.s32.totalorder %s9, 0
    %p29 = por %p27, %p28
    %p30 = scmp.ne.s32.totalorder %s19, %s22
    %p31 = scmp.eq.s32.totalorder %s14, 3
    %p32 = por %p30, %p31
    %p33 = scmp.ne.s32.totalorder %s22, %s23
    %p34 = scmp.eq.s32.totalorder %s14, 0
    %p35 = por %p33, %p34
    %p36 = scmp.ne.s32.totalorder %s22, %s23
    %p37 = scmp.eq.s32.totalorder %s15, 3
    %p38 = por %p36, %p37
    %p40 = scmp.ne.s32.totalorder %s23, %s39
    %p41 = scmp.eq.s32.totalorder %s15, 0
    %p42 = por %p40, %p41
    %s44 = sadd.s32 %s43, 1
    %p47 = scmp.eq.s32.totalorder %s9, 3
    %p48 = scmp.ne.s32.totalorder %s43, %s45
    %p49 = scmp.eq.s32.totalorder %s9, 0
    %p50 = por %p48, %p49
    %p51 = scmp.ne.s32.totalorder %s43, %s45
    %p52 = scmp.eq.s32.totalorder %s14, 3
    %p53 = por %p51, %p52
    %p54 = scmp.ne.s32.totalorder %s45, %s46
    %p55 = scmp.eq.s32.totalorder %s14, 0
    %p56 = por %p54, %p55
    %p57 = scmp.ne.s32.totalorder %s45, %s46
    %p58 = scmp.eq.s32.totalorder %s15, 3
    %p59 = por %p57, %p58
    %p61 = scmp.ne.s32.totalorder %s46, %s60
    %p62 = scmp.eq.s32.totalorder %s15, 0
    %p63 = por %p61, %p62
    %s65 = sadd.s32 %s64, 1
    %p68 = scmp.eq.s32.totalorder %s9, 3
    %p69 = scmp.ne.s32.totalorder %s64, %s66
    %p70 = scmp.eq.s32.totalorder %s9, 0
    %p71 = por %p69, %p70
    %p72 = scmp.ne.s32.totalorder %s64, %s66
    %p73 = scmp.eq.s32.totalorder %s14, 3
    %p74 = por %p72, %p73
    %p75 = scmp.ne.s32.totalorder %s66, %s67
    %p76 = scmp.eq.s32.totalorder %s14, 0
    %p77 = por %p75, %p76
    %p78 = scmp.ne.s32.totalorder %s66, %s67
    %p79 = scmp.eq.s32.totalorder %s15, 3
    %p80 = por %p78, %p79
    %p82 = scmp.ne.s32.totalorder %s67, %s81
    %p83 = scmp.eq.s32.totalorder %s15, 0
    %p84 = por %p82, %p83
    %s85 = ssub.s32 %s9, %s16
    %p86 = scmp.eq.s32.totalorder %s85, 0
    %s88 = sadd.s32 %s87, 1
    %s89 = scalar_select %p86, %s87, %s88
    %p92 = pneg %p86
    %p93 = scmp.eq.s32.totalorder %s9, 3
    %p94 = por %p92, %p93
    %p95 = scmp.ne.s32.totalorder %s87, %s90
    %p96 = scmp.eq.s32.totalorder %s9, 0
    %p97 = por %p95, %p96
    %p98 = scmp.ne.s32.totalorder %s87, %s90
    %p99 = scmp.eq.s32.totalorder %s14, 3
    %p100 = por %p98, %p99
    %p101 = scmp.ne.s32.totalorder %s90, %s91
    %p102 = scmp.eq.s32.totalorder %s14, 0
    %p103 = por %p101, %p102
    %p104 = scmp.ne.s32.totalorder %s90, %s91
    %p105 = scmp.eq.s32.totalorder %s15, 3
    %p106 = por %p104, %p105
    %p108 = scmp.ne.s32.totalorder %s91, %s107
    %p109 = scmp.eq.s32.totalorder %s15, 0
    %p110 = por %p108, %p109
    %p111 = scmp.le.s32.totalorder 1, %s9
    %p112 = scmp.lt.s32.totalorder %s9, 5
    %p113 = pnand %p111, %p112
    %p114 = pneg %p113
    // Predicated region
    $region9: #{fcos_forward.15} parent=5 // pred_check
      _
    $region10: #{fcos_forward.15} parent=5 // pred_check_branch
      %116 = sbr.rel (%p113) target = $region12
    $region11: #{fcos_forward.15} parent=5 // pred_region
      %s117 = ssub.s32 %s9, 1
      // Predicated region
      $region13: #{fcos_forward.15} parent=11 // pred_check
        %p118 = pneg %p56
      $region14: #{fcos_forward.15} parent=11 // pred_check_branch
        %120 = sbr.rel (%p118) target = $region16
      $region15: #{fcos_forward.15} parent=11 // pred_region
        _
      $region16: #{fcos_forward.15} parent=11 // pred_fallthru
        _
      // Predicated region
      $region17: #{fcos_forward.15} parent=11 // pred_check
        %p121 = pneg %p77
      $region18: #{fcos_forward.15} parent=11 // pred_check_branch
        %123 = sbr.rel (%p121) target = $region20
      $region19: #{fcos_forward.15} parent=11 // pred_region
        _
      $region20: #{fcos_forward.15} parent=11 // pred_fallthru
        _
    $region12: #{fcos_forward.15} parent=5 // pred_fallthru
      _
    %p124 = scmp.lt.s32.totalorder %s9, 4
    // Predicated region
    $region21: #{fcos_forward.15} parent=5 // pred_check
      %p125 = pneg %p124
    $region22: #{fcos_forward.15} parent=5 // pred_check_branch
      %127 = sbr.rel (%p125) target = $region24
    $region23: #{fcos_forward.15} parent=5 // pred_region
      // Predicated region
      $region25: #{fcos_forward.15} parent=23 // pred_check
        %p128 = pneg %p29
      $region26: #{fcos_forward.15} parent=23 // pred_check_branch
        %130 = sbr.rel (%p128) target = $region28
      $region27: #{fcos_forward.15} parent=23 // pred_region
        %s131 = smul.u32 64, %s9
        %p132 = scmp.lt.s32.totalorder %s131, 255
        %s133 = scalar_select %p132, %s131, 255
        %s134 = smul.addr %s133, 9
        %s135 = smul.addr %s134, 4
        %s136 = scalar_lea.vmem %s0, %s135
        %s137 = smul.u32 64, %s9
      $region28: #{fcos_forward.15} parent=23 // pred_fallthru
        _
    $region24: #{fcos_forward.15} parent=5 // pred_fallthru
      _
    %p138 = scmp.le.s32.totalorder 1, %s9
    %p139 = scmp.lt.s32.totalorder %s9, 5
    %p140 = pnand %p138, %p139
    %p141 = pneg %p140
    // Predicated region
    $region29: #{fcos_forward.15} parent=5 // pred_check
      _
    $region30: #{fcos_forward.15} parent=5 // pred_check_branch
      %143 = sbr.rel (%p140) target = $region32
    $region31: #{fcos_forward.15} parent=5 // pred_region
      %s144 = ssub.s32 %s9, 1
      %s145 = smul.u32 64, %s14
      %p146 = scmp.lt.s32.totalorder %s145, 255
      %s147 = scalar_select %p146, %s145, 255
      %s148 = smul.addr %s147, 9
      %s149 = smul.addr %s148, 4
      %s150 = scalar_lea.vmem %s0, %s149
      %p151 = pneg %p35
      %p152 = pneg %p32
      %p153 = pneg %p56
      %p154 = pneg %p53
      %p155 = pneg %p77
      %p156 = pneg %p74
      %p157 = pneg %p103
      %p158 = pneg %p100
      %s159 = smul.u32 64, %s14
      %p160 = scmp.lt.s32.totalorder %s159, 255
      %s161 = scalar_select %p160, %s159, 255
      %s162 = smul.addr %s161, 4
      %s163 = scalar_lea.vmem %s3, %s162
      %s164 = smul.u32 64, %s14
      %p165 = scmp.lt.s32.totalorder %s164, 255
      %s166 = scalar_select %p165, %s164, 255
      %s167 = smul.addr %s166, 9
      %s168 = smul.addr %s167, 4
      %s169 = scalar_lea.vmem %s0, %s168
      %s170 = smul.u32 64, %s14
      %s171 = smul.u32 64, %s14
      %p172 = scmp.lt.s32.totalorder %s171, 255
      %s173 = scalar_select %p172, %s171, 255
      %s174 = smul.addr %s173, 4
      %s175 = scalar_lea.vmem %s3, %s174
      %s176 = smul.u32 64, %s14
      %v178 = vld [vmem:[%s169] sm:$0xff]
      %v179 = vld [vmem:[%s169 + $0x8] sm:$0xff]
      %v180 = vld [vmem:[%s169 + $0x10] sm:$0xff]
      %v181 = vld [vmem:[%s169 + $0x18] sm:$0xff]
      %v182 = vld [vmem:[%s169 + $0x20] sm:$0xf]
      %v183 = vld [vmem:[%s169 + $0x24] sm:$0xff]
      %v184 = vld [vmem:[%s169 + $0x2c] sm:$0xff]
      %v185 = vld [vmem:[%s169 + $0x34] sm:$0xff]
      %v186 = vld [vmem:[%s169 + $0x3c] sm:$0xff]
      %v187 = vld [vmem:[%s169 + $0x44] sm:$0xf]
      %v188 = vld [vmem:[%s169 + $0x48] sm:$0xff]
      %v189 = vld [vmem:[%s169 + $0x50] sm:$0xff]
      %v190 = vld [vmem:[%s169 + $0x58] sm:$0xff]
      %v191 = vld [vmem:[%s169 + $0x60] sm:$0xff]
      %v192 = vld [vmem:[%s169 + $0x68] sm:$0xf]
      %v193 = vld [vmem:[%s169 + $0x6c] sm:$0xff]
      %v194 = vld [vmem:[%s169 + $0x74] sm:$0xff]
      %v195 = vld [vmem:[%s169 + $0x7c] sm:$0xff]
      %v196 = vld [vmem:[%s169 + $0x84] sm:$0xff]
      %v197 = vld [vmem:[%s169 + $0x8c] sm:$0xf]
      %v198 = vld [vmem:[%s169 + $0x90] sm:$0xff]
      %v199 = vld [vmem:[%s169 + $0x98] sm:$0xff]
      %v200 = vld [vmem:[%s169 + $0xa0] sm:$0xff]
      %v201 = vld [vmem:[%s169 + $0xa8] sm:$0xff]
      %v202 = vld [vmem:[%s169 + $0xb0] sm:$0xf]
      %v203 = vld [vmem:[%s169 + $0xb4] sm:$0xff]
      %v204 = vld [vmem:[%s169 + $0xbc] sm:$0xff]
      %v205 = vld [vmem:[%s169 + $0xc4] sm:$0xff]
      %v206 = vld [vmem:[%s169 + $0xcc] sm:$0xff]
      %v207 = vld [vmem:[%s169 + $0xd4] sm:$0xf]
      %v208 = vld [vmem:[%s169 + $0xd8] sm:$0xff]
      %v209 = vld [vmem:[%s169 + $0xe0] sm:$0xff]
      %v210 = vld [vmem:[%s169 + $0xe8] sm:$0xff]
      %v211 = vld [vmem:[%s169 + $0xf0] sm:$0xff]
      %v212 = vld [vmem:[%s169 + $0xf8] sm:$0xf]
      %v213 = vld [vmem:[%s169 + $0xfc] sm:$0xff]
      %v214 = vld [vmem:[%s169 + $0x104] sm:$0xff]
      %v215 = vld [vmem:[%s169 + $0x10c] sm:$0xff]
      %v216 = vld [vmem:[%s169 + $0x114] sm:$0xff]
      %v217 = vld [vmem:[%s169 + $0x11c] sm:$0xf]
      %v218 = vld [vmem:[%s169 + $0x120] sm:$0xff]
      %v219 = vld [vmem:[%s169 + $0x128] sm:$0xff]
      %v220 = vld [vmem:[%s169 + $0x130] sm:$0xff]
      %v221 = vld [vmem:[%s169 + $0x138] sm:$0xff]
      %v222 = vld [vmem:[%s169 + $0x140] sm:$0xf]
      %v223 = vld [vmem:[%s169 + $0x144] sm:$0xff]
      %v224 = vld [vmem:[%s169 + $0x14c] sm:$0xff]
      %v225 = vld [vmem:[%s169 + $0x154] sm:$0xff]
      %v226 = vld [vmem:[%s169 + $0x15c] sm:$0xff]
      %v227 = vld [vmem:[%s169 + $0x164] sm:$0xf]
      %v228 = vld [vmem:[%s169 + $0x168] sm:$0xff]
      %v229 = vld [vmem:[%s169 + $0x170] sm:$0xff]
      %v230 = vld [vmem:[%s169 + $0x178] sm:$0xff]
      %v231 = vld [vmem:[%s169 + $0x180] sm:$0xff]
      %v232 = vld [vmem:[%s169 + $0x188] sm:$0xf]
      %v233 = vld [vmem:[%s169 + $0x18c] sm:$0xff]
      %v234 = vld [vmem:[%s169 + $0x194] sm:$0xff]
      %v235 = vld [vmem:[%s169 + $0x19c] sm:$0xff]
      %v236 = vld [vmem:[%s169 + $0x1a4] sm:$0xff]
      %v237 = vld [vmem:[%s169 + $0x1ac] sm:$0xf]
      %v238 = vld [vmem:[%s169 + $0x1b0] sm:$0xff]
      %v239 = vld [vmem:[%s169 + $0x1b8] sm:$0xff]
      %v240 = vld [vmem:[%s169 + $0x1c0] sm:$0xff]
      %v241 = vld [vmem:[%s169 + $0x1c8] sm:$0xff]
      %v242 = vld [vmem:[%s169 + $0x1d0] sm:$0xf]
      %v243 = vld [vmem:[%s169 + $0x1d4] sm:$0xff]
      %v244 = vld [vmem:[%s169 + $0x1dc] sm:$0xff]
      %v245 = vld [vmem:[%s169 + $0x1e4] sm:$0xff]
      %v246 = vld [vmem:[%s169 + $0x1ec] sm:$0xff]
      %v247 = vld [vmem:[%s169 + $0x1f4] sm:$0xf]
      %v248 = vld [vmem:[%s169 + $0x1f8] sm:$0xff]
      %v249 = vld [vmem:[%s169 + $0x200] sm:$0xff]
      %v250 = vld [vmem:[%s169 + $0x208] sm:$0xff]
      %v251 = vld [vmem:[%s169 + $0x210] sm:$0xff]
      %v252 = vld [vmem:[%s169 + $0x218] sm:$0xf]
      %v253 = vld [vmem:[%s169 + $0x21c] sm:$0xff]
      %v254 = vld [vmem:[%s169 + $0x224] sm:$0xff]
      %v255 = vld [vmem:[%s169 + $0x22c] sm:$0xff]
      %v256 = vld [vmem:[%s169 + $0x234] sm:$0xff]
      %v257 = vld [vmem:[%s169 + $0x23c] sm:$0xf]
      %v258 = vld [vmem:[%s169 + $0x240] sm:$0xff]
      %v259 = vld [vmem:[%s169 + $0x248] sm:$0xff]
      %v260 = vld [vmem:[%s169 + $0x250] sm:$0xff]
      %v261 = vld [vmem:[%s169 + $0x258] sm:$0xff]
      %v262 = vld [vmem:[%s169 + $0x260] sm:$0xf]
      %v263 = vld [vmem:[%s169 + $0x264] sm:$0xff]
      %v264 = vld [vmem:[%s169 + $0x26c] sm:$0xff]
      %v265 = vld [vmem:[%s169 + $0x274] sm:$0xff]
      %v266 = vld [vmem:[%s169 + $0x27c] sm:$0xff]
      %v267 = vld [vmem:[%s169 + $0x284] sm:$0xf]
      %v268 = vld [vmem:[%s169 + $0x288] sm:$0xff]
      %v269 = vld [vmem:[%s169 + $0x290] sm:$0xff]
      %v270 = vld [vmem:[%s169 + $0x298] sm:$0xff]
      %v271 = vld [vmem:[%s169 + $0x2a0] sm:$0xff]
      %v272 = vld [vmem:[%s169 + $0x2a8] sm:$0xf]
      %v273 = vld [vmem:[%s169 + $0x2ac] sm:$0xff]
      %v274 = vld [vmem:[%s169 + $0x2b4] sm:$0xff]
      %v275 = vld [vmem:[%s169 + $0x2bc] sm:$0xff]
      %v276 = vld [vmem:[%s169 + $0x2c4] sm:$0xff]
      %v277 = vld [vmem:[%s169 + $0x2cc] sm:$0xf]
      %v278 = vld [vmem:[%s169 + $0x2d0] sm:$0xff]
      %v279 = vld [vmem:[%s169 + $0x2d8] sm:$0xff]
      %v280 = vld [vmem:[%s169 + $0x2e0] sm:$0xff]
      %v281 = vld [vmem:[%s169 + $0x2e8] sm:$0xff]
      %v282 = vld [vmem:[%s169 + $0x2f0] sm:$0xf]
      %v283 = vld [vmem:[%s169 + $0x2f4] sm:$0xff]
      %v284 = vld [vmem:[%s169 + $0x2fc] sm:$0xff]
      %v285 = vld [vmem:[%s169 + $0x304] sm:$0xff]
      %v286 = vld [vmem:[%s169 + $0x30c] sm:$0xff]
      %v287 = vld [vmem:[%s169 + $0x314] sm:$0xf]
      %v288 = vld [vmem:[%s169 + $0x318] sm:$0xff]
      %v289 = vld [vmem:[%s169 + $0x320] sm:$0xff]
      %v290 = vld [vmem:[%s169 + $0x328] sm:$0xff]
      %v291 = vld [vmem:[%s169 + $0x330] sm:$0xff]
      %v292 = vld [vmem:[%s169 + $0x338] sm:$0xf]
      %v293 = vld [vmem:[%s169 + $0x33c] sm:$0xff]
      %v294 = vld [vmem:[%s169 + $0x344] sm:$0xff]
      %v295 = vld [vmem:[%s169 + $0x34c] sm:$0xff]
      %v296 = vld [vmem:[%s169 + $0x354] sm:$0xff]
      %v297 = vld [vmem:[%s169 + $0x35c] sm:$0xf]
      %v298 = vld [vmem:[%s169 + $0x360] sm:$0xff]
      %v299 = vld [vmem:[%s169 + $0x368] sm:$0xff]
      %v300 = vld [vmem:[%s169 + $0x370] sm:$0xff]
      %v301 = vld [vmem:[%s169 + $0x378] sm:$0xff]
      %v302 = vld [vmem:[%s169 + $0x380] sm:$0xf]
      %v303 = vld [vmem:[%s169 + $0x384] sm:$0xff]
      %v304 = vld [vmem:[%s169 + $0x38c] sm:$0xff]
      %v305 = vld [vmem:[%s169 + $0x394] sm:$0xff]
      %v306 = vld [vmem:[%s169 + $0x39c] sm:$0xff]
      %v307 = vld [vmem:[%s169 + $0x3a4] sm:$0xf]
      %v308 = vld [vmem:[%s169 + $0x3a8] sm:$0xff]
      %v309 = vld [vmem:[%s169 + $0x3b0] sm:$0xff]
      %v310 = vld [vmem:[%s169 + $0x3b8] sm:$0xff]
      %v311 = vld [vmem:[%s169 + $0x3c0] sm:$0xff]
      %v312 = vld [vmem:[%s169 + $0x3c8] sm:$0xf]
      %v313 = vld [vmem:[%s169 + $0x3cc] sm:$0xff]
      %v314 = vld [vmem:[%s169 + $0x3d4] sm:$0xff]
      %v315 = vld [vmem:[%s169 + $0x3dc] sm:$0xff]
      %v316 = vld [vmem:[%s169 + $0x3e4] sm:$0xff]
      %v317 = vld [vmem:[%s169 + $0x3ec] sm:$0xf]
      %v318 = vld [vmem:[%s169 + $0x3f0] sm:$0xff]
      %v319 = vld [vmem:[%s169 + $0x3f8] sm:$0xff]
      %v320 = vld [vmem:[%s169 + $0x400] sm:$0xff]
      %v321 = vld [vmem:[%s169 + $0x408] sm:$0xff]
      %v322 = vld [vmem:[%s169 + $0x410] sm:$0xf]
      %v323 = vld [vmem:[%s169 + $0x414] sm:$0xff]
      %v324 = vld [vmem:[%s169 + $0x41c] sm:$0xff]
      %v325 = vld [vmem:[%s169 + $0x424] sm:$0xff]
      %v326 = vld [vmem:[%s169 + $0x42c] sm:$0xff]
      %v327 = vld [vmem:[%s169 + $0x434] sm:$0xf]
      %v328 = vld [vmem:[%s169 + $0x438] sm:$0xff]
      %v329 = vld [vmem:[%s169 + $0x440] sm:$0xff]
      %v330 = vld [vmem:[%s169 + $0x448] sm:$0xff]
      %v331 = vld [vmem:[%s169 + $0x450] sm:$0xff]
      %v332 = vld [vmem:[%s169 + $0x458] sm:$0xf]
      %v333 = vld [vmem:[%s169 + $0x45c] sm:$0xff]
      %v334 = vld [vmem:[%s169 + $0x464] sm:$0xff]
      %v335 = vld [vmem:[%s169 + $0x46c] sm:$0xff]
      %v336 = vld [vmem:[%s169 + $0x474] sm:$0xff]
      %v337 = vld [vmem:[%s169 + $0x47c] sm:$0xf]
      %v338 = vld [vmem:[%s169 + $0x480] sm:$0xff]
      %v339 = vld [vmem:[%s169 + $0x488] sm:$0xff]
      %v340 = vld [vmem:[%s169 + $0x490] sm:$0xff]
      %v341 = vld [vmem:[%s169 + $0x498] sm:$0xff]
      %v342 = vld [vmem:[%s169 + $0x4a0] sm:$0xf]
      %v343 = vld [vmem:[%s169 + $0x4a4] sm:$0xff]
      %v344 = vld [vmem:[%s169 + $0x4ac] sm:$0xff]
      %v345 = vld [vmem:[%s169 + $0x4b4] sm:$0xff]
      %v346 = vld [vmem:[%s169 + $0x4bc] sm:$0xff]
      %v347 = vld [vmem:[%s169 + $0x4c4] sm:$0xf]
      %v348 = vld [vmem:[%s169 + $0x4c8] sm:$0xff]
      %v349 = vld [vmem:[%s169 + $0x4d0] sm:$0xff]
      %v350 = vld [vmem:[%s169 + $0x4d8] sm:$0xff]
      %v351 = vld [vmem:[%s169 + $0x4e0] sm:$0xff]
      %v352 = vld [vmem:[%s169 + $0x4e8] sm:$0xf]
      %v353 = vld [vmem:[%s169 + $0x4ec] sm:$0xff]
      %v354 = vld [vmem:[%s169 + $0x4f4] sm:$0xff]
      %v355 = vld [vmem:[%s169 + $0x4fc] sm:$0xff]
      %v356 = vld [vmem:[%s169 + $0x504] sm:$0xff]
      %v357 = vld [vmem:[%s169 + $0x50c] sm:$0xf]
      %v358 = vld [vmem:[%s169 + $0x510] sm:$0xff]
      %v359 = vld [vmem:[%s169 + $0x518] sm:$0xff]
      %v360 = vld [vmem:[%s169 + $0x520] sm:$0xff]
      %v361 = vld [vmem:[%s169 + $0x528] sm:$0xff]
      %v362 = vld [vmem:[%s169 + $0x530] sm:$0xf]
      %v363 = vld [vmem:[%s169 + $0x534] sm:$0xff]
      %v364 = vld [vmem:[%s169 + $0x53c] sm:$0xff]
      %v365 = vld [vmem:[%s169 + $0x544] sm:$0xff]
      %v366 = vld [vmem:[%s169 + $0x54c] sm:$0xff]
      %v367 = vld [vmem:[%s169 + $0x554] sm:$0xf]
      %v368 = vld [vmem:[%s169 + $0x558] sm:$0xff]
      %v369 = vld [vmem:[%s169 + $0x560] sm:$0xff]
      %v370 = vld [vmem:[%s169 + $0x568] sm:$0xff]
      %v371 = vld [vmem:[%s169 + $0x570] sm:$0xff]
      %v372 = vld [vmem:[%s169 + $0x578] sm:$0xf]
      %v373 = vld [vmem:[%s169 + $0x57c] sm:$0xff]
      %v374 = vld [vmem:[%s169 + $0x584] sm:$0xff]
      %v375 = vld [vmem:[%s169 + $0x58c] sm:$0xff]
      %v376 = vld [vmem:[%s169 + $0x594] sm:$0xff]
      %v377 = vld [vmem:[%s169 + $0x59c] sm:$0xf]
      %v378 = vld [vmem:[%s169 + $0x5a0] sm:$0xff]
      %v379 = vld [vmem:[%s169 + $0x5a8] sm:$0xff]
      %v380 = vld [vmem:[%s169 + $0x5b0] sm:$0xff]
      %v381 = vld [vmem:[%s169 + $0x5b8] sm:$0xff]
      %v382 = vld [vmem:[%s169 + $0x5c0] sm:$0xf]
      %v383 = vld [vmem:[%s169 + $0x5c4] sm:$0xff]
      %v384 = vld [vmem:[%s169 + $0x5cc] sm:$0xff]
      %v385 = vld [vmem:[%s169 + $0x5d4] sm:$0xff]
      %v386 = vld [vmem:[%s169 + $0x5dc] sm:$0xff]
      %v387 = vld [vmem:[%s169 + $0x5e4] sm:$0xf]
      %v388 = vld [vmem:[%s169 + $0x5e8] sm:$0xff]
      %v389 = vld [vmem:[%s169 + $0x5f0] sm:$0xff]
      %v390 = vld [vmem:[%s169 + $0x5f8] sm:$0xff]
      %v391 = vld [vmem:[%s169 + $0x600] sm:$0xff]
      %v392 = vld [vmem:[%s169 + $0x608] sm:$0xf]
      %v393 = vld [vmem:[%s169 + $0x60c] sm:$0xff]
      %v394 = vld [vmem:[%s169 + $0x614] sm:$0xff]
      %v395 = vld [vmem:[%s169 + $0x61c] sm:$0xff]
      %v396 = vld [vmem:[%s169 + $0x624] sm:$0xff]
      %v397 = vld [vmem:[%s169 + $0x62c] sm:$0xf]
      %v398 = vld [vmem:[%s169 + $0x630] sm:$0xff]
      %v399 = vld [vmem:[%s169 + $0x638] sm:$0xff]
      %v400 = vld [vmem:[%s169 + $0x640] sm:$0xff]
      %v401 = vld [vmem:[%s169 + $0x648] sm:$0xff]
      %v402 = vld [vmem:[%s169 + $0x650] sm:$0xf]
      %v403 = vld [vmem:[%s169 + $0x654] sm:$0xff]
      %v404 = vld [vmem:[%s169 + $0x65c] sm:$0xff]
      %v405 = vld [vmem:[%s169 + $0x664] sm:$0xff]
      %v406 = vld [vmem:[%s169 + $0x66c] sm:$0xff]
      %v407 = vld [vmem:[%s169 + $0x674] sm:$0xf]
      %v408 = vld [vmem:[%s169 + $0x678] sm:$0xff]
      %v409 = vld [vmem:[%s169 + $0x680] sm:$0xff]
      %v410 = vld [vmem:[%s169 + $0x688] sm:$0xff]
      %v411 = vld [vmem:[%s169 + $0x690] sm:$0xff]
      %v412 = vld [vmem:[%s169 + $0x698] sm:$0xf]
      %v413 = vld [vmem:[%s169 + $0x69c] sm:$0xff]
      %v414 = vld [vmem:[%s169 + $0x6a4] sm:$0xff]
      %v415 = vld [vmem:[%s169 + $0x6ac] sm:$0xff]
      %v416 = vld [vmem:[%s169 + $0x6b4] sm:$0xff]
      %v417 = vld [vmem:[%s169 + $0x6bc] sm:$0xf]
      %v418 = vld [vmem:[%s169 + $0x6c0] sm:$0xff]
      %v419 = vld [vmem:[%s169 + $0x6c8] sm:$0xff]
      %v420 = vld [vmem:[%s169 + $0x6d0] sm:$0xff]
      %v421 = vld [vmem:[%s169 + $0x6d8] sm:$0xff]
      %v422 = vld [vmem:[%s169 + $0x6e0] sm:$0xf]
      %v423 = vld [vmem:[%s169 + $0x6e4] sm:$0xff]
      %v424 = vld [vmem:[%s169 + $0x6ec] sm:$0xff]
      %v425 = vld [vmem:[%s169 + $0x6f4] sm:$0xff]
      %v426 = vld [vmem:[%s169 + $0x6fc] sm:$0xff]
      %v427 = vld [vmem:[%s169 + $0x704] sm:$0xf]
      %v428 = vld [vmem:[%s169 + $0x708] sm:$0xff]
      %v429 = vld [vmem:[%s169 + $0x710] sm:$0xff]
      %v430 = vld [vmem:[%s169 + $0x718] sm:$0xff]
      %v431 = vld [vmem:[%s169 + $0x720] sm:$0xff]
      %v432 = vld [vmem:[%s169 + $0x728] sm:$0xf]
      %v433 = vld [vmem:[%s169 + $0x72c] sm:$0xff]
      %v434 = vld [vmem:[%s169 + $0x734] sm:$0xff]
      %v435 = vld [vmem:[%s169 + $0x73c] sm:$0xff]
      %v436 = vld [vmem:[%s169 + $0x744] sm:$0xff]
      %v437 = vld [vmem:[%s169 + $0x74c] sm:$0xf]
      %v438 = vld [vmem:[%s169 + $0x750] sm:$0xff]
      %v439 = vld [vmem:[%s169 + $0x758] sm:$0xff]
      %v440 = vld [vmem:[%s169 + $0x760] sm:$0xff]
      %v441 = vld [vmem:[%s169 + $0x768] sm:$0xff]
      %v442 = vld [vmem:[%s169 + $0x770] sm:$0xf]
      %v443 = vld [vmem:[%s169 + $0x774] sm:$0xff]
      %v444 = vld [vmem:[%s169 + $0x77c] sm:$0xff]
      %v445 = vld [vmem:[%s169 + $0x784] sm:$0xff]
      %v446 = vld [vmem:[%s169 + $0x78c] sm:$0xff]
      %v447 = vld [vmem:[%s169 + $0x794] sm:$0xf]
      %v448 = vld [vmem:[%s169 + $0x798] sm:$0xff]
      %v449 = vld [vmem:[%s169 + $0x7a0] sm:$0xff]
      %v450 = vld [vmem:[%s169 + $0x7a8] sm:$0xff]
      %v451 = vld [vmem:[%s169 + $0x7b0] sm:$0xff]
      %v452 = vld [vmem:[%s169 + $0x7b8] sm:$0xf]
      %v453 = vld [vmem:[%s169 + $0x7bc] sm:$0xff]
      %v454 = vld [vmem:[%s169 + $0x7c4] sm:$0xff]
      %v455 = vld [vmem:[%s169 + $0x7cc] sm:$0xff]
      %v456 = vld [vmem:[%s169 + $0x7d4] sm:$0xff]
      %v457 = vld [vmem:[%s169 + $0x7dc] sm:$0xf]
      %v458 = vld [vmem:[%s169 + $0x7e0] sm:$0xff]
      %v459 = vld [vmem:[%s169 + $0x7e8] sm:$0xff]
      %v460 = vld [vmem:[%s169 + $0x7f0] sm:$0xff]
      %v461 = vld [vmem:[%s169 + $0x7f8] sm:$0xff]
      %v462 = vld [vmem:[%s169 + $0x800] sm:$0xf]
      %v463 = vld [vmem:[%s169 + $0x804] sm:$0xff]
      %v464 = vld [vmem:[%s169 + $0x80c] sm:$0xff]
      %v465 = vld [vmem:[%s169 + $0x814] sm:$0xff]
      %v466 = vld [vmem:[%s169 + $0x81c] sm:$0xff]
      %v467 = vld [vmem:[%s169 + $0x824] sm:$0xf]
      %v468 = vld [vmem:[%s169 + $0x828] sm:$0xff]
      %v469 = vld [vmem:[%s169 + $0x830] sm:$0xff]
      %v470 = vld [vmem:[%s169 + $0x838] sm:$0xff]
      %v471 = vld [vmem:[%s169 + $0x840] sm:$0xff]
      %v472 = vld [vmem:[%s169 + $0x848] sm:$0xf]
      %v473 = vld [vmem:[%s169 + $0x84c] sm:$0xff]
      %v474 = vld [vmem:[%s169 + $0x854] sm:$0xff]
      %v475 = vld [vmem:[%s169 + $0x85c] sm:$0xff]
      %v476 = vld [vmem:[%s169 + $0x864] sm:$0xff]
      %v477 = vld [vmem:[%s169 + $0x86c] sm:$0xf]
      %v478 = vld [vmem:[%s169 + $0x870] sm:$0xff]
      %v479 = vld [vmem:[%s169 + $0x878] sm:$0xff]
      %v480 = vld [vmem:[%s169 + $0x880] sm:$0xff]
      %v481 = vld [vmem:[%s169 + $0x888] sm:$0xff]
      %v482 = vld [vmem:[%s169 + $0x890] sm:$0xf]
      %v483 = vld [vmem:[%s169 + $0x894] sm:$0xff]
      %v484 = vld [vmem:[%s169 + $0x89c] sm:$0xff]
      %v485 = vld [vmem:[%s169 + $0x8a4] sm:$0xff]
      %v486 = vld [vmem:[%s169 + $0x8ac] sm:$0xff]
      %v487 = vld [vmem:[%s169 + $0x8b4] sm:$0xf]
      %v488 = vld [vmem:[%s169 + $0x8b8] sm:$0xff]
      %v489 = vld [vmem:[%s169 + $0x8c0] sm:$0xff]
      %v490 = vld [vmem:[%s169 + $0x8c8] sm:$0xff]
      %v491 = vld [vmem:[%s169 + $0x8d0] sm:$0xff]
      %v492 = vld [vmem:[%s169 + $0x8d8] sm:$0xf]
      %v493 = vld [vmem:[%s169 + $0x8dc] sm:$0xff]
      %v494 = vld [vmem:[%s169 + $0x8e4] sm:$0xff]
      %v495 = vld [vmem:[%s169 + $0x8ec] sm:$0xff]
      %v496 = vld [vmem:[%s169 + $0x8f4] sm:$0xff]
      %v497 = vld [vmem:[%s169 + $0x8fc] sm:$0xf]
      %v498 = vld [vmem:[%s1] sm:$0xf]
      %v499 = vld [vmem:[%s1 + $0x4] sm:$0xf]
      %v500 = vld [vmem:[%s1 + $0x8] sm:$0xf]
      %v501 = vld [vmem:[%s1 + $0xc] sm:$0xf]
      %v502 = vld [vmem:[%s1 + $0x10] sm:$0xf]
      %v503 = vld [vmem:[%s1 + $0x14] sm:$0xf]
      %v504 = vld [vmem:[%s1 + $0x18] sm:$0xf]
      %v505 = vld [vmem:[%s1 + $0x1c] sm:$0xf]
      %v506 = vld [vmem:[%s1 + $0x20] sm:$0xf]
      %v507 = vld [vmem:[%s1 + $0x24] sm:$0xf]
      %v508 = vld [vmem:[%s1 + $0x28] sm:$0xf]
      %v509 = vld [vmem:[%s1 + $0x2c] sm:$0xf]
      %v510 = vld [vmem:[%s1 + $0x30] sm:$0xf]
      %v511 = vld [vmem:[%s1 + $0x34] sm:$0xf]
      %v512 = vld [vmem:[%s1 + $0x38] sm:$0xf]
      %v513 = vld [vmem:[%s1 + $0x3c] sm:$0xf]
      %v514 = vld [vmem:[%s1 + $0x40] sm:$0xf]
      %v515 = vld [vmem:[%s1 + $0x44] sm:$0xf]
      %v516 = vld [vmem:[%s1 + $0x48] sm:$0xf]
      %v517 = vld [vmem:[%s1 + $0x4c] sm:$0xf]
      %v518 = vld [vmem:[%s1 + $0x50] sm:$0xf]
      %v519 = vld [vmem:[%s1 + $0x54] sm:$0xf]
      %v520 = vld [vmem:[%s1 + $0x58] sm:$0xf]
      %v521 = vld [vmem:[%s1 + $0x5c] sm:$0xf]
      %v522 = vld [vmem:[%s1 + $0x60] sm:$0xf]
      %v523 = vld [vmem:[%s1 + $0x64] sm:$0xf]
      %v524 = vld [vmem:[%s1 + $0x68] sm:$0xf]
      %v525 = vld [vmem:[%s1 + $0x6c] sm:$0xf]
      %v526 = vld [vmem:[%s1 + $0x70] sm:$0xf]
      %v527 = vld [vmem:[%s1 + $0x74] sm:$0xf]
      %v528 = vld [vmem:[%s1 + $0x78] sm:$0xf]
      %v529 = vld [vmem:[%s1 + $0x7c] sm:$0xf]
      %v530 = vld [vmem:[%s1 + $0x80] sm:$0xf]
      %v531 = vld [vmem:[%s1 + $0x84] sm:$0xf]
      %v532 = vld [vmem:[%s1 + $0x88] sm:$0xf]
      %v533 = vld [vmem:[%s1 + $0x8c] sm:$0xf]
      %v534 = vld [vmem:[%s1 + $0x90] sm:$0xf]
      %v535 = vld [vmem:[%s1 + $0x94] sm:$0xf]
      %v536 = vld [vmem:[%s1 + $0x98] sm:$0xf]
      %v537 = vld [vmem:[%s1 + $0x9c] sm:$0xf]
      %v538 = vld [vmem:[%s1 + $0xa0] sm:$0xf]
      %v539 = vld [vmem:[%s1 + $0xa4] sm:$0xf]
      %v540 = vld [vmem:[%s1 + $0xa8] sm:$0xf]
      %v541 = vld [vmem:[%s1 + $0xac] sm:$0xf]
      %v542 = vld [vmem:[%s1 + $0xb0] sm:$0xf]
      %v543 = vld [vmem:[%s1 + $0xb4] sm:$0xf]
      %v544 = vld [vmem:[%s1 + $0xb8] sm:$0xf]
      %v545 = vld [vmem:[%s1 + $0xbc] sm:$0xf]
      %v546 = vld [vmem:[%s1 + $0xc0] sm:$0xf]
      %v547 = vld [vmem:[%s1 + $0xc4] sm:$0xf]
      %v548 = vld [vmem:[%s1 + $0xc8] sm:$0xf]
      %v549 = vld [vmem:[%s1 + $0xcc] sm:$0xf]
      %v550 = vld [vmem:[%s1 + $0xd0] sm:$0xf]
      %v551 = vld [vmem:[%s1 + $0xd4] sm:$0xf]
      %v552 = vld [vmem:[%s1 + $0xd8] sm:$0xf]
      %v553 = vld [vmem:[%s1 + $0xdc] sm:$0xf]
      %v554 = vld [vmem:[%s1 + $0xe0] sm:$0xf]
      %v555 = vld [vmem:[%s1 + $0xe4] sm:$0xf]
      %v556 = vld [vmem:[%s1 + $0xe8] sm:$0xf]
      %v557 = vld [vmem:[%s1 + $0xec] sm:$0xf]
      %v558 = vld [vmem:[%s1 + $0xf0] sm:$0xf]
      %v559 = vld [vmem:[%s1 + $0xf4] sm:$0xf]
      %v560 = vld [vmem:[%s1 + $0xf8] sm:$0xf]
      %v561 = vld [vmem:[%s1 + $0xfc] sm:$0xf]
      %v562 = vld [vmem:[%s1 + $0x100] sm:$0xf]
      %v563 = vld [vmem:[%s1 + $0x104] sm:$0xf]
      %v564 = vld [vmem:[%s1 + $0x108] sm:$0xf]
      %v565 = vld [vmem:[%s1 + $0x10c] sm:$0xf]
      %v566 = vld [vmem:[%s1 + $0x110] sm:$0xf]
      %v567 = vld [vmem:[%s1 + $0x114] sm:$0xf]
      %v568 = vld [vmem:[%s1 + $0x118] sm:$0xf]
      %v569 = vld [vmem:[%s1 + $0x11c] sm:$0xf]
      %v570 = vld [vmem:[%s1 + $0x120] sm:$0xf]
      %v571 = vld [vmem:[%s1 + $0x124] sm:$0xf]
      %v572 = vld [vmem:[%s1 + $0x128] sm:$0xf]
      %v573 = vld [vmem:[%s1 + $0x12c] sm:$0xf]
      %v574 = vld [vmem:[%s1 + $0x130] sm:$0xf]
      %v575 = vld [vmem:[%s1 + $0x134] sm:$0xf]
      %v576 = vld [vmem:[%s1 + $0x138] sm:$0xf]
      %v577 = vld [vmem:[%s1 + $0x13c] sm:$0xf]
      %v578 = vld [vmem:[%s1 + $0x140] sm:$0xf]
      %v579 = vld [vmem:[%s1 + $0x144] sm:$0xf]
      %v580 = vld [vmem:[%s1 + $0x148] sm:$0xf]
      %v581 = vld [vmem:[%s1 + $0x14c] sm:$0xf]
      %v582 = vld [vmem:[%s1 + $0x150] sm:$0xf]
      %v583 = vld [vmem:[%s1 + $0x154] sm:$0xf]
      %v584 = vld [vmem:[%s1 + $0x158] sm:$0xf]
      %v585 = vld [vmem:[%s1 + $0x15c] sm:$0xf]
      %v586 = vld [vmem:[%s1 + $0x160] sm:$0xf]
      %v587 = vld [vmem:[%s1 + $0x164] sm:$0xf]
      %v588 = vld [vmem:[%s1 + $0x168] sm:$0xf]
      %v589 = vld [vmem:[%s1 + $0x16c] sm:$0xf]
      %v590 = vld [vmem:[%s1 + $0x170] sm:$0xf]
      %v591 = vld [vmem:[%s1 + $0x174] sm:$0xf]
      %v592 = vld [vmem:[%s1 + $0x178] sm:$0xf]
      %v593 = vld [vmem:[%s1 + $0x17c] sm:$0xf]
      %v594 = vld [vmem:[%s1 + $0x180] sm:$0xf]
      %v595 = vld [vmem:[%s1 + $0x184] sm:$0xf]
      %v596 = vld [vmem:[%s1 + $0x188] sm:$0xf]
      %v597 = vld [vmem:[%s1 + $0x18c] sm:$0xf]
      %v598 = vld [vmem:[%s1 + $0x190] sm:$0xf]
      %v599 = vld [vmem:[%s1 + $0x194] sm:$0xf]
      %v600 = vld [vmem:[%s1 + $0x198] sm:$0xf]
      %v601 = vld [vmem:[%s1 + $0x19c] sm:$0xf]
      %v602 = vld [vmem:[%s1 + $0x1a0] sm:$0xf]
      %v603 = vld [vmem:[%s1 + $0x1a4] sm:$0xf]
      %v604 = vld [vmem:[%s1 + $0x1a8] sm:$0xf]
      %v605 = vld [vmem:[%s1 + $0x1ac] sm:$0xf]
      %v606 = vld [vmem:[%s1 + $0x1b0] sm:$0xf]
      %v607 = vld [vmem:[%s1 + $0x1b4] sm:$0xf]
      %v608 = vld [vmem:[%s1 + $0x1b8] sm:$0xf]
      %v609 = vld [vmem:[%s1 + $0x1bc] sm:$0xf]
      %v610 = vld [vmem:[%s1 + $0x1c0] sm:$0xf]
      %v611 = vld [vmem:[%s1 + $0x1c4] sm:$0xf]
      %v612 = vld [vmem:[%s1 + $0x1c8] sm:$0xf]
      %v613 = vld [vmem:[%s1 + $0x1cc] sm:$0xf]
      %v614 = vld [vmem:[%s1 + $0x1d0] sm:$0xf]
      %v615 = vld [vmem:[%s1 + $0x1d4] sm:$0xf]
      %v616 = vld [vmem:[%s1 + $0x1d8] sm:$0xf]
      %v617 = vld [vmem:[%s1 + $0x1dc] sm:$0xf]
      %v618 = vld [vmem:[%s1 + $0x1e0] sm:$0xf]
      %v619 = vld [vmem:[%s1 + $0x1e4] sm:$0xf]
      %v620 = vld [vmem:[%s1 + $0x1e8] sm:$0xf]
      %v621 = vld [vmem:[%s1 + $0x1ec] sm:$0xf]
      %v622 = vld [vmem:[%s1 + $0x1f0] sm:$0xf]
      %v623 = vld [vmem:[%s1 + $0x1f4] sm:$0xf]
      %v624 = vld [vmem:[%s1 + $0x1f8] sm:$0xf]
      %v625 = vld [vmem:[%s1 + $0x1fc] sm:$0xf]
      %v626 = vld [vmem:[%s1 + $0x200] sm:$0xf]
      %v627 = vld [vmem:[%s1 + $0x204] sm:$0xf]
      %v628 = vld [vmem:[%s1 + $0x208] sm:$0xf]
      %v629 = vld [vmem:[%s1 + $0x20c] sm:$0xf]
      %v630 = vld [vmem:[%s1 + $0x210] sm:$0xf]
      %v631 = vld [vmem:[%s1 + $0x214] sm:$0xf]
      %v632 = vld [vmem:[%s1 + $0x218] sm:$0xf]
      %v633 = vld [vmem:[%s1 + $0x21c] sm:$0xf]
      %v634 = vld [vmem:[%s1 + $0x220] sm:$0xf]
      %v635 = vld [vmem:[%s1 + $0x224] sm:$0xf]
      %v636 = vld [vmem:[%s1 + $0x228] sm:$0xf]
      %v637 = vld [vmem:[%s1 + $0x22c] sm:$0xf]
      %v638 = vld [vmem:[%s1 + $0x230] sm:$0xf]
      %v639 = vld [vmem:[%s1 + $0x234] sm:$0xf]
      %v640 = vld [vmem:[%s1 + $0x238] sm:$0xf]
      %v641 = vld [vmem:[%s1 + $0x23c] sm:$0xf]
      %v642 = vld [vmem:[%s2] sm:$0x1]
      %v644 = vlaneseq
      %v645 = vshrl.u32 %v644, 7
      %v646 = vsub.s32 0, %v645
      %v647 = vrot.slane %v642, %v646
      %v969 = vunpack.c.l.b16 %v178
      %v970 = vunpack.c.h.b16 %v178
      %v971 = vunpack.c.l.b16 %v179
      %v972 = vunpack.c.h.b16 %v179
      %v973 = vunpack.c.l.b16 %v180
      %v974 = vunpack.c.h.b16 %v180
      %v975 = vunpack.c.l.b16 %v181
      %v976 = vunpack.c.h.b16 %v181
      %v977 = vunpack.c.l.b16 %v182
      %v978 = vunpack.c.l.b16 %v183
      %v979 = vunpack.c.h.b16 %v183
      %v980 = vunpack.c.l.b16 %v184
      %v981 = vunpack.c.h.b16 %v184
      %v982 = vunpack.c.l.b16 %v185
      %v983 = vunpack.c.h.b16 %v185
      %v984 = vunpack.c.l.b16 %v186
      %v985 = vunpack.c.h.b16 %v186
      %v986 = vunpack.c.l.b16 %v187
      %v987 = vunpack.c.l.b16 %v188
      %v988 = vunpack.c.h.b16 %v188
      %v989 = vunpack.c.l.b16 %v189
      %v990 = vunpack.c.h.b16 %v189
      %v991 = vunpack.c.l.b16 %v190
      %v992 = vunpack.c.h.b16 %v190
      %v993 = vunpack.c.l.b16 %v191
      %v994 = vunpack.c.h.b16 %v191
      %v995 = vunpack.c.l.b16 %v192
      %v996 = vunpack.c.l.b16 %v193
      %v997 = vunpack.c.h.b16 %v193
      %v998 = vunpack.c.l.b16 %v194
      %v999 = vunpack.c.h.b16 %v194
      %v1000 = vunpack.c.l.b16 %v195
      %v1001 = vunpack.c.h.b16 %v195
      %v1002 = vunpack.c.l.b16 %v196
      %v1003 = vunpack.c.h.b16 %v196
      %v1004 = vunpack.c.l.b16 %v197
      %v1005 = vunpack.c.l.b16 %v198
      %v1006 = vunpack.c.h.b16 %v198
      %v1007 = vunpack.c.l.b16 %v199
      %v1008 = vunpack.c.h.b16 %v199
      %v1009 = vunpack.c.l.b16 %v200
      %v1010 = vunpack.c.h.b16 %v200
      %v1011 = vunpack.c.l.b16 %v201
      %v1012 = vunpack.c.h.b16 %v201
      %v1013 = vunpack.c.l.b16 %v202
      %v1014 = vunpack.c.l.b16 %v203
      %v1015 = vunpack.c.h.b16 %v203
      %v1016 = vunpack.c.l.b16 %v204
      %v1017 = vunpack.c.h.b16 %v204
      %v1018 = vunpack.c.l.b16 %v205
      %v1019 = vunpack.c.h.b16 %v205
      %v1020 = vunpack.c.l.b16 %v206
      %v1021 = vunpack.c.h.b16 %v206
      %v1022 = vunpack.c.l.b16 %v207
      %v1023 = vunpack.c.l.b16 %v208
      %v1024 = vunpack.c.h.b16 %v208
      %v1025 = vunpack.c.l.b16 %v209
      %v1026 = vunpack.c.h.b16 %v209
      %v1027 = vunpack.c.l.b16 %v210
      %v1028 = vunpack.c.h.b16 %v210
      %v1029 = vunpack.c.l.b16 %v211
      %v1030 = vunpack.c.h.b16 %v211
      %v1031 = vunpack.c.l.b16 %v212
      %v1032 = vunpack.c.l.b16 %v213
      %v1033 = vunpack.c.h.b16 %v213
      %v1034 = vunpack.c.l.b16 %v214
      %v1035 = vunpack.c.h.b16 %v214
      %v1036 = vunpack.c.l.b16 %v215
      %v1037 = vunpack.c.h.b16 %v215
      %v1038 = vunpack.c.l.b16 %v216
      %v1039 = vunpack.c.h.b16 %v216
      %v1040 = vunpack.c.l.b16 %v217
      %v1041 = vunpack.c.l.b16 %v218
      %v1042 = vunpack.c.h.b16 %v218
      %v1043 = vunpack.c.l.b16 %v219
      %v1044 = vunpack.c.h.b16 %v219
      %v1045 = vunpack.c.l.b16 %v220
      %v1046 = vunpack.c.h.b16 %v220
      %v1047 = vunpack.c.l.b16 %v221
      %v1048 = vunpack.c.h.b16 %v221
      %v1049 = vunpack.c.l.b16 %v222
      %v1050 = vunpack.c.l.b16 %v223
      %v1051 = vunpack.c.h.b16 %v223
      %v1052 = vunpack.c.l.b16 %v224
      %v1053 = vunpack.c.h.b16 %v224
      %v1054 = vunpack.c.l.b16 %v225
      %v1055 = vunpack.c.h.b16 %v225
      %v1056 = vunpack.c.l.b16 %v226
      %v1057 = vunpack.c.h.b16 %v226
      %v1058 = vunpack.c.l.b16 %v227
      %v1059 = vunpack.c.l.b16 %v228
      %v1060 = vunpack.c.h.b16 %v228
      %v1061 = vunpack.c.l.b16 %v229
      %v1062 = vunpack.c.h.b16 %v229
      %v1063 = vunpack.c.l.b16 %v230
      %v1064 = vunpack.c.h.b16 %v230
      %v1065 = vunpack.c.l.b16 %v231
      %v1066 = vunpack.c.h.b16 %v231
      %v1067 = vunpack.c.l.b16 %v232
      %v1068 = vunpack.c.l.b16 %v233
      %v1069 = vunpack.c.h.b16 %v233
      %v1070 = vunpack.c.l.b16 %v234
      %v1071 = vunpack.c.h.b16 %v234
      %v1072 = vunpack.c.l.b16 %v235
      %v1073 = vunpack.c.h.b16 %v235
      %v1074 = vunpack.c.l.b16 %v236
      %v1075 = vunpack.c.h.b16 %v236
      %v1076 = vunpack.c.l.b16 %v237
      %v1077 = vunpack.c.l.b16 %v238
      %v1078 = vunpack.c.h.b16 %v238
      %v1079 = vunpack.c.l.b16 %v239
      %v1080 = vunpack.c.h.b16 %v239
      %v1081 = vunpack.c.l.b16 %v240
      %v1082 = vunpack.c.h.b16 %v240
      %v1083 = vunpack.c.l.b16 %v241
      %v1084 = vunpack.c.h.b16 %v241
      %v1085 = vunpack.c.l.b16 %v242
      %v1086 = vunpack.c.l.b16 %v243
      %v1087 = vunpack.c.h.b16 %v243
      %v1088 = vunpack.c.l.b16 %v244
      %v1089 = vunpack.c.h.b16 %v244
      %v1090 = vunpack.c.l.b16 %v245
      %v1091 = vunpack.c.h.b16 %v245
      %v1092 = vunpack.c.l.b16 %v246
      %v1093 = vunpack.c.h.b16 %v246
      %v1094 = vunpack.c.l.b16 %v247
      %v1095 = vunpack.c.l.b16 %v248
      %v1096 = vunpack.c.h.b16 %v248
      %v1097 = vunpack.c.l.b16 %v249
      %v1098 = vunpack.c.h.b16 %v249
      %v1099 = vunpack.c.l.b16 %v250
      %v1100 = vunpack.c.h.b16 %v250
      %v1101 = vunpack.c.l.b16 %v251
      %v1102 = vunpack.c.h.b16 %v251
      %v1103 = vunpack.c.l.b16 %v252
      %v1104 = vunpack.c.l.b16 %v253
      %v1105 = vunpack.c.h.b16 %v253
      %v1106 = vunpack.c.l.b16 %v254
      %v1107 = vunpack.c.h.b16 %v254
      %v1108 = vunpack.c.l.b16 %v255
      %v1109 = vunpack.c.h.b16 %v255
      %v1110 = vunpack.c.l.b16 %v256
      %v1111 = vunpack.c.h.b16 %v256
      %v1112 = vunpack.c.l.b16 %v257
      %v1113 = vunpack.c.l.b16 %v258
      %v1114 = vunpack.c.h.b16 %v258
      %v1115 = vunpack.c.l.b16 %v259
      %v1116 = vunpack.c.h.b16 %v259
      %v1117 = vunpack.c.l.b16 %v260
      %v1118 = vunpack.c.h.b16 %v260
      %v1119 = vunpack.c.l.b16 %v261
      %v1120 = vunpack.c.h.b16 %v261
      %v1121 = vunpack.c.l.b16 %v262
      %v1122 = vunpack.c.l.b16 %v263
      %v1123 = vunpack.c.h.b16 %v263
      %v1124 = vunpack.c.l.b16 %v264
      %v1125 = vunpack.c.h.b16 %v264
      %v1126 = vunpack.c.l.b16 %v265
      %v1127 = vunpack.c.h.b16 %v265
      %v1128 = vunpack.c.l.b16 %v266
      %v1129 = vunpack.c.h.b16 %v266
      %v1130 = vunpack.c.l.b16 %v267
      %v1131 = vunpack.c.l.b16 %v268
      %v1132 = vunpack.c.h.b16 %v268
      %v1133 = vunpack.c.l.b16 %v269
      %v1134 = vunpack.c.h.b16 %v269
      %v1135 = vunpack.c.l.b16 %v270
      %v1136 = vunpack.c.h.b16 %v270
      %v1137 = vunpack.c.l.b16 %v271
      %v1138 = vunpack.c.h.b16 %v271
      %v1139 = vunpack.c.l.b16 %v272
      %v1140 = vunpack.c.l.b16 %v273
      %v1141 = vunpack.c.h.b16 %v273
      %v1142 = vunpack.c.l.b16 %v274
      %v1143 = vunpack.c.h.b16 %v274
      %v1144 = vunpack.c.l.b16 %v275
      %v1145 = vunpack.c.h.b16 %v275
      %v1146 = vunpack.c.l.b16 %v276
      %v1147 = vunpack.c.h.b16 %v276
      %v1148 = vunpack.c.l.b16 %v277
      %v1149 = vunpack.c.l.b16 %v278
      %v1150 = vunpack.c.h.b16 %v278
      %v1151 = vunpack.c.l.b16 %v279
      %v1152 = vunpack.c.h.b16 %v279
      %v1153 = vunpack.c.l.b16 %v280
      %v1154 = vunpack.c.h.b16 %v280
      %v1155 = vunpack.c.l.b16 %v281
      %v1156 = vunpack.c.h.b16 %v281
      %v1157 = vunpack.c.l.b16 %v282
      %v1158 = vunpack.c.l.b16 %v283
      %v1159 = vunpack.c.h.b16 %v283
      %v1160 = vunpack.c.l.b16 %v284
      %v1161 = vunpack.c.h.b16 %v284
      %v1162 = vunpack.c.l.b16 %v285
      %v1163 = vunpack.c.h.b16 %v285
      %v1164 = vunpack.c.l.b16 %v286
      %v1165 = vunpack.c.h.b16 %v286
      %v1166 = vunpack.c.l.b16 %v287
      %v1167 = vunpack.c.l.b16 %v288
      %v1168 = vunpack.c.h.b16 %v288
      %v1169 = vunpack.c.l.b16 %v289
      %v1170 = vunpack.c.h.b16 %v289
      %v1171 = vunpack.c.l.b16 %v290
      %v1172 = vunpack.c.h.b16 %v290
      %v1173 = vunpack.c.l.b16 %v291
      %v1174 = vunpack.c.h.b16 %v291
      %v1175 = vunpack.c.l.b16 %v292
      %v1176 = vunpack.c.l.b16 %v293
      %v1177 = vunpack.c.h.b16 %v293
      %v1178 = vunpack.c.l.b16 %v294
      %v1179 = vunpack.c.h.b16 %v294
      %v1180 = vunpack.c.l.b16 %v295
      %v1181 = vunpack.c.h.b16 %v295
      %v1182 = vunpack.c.l.b16 %v296
      %v1183 = vunpack.c.h.b16 %v296
      %v1184 = vunpack.c.l.b16 %v297
      %v1185 = vunpack.c.l.b16 %v298
      %v1186 = vunpack.c.h.b16 %v298
      %v1187 = vunpack.c.l.b16 %v299
      %v1188 = vunpack.c.h.b16 %v299
      %v1189 = vunpack.c.l.b16 %v300
      %v1190 = vunpack.c.h.b16 %v300
      %v1191 = vunpack.c.l.b16 %v301
      %v1192 = vunpack.c.h.b16 %v301
      %v1193 = vunpack.c.l.b16 %v302
      %v1194 = vunpack.c.l.b16 %v303
      %v1195 = vunpack.c.h.b16 %v303
      %v1196 = vunpack.c.l.b16 %v304
      %v1197 = vunpack.c.h.b16 %v304
      %v1198 = vunpack.c.l.b16 %v305
      %v1199 = vunpack.c.h.b16 %v305
      %v1200 = vunpack.c.l.b16 %v306
      %v1201 = vunpack.c.h.b16 %v306
      %v1202 = vunpack.c.l.b16 %v307
      %v1203 = vunpack.c.l.b16 %v308
      %v1204 = vunpack.c.h.b16 %v308
      %v1205 = vunpack.c.l.b16 %v309
      %v1206 = vunpack.c.h.b16 %v309
      %v1207 = vunpack.c.l.b16 %v310
      %v1208 = vunpack.c.h.b16 %v310
      %v1209 = vunpack.c.l.b16 %v311
      %v1210 = vunpack.c.h.b16 %v311
      %v1211 = vunpack.c.l.b16 %v312
      %v1212 = vunpack.c.l.b16 %v313
      %v1213 = vunpack.c.h.b16 %v313
      %v1214 = vunpack.c.l.b16 %v314
      %v1215 = vunpack.c.h.b16 %v314
      %v1216 = vunpack.c.l.b16 %v315
      %v1217 = vunpack.c.h.b16 %v315
      %v1218 = vunpack.c.l.b16 %v316
      %v1219 = vunpack.c.h.b16 %v316
      %v1220 = vunpack.c.l.b16 %v317
      %v1221 = vunpack.c.l.b16 %v318
      %v1222 = vunpack.c.h.b16 %v318
      %v1223 = vunpack.c.l.b16 %v319
      %v1224 = vunpack.c.h.b16 %v319
      %v1225 = vunpack.c.l.b16 %v320
      %v1226 = vunpack.c.h.b16 %v320
      %v1227 = vunpack.c.l.b16 %v321
      %v1228 = vunpack.c.h.b16 %v321
      %v1229 = vunpack.c.l.b16 %v322
      %v1230 = vunpack.c.l.b16 %v323
      %v1231 = vunpack.c.h.b16 %v323
      %v1232 = vunpack.c.l.b16 %v324
      %v1233 = vunpack.c.h.b16 %v324
      %v1234 = vunpack.c.l.b16 %v325
      %v1235 = vunpack.c.h.b16 %v325
      %v1236 = vunpack.c.l.b16 %v326
      %v1237 = vunpack.c.h.b16 %v326
      %v1238 = vunpack.c.l.b16 %v327
      %v1239 = vunpack.c.l.b16 %v328
      %v1240 = vunpack.c.h.b16 %v328
      %v1241 = vunpack.c.l.b16 %v329
      %v1242 = vunpack.c.h.b16 %v329
      %v1243 = vunpack.c.l.b16 %v330
      %v1244 = vunpack.c.h.b16 %v330
      %v1245 = vunpack.c.l.b16 %v331
      %v1246 = vunpack.c.h.b16 %v331
      %v1247 = vunpack.c.l.b16 %v332
      %v1248 = vunpack.c.l.b16 %v333
      %v1249 = vunpack.c.h.b16 %v333
      %v1250 = vunpack.c.l.b16 %v334
      %v1251 = vunpack.c.h.b16 %v334
      %v1252 = vunpack.c.l.b16 %v335
      %v1253 = vunpack.c.h.b16 %v335
      %v1254 = vunpack.c.l.b16 %v336
      %v1255 = vunpack.c.h.b16 %v336
      %v1256 = vunpack.c.l.b16 %v337
      %v1257 = vunpack.c.l.b16 %v338
      %v1258 = vunpack.c.h.b16 %v338
      %v1259 = vunpack.c.l.b16 %v339
      %v1260 = vunpack.c.h.b16 %v339
      %v1261 = vunpack.c.l.b16 %v340
      %v1262 = vunpack.c.h.b16 %v340
      %v1263 = vunpack.c.l.b16 %v341
      %v1264 = vunpack.c.h.b16 %v341
      %v1265 = vunpack.c.l.b16 %v342
      %v1266 = vunpack.c.l.b16 %v343
      %v1267 = vunpack.c.h.b16 %v343
      %v1268 = vunpack.c.l.b16 %v344
      %v1269 = vunpack.c.h.b16 %v344
      %v1270 = vunpack.c.l.b16 %v345
      %v1271 = vunpack.c.h.b16 %v345
      %v1272 = vunpack.c.l.b16 %v346
      %v1273 = vunpack.c.h.b16 %v346
      %v1274 = vunpack.c.l.b16 %v347
      %v1275 = vunpack.c.l.b16 %v348
      %v1276 = vunpack.c.h.b16 %v348
      %v1277 = vunpack.c.l.b16 %v349
      %v1278 = vunpack.c.h.b16 %v349
      %v1279 = vunpack.c.l.b16 %v350
      %v1280 = vunpack.c.h.b16 %v350
      %v1281 = vunpack.c.l.b16 %v351
      %v1282 = vunpack.c.h.b16 %v351
      %v1283 = vunpack.c.l.b16 %v352
      %v1284 = vunpack.c.l.b16 %v353
      %v1285 = vunpack.c.h.b16 %v353
      %v1286 = vunpack.c.l.b16 %v354
      %v1287 = vunpack.c.h.b16 %v354
      %v1288 = vunpack.c.l.b16 %v355
      %v1289 = vunpack.c.h.b16 %v355
      %v1290 = vunpack.c.l.b16 %v356
      %v1291 = vunpack.c.h.b16 %v356
      %v1292 = vunpack.c.l.b16 %v357
      %v1293 = vunpack.c.l.b16 %v358
      %v1294 = vunpack.c.h.b16 %v358
      %v1295 = vunpack.c.l.b16 %v359
      %v1296 = vunpack.c.h.b16 %v359
      %v1297 = vunpack.c.l.b16 %v360
      %v1298 = vunpack.c.h.b16 %v360
      %v1299 = vunpack.c.l.b16 %v361
      %v1300 = vunpack.c.h.b16 %v361
      %v1301 = vunpack.c.l.b16 %v362
      %v1302 = vunpack.c.l.b16 %v363
      %v1303 = vunpack.c.h.b16 %v363
      %v1304 = vunpack.c.l.b16 %v364
      %v1305 = vunpack.c.h.b16 %v364
      %v1306 = vunpack.c.l.b16 %v365
      %v1307 = vunpack.c.h.b16 %v365
      %v1308 = vunpack.c.l.b16 %v366
      %v1309 = vunpack.c.h.b16 %v366
      %v1310 = vunpack.c.l.b16 %v367
      %v1311 = vunpack.c.l.b16 %v368
      %v1312 = vunpack.c.h.b16 %v368
      %v1313 = vunpack.c.l.b16 %v369
      %v1314 = vunpack.c.h.b16 %v369
      %v1315 = vunpack.c.l.b16 %v370
      %v1316 = vunpack.c.h.b16 %v370
      %v1317 = vunpack.c.l.b16 %v371
      %v1318 = vunpack.c.h.b16 %v371
      %v1319 = vunpack.c.l.b16 %v372
      %v1320 = vunpack.c.l.b16 %v373
      %v1321 = vunpack.c.h.b16 %v373
      %v1322 = vunpack.c.l.b16 %v374
      %v1323 = vunpack.c.h.b16 %v374
      %v1324 = vunpack.c.l.b16 %v375
      %v1325 = vunpack.c.h.b16 %v375
      %v1326 = vunpack.c.l.b16 %v376
      %v1327 = vunpack.c.h.b16 %v376
      %v1328 = vunpack.c.l.b16 %v377
      %v1329 = vunpack.c.l.b16 %v378
      %v1330 = vunpack.c.h.b16 %v378
      %v1331 = vunpack.c.l.b16 %v379
      %v1332 = vunpack.c.h.b16 %v379
      %v1333 = vunpack.c.l.b16 %v380
      %v1334 = vunpack.c.h.b16 %v380
      %v1335 = vunpack.c.l.b16 %v381
      %v1336 = vunpack.c.h.b16 %v381
      %v1337 = vunpack.c.l.b16 %v382
      %v1338 = vunpack.c.l.b16 %v383
      %v1339 = vunpack.c.h.b16 %v383
      %v1340 = vunpack.c.l.b16 %v384
      %v1341 = vunpack.c.h.b16 %v384
      %v1342 = vunpack.c.l.b16 %v385
      %v1343 = vunpack.c.h.b16 %v385
      %v1344 = vunpack.c.l.b16 %v386
      %v1345 = vunpack.c.h.b16 %v386
      %v1346 = vunpack.c.l.b16 %v387
      %v1347 = vunpack.c.l.b16 %v388
      %v1348 = vunpack.c.h.b16 %v388
      %v1349 = vunpack.c.l.b16 %v389
      %v1350 = vunpack.c.h.b16 %v389
      %v1351 = vunpack.c.l.b16 %v390
      %v1352 = vunpack.c.h.b16 %v390
      %v1353 = vunpack.c.l.b16 %v391
      %v1354 = vunpack.c.h.b16 %v391
      %v1355 = vunpack.c.l.b16 %v392
      %v1356 = vunpack.c.l.b16 %v393
      %v1357 = vunpack.c.h.b16 %v393
      %v1358 = vunpack.c.l.b16 %v394
      %v1359 = vunpack.c.h.b16 %v394
      %v1360 = vunpack.c.l.b16 %v395
      %v1361 = vunpack.c.h.b16 %v395
      %v1362 = vunpack.c.l.b16 %v396
      %v1363 = vunpack.c.h.b16 %v396
      %v1364 = vunpack.c.l.b16 %v397
      %v1365 = vunpack.c.l.b16 %v398
      %v1366 = vunpack.c.h.b16 %v398
      %v1367 = vunpack.c.l.b16 %v399
      %v1368 = vunpack.c.h.b16 %v399
      %v1369 = vunpack.c.l.b16 %v400
      %v1370 = vunpack.c.h.b16 %v400
      %v1371 = vunpack.c.l.b16 %v401
      %v1372 = vunpack.c.h.b16 %v401
      %v1373 = vunpack.c.l.b16 %v402
      %v1374 = vunpack.c.l.b16 %v403
      %v1375 = vunpack.c.h.b16 %v403
      %v1376 = vunpack.c.l.b16 %v404
      %v1377 = vunpack.c.h.b16 %v404
      %v1378 = vunpack.c.l.b16 %v405
      %v1379 = vunpack.c.h.b16 %v405
      %v1380 = vunpack.c.l.b16 %v406
      %v1381 = vunpack.c.h.b16 %v406
      %v1382 = vunpack.c.l.b16 %v407
      %v1383 = vunpack.c.l.b16 %v408
      %v1384 = vunpack.c.h.b16 %v408
      %v1385 = vunpack.c.l.b16 %v409
      %v1386 = vunpack.c.h.b16 %v409
      %v1387 = vunpack.c.l.b16 %v410
      %v1388 = vunpack.c.h.b16 %v410
      %v1389 = vunpack.c.l.b16 %v411
      %v1390 = vunpack.c.h.b16 %v411
      %v1391 = vunpack.c.l.b16 %v412
      %v1392 = vunpack.c.l.b16 %v413
      %v1393 = vunpack.c.h.b16 %v413
      %v1394 = vunpack.c.l.b16 %v414
      %v1395 = vunpack.c.h.b16 %v414
      %v1396 = vunpack.c.l.b16 %v415
      %v1397 = vunpack.c.h.b16 %v415
      %v1398 = vunpack.c.l.b16 %v416
      %v1399 = vunpack.c.h.b16 %v416
      %v1400 = vunpack.c.l.b16 %v417
      %v1401 = vunpack.c.l.b16 %v418
      %v1402 = vunpack.c.h.b16 %v418
      %v1403 = vunpack.c.l.b16 %v419
      %v1404 = vunpack.c.h.b16 %v419
      %v1405 = vunpack.c.l.b16 %v420
      %v1406 = vunpack.c.h.b16 %v420
      %v1407 = vunpack.c.l.b16 %v421
      %v1408 = vunpack.c.h.b16 %v421
      %v1409 = vunpack.c.l.b16 %v422
      %v1410 = vunpack.c.l.b16 %v423
      %v1411 = vunpack.c.h.b16 %v423
      %v1412 = vunpack.c.l.b16 %v424
      %v1413 = vunpack.c.h.b16 %v424
      %v1414 = vunpack.c.l.b16 %v425
      %v1415 = vunpack.c.h.b16 %v425
      %v1416 = vunpack.c.l.b16 %v426
      %v1417 = vunpack.c.h.b16 %v426
      %v1418 = vunpack.c.l.b16 %v427
      %v1419 = vunpack.c.l.b16 %v428
      %v1420 = vunpack.c.h.b16 %v428
      %v1421 = vunpack.c.l.b16 %v429
      %v1422 = vunpack.c.h.b16 %v429
      %v1423 = vunpack.c.l.b16 %v430
      %v1424 = vunpack.c.h.b16 %v430
      %v1425 = vunpack.c.l.b16 %v431
      %v1426 = vunpack.c.h.b16 %v431
      %v1427 = vunpack.c.l.b16 %v432
      %v1428 = vunpack.c.l.b16 %v433
      %v1429 = vunpack.c.h.b16 %v433
      %v1430 = vunpack.c.l.b16 %v434
      %v1431 = vunpack.c.h.b16 %v434
      %v1432 = vunpack.c.l.b16 %v435
      %v1433 = vunpack.c.h.b16 %v435
      %v1434 = vunpack.c.l.b16 %v436
      %v1435 = vunpack.c.h.b16 %v436
      %v1436 = vunpack.c.l.b16 %v437
      %v1437 = vunpack.c.l.b16 %v438
      %v1438 = vunpack.c.h.b16 %v438
      %v1439 = vunpack.c.l.b16 %v439
      %v1440 = vunpack.c.h.b16 %v439
      %v1441 = vunpack.c.l.b16 %v440
      %v1442 = vunpack.c.h.b16 %v440
      %v1443 = vunpack.c.l.b16 %v441
      %v1444 = vunpack.c.h.b16 %v441
      %v1445 = vunpack.c.l.b16 %v442
      %v1446 = vunpack.c.l.b16 %v443
      %v1447 = vunpack.c.h.b16 %v443
      %v1448 = vunpack.c.l.b16 %v444
      %v1449 = vunpack.c.h.b16 %v444
      %v1450 = vunpack.c.l.b16 %v445
      %v1451 = vunpack.c.h.b16 %v445
      %v1452 = vunpack.c.l.b16 %v446
      %v1453 = vunpack.c.h.b16 %v446
      %v1454 = vunpack.c.l.b16 %v447
      %v1455 = vunpack.c.l.b16 %v448
      %v1456 = vunpack.c.h.b16 %v448
      %v1457 = vunpack.c.l.b16 %v449
      %v1458 = vunpack.c.h.b16 %v449
      %v1459 = vunpack.c.l.b16 %v450
      %v1460 = vunpack.c.h.b16 %v450
      %v1461 = vunpack.c.l.b16 %v451
      %v1462 = vunpack.c.h.b16 %v451
      %v1463 = vunpack.c.l.b16 %v452
      %v1464 = vunpack.c.l.b16 %v453
      %v1465 = vunpack.c.h.b16 %v453
      %v1466 = vunpack.c.l.b16 %v454
      %v1467 = vunpack.c.h.b16 %v454
      %v1468 = vunpack.c.l.b16 %v455
      %v1469 = vunpack.c.h.b16 %v455
      %v1470 = vunpack.c.l.b16 %v456
      %v1471 = vunpack.c.h.b16 %v456
      %v1472 = vunpack.c.l.b16 %v457
      %v1473 = vunpack.c.l.b16 %v458
      %v1474 = vunpack.c.h.b16 %v458
      %v1475 = vunpack.c.l.b16 %v459
      %v1476 = vunpack.c.h.b16 %v459
      %v1477 = vunpack.c.l.b16 %v460
      %v1478 = vunpack.c.h.b16 %v460
      %v1479 = vunpack.c.l.b16 %v461
      %v1480 = vunpack.c.h.b16 %v461
      %v1481 = vunpack.c.l.b16 %v462
      %v1482 = vunpack.c.l.b16 %v463
      %v1483 = vunpack.c.h.b16 %v463
      %v1484 = vunpack.c.l.b16 %v464
      %v1485 = vunpack.c.h.b16 %v464
      %v1486 = vunpack.c.l.b16 %v465
      %v1487 = vunpack.c.h.b16 %v465
      %v1488 = vunpack.c.l.b16 %v466
      %v1489 = vunpack.c.h.b16 %v466
      %v1490 = vunpack.c.l.b16 %v467
      %v1491 = vunpack.c.l.b16 %v468
      %v1492 = vunpack.c.h.b16 %v468
      %v1493 = vunpack.c.l.b16 %v469
      %v1494 = vunpack.c.h.b16 %v469
      %v1495 = vunpack.c.l.b16 %v470
      %v1496 = vunpack.c.h.b16 %v470
      %v1497 = vunpack.c.l.b16 %v471
      %v1498 = vunpack.c.h.b16 %v471
      %v1499 = vunpack.c.l.b16 %v472
      %v1500 = vunpack.c.l.b16 %v473
      %v1501 = vunpack.c.h.b16 %v473
      %v1502 = vunpack.c.l.b16 %v474
      %v1503 = vunpack.c.h.b16 %v474
      %v1504 = vunpack.c.l.b16 %v475
      %v1505 = vunpack.c.h.b16 %v475
      %v1506 = vunpack.c.l.b16 %v476
      %v1507 = vunpack.c.h.b16 %v476
      %v1508 = vunpack.c.l.b16 %v477
      %v1509 = vunpack.c.l.b16 %v478
      %v1510 = vunpack.c.h.b16 %v478
      %v1511 = vunpack.c.l.b16 %v479
      %v1512 = vunpack.c.h.b16 %v479
      %v1513 = vunpack.c.l.b16 %v480
      %v1514 = vunpack.c.h.b16 %v480
      %v1515 = vunpack.c.l.b16 %v481
      %v1516 = vunpack.c.h.b16 %v481
      %v1517 = vunpack.c.l.b16 %v482
      %v1518 = vunpack.c.l.b16 %v483
      %v1519 = vunpack.c.h.b16 %v483
      %v1520 = vunpack.c.l.b16 %v484
      %v1521 = vunpack.c.h.b16 %v484
      %v1522 = vunpack.c.l.b16 %v485
      %v1523 = vunpack.c.h.b16 %v485
      %v1524 = vunpack.c.l.b16 %v486
      %v1525 = vunpack.c.h.b16 %v486
      %v1526 = vunpack.c.l.b16 %v487
      %v1527 = vunpack.c.l.b16 %v488
      %v1528 = vunpack.c.h.b16 %v488
      %v1529 = vunpack.c.l.b16 %v489
      %v1530 = vunpack.c.h.b16 %v489
      %v1531 = vunpack.c.l.b16 %v490
      %v1532 = vunpack.c.h.b16 %v490
      %v1533 = vunpack.c.l.b16 %v491
      %v1534 = vunpack.c.h.b16 %v491
      %v1535 = vunpack.c.l.b16 %v492
      %v1536 = vunpack.c.l.b16 %v493
      %v1537 = vunpack.c.h.b16 %v493
      %v1538 = vunpack.c.l.b16 %v494
      %v1539 = vunpack.c.h.b16 %v494
      %v1540 = vunpack.c.l.b16 %v495
      %v1541 = vunpack.c.h.b16 %v495
      %v1542 = vunpack.c.l.b16 %v496
      %v1543 = vunpack.c.h.b16 %v496
      %v1544 = vunpack.c.l.b16 %v497
      %v1545 = vpack.c.b16 %v978, %v969
      %v1546 = vpack.c.b16 %v979, %v970
      %v1547 = vpack.c.b16 %v980, %v971
      %v1548 = vpack.c.b16 %v981, %v972
      %v1549 = vpack.c.b16 %v982, %v973
      %v1550 = vpack.c.b16 %v983, %v974
      %v1551 = vpack.c.b16 %v984, %v975
      %v1552 = vpack.c.b16 %v985, %v976
      %v1553 = vpack.c.b16 %v986, %v977
      %v1554 = vpack.c.b16 %v996, %v987
      %v1555 = vpack.c.b16 %v997, %v988
      %v1556 = vpack.c.b16 %v998, %v989
      %v1557 = vpack.c.b16 %v999, %v990
      %v1558 = vpack.c.b16 %v1000, %v991
      %v1559 = vpack.c.b16 %v1001, %v992
      %v1560 = vpack.c.b16 %v1002, %v993
      %v1561 = vpack.c.b16 %v1003, %v994
      %v1562 = vpack.c.b16 %v1004, %v995
      %v1563 = vpack.c.b16 %v1014, %v1005
      %v1564 = vpack.c.b16 %v1015, %v1006
      %v1565 = vpack.c.b16 %v1016, %v1007
      %v1566 = vpack.c.b16 %v1017, %v1008
      %v1567 = vpack.c.b16 %v1018, %v1009
      %v1568 = vpack.c.b16 %v1019, %v1010
      %v1569 = vpack.c.b16 %v1020, %v1011
      %v1570 = vpack.c.b16 %v1021, %v1012
      %v1571 = vpack.c.b16 %v1022, %v1013
      %v1572 = vpack.c.b16 %v1032, %v1023
      %v1573 = vpack.c.b16 %v1033, %v1024
      %v1574 = vpack.c.b16 %v1034, %v1025
      %v1575 = vpack.c.b16 %v1035, %v1026
      %v1576 = vpack.c.b16 %v1036, %v1027
      %v1577 = vpack.c.b16 %v1037, %v1028
      %v1578 = vpack.c.b16 %v1038, %v1029
      %v1579 = vpack.c.b16 %v1039, %v1030
      %v1580 = vpack.c.b16 %v1040, %v1031
      %v1581 = vpack.c.b16 %v1050, %v1041
      %v1582 = vpack.c.b16 %v1051, %v1042
      %v1583 = vpack.c.b16 %v1052, %v1043
      %v1584 = vpack.c.b16 %v1053, %v1044
      %v1585 = vpack.c.b16 %v1054, %v1045
      %v1586 = vpack.c.b16 %v1055, %v1046
      %v1587 = vpack.c.b16 %v1056, %v1047
      %v1588 = vpack.c.b16 %v1057, %v1048
      %v1589 = vpack.c.b16 %v1058, %v1049
      %v1590 = vpack.c.b16 %v1068, %v1059
      %v1591 = vpack.c.b16 %v1069, %v1060
      %v1592 = vpack.c.b16 %v1070, %v1061
      %v1593 = vpack.c.b16 %v1071, %v1062
      %v1594 = vpack.c.b16 %v1072, %v1063
      %v1595 = vpack.c.b16 %v1073, %v1064
      %v1596 = vpack.c.b16 %v1074, %v1065
      %v1597 = vpack.c.b16 %v1075, %v1066
      %v1598 = vpack.c.b16 %v1076, %v1067
      %v1599 = vpack.c.b16 %v1086, %v1077
      %v1600 = vpack.c.b16 %v1087, %v1078
      %v1601 = vpack.c.b16 %v1088, %v1079
      %v1602 = vpack.c.b16 %v1089, %v1080
      %v1603 = vpack.c.b16 %v1090, %v1081
      %v1604 = vpack.c.b16 %v1091, %v1082
      %v1605 = vpack.c.b16 %v1092, %v1083
      %v1606 = vpack.c.b16 %v1093, %v1084
      %v1607 = vpack.c.b16 %v1094, %v1085
      %v1608 = vpack.c.b16 %v1104, %v1095
      %v1609 = vpack.c.b16 %v1105, %v1096
      %v1610 = vpack.c.b16 %v1106, %v1097
      %v1611 = vpack.c.b16 %v1107, %v1098
      %v1612 = vpack.c.b16 %v1108, %v1099
      %v1613 = vpack.c.b16 %v1109, %v1100
      %v1614 = vpack.c.b16 %v1110, %v1101
      %v1615 = vpack.c.b16 %v1111, %v1102
      %v1616 = vpack.c.b16 %v1112, %v1103
      %v1617 = vpack.c.b16 %v1122, %v1113
      %v1618 = vpack.c.b16 %v1123, %v1114
      %v1619 = vpack.c.b16 %v1124, %v1115
      %v1620 = vpack.c.b16 %v1125, %v1116
      %v1621 = vpack.c.b16 %v1126, %v1117
      %v1622 = vpack.c.b16 %v1127, %v1118
      %v1623 = vpack.c.b16 %v1128, %v1119
      %v1624 = vpack.c.b16 %v1129, %v1120
      %v1625 = vpack.c.b16 %v1130, %v1121
      %v1626 = vpack.c.b16 %v1140, %v1131
      %v1627 = vpack.c.b16 %v1141, %v1132
      %v1628 = vpack.c.b16 %v1142, %v1133
      %v1629 = vpack.c.b16 %v1143, %v1134
      %v1630 = vpack.c.b16 %v1144, %v1135
      %v1631 = vpack.c.b16 %v1145, %v1136
      %v1632 = vpack.c.b16 %v1146, %v1137
      %v1633 = vpack.c.b16 %v1147, %v1138
      %v1634 = vpack.c.b16 %v1148, %v1139
      %v1635 = vpack.c.b16 %v1158, %v1149
      %v1636 = vpack.c.b16 %v1159, %v1150
      %v1637 = vpack.c.b16 %v1160, %v1151
      %v1638 = vpack.c.b16 %v1161, %v1152
      %v1639 = vpack.c.b16 %v1162, %v1153
      %v1640 = vpack.c.b16 %v1163, %v1154
      %v1641 = vpack.c.b16 %v1164, %v1155
      %v1642 = vpack.c.b16 %v1165, %v1156
      %v1643 = vpack.c.b16 %v1166, %v1157
      %v1644 = vpack.c.b16 %v1176, %v1167
      %v1645 = vpack.c.b16 %v1177, %v1168
      %v1646 = vpack.c.b16 %v1178, %v1169
      %v1647 = vpack.c.b16 %v1179, %v1170
      %v1648 = vpack.c.b16 %v1180, %v1171
      %v1649 = vpack.c.b16 %v1181, %v1172
      %v1650 = vpack.c.b16 %v1182, %v1173
      %v1651 = vpack.c.b16 %v1183, %v1174
      %v1652 = vpack.c.b16 %v1184, %v1175
      %v1653 = vpack.c.b16 %v1194, %v1185
      %v1654 = vpack.c.b16 %v1195, %v1186
      %v1655 = vpack.c.b16 %v1196, %v1187
      %v1656 = vpack.c.b16 %v1197, %v1188
      %v1657 = vpack.c.b16 %v1198, %v1189
      %v1658 = vpack.c.b16 %v1199, %v1190
      %v1659 = vpack.c.b16 %v1200, %v1191
      %v1660 = vpack.c.b16 %v1201, %v1192
      %v1661 = vpack.c.b16 %v1202, %v1193
      %v1662 = vpack.c.b16 %v1212, %v1203
      %v1663 = vpack.c.b16 %v1213, %v1204
      %v1664 = vpack.c.b16 %v1214, %v1205
      %v1665 = vpack.c.b16 %v1215, %v1206
      %v1666 = vpack.c.b16 %v1216, %v1207
      %v1667 = vpack.c.b16 %v1217, %v1208
      %v1668 = vpack.c.b16 %v1218, %v1209
      %v1669 = vpack.c.b16 %v1219, %v1210
      %v1670 = vpack.c.b16 %v1220, %v1211
      %v1671 = vpack.c.b16 %v1230, %v1221
      %v1672 = vpack.c.b16 %v1231, %v1222
      %v1673 = vpack.c.b16 %v1232, %v1223
      %v1674 = vpack.c.b16 %v1233, %v1224
      %v1675 = vpack.c.b16 %v1234, %v1225
      %v1676 = vpack.c.b16 %v1235, %v1226
      %v1677 = vpack.c.b16 %v1236, %v1227
      %v1678 = vpack.c.b16 %v1237, %v1228
      %v1679 = vpack.c.b16 %v1238, %v1229
      %v1680 = vpack.c.b16 %v1248, %v1239
      %v1681 = vpack.c.b16 %v1249, %v1240
      %v1682 = vpack.c.b16 %v1250, %v1241
      %v1683 = vpack.c.b16 %v1251, %v1242
      %v1684 = vpack.c.b16 %v1252, %v1243
      %v1685 = vpack.c.b16 %v1253, %v1244
      %v1686 = vpack.c.b16 %v1254, %v1245
      %v1687 = vpack.c.b16 %v1255, %v1246
      %v1688 = vpack.c.b16 %v1256, %v1247
      %v1689 = vpack.c.b16 %v1266, %v1257
      %v1690 = vpack.c.b16 %v1267, %v1258
      %v1691 = vpack.c.b16 %v1268, %v1259
      %v1692 = vpack.c.b16 %v1269, %v1260
      %v1693 = vpack.c.b16 %v1270, %v1261
      %v1694 = vpack.c.b16 %v1271, %v1262
      %v1695 = vpack.c.b16 %v1272, %v1263
      %v1696 = vpack.c.b16 %v1273, %v1264
      %v1697 = vpack.c.b16 %v1274, %v1265
      %v1698 = vpack.c.b16 %v1284, %v1275
      %v1699 = vpack.c.b16 %v1285, %v1276
      %v1700 = vpack.c.b16 %v1286, %v1277
      %v1701 = vpack.c.b16 %v1287, %v1278
      %v1702 = vpack.c.b16 %v1288, %v1279
      %v1703 = vpack.c.b16 %v1289, %v1280
      %v1704 = vpack.c.b16 %v1290, %v1281
      %v1705 = vpack.c.b16 %v1291, %v1282
      %v1706 = vpack.c.b16 %v1292, %v1283
      %v1707 = vpack.c.b16 %v1302, %v1293
      %v1708 = vpack.c.b16 %v1303, %v1294
      %v1709 = vpack.c.b16 %v1304, %v1295
      %v1710 = vpack.c.b16 %v1305, %v1296
      %v1711 = vpack.c.b16 %v1306, %v1297
      %v1712 = vpack.c.b16 %v1307, %v1298
      %v1713 = vpack.c.b16 %v1308, %v1299
      %v1714 = vpack.c.b16 %v1309, %v1300
      %v1715 = vpack.c.b16 %v1310, %v1301
      %v1716 = vpack.c.b16 %v1320, %v1311
      %v1717 = vpack.c.b16 %v1321, %v1312
      %v1718 = vpack.c.b16 %v1322, %v1313
      %v1719 = vpack.c.b16 %v1323, %v1314
      %v1720 = vpack.c.b16 %v1324, %v1315
      %v1721 = vpack.c.b16 %v1325, %v1316
      %v1722 = vpack.c.b16 %v1326, %v1317
      %v1723 = vpack.c.b16 %v1327, %v1318
      %v1724 = vpack.c.b16 %v1328, %v1319
      %v1725 = vpack.c.b16 %v1338, %v1329
      %v1726 = vpack.c.b16 %v1339, %v1330
      %v1727 = vpack.c.b16 %v1340, %v1331
      %v1728 = vpack.c.b16 %v1341, %v1332
      %v1729 = vpack.c.b16 %v1342, %v1333
      %v1730 = vpack.c.b16 %v1343, %v1334
      %v1731 = vpack.c.b16 %v1344, %v1335
      %v1732 = vpack.c.b16 %v1345, %v1336
      %v1733 = vpack.c.b16 %v1346, %v1337
      %v1734 = vpack.c.b16 %v1356, %v1347
      %v1735 = vpack.c.b16 %v1357, %v1348
      %v1736 = vpack.c.b16 %v1358, %v1349
      %v1737 = vpack.c.b16 %v1359, %v1350
      %v1738 = vpack.c.b16 %v1360, %v1351
      %v1739 = vpack.c.b16 %v1361, %v1352
      %v1740 = vpack.c.b16 %v1362, %v1353
      %v1741 = vpack.c.b16 %v1363, %v1354
      %v1742 = vpack.c.b16 %v1364, %v1355
      %v1743 = vpack.c.b16 %v1374, %v1365
      %v1744 = vpack.c.b16 %v1375, %v1366
      %v1745 = vpack.c.b16 %v1376, %v1367
      %v1746 = vpack.c.b16 %v1377, %v1368
      %v1747 = vpack.c.b16 %v1378, %v1369
      %v1748 = vpack.c.b16 %v1379, %v1370
      %v1749 = vpack.c.b16 %v1380, %v1371
      %v1750 = vpack.c.b16 %v1381, %v1372
      %v1751 = vpack.c.b16 %v1382, %v1373
      %v1752 = vpack.c.b16 %v1392, %v1383
      %v1753 = vpack.c.b16 %v1393, %v1384
      %v1754 = vpack.c.b16 %v1394, %v1385
      %v1755 = vpack.c.b16 %v1395, %v1386
      %v1756 = vpack.c.b16 %v1396, %v1387
      %v1757 = vpack.c.b16 %v1397, %v1388
      %v1758 = vpack.c.b16 %v1398, %v1389
      %v1759 = vpack.c.b16 %v1399, %v1390
      %v1760 = vpack.c.b16 %v1400, %v1391
      %v1761 = vpack.c.b16 %v1410, %v1401
      %v1762 = vpack.c.b16 %v1411, %v1402
      %v1763 = vpack.c.b16 %v1412, %v1403
      %v1764 = vpack.c.b16 %v1413, %v1404
      %v1765 = vpack.c.b16 %v1414, %v1405
      %v1766 = vpack.c.b16 %v1415, %v1406
      %v1767 = vpack.c.b16 %v1416, %v1407
      %v1768 = vpack.c.b16 %v1417, %v1408
      %v1769 = vpack.c.b16 %v1418, %v1409
      %v1770 = vpack.c.b16 %v1428, %v1419
      %v1771 = vpack.c.b16 %v1429, %v1420
      %v1772 = vpack.c.b16 %v1430, %v1421
      %v1773 = vpack.c.b16 %v1431, %v1422
      %v1774 = vpack.c.b16 %v1432, %v1423
      %v1775 = vpack.c.b16 %v1433, %v1424
      %v1776 = vpack.c.b16 %v1434, %v1425
      %v1777 = vpack.c.b16 %v1435, %v1426
      %v1778 = vpack.c.b16 %v1436, %v1427
      %v1779 = vpack.c.b16 %v1446, %v1437
      %v1780 = vpack.c.b16 %v1447, %v1438
      %v1781 = vpack.c.b16 %v1448, %v1439
      %v1782 = vpack.c.b16 %v1449, %v1440
      %v1783 = vpack.c.b16 %v1450, %v1441
      %v1784 = vpack.c.b16 %v1451, %v1442
      %v1785 = vpack.c.b16 %v1452, %v1443
      %v1786 = vpack.c.b16 %v1453, %v1444
      %v1787 = vpack.c.b16 %v1454, %v1445
      %v1788 = vpack.c.b16 %v1464, %v1455
      %v1789 = vpack.c.b16 %v1465, %v1456
      %v1790 = vpack.c.b16 %v1466, %v1457
      %v1791 = vpack.c.b16 %v1467, %v1458
      %v1792 = vpack.c.b16 %v1468, %v1459
      %v1793 = vpack.c.b16 %v1469, %v1460
      %v1794 = vpack.c.b16 %v1470, %v1461
      %v1795 = vpack.c.b16 %v1471, %v1462
      %v1796 = vpack.c.b16 %v1472, %v1463
      %v1797 = vpack.c.b16 %v1482, %v1473
      %v1798 = vpack.c.b16 %v1483, %v1474
      %v1799 = vpack.c.b16 %v1484, %v1475
      %v1800 = vpack.c.b16 %v1485, %v1476
      %v1801 = vpack.c.b16 %v1486, %v1477
      %v1802 = vpack.c.b16 %v1487, %v1478
      %v1803 = vpack.c.b16 %v1488, %v1479
      %v1804 = vpack.c.b16 %v1489, %v1480
      %v1805 = vpack.c.b16 %v1490, %v1481
      %v1806 = vpack.c.b16 %v1500, %v1491
      %v1807 = vpack.c.b16 %v1501, %v1492
      %v1808 = vpack.c.b16 %v1502, %v1493
      %v1809 = vpack.c.b16 %v1503, %v1494
      %v1810 = vpack.c.b16 %v1504, %v1495
      %v1811 = vpack.c.b16 %v1505, %v1496
      %v1812 = vpack.c.b16 %v1506, %v1497
      %v1813 = vpack.c.b16 %v1507, %v1498
      %v1814 = vpack.c.b16 %v1508, %v1499
      %v1815 = vpack.c.b16 %v1518, %v1509
      %v1816 = vpack.c.b16 %v1519, %v1510
      %v1817 = vpack.c.b16 %v1520, %v1511
      %v1818 = vpack.c.b16 %v1521, %v1512
      %v1819 = vpack.c.b16 %v1522, %v1513
      %v1820 = vpack.c.b16 %v1523, %v1514
      %v1821 = vpack.c.b16 %v1524, %v1515
      %v1822 = vpack.c.b16 %v1525, %v1516
      %v1823 = vpack.c.b16 %v1526, %v1517
      %v1824 = vpack.c.b16 %v1536, %v1527
      %v1825 = vpack.c.b16 %v1537, %v1528
      %v1826 = vpack.c.b16 %v1538, %v1529
      %v1827 = vpack.c.b16 %v1539, %v1530
      %v1828 = vpack.c.b16 %v1540, %v1531
      %v1829 = vpack.c.b16 %v1541, %v1532
      %v1830 = vpack.c.b16 %v1542, %v1533
      %v1831 = vpack.c.b16 %v1543, %v1534
      %v1832 = vpack.c.b16 %v1544, %v1535
      %v2265 = vunpack.c.l.b16 %v498
      %v2266 = vunpack.c.l.b16 %v499
      %v2267 = vunpack.c.l.b16 %v500
      %v2268 = vunpack.c.l.b16 %v501
      %v2269 = vunpack.c.l.b16 %v502
      %v2270 = vunpack.c.l.b16 %v503
      %v2271 = vunpack.c.l.b16 %v504
      %v2272 = vunpack.c.l.b16 %v505
      %v2273 = vunpack.c.l.b16 %v506
      %v2274 = vunpack.c.l.b16 %v507
      %v2275 = vunpack.c.l.b16 %v508
      %v2276 = vunpack.c.l.b16 %v509
      %v2277 = vunpack.c.l.b16 %v510
      %v2278 = vunpack.c.l.b16 %v511
      %v2279 = vunpack.c.l.b16 %v512
      %v2280 = vunpack.c.l.b16 %v513
      %v2281 = vunpack.c.l.b16 %v514
      %v2282 = vunpack.c.l.b16 %v515
      %v2283 = vunpack.c.l.b16 %v516
      %v2284 = vunpack.c.l.b16 %v517
      %v2285 = vunpack.c.l.b16 %v518
      %v2286 = vunpack.c.l.b16 %v519
      %v2287 = vunpack.c.l.b16 %v520
      %v2288 = vunpack.c.l.b16 %v521
      %v2289 = vunpack.c.l.b16 %v522
      %v2290 = vunpack.c.l.b16 %v523
      %v2291 = vunpack.c.l.b16 %v524
      %v2292 = vunpack.c.l.b16 %v525
      %v2293 = vunpack.c.l.b16 %v526
      %v2294 = vunpack.c.l.b16 %v527
      %v2295 = vunpack.c.l.b16 %v528
      %v2296 = vunpack.c.l.b16 %v529
      %v2297 = vunpack.c.l.b16 %v530
      %v2298 = vunpack.c.l.b16 %v531
      %v2299 = vunpack.c.l.b16 %v532
      %v2300 = vunpack.c.l.b16 %v533
      %v2301 = vunpack.c.l.b16 %v534
      %v2302 = vunpack.c.l.b16 %v535
      %v2303 = vunpack.c.l.b16 %v536
      %v2304 = vunpack.c.l.b16 %v537
      %v2305 = vunpack.c.l.b16 %v538
      %v2306 = vunpack.c.l.b16 %v539
      %v2307 = vunpack.c.l.b16 %v540
      %v2308 = vunpack.c.l.b16 %v541
      %v2309 = vunpack.c.l.b16 %v542
      %v2310 = vunpack.c.l.b16 %v543
      %v2311 = vunpack.c.l.b16 %v544
      %v2312 = vunpack.c.l.b16 %v545
      %v2313 = vunpack.c.l.b16 %v546
      %v2314 = vunpack.c.l.b16 %v547
      %v2315 = vunpack.c.l.b16 %v548
      %v2316 = vunpack.c.l.b16 %v549
      %v2317 = vunpack.c.l.b16 %v550
      %v2318 = vunpack.c.l.b16 %v551
      %v2319 = vunpack.c.l.b16 %v552
      %v2320 = vunpack.c.l.b16 %v553
      %v2321 = vunpack.c.l.b16 %v554
      %v2322 = vunpack.c.l.b16 %v555
      %v2323 = vunpack.c.l.b16 %v556
      %v2324 = vunpack.c.l.b16 %v557
      %v2325 = vunpack.c.l.b16 %v558
      %v2326 = vunpack.c.l.b16 %v559
      %v2327 = vunpack.c.l.b16 %v560
      %v2328 = vunpack.c.l.b16 %v561
      %v2329 = vunpack.c.l.b16 %v562
      %v2330 = vunpack.c.l.b16 %v563
      %v2331 = vunpack.c.l.b16 %v564
      %v2332 = vunpack.c.l.b16 %v565
      %v2333 = vunpack.c.l.b16 %v566
      %v2334 = vunpack.c.l.b16 %v567
      %v2335 = vunpack.c.l.b16 %v568
      %v2336 = vunpack.c.l.b16 %v569
      %v2337 = vunpack.c.l.b16 %v570
      %v2338 = vunpack.c.l.b16 %v571
      %v2339 = vunpack.c.l.b16 %v572
      %v2340 = vunpack.c.l.b16 %v573
      %v2341 = vunpack.c.l.b16 %v574
      %v2342 = vunpack.c.l.b16 %v575
      %v2343 = vunpack.c.l.b16 %v576
      %v2344 = vunpack.c.l.b16 %v577
      %v2345 = vunpack.c.l.b16 %v578
      %v2346 = vunpack.c.l.b16 %v579
      %v2347 = vunpack.c.l.b16 %v580
      %v2348 = vunpack.c.l.b16 %v581
      %v2349 = vunpack.c.l.b16 %v582
      %v2350 = vunpack.c.l.b16 %v583
      %v2351 = vunpack.c.l.b16 %v584
      %v2352 = vunpack.c.l.b16 %v585
      %v2353 = vunpack.c.l.b16 %v586
      %v2354 = vunpack.c.l.b16 %v587
      %v2355 = vunpack.c.l.b16 %v588
      %v2356 = vunpack.c.l.b16 %v589
      %v2357 = vunpack.c.l.b16 %v590
      %v2358 = vunpack.c.l.b16 %v591
      %v2359 = vunpack.c.l.b16 %v592
      %v2360 = vunpack.c.l.b16 %v593
      %v2361 = vunpack.c.l.b16 %v594
      %v2362 = vunpack.c.l.b16 %v595
      %v2363 = vunpack.c.l.b16 %v596
      %v2364 = vunpack.c.l.b16 %v597
      %v2365 = vunpack.c.l.b16 %v598
      %v2366 = vunpack.c.l.b16 %v599
      %v2367 = vunpack.c.l.b16 %v600
      %v2368 = vunpack.c.l.b16 %v601
      %v2369 = vunpack.c.l.b16 %v602
      %v2370 = vunpack.c.l.b16 %v603
      %v2371 = vunpack.c.l.b16 %v604
      %v2372 = vunpack.c.l.b16 %v605
      %v2373 = vunpack.c.l.b16 %v606
      %v2374 = vunpack.c.l.b16 %v607
      %v2375 = vunpack.c.l.b16 %v608
      %v2376 = vunpack.c.l.b16 %v609
      %v2377 = vunpack.c.l.b16 %v610
      %v2378 = vunpack.c.l.b16 %v611
      %v2379 = vunpack.c.l.b16 %v612
      %v2380 = vunpack.c.l.b16 %v613
      %v2381 = vunpack.c.l.b16 %v614
      %v2382 = vunpack.c.l.b16 %v615
      %v2383 = vunpack.c.l.b16 %v616
      %v2384 = vunpack.c.l.b16 %v617
      %v2385 = vunpack.c.l.b16 %v618
      %v2386 = vunpack.c.l.b16 %v619
      %v2387 = vunpack.c.l.b16 %v620
      %v2388 = vunpack.c.l.b16 %v621
      %v2389 = vunpack.c.l.b16 %v622
      %v2390 = vunpack.c.l.b16 %v623
      %v2391 = vunpack.c.l.b16 %v624
      %v2392 = vunpack.c.l.b16 %v625
      %v2393 = vunpack.c.l.b16 %v626
      %v2394 = vunpack.c.l.b16 %v627
      %v2395 = vunpack.c.l.b16 %v628
      %v2396 = vunpack.c.l.b16 %v629
      %v2397 = vunpack.c.l.b16 %v630
      %v2398 = vunpack.c.l.b16 %v631
      %v2399 = vunpack.c.l.b16 %v632
      %v2400 = vunpack.c.l.b16 %v633
      %v2401 = vunpack.c.l.b16 %v634
      %v2402 = vunpack.c.l.b16 %v635
      %v2403 = vunpack.c.l.b16 %v636
      %v2404 = vunpack.c.l.b16 %v637
      %v2405 = vunpack.c.l.b16 %v638
      %v2406 = vunpack.c.l.b16 %v639
      %v2407 = vunpack.c.l.b16 %v640
      %v2408 = vunpack.c.l.b16 %v641
      %v2409 = vpack.c.b16 %v2266, %v2265
      %v2410 = vpack.c.b16 %v2268, %v2267
      %v2411 = vpack.c.b16 %v2270, %v2269
      %v2412 = vpack.c.b16 %v2272, %v2271
      %v2413 = vpack.c.b16 %v2274, %v2273
      %v2414 = vpack.c.b16 %v2276, %v2275
      %v2415 = vpack.c.b16 %v2278, %v2277
      %v2416 = vpack.c.b16 %v2280, %v2279
      %v2417 = vpack.c.b16 %v2282, %v2281
      %v2418 = vpack.c.b16 %v2284, %v2283
      %v2419 = vpack.c.b16 %v2286, %v2285
      %v2420 = vpack.c.b16 %v2288, %v2287
      %v2421 = vpack.c.b16 %v2290, %v2289
      %v2422 = vpack.c.b16 %v2292, %v2291
      %v2423 = vpack.c.b16 %v2294, %v2293
      %v2424 = vpack.c.b16 %v2296, %v2295
      %v2425 = vpack.c.b16 %v2298, %v2297
      %v2426 = vpack.c.b16 %v2300, %v2299
      %v2427 = vpack.c.b16 %v2302, %v2301
      %v2428 = vpack.c.b16 %v2304, %v2303
      %v2429 = vpack.c.b16 %v2306, %v2305
      %v2430 = vpack.c.b16 %v2308, %v2307
      %v2431 = vpack.c.b16 %v2310, %v2309
      %v2432 = vpack.c.b16 %v2312, %v2311
      %v2433 = vpack.c.b16 %v2314, %v2313
      %v2434 = vpack.c.b16 %v2316, %v2315
      %v2435 = vpack.c.b16 %v2318, %v2317
      %v2436 = vpack.c.b16 %v2320, %v2319
      %v2437 = vpack.c.b16 %v2322, %v2321
      %v2438 = vpack.c.b16 %v2324, %v2323
      %v2439 = vpack.c.b16 %v2326, %v2325
      %v2440 = vpack.c.b16 %v2328, %v2327
      %v2441 = vpack.c.b16 %v2330, %v2329
      %v2442 = vpack.c.b16 %v2332, %v2331
      %v2443 = vpack.c.b16 %v2334, %v2333
      %v2444 = vpack.c.b16 %v2336, %v2335
      %v2445 = vpack.c.b16 %v2338, %v2337
      %v2446 = vpack.c.b16 %v2340, %v2339
      %v2447 = vpack.c.b16 %v2342, %v2341
      %v2448 = vpack.c.b16 %v2344, %v2343
      %v2449 = vpack.c.b16 %v2346, %v2345
      %v2450 = vpack.c.b16 %v2348, %v2347
      %v2451 = vpack.c.b16 %v2350, %v2349
      %v2452 = vpack.c.b16 %v2352, %v2351
      %v2453 = vpack.c.b16 %v2354, %v2353
      %v2454 = vpack.c.b16 %v2356, %v2355
      %v2455 = vpack.c.b16 %v2358, %v2357
      %v2456 = vpack.c.b16 %v2360, %v2359
      %v2457 = vpack.c.b16 %v2362, %v2361
      %v2458 = vpack.c.b16 %v2364, %v2363
      %v2459 = vpack.c.b16 %v2366, %v2365
      %v2460 = vpack.c.b16 %v2368, %v2367
      %v2461 = vpack.c.b16 %v2370, %v2369
      %v2462 = vpack.c.b16 %v2372, %v2371
      %v2463 = vpack.c.b16 %v2374, %v2373
      %v2464 = vpack.c.b16 %v2376, %v2375
      %v2465 = vpack.c.b16 %v2378, %v2377
      %v2466 = vpack.c.b16 %v2380, %v2379
      %v2467 = vpack.c.b16 %v2382, %v2381
      %v2468 = vpack.c.b16 %v2384, %v2383
      %v2469 = vpack.c.b16 %v2386, %v2385
      %v2470 = vpack.c.b16 %v2388, %v2387
      %v2471 = vpack.c.b16 %v2390, %v2389
      %v2472 = vpack.c.b16 %v2392, %v2391
      %v2473 = vpack.c.b16 %v2394, %v2393
      %v2474 = vpack.c.b16 %v2396, %v2395
      %v2475 = vpack.c.b16 %v2398, %v2397
      %v2476 = vpack.c.b16 %v2400, %v2399
      %v2477 = vpack.c.b16 %v2402, %v2401
      %v2478 = vpack.c.b16 %v2404, %v2403
      %v2479 = vpack.c.b16 %v2406, %v2405
      %v2480 = vpack.c.b16 %v2408, %v2407
      %2553 = vmatprep.subr.bf16.mxu0 0
      %2554 = vmatpush1.bf16.msra.mxu0 %v2416
      %2555 = vmatprep.subr.bf16.mxu0 0
      %2556 = vmatpush1.bf16.msra.mxu0 %v2415
      %2557 = vmatprep.subr.bf16.mxu0 0
      %2558 = vmatpush1.bf16.msra.mxu0 %v2414
      %2559 = vmatprep.subr.bf16.mxu0 0
      %2560 = vmatpush1.bf16.msra.mxu0 %v2413
      %2561 = vmatprep.subr.bf16.mxu0 0
      %2562 = vmatpush1.bf16.msra.mxu0 %v2412
      %2563 = vmatprep.subr.bf16.mxu0 0
      %2564 = vmatpush1.bf16.msra.mxu0 %v2411
      %2565 = vmatprep.subr.bf16.mxu0 0
      %2566 = vmatpush1.bf16.msra.mxu0 %v2410
      %2567 = vmatprep.subr.bf16.mxu0 0
      %2568 = vmatpush1.bf16.msra.mxu0 %v2409
      %2569 = vmatprep.subr.bf16.mxu0 0
      %2570 = vmatpush2.bf16.msra.mxu0 %v2424
      %2571 = vmatprep.subr.bf16.mxu0 0
      %2572 = vmatpush2.bf16.msra.mxu0 %v2423
      %2573 = vmatprep.subr.bf16.mxu0 0
      %2574 = vmatpush2.bf16.msra.mxu0 %v2422
      %2575 = vmatprep.subr.bf16.mxu0 0
      %2576 = vmatpush2.bf16.msra.mxu0 %v2421
      %2577 = vmatprep.subr.bf16.mxu0 0
      %2578 = vmatpush2.bf16.msra.mxu0 %v2420
      %2579 = vmatprep.subr.bf16.mxu0 0
      %2580 = vmatpush2.bf16.msra.mxu0 %v2419
      %2581 = vmatprep.subr.bf16.mxu0 0
      %2582 = vmatpush2.bf16.msra.mxu0 %v2418
      %2583 = vmatprep.subr.bf16.mxu0 0
      %2584 = vmatpush2.bf16.msra.mxu0 %v2417
      %2585 = vmatprep.mubr.bf16.mxu0 %v1546
      %2586 = vmatmul.mubr.bf16.gmra.mxu0 %v1545
      %v2587 = vpop.f32.mrf.mxu0
      %v2588 = vadd.f32 %v647, %v2587
      %v2589 = vpop.f32.mrf.mxu0
      %v2590 = vpop.f32.mrf.mxu0
      %v2591 = vadd.f32 %v647, %v2590
      %v2592 = vpop.f32.mrf.mxu0
      %2593 = vmatprep.mubr.bf16.mxu0 %v1555
      %2594 = vmatmul.mubr.bf16.gmra.mxu0 %v1554
      %v2595 = vpop.f32.mrf.mxu0
      %v2596 = vadd.f32 %v647, %v2595
      %v2597 = vpop.f32.mrf.mxu0
      %v2598 = vpop.f32.mrf.mxu0
      %v2599 = vadd.f32 %v647, %v2598
      %v2600 = vpop.f32.mrf.mxu0
      %2601 = vmatprep.mubr.bf16.mxu0 %v1564
      %2602 = vmatmul.mubr.bf16.gmra.mxu0 %v1563
      %v2603 = vpop.f32.mrf.mxu0
      %v2604 = vadd.f32 %v647, %v2603
      %v2605 = vpop.f32.mrf.mxu0
      %v2606 = vpop.f32.mrf.mxu0
      %v2607 = vadd.f32 %v647, %v2606
      %v2608 = vpop.f32.mrf.mxu0
      %2609 = vmatprep.mubr.bf16.mxu0 %v1573
      %2610 = vmatmul.mubr.bf16.gmra.mxu0 %v1572
      %v2611 = vpop.f32.mrf.mxu0
      %v2612 = vadd.f32 %v647, %v2611
      %v2613 = vpop.f32.mrf.mxu0
      %v2614 = vpop.f32.mrf.mxu0
      %v2615 = vadd.f32 %v647, %v2614
      %v2616 = vpop.f32.mrf.mxu0
      %2617 = vmatprep.mubr.bf16.mxu0 %v1582
      %2618 = vmatmul.mubr.bf16.gmra.mxu0 %v1581
      %v2619 = vpop.f32.mrf.mxu0
      %v2620 = vadd.f32 %v647, %v2619
      %v2621 = vpop.f32.mrf.mxu0
      %v2622 = vpop.f32.mrf.mxu0
      %v2623 = vadd.f32 %v647, %v2622
      %v2624 = vpop.f32.mrf.mxu0
      %2625 = vmatprep.mubr.bf16.mxu0 %v1591
      %2626 = vmatmul.mubr.bf16.gmra.mxu0 %v1590
      %v2627 = vpop.f32.mrf.mxu0
      %v2628 = vadd.f32 %v647, %v2627
      %v2629 = vpop.f32.mrf.mxu0
      %v2630 = vpop.f32.mrf.mxu0
      %v2631 = vadd.f32 %v647, %v2630
      %v2632 = vpop.f32.mrf.mxu0
      %2633 = vmatprep.mubr.bf16.mxu0 %v1600
      %2634 = vmatmul.mubr.bf16.gmra.mxu0 %v1599
      %v2635 = vpop.f32.mrf.mxu0
      %v2636 = vadd.f32 %v647, %v2635
      %v2637 = vpop.f32.mrf.mxu0
      %v2638 = vpop.f32.mrf.mxu0
      %v2639 = vadd.f32 %v647, %v2638
      %v2640 = vpop.f32.mrf.mxu0
      %2641 = vmatprep.mubr.bf16.mxu0 %v1609
      %2642 = vmatmul.mubr.bf16.gmra.mxu0 %v1608
      %v2643 = vpop.f32.mrf.mxu0
      %v2644 = vadd.f32 %v647, %v2643
      %v2645 = vpop.f32.mrf.mxu0
      %v2646 = vpop.f32.mrf.mxu0
      %v2647 = vadd.f32 %v647, %v2646
      %v2648 = vpop.f32.mrf.mxu0
      %2649 = vmatprep.mubr.bf16.mxu0 %v1618
      %2650 = vmatmul.mubr.bf16.gmra.mxu0 %v1617
      %v2651 = vpop.f32.mrf.mxu0
      %v2652 = vadd.f32 %v647, %v2651
      %v2653 = vpop.f32.mrf.mxu0
      %v2654 = vpop.f32.mrf.mxu0
      %v2655 = vadd.f32 %v647, %v2654
      %v2656 = vpop.f32.mrf.mxu0
      %2657 = vmatprep.mubr.bf16.mxu0 %v1627
      %2658 = vmatmul.mubr.bf16.gmra.mxu0 %v1626
      %v2659 = vpop.f32.mrf.mxu0
      %v2660 = vadd.f32 %v647, %v2659
      %v2661 = vpop.f32.mrf.mxu0
      %v2662 = vpop.f32.mrf.mxu0
      %v2663 = vadd.f32 %v647, %v2662
      %v2664 = vpop.f32.mrf.mxu0
      %2665 = vmatprep.mubr.bf16.mxu0 %v1636
      %2666 = vmatmul.mubr.bf16.gmra.mxu0 %v1635
      %v2667 = vpop.f32.mrf.mxu0
      %v2668 = vadd.f32 %v647, %v2667
      %v2669 = vpop.f32.mrf.mxu0
      %v2670 = vpop.f32.mrf.mxu0
      %v2671 = vadd.f32 %v647, %v2670
      %v2672 = vpop.f32.mrf.mxu0
      %2673 = vmatprep.mubr.bf16.mxu0 %v1645
      %2674 = vmatmul.mubr.bf16.gmra.mxu0 %v1644
      %v2675 = vpop.f32.mrf.mxu0
      %v2676 = vadd.f32 %v647, %v2675
      %v2677 = vpop.f32.mrf.mxu0
      %v2678 = vpop.f32.mrf.mxu0
      %v2679 = vadd.f32 %v647, %v2678
      %v2680 = vpop.f32.mrf.mxu0
      %2681 = vmatprep.mubr.bf16.mxu0 %v1654
      %2682 = vmatmul.mubr.bf16.gmra.mxu0 %v1653
      %v2683 = vpop.f32.mrf.mxu0
      %v2684 = vadd.f32 %v647, %v2683
      %v2685 = vpop.f32.mrf.mxu0
      %v2686 = vpop.f32.mrf.mxu0
      %v2687 = vadd.f32 %v647, %v2686
      %v2688 = vpop.f32.mrf.mxu0
      %2689 = vmatprep.mubr.bf16.mxu0 %v1663
      %2690 = vmatmul.mubr.bf16.gmra.mxu0 %v1662
      %v2691 = vpop.f32.mrf.mxu0
      %v2692 = vadd.f32 %v647, %v2691
      %v2693 = vpop.f32.mrf.mxu0
      %v2694 = vpop.f32.mrf.mxu0
      %v2695 = vadd.f32 %v647, %v2694
      %v2696 = vpop.f32.mrf.mxu0
      %2697 = vmatprep.mubr.bf16.mxu0 %v1672
      %2698 = vmatmul.mubr.bf16.gmra.mxu0 %v1671
      %v2699 = vpop.f32.mrf.mxu0
      %v2700 = vadd.f32 %v647, %v2699
      %v2701 = vpop.f32.mrf.mxu0
      %v2702 = vpop.f32.mrf.mxu0
      %v2703 = vadd.f32 %v647, %v2702
      %v2704 = vpop.f32.mrf.mxu0
      %2705 = vmatprep.mubr.bf16.mxu0 %v1681
      %2706 = vmatmul.mubr.bf16.gmra.mxu0 %v1680
      %v2707 = vpop.f32.mrf.mxu0
      %v2708 = vadd.f32 %v647, %v2707
      %v2709 = vpop.f32.mrf.mxu0
      %v2710 = vpop.f32.mrf.mxu0
      %v2711 = vadd.f32 %v647, %v2710
      %v2712 = vpop.f32.mrf.mxu0
      %2713 = vmatprep.mubr.bf16.mxu0 %v1690
      %2714 = vmatmul.mubr.bf16.gmra.mxu0 %v1689
      %v2715 = vpop.f32.mrf.mxu0
      %v2716 = vadd.f32 %v647, %v2715
      %v2717 = vpop.f32.mrf.mxu0
      %v2718 = vpop.f32.mrf.mxu0
      %v2719 = vadd.f32 %v647, %v2718
      %v2720 = vpop.f32.mrf.mxu0
      %2721 = vmatprep.mubr.bf16.mxu0 %v1699
      %2722 = vmatmul.mubr.bf16.gmra.mxu0 %v1698
      %v2723 = vpop.f32.mrf.mxu0
      %v2724 = vadd.f32 %v647, %v2723
      %v2725 = vpop.f32.mrf.mxu0
      %v2726 = vpop.f32.mrf.mxu0
      %v2727 = vadd.f32 %v647, %v2726
      %v2728 = vpop.f32.mrf.mxu0
      %2729 = vmatprep.mubr.bf16.mxu0 %v1708
      %2730 = vmatmul.mubr.bf16.gmra.mxu0 %v1707
      %v2731 = vpop.f32.mrf.mxu0
      %v2732 = vadd.f32 %v647, %v2731
      %v2733 = vpop.f32.mrf.mxu0
      %v2734 = vpop.f32.mrf.mxu0
      %v2735 = vadd.f32 %v647, %v2734
      %v2736 = vpop.f32.mrf.mxu0
      %2737 = vmatprep.mubr.bf16.mxu0 %v1717
      %2738 = vmatmul.mubr.bf16.gmra.mxu0 %v1716
      %v2739 = vpop.f32.mrf.mxu0
      %v2740 = vadd.f32 %v647, %v2739
      %v2741 = vpop.f32.mrf.mxu0
      %v2742 = vpop.f32.mrf.mxu0
      %v2743 = vadd.f32 %v647, %v2742
      %v2744 = vpop.f32.mrf.mxu0
      %2745 = vmatprep.mubr.bf16.mxu0 %v1726
      %2746 = vmatmul.mubr.bf16.gmra.mxu0 %v1725
      %v2747 = vpop.f32.mrf.mxu0
      %v2748 = vadd.f32 %v647, %v2747
      %v2749 = vpop.f32.mrf.mxu0
      %v2750 = vpop.f32.mrf.mxu0
      %v2751 = vadd.f32 %v647, %v2750
      %v2752 = vpop.f32.mrf.mxu0
      %2753 = vmatprep.mubr.bf16.mxu0 %v1735
      %2754 = vmatmul.mubr.bf16.gmra.mxu0 %v1734
      %v2755 = vpop.f32.mrf.mxu0
      %v2756 = vadd.f32 %v647, %v2755
      %v2757 = vpop.f32.mrf.mxu0
      %v2758 = vpop.f32.mrf.mxu0
      %v2759 = vadd.f32 %v647, %v2758
      %v2760 = vpop.f32.mrf.mxu0
      %2761 = vmatprep.mubr.bf16.mxu0 %v1744
      %2762 = vmatmul.mubr.bf16.gmra.mxu0 %v1743
      %v2763 = vpop.f32.mrf.mxu0
      %v2764 = vadd.f32 %v647, %v2763
      %v2765 = vpop.f32.mrf.mxu0
      %v2766 = vpop.f32.mrf.mxu0
      %v2767 = vadd.f32 %v647, %v2766
      %v2768 = vpop.f32.mrf.mxu0
      %2769 = vmatprep.mubr.bf16.mxu0 %v1753
      %2770 = vmatmul.mubr.bf16.gmra.mxu0 %v1752
      %v2771 = vpop.f32.mrf.mxu0
      %v2772 = vadd.f32 %v647, %v2771
      %v2773 = vpop.f32.mrf.mxu0
      %v2774 = vpop.f32.mrf.mxu0
      %v2775 = vadd.f32 %v647, %v2774
      %v2776 = vpop.f32.mrf.mxu0
      %2777 = vmatprep.mubr.bf16.mxu0 %v1762
      %2778 = vmatmul.mubr.bf16.gmra.mxu0 %v1761
      %v2779 = vpop.f32.mrf.mxu0
      %v2780 = vadd.f32 %v647, %v2779
      %v2781 = vpop.f32.mrf.mxu0
      %v2782 = vpop.f32.mrf.mxu0
      %v2783 = vadd.f32 %v647, %v2782
      %v2784 = vpop.f32.mrf.mxu0
      %2785 = vmatprep.mubr.bf16.mxu0 %v1771
      %2786 = vmatmul.mubr.bf16.gmra.mxu0 %v1770
      %v2787 = vpop.f32.mrf.mxu0
      %v2788 = vadd.f32 %v647, %v2787
      %v2789 = vpop.f32.mrf.mxu0
      %v2790 = vpop.f32.mrf.mxu0
      %v2791 = vadd.f32 %v647, %v2790
      %v2792 = vpop.f32.mrf.mxu0
      %2793 = vmatprep.mubr.bf16.mxu0 %v1780
      %2794 = vmatmul.mubr.bf16.gmra.mxu0 %v1779
      %v2795 = vpop.f32.mrf.mxu0
      %v2796 = vadd.f32 %v647, %v2795
      %v2797 = vpop.f32.mrf.mxu0
      %v2798 = vpop.f32.mrf.mxu0
      %v2799 = vadd.f32 %v647, %v2798
      %v2800 = vpop.f32.mrf.mxu0
      %2801 = vmatprep.mubr.bf16.mxu0 %v1789
      %2802 = vmatmul.mubr.bf16.gmra.mxu0 %v1788
      %v2803 = vpop.f32.mrf.mxu0
      %v2804 = vadd.f32 %v647, %v2803
      %v2805 = vpop.f32.mrf.mxu0
      %v2806 = vpop.f32.mrf.mxu0
      %v2807 = vadd.f32 %v647, %v2806
      %v2808 = vpop.f32.mrf.mxu0
      %2809 = vmatprep.mubr.bf16.mxu0 %v1798
      %2810 = vmatmul.mubr.bf16.gmra.mxu0 %v1797
      %v2811 = vpop.f32.mrf.mxu0
      %v2812 = vadd.f32 %v647, %v2811
      %v2813 = vpop.f32.mrf.mxu0
      %v2814 = vpop.f32.mrf.mxu0
      %v2815 = vadd.f32 %v647, %v2814
      %v2816 = vpop.f32.mrf.mxu0
      %2817 = vmatprep.mubr.bf16.mxu0 %v1807
      %2818 = vmatmul.mubr.bf16.gmra.mxu0 %v1806
      %v2819 = vpop.f32.mrf.mxu0
      %v2820 = vadd.f32 %v647, %v2819
      %v2821 = vpop.f32.mrf.mxu0
      %v2822 = vpop.f32.mrf.mxu0
      %v2823 = vadd.f32 %v647, %v2822
      %v2824 = vpop.f32.mrf.mxu0
      %2825 = vmatprep.mubr.bf16.mxu0 %v1816
      %2826 = vmatmul.mubr.bf16.gmra.mxu0 %v1815
      %v2827 = vpop.f32.mrf.mxu0
      %v2828 = vadd.f32 %v647, %v2827
      %v2829 = vpop.f32.mrf.mxu0
      %v2830 = vpop.f32.mrf.mxu0
      %v2831 = vadd.f32 %v647, %v2830
      %v2832 = vpop.f32.mrf.mxu0
      %2833 = vmatprep.mubr.bf16.mxu0 %v1825
      %2834 = vmatmul.mubr.bf16.gmra.mxu0 %v1824
      %v2835 = vpop.f32.mrf.mxu0
      %v2836 = vadd.f32 %v647, %v2835
      %v2837 = vpop.f32.mrf.mxu0
      %v2838 = vpop.f32.mrf.mxu0
      %v2839 = vadd.f32 %v647, %v2838
      %v2840 = vpop.f32.mrf.mxu0
      %2841 = vdwg.mxu0
      %2842 = vmatprep.subr.bf16.mxu0 0
      %2843 = vmatpush1.bf16.msra.mxu0 %v2432
      %2844 = vmatprep.subr.bf16.mxu0 0
      %2845 = vmatpush1.bf16.msra.mxu0 %v2431
      %2846 = vmatprep.subr.bf16.mxu0 0
      %2847 = vmatpush1.bf16.msra.mxu0 %v2430
      %2848 = vmatprep.subr.bf16.mxu0 0
      %2849 = vmatpush1.bf16.msra.mxu0 %v2429
      %2850 = vmatprep.subr.bf16.mxu0 0
      %2851 = vmatpush1.bf16.msra.mxu0 %v2428
      %2852 = vmatprep.subr.bf16.mxu0 0
      %2853 = vmatpush1.bf16.msra.mxu0 %v2427
      %2854 = vmatprep.subr.bf16.mxu0 0
      %2855 = vmatpush1.bf16.msra.mxu0 %v2426
      %2856 = vmatprep.subr.bf16.mxu0 0
      %2857 = vmatpush1.bf16.msra.mxu0 %v2425
      %2858 = vmatprep.subr.bf16.mxu0 0
      %2859 = vmatpush2.bf16.msra.mxu0 %v2440
      %2860 = vmatprep.subr.bf16.mxu0 0
      %2861 = vmatpush2.bf16.msra.mxu0 %v2439
      %2862 = vmatprep.subr.bf16.mxu0 0
      %2863 = vmatpush2.bf16.msra.mxu0 %v2438
      %2864 = vmatprep.subr.bf16.mxu0 0
      %2865 = vmatpush2.bf16.msra.mxu0 %v2437
      %2866 = vmatprep.subr.bf16.mxu0 0
      %2867 = vmatpush2.bf16.msra.mxu0 %v2436
      %2868 = vmatprep.subr.bf16.mxu0 0
      %2869 = vmatpush2.bf16.msra.mxu0 %v2435
      %2870 = vmatprep.subr.bf16.mxu0 0
      %2871 = vmatpush2.bf16.msra.mxu0 %v2434
      %2872 = vmatprep.subr.bf16.mxu0 0
      %2873 = vmatpush2.bf16.msra.mxu0 %v2433
      %2874 = vmatprep.mubr.bf16.mxu0 %v1548
      %2875 = vmatmul.mubr.bf16.gmra.mxu0 %v1547
      %v2876 = vpop.f32.mrf.mxu0
      %v2877 = vadd.f32 %v2588, %v2876
      %v2878 = vpop.f32.mrf.mxu0
      %v2879 = vpop.f32.mrf.mxu0
      %v2880 = vadd.f32 %v2591, %v2879
      %v2881 = vpop.f32.mrf.mxu0
      %2882 = vmatprep.mubr.bf16.mxu0 %v1557
      %2883 = vmatmul.mubr.bf16.gmra.mxu0 %v1556
      %v2884 = vpop.f32.mrf.mxu0
      %v2885 = vadd.f32 %v2596, %v2884
      %v2886 = vpop.f32.mrf.mxu0
      %v2887 = vpop.f32.mrf.mxu0
      %v2888 = vadd.f32 %v2599, %v2887
      %v2889 = vpop.f32.mrf.mxu0
      %2890 = vmatprep.mubr.bf16.mxu0 %v1566
      %2891 = vmatmul.mubr.bf16.gmra.mxu0 %v1565
      %v2892 = vpop.f32.mrf.mxu0
      %v2893 = vadd.f32 %v2604, %v2892
      %v2894 = vpop.f32.mrf.mxu0
      %v2895 = vpop.f32.mrf.mxu0
      %v2896 = vadd.f32 %v2607, %v2895
      %v2897 = vpop.f32.mrf.mxu0
      %2898 = vmatprep.mubr.bf16.mxu0 %v1575
      %2899 = vmatmul.mubr.bf16.gmra.mxu0 %v1574
      %v2900 = vpop.f32.mrf.mxu0
      %v2901 = vadd.f32 %v2612, %v2900
      %v2902 = vpop.f32.mrf.mxu0
      %v2903 = vpop.f32.mrf.mxu0
      %v2904 = vadd.f32 %v2615, %v2903
      %v2905 = vpop.f32.mrf.mxu0
      %2906 = vmatprep.mubr.bf16.mxu0 %v1584
      %2907 = vmatmul.mubr.bf16.gmra.mxu0 %v1583
      %v2908 = vpop.f32.mrf.mxu0
      %v2909 = vadd.f32 %v2620, %v2908
      %v2910 = vpop.f32.mrf.mxu0
      %v2911 = vpop.f32.mrf.mxu0
      %v2912 = vadd.f32 %v2623, %v2911
      %v2913 = vpop.f32.mrf.mxu0
      %2914 = vmatprep.mubr.bf16.mxu0 %v1593
      %2915 = vmatmul.mubr.bf16.gmra.mxu0 %v1592
      %v2916 = vpop.f32.mrf.mxu0
      %v2917 = vadd.f32 %v2628, %v2916
      %v2918 = vpop.f32.mrf.mxu0
      %v2919 = vpop.f32.mrf.mxu0
      %v2920 = vadd.f32 %v2631, %v2919
      %v2921 = vpop.f32.mrf.mxu0
      %2922 = vmatprep.mubr.bf16.mxu0 %v1602
      %2923 = vmatmul.mubr.bf16.gmra.mxu0 %v1601
      %v2924 = vpop.f32.mrf.mxu0
      %v2925 = vadd.f32 %v2636, %v2924
      %v2926 = vpop.f32.mrf.mxu0
      %v2927 = vpop.f32.mrf.mxu0
      %v2928 = vadd.f32 %v2639, %v2927
      %v2929 = vpop.f32.mrf.mxu0
      %2930 = vmatprep.mubr.bf16.mxu0 %v1611
      %2931 = vmatmul.mubr.bf16.gmra.mxu0 %v1610
      %v2932 = vpop.f32.mrf.mxu0
      %v2933 = vadd.f32 %v2644, %v2932
      %v2934 = vpop.f32.mrf.mxu0
      %v2935 = vpop.f32.mrf.mxu0
      %v2936 = vadd.f32 %v2647, %v2935
      %v2937 = vpop.f32.mrf.mxu0
      %2938 = vmatprep.mubr.bf16.mxu0 %v1620
      %2939 = vmatmul.mubr.bf16.gmra.mxu0 %v1619
      %v2940 = vpop.f32.mrf.mxu0
      %v2941 = vadd.f32 %v2652, %v2940
      %v2942 = vpop.f32.mrf.mxu0
      %v2943 = vpop.f32.mrf.mxu0
      %v2944 = vadd.f32 %v2655, %v2943
      %v2945 = vpop.f32.mrf.mxu0
      %2946 = vmatprep.mubr.bf16.mxu0 %v1629
      %2947 = vmatmul.mubr.bf16.gmra.mxu0 %v1628
      %v2948 = vpop.f32.mrf.mxu0
      %v2949 = vadd.f32 %v2660, %v2948
      %v2950 = vpop.f32.mrf.mxu0
      %v2951 = vpop.f32.mrf.mxu0
      %v2952 = vadd.f32 %v2663, %v2951
      %v2953 = vpop.f32.mrf.mxu0
      %2954 = vmatprep.mubr.bf16.mxu0 %v1638
      %2955 = vmatmul.mubr.bf16.gmra.mxu0 %v1637
      %v2956 = vpop.f32.mrf.mxu0
      %v2957 = vadd.f32 %v2668, %v2956
      %v2958 = vpop.f32.mrf.mxu0
      %v2959 = vpop.f32.mrf.mxu0
      %v2960 = vadd.f32 %v2671, %v2959
      %v2961 = vpop.f32.mrf.mxu0
      %2962 = vmatprep.mubr.bf16.mxu0 %v1647
      %2963 = vmatmul.mubr.bf16.gmra.mxu0 %v1646
      %v2964 = vpop.f32.mrf.mxu0
      %v2965 = vadd.f32 %v2676, %v2964
      %v2966 = vpop.f32.mrf.mxu0
      %v2967 = vpop.f32.mrf.mxu0
      %v2968 = vadd.f32 %v2679, %v2967
      %v2969 = vpop.f32.mrf.mxu0
      %2970 = vmatprep.mubr.bf16.mxu0 %v1656
      %2971 = vmatmul.mubr.bf16.gmra.mxu0 %v1655
      %v2972 = vpop.f32.mrf.mxu0
      %v2973 = vadd.f32 %v2684, %v2972
      %v2974 = vpop.f32.mrf.mxu0
      %v2975 = vpop.f32.mrf.mxu0
      %v2976 = vadd.f32 %v2687, %v2975
      %v2977 = vpop.f32.mrf.mxu0
      %2978 = vmatprep.mubr.bf16.mxu0 %v1665
      %2979 = vmatmul.mubr.bf16.gmra.mxu0 %v1664
      %v2980 = vpop.f32.mrf.mxu0
      %v2981 = vadd.f32 %v2692, %v2980
      %v2982 = vpop.f32.mrf.mxu0
      %v2983 = vpop.f32.mrf.mxu0
      %v2984 = vadd.f32 %v2695, %v2983
      %v2985 = vpop.f32.mrf.mxu0
      %2986 = vmatprep.mubr.bf16.mxu0 %v1674
      %2987 = vmatmul.mubr.bf16.gmra.mxu0 %v1673
      %v2988 = vpop.f32.mrf.mxu0
      %v2989 = vadd.f32 %v2700, %v2988
      %v2990 = vpop.f32.mrf.mxu0
      %v2991 = vpop.f32.mrf.mxu0
      %v2992 = vadd.f32 %v2703, %v2991
      %v2993 = vpop.f32.mrf.mxu0
      %2994 = vmatprep.mubr.bf16.mxu0 %v1683
      %2995 = vmatmul.mubr.bf16.gmra.mxu0 %v1682
      %v2996 = vpop.f32.mrf.mxu0
      %v2997 = vadd.f32 %v2708, %v2996
      %v2998 = vpop.f32.mrf.mxu0
      %v2999 = vpop.f32.mrf.mxu0
      %v3000 = vadd.f32 %v2711, %v2999
      %v3001 = vpop.f32.mrf.mxu0
      %3002 = vmatprep.mubr.bf16.mxu0 %v1692
      %3003 = vmatmul.mubr.bf16.gmra.mxu0 %v1691
      %v3004 = vpop.f32.mrf.mxu0
      %v3005 = vadd.f32 %v2716, %v3004
      %v3006 = vpop.f32.mrf.mxu0
      %v3007 = vpop.f32.mrf.mxu0
      %v3008 = vadd.f32 %v2719, %v3007
      %v3009 = vpop.f32.mrf.mxu0
      %3010 = vmatprep.mubr.bf16.mxu0 %v1701
      %3011 = vmatmul.mubr.bf16.gmra.mxu0 %v1700
      %v3012 = vpop.f32.mrf.mxu0
      %v3013 = vadd.f32 %v2724, %v3012
      %v3014 = vpop.f32.mrf.mxu0
      %v3015 = vpop.f32.mrf.mxu0
      %v3016 = vadd.f32 %v2727, %v3015
      %v3017 = vpop.f32.mrf.mxu0
      %3018 = vmatprep.mubr.bf16.mxu0 %v1710
      %3019 = vmatmul.mubr.bf16.gmra.mxu0 %v1709
      %v3020 = vpop.f32.mrf.mxu0
      %v3021 = vadd.f32 %v2732, %v3020
      %v3022 = vpop.f32.mrf.mxu0
      %v3023 = vpop.f32.mrf.mxu0
      %v3024 = vadd.f32 %v2735, %v3023
      %v3025 = vpop.f32.mrf.mxu0
      %3026 = vmatprep.mubr.bf16.mxu0 %v1719
      %3027 = vmatmul.mubr.bf16.gmra.mxu0 %v1718
      %v3028 = vpop.f32.mrf.mxu0
      %v3029 = vadd.f32 %v2740, %v3028
      %v3030 = vpop.f32.mrf.mxu0
      %v3031 = vpop.f32.mrf.mxu0
      %v3032 = vadd.f32 %v2743, %v3031
      %v3033 = vpop.f32.mrf.mxu0
      %3034 = vmatprep.mubr.bf16.mxu0 %v1728
      %3035 = vmatmul.mubr.bf16.gmra.mxu0 %v1727
      %v3036 = vpop.f32.mrf.mxu0
      %v3037 = vadd.f32 %v2748, %v3036
      %v3038 = vpop.f32.mrf.mxu0
      %v3039 = vpop.f32.mrf.mxu0
      %v3040 = vadd.f32 %v2751, %v3039
      %v3041 = vpop.f32.mrf.mxu0
      %3042 = vmatprep.mubr.bf16.mxu0 %v1737
      %3043 = vmatmul.mubr.bf16.gmra.mxu0 %v1736
      %v3044 = vpop.f32.mrf.mxu0
      %v3045 = vadd.f32 %v2756, %v3044
      %v3046 = vpop.f32.mrf.mxu0
      %v3047 = vpop.f32.mrf.mxu0
      %v3048 = vadd.f32 %v2759, %v3047
      %v3049 = vpop.f32.mrf.mxu0
      %3050 = vmatprep.mubr.bf16.mxu0 %v1746
      %3051 = vmatmul.mubr.bf16.gmra.mxu0 %v1745
      %v3052 = vpop.f32.mrf.mxu0
      %v3053 = vadd.f32 %v2764, %v3052
      %v3054 = vpop.f32.mrf.mxu0
      %v3055 = vpop.f32.mrf.mxu0
      %v3056 = vadd.f32 %v2767, %v3055
      %v3057 = vpop.f32.mrf.mxu0
      %3058 = vmatprep.mubr.bf16.mxu0 %v1755
      %3059 = vmatmul.mubr.bf16.gmra.mxu0 %v1754
      %v3060 = vpop.f32.mrf.mxu0
      %v3061 = vadd.f32 %v2772, %v3060
      %v3062 = vpop.f32.mrf.mxu0
      %v3063 = vpop.f32.mrf.mxu0
      %v3064 = vadd.f32 %v2775, %v3063
      %v3065 = vpop.f32.mrf.mxu0
      %3066 = vmatprep.mubr.bf16.mxu0 %v1764
      %3067 = vmatmul.mubr.bf16.gmra.mxu0 %v1763
      %v3068 = vpop.f32.mrf.mxu0
      %v3069 = vadd.f32 %v2780, %v3068
      %v3070 = vpop.f32.mrf.mxu0
      %v3071 = vpop.f32.mrf.mxu0
      %v3072 = vadd.f32 %v2783, %v3071
      %v3073 = vpop.f32.mrf.mxu0
      %3074 = vmatprep.mubr.bf16.mxu0 %v1773
      %3075 = vmatmul.mubr.bf16.gmra.mxu0 %v1772
      %v3076 = vpop.f32.mrf.mxu0
      %v3077 = vadd.f32 %v2788, %v3076
      %v3078 = vpop.f32.mrf.mxu0
      %v3079 = vpop.f32.mrf.mxu0
      %v3080 = vadd.f32 %v2791, %v3079
      %v3081 = vpop.f32.mrf.mxu0
      %3082 = vmatprep.mubr.bf16.mxu0 %v1782
      %3083 = vmatmul.mubr.bf16.gmra.mxu0 %v1781
      %v3084 = vpop.f32.mrf.mxu0
      %v3085 = vadd.f32 %v2796, %v3084
      %v3086 = vpop.f32.mrf.mxu0
      %v3087 = vpop.f32.mrf.mxu0
      %v3088 = vadd.f32 %v2799, %v3087
      %v3089 = vpop.f32.mrf.mxu0
      %3090 = vmatprep.mubr.bf16.mxu0 %v1791
      %3091 = vmatmul.mubr.bf16.gmra.mxu0 %v1790
      %v3092 = vpop.f32.mrf.mxu0
      %v3093 = vadd.f32 %v2804, %v3092
      %v3094 = vpop.f32.mrf.mxu0
      %v3095 = vpop.f32.mrf.mxu0
      %v3096 = vadd.f32 %v2807, %v3095
      %v3097 = vpop.f32.mrf.mxu0
      %3098 = vmatprep.mubr.bf16.mxu0 %v1800
      %3099 = vmatmul.mubr.bf16.gmra.mxu0 %v1799
      %v3100 = vpop.f32.mrf.mxu0
      %v3101 = vadd.f32 %v2812, %v3100
      %v3102 = vpop.f32.mrf.mxu0
      %v3103 = vpop.f32.mrf.mxu0
      %v3104 = vadd.f32 %v2815, %v3103
      %v3105 = vpop.f32.mrf.mxu0
      %3106 = vmatprep.mubr.bf16.mxu0 %v1809
      %3107 = vmatmul.mubr.bf16.gmra.mxu0 %v1808
      %v3108 = vpop.f32.mrf.mxu0
      %v3109 = vadd.f32 %v2820, %v3108
      %v3110 = vpop.f32.mrf.mxu0
      %v3111 = vpop.f32.mrf.mxu0
      %v3112 = vadd.f32 %v2823, %v3111
      %v3113 = vpop.f32.mrf.mxu0
      %3114 = vmatprep.mubr.bf16.mxu0 %v1818
      %3115 = vmatmul.mubr.bf16.gmra.mxu0 %v1817
      %v3116 = vpop.f32.mrf.mxu0
      %v3117 = vadd.f32 %v2828, %v3116
      %v3118 = vpop.f32.mrf.mxu0
      %v3119 = vpop.f32.mrf.mxu0
      %v3120 = vadd.f32 %v2831, %v3119
      %v3121 = vpop.f32.mrf.mxu0
      %3122 = vmatprep.mubr.bf16.mxu0 %v1827
      %3123 = vmatmul.mubr.bf16.gmra.mxu0 %v1826
      %v3124 = vpop.f32.mrf.mxu0
      %v3125 = vadd.f32 %v2836, %v3124
      %v3126 = vpop.f32.mrf.mxu0
      %v3127 = vpop.f32.mrf.mxu0
      %v3128 = vadd.f32 %v2839, %v3127
      %v3129 = vpop.f32.mrf.mxu0
      %3130 = vdwg.mxu0
      %3131 = vmatprep.subr.bf16.mxu0 0
      %3132 = vmatpush1.bf16.msra.mxu0 %v2448
      %3133 = vmatprep.subr.bf16.mxu0 0
      %3134 = vmatpush1.bf16.msra.mxu0 %v2447
      %3135 = vmatprep.subr.bf16.mxu0 0
      %3136 = vmatpush1.bf16.msra.mxu0 %v2446
      %3137 = vmatprep.subr.bf16.mxu0 0
      %3138 = vmatpush1.bf16.msra.mxu0 %v2445
      %3139 = vmatprep.subr.bf16.mxu0 0
      %3140 = vmatpush1.bf16.msra.mxu0 %v2444
      %3141 = vmatprep.subr.bf16.mxu0 0
      %3142 = vmatpush1.bf16.msra.mxu0 %v2443
      %3143 = vmatprep.subr.bf16.mxu0 0
      %3144 = vmatpush1.bf16.msra.mxu0 %v2442
      %3145 = vmatprep.subr.bf16.mxu0 0
      %3146 = vmatpush1.bf16.msra.mxu0 %v2441
      %3147 = vmatprep.subr.bf16.mxu0 0
      %3148 = vmatpush2.bf16.msra.mxu0 %v2456
      %3149 = vmatprep.subr.bf16.mxu0 0
      %3150 = vmatpush2.bf16.msra.mxu0 %v2455
      %3151 = vmatprep.subr.bf16.mxu0 0
      %3152 = vmatpush2.bf16.msra.mxu0 %v2454
      %3153 = vmatprep.subr.bf16.mxu0 0
      %3154 = vmatpush2.bf16.msra.mxu0 %v2453
      %3155 = vmatprep.subr.bf16.mxu0 0
      %3156 = vmatpush2.bf16.msra.mxu0 %v2452
      %3157 = vmatprep.subr.bf16.mxu0 0
      %3158 = vmatpush2.bf16.msra.mxu0 %v2451
      %3159 = vmatprep.subr.bf16.mxu0 0
      %3160 = vmatpush2.bf16.msra.mxu0 %v2450
      %3161 = vmatprep.subr.bf16.mxu0 0
      %3162 = vmatpush2.bf16.msra.mxu0 %v2449
      %3163 = vmatprep.mubr.bf16.mxu0 %v1550
      %3164 = vmatmul.mubr.bf16.gmra.mxu0 %v1549
      %v3165 = vpop.f32.mrf.mxu0
      %v3166 = vadd.f32 %v2877, %v3165
      %v3167 = vpop.f32.mrf.mxu0
      %v3168 = vpop.f32.mrf.mxu0
      %v3169 = vadd.f32 %v2880, %v3168
      %v3170 = vpop.f32.mrf.mxu0
      %3171 = vmatprep.mubr.bf16.mxu0 %v1559
      %3172 = vmatmul.mubr.bf16.gmra.mxu0 %v1558
      %v3173 = vpop.f32.mrf.mxu0
      %v3174 = vadd.f32 %v2885, %v3173
      %v3175 = vpop.f32.mrf.mxu0
      %v3176 = vpop.f32.mrf.mxu0
      %v3177 = vadd.f32 %v2888, %v3176
      %v3178 = vpop.f32.mrf.mxu0
      %3179 = vmatprep.mubr.bf16.mxu0 %v1568
      %3180 = vmatmul.mubr.bf16.gmra.mxu0 %v1567
      %v3181 = vpop.f32.mrf.mxu0
      %v3182 = vadd.f32 %v2893, %v3181
      %v3183 = vpop.f32.mrf.mxu0
      %v3184 = vpop.f32.mrf.mxu0
      %v3185 = vadd.f32 %v2896, %v3184
      %v3186 = vpop.f32.mrf.mxu0
      %3187 = vmatprep.mubr.bf16.mxu0 %v1577
      %3188 = vmatmul.mubr.bf16.gmra.mxu0 %v1576
      %v3189 = vpop.f32.mrf.mxu0
      %v3190 = vadd.f32 %v2901, %v3189
      %v3191 = vpop.f32.mrf.mxu0
      %v3192 = vpop.f32.mrf.mxu0
      %v3193 = vadd.f32 %v2904, %v3192
      %v3194 = vpop.f32.mrf.mxu0
      %3195 = vmatprep.mubr.bf16.mxu0 %v1586
      %3196 = vmatmul.mubr.bf16.gmra.mxu0 %v1585
      %v3197 = vpop.f32.mrf.mxu0
      %v3198 = vadd.f32 %v2909, %v3197
      %v3199 = vpop.f32.mrf.mxu0
      %v3200 = vpop.f32.mrf.mxu0
      %v3201 = vadd.f32 %v2912, %v3200
      %v3202 = vpop.f32.mrf.mxu0
      %3203 = vmatprep.mubr.bf16.mxu0 %v1595
      %3204 = vmatmul.mubr.bf16.gmra.mxu0 %v1594
      %v3205 = vpop.f32.mrf.mxu0
      %v3206 = vadd.f32 %v2917, %v3205
      %v3207 = vpop.f32.mrf.mxu0
      %v3208 = vpop.f32.mrf.mxu0
      %v3209 = vadd.f32 %v2920, %v3208
      %v3210 = vpop.f32.mrf.mxu0
      %3211 = vmatprep.mubr.bf16.mxu0 %v1604
      %3212 = vmatmul.mubr.bf16.gmra.mxu0 %v1603
      %v3213 = vpop.f32.mrf.mxu0
      %v3214 = vadd.f32 %v2925, %v3213
      %v3215 = vpop.f32.mrf.mxu0
      %v3216 = vpop.f32.mrf.mxu0
      %v3217 = vadd.f32 %v2928, %v3216
      %v3218 = vpop.f32.mrf.mxu0
      %3219 = vmatprep.mubr.bf16.mxu0 %v1613
      %3220 = vmatmul.mubr.bf16.gmra.mxu0 %v1612
      %v3221 = vpop.f32.mrf.mxu0
      %v3222 = vadd.f32 %v2933, %v3221
      %v3223 = vpop.f32.mrf.mxu0
      %v3224 = vpop.f32.mrf.mxu0
      %v3225 = vadd.f32 %v2936, %v3224
      %v3226 = vpop.f32.mrf.mxu0
      %3227 = vmatprep.mubr.bf16.mxu0 %v1622
      %3228 = vmatmul.mubr.bf16.gmra.mxu0 %v1621
      %v3229 = vpop.f32.mrf.mxu0
      %v3230 = vadd.f32 %v2941, %v3229
      %v3231 = vpop.f32.mrf.mxu0
      %v3232 = vpop.f32.mrf.mxu0
      %v3233 = vadd.f32 %v2944, %v3232
      %v3234 = vpop.f32.mrf.mxu0
      %3235 = vmatprep.mubr.bf16.mxu0 %v1631
      %3236 = vmatmul.mubr.bf16.gmra.mxu0 %v1630
      %v3237 = vpop.f32.mrf.mxu0
      %v3238 = vadd.f32 %v2949, %v3237
      %v3239 = vpop.f32.mrf.mxu0
      %v3240 = vpop.f32.mrf.mxu0
      %v3241 = vadd.f32 %v2952, %v3240
      %v3242 = vpop.f32.mrf.mxu0
      %3243 = vmatprep.mubr.bf16.mxu0 %v1640
      %3244 = vmatmul.mubr.bf16.gmra.mxu0 %v1639
      %v3245 = vpop.f32.mrf.mxu0
      %v3246 = vadd.f32 %v2957, %v3245
      %v3247 = vpop.f32.mrf.mxu0
      %v3248 = vpop.f32.mrf.mxu0
      %v3249 = vadd.f32 %v2960, %v3248
      %v3250 = vpop.f32.mrf.mxu0
      %3251 = vmatprep.mubr.bf16.mxu0 %v1649
      %3252 = vmatmul.mubr.bf16.gmra.mxu0 %v1648
      %v3253 = vpop.f32.mrf.mxu0
      %v3254 = vadd.f32 %v2965, %v3253
      %v3255 = vpop.f32.mrf.mxu0
      %v3256 = vpop.f32.mrf.mxu0
      %v3257 = vadd.f32 %v2968, %v3256
      %v3258 = vpop.f32.mrf.mxu0
      %3259 = vmatprep.mubr.bf16.mxu0 %v1658
      %3260 = vmatmul.mubr.bf16.gmra.mxu0 %v1657
      %v3261 = vpop.f32.mrf.mxu0
      %v3262 = vadd.f32 %v2973, %v3261
      %v3263 = vpop.f32.mrf.mxu0
      %v3264 = vpop.f32.mrf.mxu0
      %v3265 = vadd.f32 %v2976, %v3264
      %v3266 = vpop.f32.mrf.mxu0
      %3267 = vmatprep.mubr.bf16.mxu0 %v1667
      %3268 = vmatmul.mubr.bf16.gmra.mxu0 %v1666
      %v3269 = vpop.f32.mrf.mxu0
      %v3270 = vadd.f32 %v2981, %v3269
      %v3271 = vpop.f32.mrf.mxu0
      %v3272 = vpop.f32.mrf.mxu0
      %v3273 = vadd.f32 %v2984, %v3272
      %v3274 = vpop.f32.mrf.mxu0
      %3275 = vmatprep.mubr.bf16.mxu0 %v1676
      %3276 = vmatmul.mubr.bf16.gmra.mxu0 %v1675
      %v3277 = vpop.f32.mrf.mxu0
      %v3278 = vadd.f32 %v2989, %v3277
      %v3279 = vpop.f32.mrf.mxu0
      %v3280 = vpop.f32.mrf.mxu0
      %v3281 = vadd.f32 %v2992, %v3280
      %v3282 = vpop.f32.mrf.mxu0
      %3283 = vmatprep.mubr.bf16.mxu0 %v1685
      %3284 = vmatmul.mubr.bf16.gmra.mxu0 %v1684
      %v3285 = vpop.f32.mrf.mxu0
      %v3286 = vadd.f32 %v2997, %v3285
      %v3287 = vpop.f32.mrf.mxu0
      %v3288 = vpop.f32.mrf.mxu0
      %v3289 = vadd.f32 %v3000, %v3288
      %v3290 = vpop.f32.mrf.mxu0
      %3291 = vmatprep.mubr.bf16.mxu0 %v1694
      %3292 = vmatmul.mubr.bf16.gmra.mxu0 %v1693
      %v3293 = vpop.f32.mrf.mxu0
      %v3294 = vadd.f32 %v3005, %v3293
      %v3295 = vpop.f32.mrf.mxu0
      %v3296 = vpop.f32.mrf.mxu0
      %v3297 = vadd.f32 %v3008, %v3296
      %v3298 = vpop.f32.mrf.mxu0
      %3299 = vmatprep.mubr.bf16.mxu0 %v1703
      %3300 = vmatmul.mubr.bf16.gmra.mxu0 %v1702
      %v3301 = vpop.f32.mrf.mxu0
      %v3302 = vadd.f32 %v3013, %v3301
      %v3303 = vpop.f32.mrf.mxu0
      %v3304 = vpop.f32.mrf.mxu0
      %v3305 = vadd.f32 %v3016, %v3304
      %v3306 = vpop.f32.mrf.mxu0
      %3307 = vmatprep.mubr.bf16.mxu0 %v1712
      %3308 = vmatmul.mubr.bf16.gmra.mxu0 %v1711
      %v3309 = vpop.f32.mrf.mxu0
      %v3310 = vadd.f32 %v3021, %v3309
      %v3311 = vpop.f32.mrf.mxu0
      %v3312 = vpop.f32.mrf.mxu0
      %v3313 = vadd.f32 %v3024, %v3312
      %v3314 = vpop.f32.mrf.mxu0
      %3315 = vmatprep.mubr.bf16.mxu0 %v1721
      %3316 = vmatmul.mubr.bf16.gmra.mxu0 %v1720
      %v3317 = vpop.f32.mrf.mxu0
      %v3318 = vadd.f32 %v3029, %v3317
      %v3319 = vpop.f32.mrf.mxu0
      %v3320 = vpop.f32.mrf.mxu0
      %v3321 = vadd.f32 %v3032, %v3320
      %v3322 = vpop.f32.mrf.mxu0
      %3323 = vmatprep.mubr.bf16.mxu0 %v1730
      %3324 = vmatmul.mubr.bf16.gmra.mxu0 %v1729
      %v3325 = vpop.f32.mrf.mxu0
      %v3326 = vadd.f32 %v3037, %v3325
      %v3327 = vpop.f32.mrf.mxu0
      %v3328 = vpop.f32.mrf.mxu0
      %v3329 = vadd.f32 %v3040, %v3328
      %v3330 = vpop.f32.mrf.mxu0
      %3331 = vmatprep.mubr.bf16.mxu0 %v1739
      %3332 = vmatmul.mubr.bf16.gmra.mxu0 %v1738
      %v3333 = vpop.f32.mrf.mxu0
      %v3334 = vadd.f32 %v3045, %v3333
      %v3335 = vpop.f32.mrf.mxu0
      %v3336 = vpop.f32.mrf.mxu0
      %v3337 = vadd.f32 %v3048, %v3336
      %v3338 = vpop.f32.mrf.mxu0
      %3339 = vmatprep.mubr.bf16.mxu0 %v1748
      %3340 = vmatmul.mubr.bf16.gmra.mxu0 %v1747
      %v3341 = vpop.f32.mrf.mxu0
      %v3342 = vadd.f32 %v3053, %v3341
      %v3343 = vpop.f32.mrf.mxu0
      %v3344 = vpop.f32.mrf.mxu0
      %v3345 = vadd.f32 %v3056, %v3344
      %v3346 = vpop.f32.mrf.mxu0
      %3347 = vmatprep.mubr.bf16.mxu0 %v1757
      %3348 = vmatmul.mubr.bf16.gmra.mxu0 %v1756
      %v3349 = vpop.f32.mrf.mxu0
      %v3350 = vadd.f32 %v3061, %v3349
      %v3351 = vpop.f32.mrf.mxu0
      %v3352 = vpop.f32.mrf.mxu0
      %v3353 = vadd.f32 %v3064, %v3352
      %v3354 = vpop.f32.mrf.mxu0
      %3355 = vmatprep.mubr.bf16.mxu0 %v1766
      %3356 = vmatmul.mubr.bf16.gmra.mxu0 %v1765
      %v3357 = vpop.f32.mrf.mxu0
      %v3358 = vadd.f32 %v3069, %v3357
      %v3359 = vpop.f32.mrf.mxu0
      %v3360 = vpop.f32.mrf.mxu0
      %v3361 = vadd.f32 %v3072, %v3360
      %v3362 = vpop.f32.mrf.mxu0
      %3363 = vmatprep.mubr.bf16.mxu0 %v1775
      %3364 = vmatmul.mubr.bf16.gmra.mxu0 %v1774
      %v3365 = vpop.f32.mrf.mxu0
      %v3366 = vadd.f32 %v3077, %v3365
      %v3367 = vpop.f32.mrf.mxu0
      %v3368 = vpop.f32.mrf.mxu0
      %v3369 = vadd.f32 %v3080, %v3368
      %v3370 = vpop.f32.mrf.mxu0
      %3371 = vmatprep.mubr.bf16.mxu0 %v1784
      %3372 = vmatmul.mubr.bf16.gmra.mxu0 %v1783
      %v3373 = vpop.f32.mrf.mxu0
      %v3374 = vadd.f32 %v3085, %v3373
      %v3375 = vpop.f32.mrf.mxu0
      %v3376 = vpop.f32.mrf.mxu0
      %v3377 = vadd.f32 %v3088, %v3376
      %v3378 = vpop.f32.mrf.mxu0
      %3379 = vmatprep.mubr.bf16.mxu0 %v1793
      %3380 = vmatmul.mubr.bf16.gmra.mxu0 %v1792
      %v3381 = vpop.f32.mrf.mxu0
      %v3382 = vadd.f32 %v3093, %v3381
      %v3383 = vpop.f32.mrf.mxu0
      %v3384 = vpop.f32.mrf.mxu0
      %v3385 = vadd.f32 %v3096, %v3384
      %v3386 = vpop.f32.mrf.mxu0
      %3387 = vmatprep.mubr.bf16.mxu0 %v1802
      %3388 = vmatmul.mubr.bf16.gmra.mxu0 %v1801
      %v3389 = vpop.f32.mrf.mxu0
      %v3390 = vadd.f32 %v3101, %v3389
      %v3391 = vpop.f32.mrf.mxu0
      %v3392 = vpop.f32.mrf.mxu0
      %v3393 = vadd.f32 %v3104, %v3392
      %v3394 = vpop.f32.mrf.mxu0
      %3395 = vmatprep.mubr.bf16.mxu0 %v1811
      %3396 = vmatmul.mubr.bf16.gmra.mxu0 %v1810
      %v3397 = vpop.f32.mrf.mxu0
      %v3398 = vadd.f32 %v3109, %v3397
      %v3399 = vpop.f32.mrf.mxu0
      %v3400 = vpop.f32.mrf.mxu0
      %v3401 = vadd.f32 %v3112, %v3400
      %v3402 = vpop.f32.mrf.mxu0
      %3403 = vmatprep.mubr.bf16.mxu0 %v1820
      %3404 = vmatmul.mubr.bf16.gmra.mxu0 %v1819
      %v3405 = vpop.f32.mrf.mxu0
      %v3406 = vadd.f32 %v3117, %v3405
      %v3407 = vpop.f32.mrf.mxu0
      %v3408 = vpop.f32.mrf.mxu0
      %v3409 = vadd.f32 %v3120, %v3408
      %v3410 = vpop.f32.mrf.mxu0
      %3411 = vmatprep.mubr.bf16.mxu0 %v1829
      %3412 = vmatmul.mubr.bf16.gmra.mxu0 %v1828
      %v3413 = vpop.f32.mrf.mxu0
      %v3414 = vadd.f32 %v3125, %v3413
      %v3415 = vpop.f32.mrf.mxu0
      %v3416 = vpop.f32.mrf.mxu0
      %v3417 = vadd.f32 %v3128, %v3416
      %v3418 = vpop.f32.mrf.mxu0
      %3419 = vdwg.mxu0
      %3420 = vmatprep.subr.bf16.mxu0 0
      %3421 = vmatpush1.bf16.msra.mxu0 %v2464
      %3422 = vmatprep.subr.bf16.mxu0 0
      %3423 = vmatpush1.bf16.msra.mxu0 %v2463
      %3424 = vmatprep.subr.bf16.mxu0 0
      %3425 = vmatpush1.bf16.msra.mxu0 %v2462
      %3426 = vmatprep.subr.bf16.mxu0 0
      %3427 = vmatpush1.bf16.msra.mxu0 %v2461
      %3428 = vmatprep.subr.bf16.mxu0 0
      %3429 = vmatpush1.bf16.msra.mxu0 %v2460
      %3430 = vmatprep.subr.bf16.mxu0 0
      %3431 = vmatpush1.bf16.msra.mxu0 %v2459
      %3432 = vmatprep.subr.bf16.mxu0 0
      %3433 = vmatpush1.bf16.msra.mxu0 %v2458
      %3434 = vmatprep.subr.bf16.mxu0 0
      %3435 = vmatpush1.bf16.msra.mxu0 %v2457
      %3436 = vmatprep.subr.bf16.mxu0 0
      %3437 = vmatpush2.bf16.msra.mxu0 %v2472
      %3438 = vmatprep.subr.bf16.mxu0 0
      %3439 = vmatpush2.bf16.msra.mxu0 %v2471
      %3440 = vmatprep.subr.bf16.mxu0 0
      %3441 = vmatpush2.bf16.msra.mxu0 %v2470
      %3442 = vmatprep.subr.bf16.mxu0 0
      %3443 = vmatpush2.bf16.msra.mxu0 %v2469
      %3444 = vmatprep.subr.bf16.mxu0 0
      %3445 = vmatpush2.bf16.msra.mxu0 %v2468
      %3446 = vmatprep.subr.bf16.mxu0 0
      %3447 = vmatpush2.bf16.msra.mxu0 %v2467
      %3448 = vmatprep.subr.bf16.mxu0 0
      %3449 = vmatpush2.bf16.msra.mxu0 %v2466
      %3450 = vmatprep.subr.bf16.mxu0 0
      %3451 = vmatpush2.bf16.msra.mxu0 %v2465
      %3452 = vmatprep.mubr.bf16.mxu0 %v1552
      %3453 = vmatmul.mubr.bf16.gmra.mxu0 %v1551
      %v3454 = vpop.f32.mrf.mxu0
      %v3455 = vadd.f32 %v3166, %v3454
      %v3456 = vpop.f32.mrf.mxu0
      %v3457 = vpop.f32.mrf.mxu0
      %v3458 = vadd.f32 %v3169, %v3457
      %v3459 = vpop.f32.mrf.mxu0
      %3460 = vmatprep.mubr.bf16.mxu0 %v1561
      %3461 = vmatmul.mubr.bf16.gmra.mxu0 %v1560
      %v3462 = vpop.f32.mrf.mxu0
      %v3463 = vadd.f32 %v3174, %v3462
      %v3464 = vpop.f32.mrf.mxu0
      %v3465 = vpop.f32.mrf.mxu0
      %v3466 = vadd.f32 %v3177, %v3465
      %v3467 = vpop.f32.mrf.mxu0
      %3468 = vmatprep.mubr.bf16.mxu0 %v1570
      %3469 = vmatmul.mubr.bf16.gmra.mxu0 %v1569
      %v3470 = vpop.f32.mrf.mxu0
      %v3471 = vadd.f32 %v3182, %v3470
      %v3472 = vpop.f32.mrf.mxu0
      %v3473 = vpop.f32.mrf.mxu0
      %v3474 = vadd.f32 %v3185, %v3473
      %v3475 = vpop.f32.mrf.mxu0
      %3476 = vmatprep.mubr.bf16.mxu0 %v1579
      %3477 = vmatmul.mubr.bf16.gmra.mxu0 %v1578
      %v3478 = vpop.f32.mrf.mxu0
      %v3479 = vadd.f32 %v3190, %v3478
      %v3480 = vpop.f32.mrf.mxu0
      %v3481 = vpop.f32.mrf.mxu0
      %v3482 = vadd.f32 %v3193, %v3481
      %v3483 = vpop.f32.mrf.mxu0
      %3484 = vmatprep.mubr.bf16.mxu0 %v1588
      %3485 = vmatmul.mubr.bf16.gmra.mxu0 %v1587
      %v3486 = vpop.f32.mrf.mxu0
      %v3487 = vadd.f32 %v3198, %v3486
      %v3488 = vpop.f32.mrf.mxu0
      %v3489 = vpop.f32.mrf.mxu0
      %v3490 = vadd.f32 %v3201, %v3489
      %v3491 = vpop.f32.mrf.mxu0
      %3492 = vmatprep.mubr.bf16.mxu0 %v1597
      %3493 = vmatmul.mubr.bf16.gmra.mxu0 %v1596
      %v3494 = vpop.f32.mrf.mxu0
      %v3495 = vadd.f32 %v3206, %v3494
      %v3496 = vpop.f32.mrf.mxu0
      %v3497 = vpop.f32.mrf.mxu0
      %v3498 = vadd.f32 %v3209, %v3497
      %v3499 = vpop.f32.mrf.mxu0
      %3500 = vmatprep.mubr.bf16.mxu0 %v1606
      %3501 = vmatmul.mubr.bf16.gmra.mxu0 %v1605
      %v3502 = vpop.f32.mrf.mxu0
      %v3503 = vadd.f32 %v3214, %v3502
      %v3504 = vpop.f32.mrf.mxu0
      %v3505 = vpop.f32.mrf.mxu0
      %v3506 = vadd.f32 %v3217, %v3505
      %v3507 = vpop.f32.mrf.mxu0
      %3508 = vmatprep.mubr.bf16.mxu0 %v1615
      %3509 = vmatmul.mubr.bf16.gmra.mxu0 %v1614
      %v3510 = vpop.f32.mrf.mxu0
      %v3511 = vadd.f32 %v3222, %v3510
      %v3512 = vpop.f32.mrf.mxu0
      %v3513 = vpop.f32.mrf.mxu0
      %v3514 = vadd.f32 %v3225, %v3513
      %v3515 = vpop.f32.mrf.mxu0
      %3516 = vmatprep.mubr.bf16.mxu0 %v1624
      %3517 = vmatmul.mubr.bf16.gmra.mxu0 %v1623
      %v3518 = vpop.f32.mrf.mxu0
      %v3519 = vadd.f32 %v3230, %v3518
      %v3520 = vpop.f32.mrf.mxu0
      %v3521 = vpop.f32.mrf.mxu0
      %v3522 = vadd.f32 %v3233, %v3521
      %v3523 = vpop.f32.mrf.mxu0
      %3524 = vmatprep.mubr.bf16.mxu0 %v1633
      %3525 = vmatmul.mubr.bf16.gmra.mxu0 %v1632
      %v3526 = vpop.f32.mrf.mxu0
      %v3527 = vadd.f32 %v3238, %v3526
      %v3528 = vpop.f32.mrf.mxu0
      %v3529 = vpop.f32.mrf.mxu0
      %v3530 = vadd.f32 %v3241, %v3529
      %v3531 = vpop.f32.mrf.mxu0
      %3532 = vmatprep.mubr.bf16.mxu0 %v1642
      %3533 = vmatmul.mubr.bf16.gmra.mxu0 %v1641
      %v3534 = vpop.f32.mrf.mxu0
      %v3535 = vadd.f32 %v3246, %v3534
      %v3536 = vpop.f32.mrf.mxu0
      %v3537 = vpop.f32.mrf.mxu0
      %v3538 = vadd.f32 %v3249, %v3537
      %v3539 = vpop.f32.mrf.mxu0
      %3540 = vmatprep.mubr.bf16.mxu0 %v1651
      %3541 = vmatmul.mubr.bf16.gmra.mxu0 %v1650
      %v3542 = vpop.f32.mrf.mxu0
      %v3543 = vadd.f32 %v3254, %v3542
      %v3544 = vpop.f32.mrf.mxu0
      %v3545 = vpop.f32.mrf.mxu0
      %v3546 = vadd.f32 %v3257, %v3545
      %v3547 = vpop.f32.mrf.mxu0
      %3548 = vmatprep.mubr.bf16.mxu0 %v1660
      %3549 = vmatmul.mubr.bf16.gmra.mxu0 %v1659
      %v3550 = vpop.f32.mrf.mxu0
      %v3551 = vadd.f32 %v3262, %v3550
      %v3552 = vpop.f32.mrf.mxu0
      %v3553 = vpop.f32.mrf.mxu0
      %v3554 = vadd.f32 %v3265, %v3553
      %v3555 = vpop.f32.mrf.mxu0
      %3556 = vmatprep.mubr.bf16.mxu0 %v1669
      %3557 = vmatmul.mubr.bf16.gmra.mxu0 %v1668
      %v3558 = vpop.f32.mrf.mxu0
      %v3559 = vadd.f32 %v3270, %v3558
      %v3560 = vpop.f32.mrf.mxu0
      %v3561 = vpop.f32.mrf.mxu0
      %v3562 = vadd.f32 %v3273, %v3561
      %v3563 = vpop.f32.mrf.mxu0
      %3564 = vmatprep.mubr.bf16.mxu0 %v1678
      %3565 = vmatmul.mubr.bf16.gmra.mxu0 %v1677
      %v3566 = vpop.f32.mrf.mxu0
      %v3567 = vadd.f32 %v3278, %v3566
      %v3568 = vpop.f32.mrf.mxu0
      %v3569 = vpop.f32.mrf.mxu0
      %v3570 = vadd.f32 %v3281, %v3569
      %v3571 = vpop.f32.mrf.mxu0
      %3572 = vmatprep.mubr.bf16.mxu0 %v1687
      %3573 = vmatmul.mubr.bf16.gmra.mxu0 %v1686
      %v3574 = vpop.f32.mrf.mxu0
      %v3575 = vadd.f32 %v3286, %v3574
      %v3576 = vpop.f32.mrf.mxu0
      %v3577 = vpop.f32.mrf.mxu0
      %v3578 = vadd.f32 %v3289, %v3577
      %v3579 = vpop.f32.mrf.mxu0
      %3580 = vmatprep.mubr.bf16.mxu0 %v1696
      %3581 = vmatmul.mubr.bf16.gmra.mxu0 %v1695
      %v3582 = vpop.f32.mrf.mxu0
      %v3583 = vadd.f32 %v3294, %v3582
      %v3584 = vpop.f32.mrf.mxu0
      %v3585 = vpop.f32.mrf.mxu0
      %v3586 = vadd.f32 %v3297, %v3585
      %v3587 = vpop.f32.mrf.mxu0
      %3588 = vmatprep.mubr.bf16.mxu0 %v1705
      %3589 = vmatmul.mubr.bf16.gmra.mxu0 %v1704
      %v3590 = vpop.f32.mrf.mxu0
      %v3591 = vadd.f32 %v3302, %v3590
      %v3592 = vpop.f32.mrf.mxu0
      %v3593 = vpop.f32.mrf.mxu0
      %v3594 = vadd.f32 %v3305, %v3593
      %v3595 = vpop.f32.mrf.mxu0
      %3596 = vmatprep.mubr.bf16.mxu0 %v1714
      %3597 = vmatmul.mubr.bf16.gmra.mxu0 %v1713
      %v3598 = vpop.f32.mrf.mxu0
      %v3599 = vadd.f32 %v3310, %v3598
      %v3600 = vpop.f32.mrf.mxu0
      %v3601 = vpop.f32.mrf.mxu0
      %v3602 = vadd.f32 %v3313, %v3601
      %v3603 = vpop.f32.mrf.mxu0
      %3604 = vmatprep.mubr.bf16.mxu0 %v1723
      %3605 = vmatmul.mubr.bf16.gmra.mxu0 %v1722
      %v3606 = vpop.f32.mrf.mxu0
      %v3607 = vadd.f32 %v3318, %v3606
      %v3608 = vpop.f32.mrf.mxu0
      %v3609 = vpop.f32.mrf.mxu0
      %v3610 = vadd.f32 %v3321, %v3609
      %v3611 = vpop.f32.mrf.mxu0
      %3612 = vmatprep.mubr.bf16.mxu0 %v1732
      %3613 = vmatmul.mubr.bf16.gmra.mxu0 %v1731
      %v3614 = vpop.f32.mrf.mxu0
      %v3615 = vadd.f32 %v3326, %v3614
      %v3616 = vpop.f32.mrf.mxu0
      %v3617 = vpop.f32.mrf.mxu0
      %v3618 = vadd.f32 %v3329, %v3617
      %v3619 = vpop.f32.mrf.mxu0
      %3620 = vmatprep.mubr.bf16.mxu0 %v1741
      %3621 = vmatmul.mubr.bf16.gmra.mxu0 %v1740
      %v3622 = vpop.f32.mrf.mxu0
      %v3623 = vadd.f32 %v3334, %v3622
      %v3624 = vpop.f32.mrf.mxu0
      %v3625 = vpop.f32.mrf.mxu0
      %v3626 = vadd.f32 %v3337, %v3625
      %v3627 = vpop.f32.mrf.mxu0
      %3628 = vmatprep.mubr.bf16.mxu0 %v1750
      %3629 = vmatmul.mubr.bf16.gmra.mxu0 %v1749
      %v3630 = vpop.f32.mrf.mxu0
      %v3631 = vadd.f32 %v3342, %v3630
      %v3632 = vpop.f32.mrf.mxu0
      %v3633 = vpop.f32.mrf.mxu0
      %v3634 = vadd.f32 %v3345, %v3633
      %v3635 = vpop.f32.mrf.mxu0
      %3636 = vmatprep.mubr.bf16.mxu0 %v1759
      %3637 = vmatmul.mubr.bf16.gmra.mxu0 %v1758
      %v3638 = vpop.f32.mrf.mxu0
      %v3639 = vadd.f32 %v3350, %v3638
      %v3640 = vpop.f32.mrf.mxu0
      %v3641 = vpop.f32.mrf.mxu0
      %v3642 = vadd.f32 %v3353, %v3641
      %v3643 = vpop.f32.mrf.mxu0
      %3644 = vmatprep.mubr.bf16.mxu0 %v1768
      %3645 = vmatmul.mubr.bf16.gmra.mxu0 %v1767
      %v3646 = vpop.f32.mrf.mxu0
      %v3647 = vadd.f32 %v3358, %v3646
      %v3648 = vpop.f32.mrf.mxu0
      %v3649 = vpop.f32.mrf.mxu0
      %v3650 = vadd.f32 %v3361, %v3649
      %v3651 = vpop.f32.mrf.mxu0
      %3652 = vmatprep.mubr.bf16.mxu0 %v1777
      %3653 = vmatmul.mubr.bf16.gmra.mxu0 %v1776
      %v3654 = vpop.f32.mrf.mxu0
      %v3655 = vadd.f32 %v3366, %v3654
      %v3656 = vpop.f32.mrf.mxu0
      %v3657 = vpop.f32.mrf.mxu0
      %v3658 = vadd.f32 %v3369, %v3657
      %v3659 = vpop.f32.mrf.mxu0
      %3660 = vmatprep.mubr.bf16.mxu0 %v1786
      %3661 = vmatmul.mubr.bf16.gmra.mxu0 %v1785
      %v3662 = vpop.f32.mrf.mxu0
      %v3663 = vadd.f32 %v3374, %v3662
      %v3664 = vpop.f32.mrf.mxu0
      %v3665 = vpop.f32.mrf.mxu0
      %v3666 = vadd.f32 %v3377, %v3665
      %v3667 = vpop.f32.mrf.mxu0
      %3668 = vmatprep.mubr.bf16.mxu0 %v1795
      %3669 = vmatmul.mubr.bf16.gmra.mxu0 %v1794
      %v3670 = vpop.f32.mrf.mxu0
      %v3671 = vadd.f32 %v3382, %v3670
      %v3672 = vpop.f32.mrf.mxu0
      %v3673 = vpop.f32.mrf.mxu0
      %v3674 = vadd.f32 %v3385, %v3673
      %v3675 = vpop.f32.mrf.mxu0
      %3676 = vmatprep.mubr.bf16.mxu0 %v1804
      %3677 = vmatmul.mubr.bf16.gmra.mxu0 %v1803
      %v3678 = vpop.f32.mrf.mxu0
      %v3679 = vadd.f32 %v3390, %v3678
      %v3680 = vpop.f32.mrf.mxu0
      %v3681 = vpop.f32.mrf.mxu0
      %v3682 = vadd.f32 %v3393, %v3681
      %v3683 = vpop.f32.mrf.mxu0
      %3684 = vmatprep.mubr.bf16.mxu0 %v1813
      %3685 = vmatmul.mubr.bf16.gmra.mxu0 %v1812
      %v3686 = vpop.f32.mrf.mxu0
      %v3687 = vadd.f32 %v3398, %v3686
      %v3688 = vpop.f32.mrf.mxu0
      %v3689 = vpop.f32.mrf.mxu0
      %v3690 = vadd.f32 %v3401, %v3689
      %v3691 = vpop.f32.mrf.mxu0
      %3692 = vmatprep.mubr.bf16.mxu0 %v1822
      %3693 = vmatmul.mubr.bf16.gmra.mxu0 %v1821
      %v3694 = vpop.f32.mrf.mxu0
      %v3695 = vadd.f32 %v3406, %v3694
      %v3696 = vpop.f32.mrf.mxu0
      %v3697 = vpop.f32.mrf.mxu0
      %v3698 = vadd.f32 %v3409, %v3697
      %v3699 = vpop.f32.mrf.mxu0
      %3700 = vmatprep.mubr.bf16.mxu0 %v1831
      %3701 = vmatmul.mubr.bf16.gmra.mxu0 %v1830
      %v3702 = vpop.f32.mrf.mxu0
      %v3703 = vadd.f32 %v3414, %v3702
      %v3704 = vpop.f32.mrf.mxu0
      %v3705 = vpop.f32.mrf.mxu0
      %v3706 = vadd.f32 %v3417, %v3705
      %v3707 = vpop.f32.mrf.mxu0
      %3708 = vdwg.mxu0
      %3709 = vmatprep.subr.bf16.mxu0 0
      %3710 = vmatpush1.bf16.msra.mxu0 %v2480
      %3711 = vmatprep.subr.bf16.mxu0 0
      %3712 = vmatpush1.bf16.msra.mxu0 %v2479
      %3713 = vmatprep.subr.bf16.mxu0 0
      %3714 = vmatpush1.bf16.msra.mxu0 %v2478
      %3715 = vmatprep.subr.bf16.mxu0 0
      %3716 = vmatpush1.bf16.msra.mxu0 %v2477
      %3717 = vmatprep.subr.bf16.mxu0 0
      %3718 = vmatpush1.bf16.msra.mxu0 %v2476
      %3719 = vmatprep.subr.bf16.mxu0 0
      %3720 = vmatpush1.bf16.msra.mxu0 %v2475
      %3721 = vmatprep.subr.bf16.mxu0 0
      %3722 = vmatpush1.bf16.msra.mxu0 %v2474
      %3723 = vmatprep.subr.bf16.mxu0 0
      %3724 = vmatpush1.bf16.msra.mxu0 %v2473
      %3725 = vmatprep.subr.bf16.mxu0 0
      %3726 = vmatpush2.bf16.msra.mxu0 0
      %3727 = vmatprep.subr.bf16.mxu0 0
      %3728 = vmatpush2.bf16.msra.mxu0 0
      %3729 = vmatprep.subr.bf16.mxu0 0
      %3730 = vmatpush2.bf16.msra.mxu0 0
      %3731 = vmatprep.subr.bf16.mxu0 0
      %3732 = vmatpush2.bf16.msra.mxu0 0
      %3733 = vmatprep.subr.bf16.mxu0 0
      %3734 = vmatpush2.bf16.msra.mxu0 0
      %3735 = vmatprep.subr.bf16.mxu0 0
      %3736 = vmatpush2.bf16.msra.mxu0 0
      %3737 = vmatprep.subr.bf16.mxu0 0
      %3738 = vmatpush2.bf16.msra.mxu0 0
      %3739 = vmatprep.subr.bf16.mxu0 0
      %3740 = vmatpush2.bf16.msra.mxu0 0
      %3741 = vmatprep.mubr.bf16.mxu0 0
      %3742 = vmatmul.mubr.bf16.gmra.mxu0 %v1553
      %v3743 = vpop.f32.mrf.mxu0
      %v3744 = vadd.f32 %v3455, %v3743
      %v3745 = vpop.f32.mrf.mxu0
      %v3746 = vpop.f32.mrf.mxu0
      %v3747 = vadd.f32 %v3458, %v3746
      %v3748 = vpop.f32.mrf.mxu0
      %3749 = vmatprep.mubr.bf16.mxu0 0
      %3750 = vmatmul.mubr.bf16.gmra.mxu0 %v1562
      %v3751 = vpop.f32.mrf.mxu0
      %v3752 = vadd.f32 %v3463, %v3751
      %v3753 = vpop.f32.mrf.mxu0
      %v3754 = vpop.f32.mrf.mxu0
      %v3755 = vadd.f32 %v3466, %v3754
      %v3756 = vpop.f32.mrf.mxu0
      %3757 = vmatprep.mubr.bf16.mxu0 0
      %3758 = vmatmul.mubr.bf16.gmra.mxu0 %v1571
      %v3759 = vpop.f32.mrf.mxu0
      %v3760 = vadd.f32 %v3471, %v3759
      %v3761 = vpop.f32.mrf.mxu0
      %v3762 = vpop.f32.mrf.mxu0
      %v3763 = vadd.f32 %v3474, %v3762
      %v3764 = vpop.f32.mrf.mxu0
      %3765 = vmatprep.mubr.bf16.mxu0 0
      %3766 = vmatmul.mubr.bf16.gmra.mxu0 %v1580
      %v3767 = vpop.f32.mrf.mxu0
      %v3768 = vadd.f32 %v3479, %v3767
      %v3769 = vpop.f32.mrf.mxu0
      %v3770 = vpop.f32.mrf.mxu0
      %v3771 = vadd.f32 %v3482, %v3770
      %v3772 = vpop.f32.mrf.mxu0
      %3773 = vmatprep.mubr.bf16.mxu0 0
      %3774 = vmatmul.mubr.bf16.gmra.mxu0 %v1589
      %v3775 = vpop.f32.mrf.mxu0
      %v3776 = vadd.f32 %v3487, %v3775
      %v3777 = vpop.f32.mrf.mxu0
      %v3778 = vpop.f32.mrf.mxu0
      %v3779 = vadd.f32 %v3490, %v3778
      %v3780 = vpop.f32.mrf.mxu0
      %3781 = vmatprep.mubr.bf16.mxu0 0
      %3782 = vmatmul.mubr.bf16.gmra.mxu0 %v1598
      %v3783 = vpop.f32.mrf.mxu0
      %v3784 = vadd.f32 %v3495, %v3783
      %v3785 = vpop.f32.mrf.mxu0
      %v3786 = vpop.f32.mrf.mxu0
      %v3787 = vadd.f32 %v3498, %v3786
      %v3788 = vpop.f32.mrf.mxu0
      %3789 = vmatprep.mubr.bf16.mxu0 0
      %3790 = vmatmul.mubr.bf16.gmra.mxu0 %v1607
      %v3791 = vpop.f32.mrf.mxu0
      %v3792 = vadd.f32 %v3503, %v3791
      %v3793 = vpop.f32.mrf.mxu0
      %v3794 = vpop.f32.mrf.mxu0
      %v3795 = vadd.f32 %v3506, %v3794
      %v3796 = vpop.f32.mrf.mxu0
      %3797 = vmatprep.mubr.bf16.mxu0 0
      %3798 = vmatmul.mubr.bf16.gmra.mxu0 %v1616
      %v3799 = vpop.f32.mrf.mxu0
      %v3800 = vadd.f32 %v3511, %v3799
      %v3801 = vpop.f32.mrf.mxu0
      %v3802 = vpop.f32.mrf.mxu0
      %v3803 = vadd.f32 %v3514, %v3802
      %v3804 = vpop.f32.mrf.mxu0
      %3805 = vmatprep.mubr.bf16.mxu0 0
      %3806 = vmatmul.mubr.bf16.gmra.mxu0 %v1625
      %v3807 = vpop.f32.mrf.mxu0
      %v3808 = vadd.f32 %v3519, %v3807
      %v3809 = vpop.f32.mrf.mxu0
      %v3810 = vpop.f32.mrf.mxu0
      %v3811 = vadd.f32 %v3522, %v3810
      %v3812 = vpop.f32.mrf.mxu0
      %3813 = vmatprep.mubr.bf16.mxu0 0
      %3814 = vmatmul.mubr.bf16.gmra.mxu0 %v1634
      %v3815 = vpop.f32.mrf.mxu0
      %v3816 = vadd.f32 %v3527, %v3815
      %v3817 = vpop.f32.mrf.mxu0
      %v3818 = vpop.f32.mrf.mxu0
      %v3819 = vadd.f32 %v3530, %v3818
      %v3820 = vpop.f32.mrf.mxu0
      %3821 = vmatprep.mubr.bf16.mxu0 0
      %3822 = vmatmul.mubr.bf16.gmra.mxu0 %v1643
      %v3823 = vpop.f32.mrf.mxu0
      %v3824 = vadd.f32 %v3535, %v3823
      %v3825 = vpop.f32.mrf.mxu0
      %v3826 = vpop.f32.mrf.mxu0
      %v3827 = vadd.f32 %v3538, %v3826
      %v3828 = vpop.f32.mrf.mxu0
      %3829 = vmatprep.mubr.bf16.mxu0 0
      %3830 = vmatmul.mubr.bf16.gmra.mxu0 %v1652
      %v3831 = vpop.f32.mrf.mxu0
      %v3832 = vadd.f32 %v3543, %v3831
      %v3833 = vpop.f32.mrf.mxu0
      %v3834 = vpop.f32.mrf.mxu0
      %v3835 = vadd.f32 %v3546, %v3834
      %v3836 = vpop.f32.mrf.mxu0
      %3837 = vmatprep.mubr.bf16.mxu0 0
      %3838 = vmatmul.mubr.bf16.gmra.mxu0 %v1661
      %v3839 = vpop.f32.mrf.mxu0
      %v3840 = vadd.f32 %v3551, %v3839
      %v3841 = vpop.f32.mrf.mxu0
      %v3842 = vpop.f32.mrf.mxu0
      %v3843 = vadd.f32 %v3554, %v3842
      %v3844 = vpop.f32.mrf.mxu0
      %3845 = vmatprep.mubr.bf16.mxu0 0
      %3846 = vmatmul.mubr.bf16.gmra.mxu0 %v1670
      %v3847 = vpop.f32.mrf.mxu0
      %v3848 = vadd.f32 %v3559, %v3847
      %v3849 = vpop.f32.mrf.mxu0
      %v3850 = vpop.f32.mrf.mxu0
      %v3851 = vadd.f32 %v3562, %v3850
      %v3852 = vpop.f32.mrf.mxu0
      %3853 = vmatprep.mubr.bf16.mxu0 0
      %3854 = vmatmul.mubr.bf16.gmra.mxu0 %v1679
      %v3855 = vpop.f32.mrf.mxu0
      %v3856 = vadd.f32 %v3567, %v3855
      %v3857 = vpop.f32.mrf.mxu0
      %v3858 = vpop.f32.mrf.mxu0
      %v3859 = vadd.f32 %v3570, %v3858
      %v3860 = vpop.f32.mrf.mxu0
      %3861 = vmatprep.mubr.bf16.mxu0 0
      %3862 = vmatmul.mubr.bf16.gmra.mxu0 %v1688
      %v3863 = vpop.f32.mrf.mxu0
      %v3864 = vadd.f32 %v3575, %v3863
      %v3865 = vpop.f32.mrf.mxu0
      %v3866 = vpop.f32.mrf.mxu0
      %v3867 = vadd.f32 %v3578, %v3866
      %v3868 = vpop.f32.mrf.mxu0
      %3869 = vmatprep.mubr.bf16.mxu0 0
      %3870 = vmatmul.mubr.bf16.gmra.mxu0 %v1697
      %v3871 = vpop.f32.mrf.mxu0
      %v3872 = vadd.f32 %v3583, %v3871
      %v3873 = vpop.f32.mrf.mxu0
      %v3874 = vpop.f32.mrf.mxu0
      %v3875 = vadd.f32 %v3586, %v3874
      %v3876 = vpop.f32.mrf.mxu0
      %3877 = vmatprep.mubr.bf16.mxu0 0
      %3878 = vmatmul.mubr.bf16.gmra.mxu0 %v1706
      %v3879 = vpop.f32.mrf.mxu0
      %v3880 = vadd.f32 %v3591, %v3879
      %v3881 = vpop.f32.mrf.mxu0
      %v3882 = vpop.f32.mrf.mxu0
      %v3883 = vadd.f32 %v3594, %v3882
      %v3884 = vpop.f32.mrf.mxu0
      %3885 = vmatprep.mubr.bf16.mxu0 0
      %3886 = vmatmul.mubr.bf16.gmra.mxu0 %v1715
      %v3887 = vpop.f32.mrf.mxu0
      %v3888 = vadd.f32 %v3599, %v3887
      %v3889 = vpop.f32.mrf.mxu0
      %v3890 = vpop.f32.mrf.mxu0
      %v3891 = vadd.f32 %v3602, %v3890
      %v3892 = vpop.f32.mrf.mxu0
      %3893 = vmatprep.mubr.bf16.mxu0 0
      %3894 = vmatmul.mubr.bf16.gmra.mxu0 %v1724
      %v3895 = vpop.f32.mrf.mxu0
      %v3896 = vadd.f32 %v3607, %v3895
      %v3897 = vpop.f32.mrf.mxu0
      %v3898 = vpop.f32.mrf.mxu0
      %v3899 = vadd.f32 %v3610, %v3898
      %v3900 = vpop.f32.mrf.mxu0
      %3901 = vmatprep.mubr.bf16.mxu0 0
      %3902 = vmatmul.mubr.bf16.gmra.mxu0 %v1733
      %v3903 = vpop.f32.mrf.mxu0
      %v3904 = vadd.f32 %v3615, %v3903
      %v3905 = vpop.f32.mrf.mxu0
      %v3906 = vpop.f32.mrf.mxu0
      %v3907 = vadd.f32 %v3618, %v3906
      %v3908 = vpop.f32.mrf.mxu0
      %3909 = vmatprep.mubr.bf16.mxu0 0
      %3910 = vmatmul.mubr.bf16.gmra.mxu0 %v1742
      %v3911 = vpop.f32.mrf.mxu0
      %v3912 = vadd.f32 %v3623, %v3911
      %v3913 = vpop.f32.mrf.mxu0
      %v3914 = vpop.f32.mrf.mxu0
      %v3915 = vadd.f32 %v3626, %v3914
      %v3916 = vpop.f32.mrf.mxu0
      %3917 = vmatprep.mubr.bf16.mxu0 0
      %3918 = vmatmul.mubr.bf16.gmra.mxu0 %v1751
      %v3919 = vpop.f32.mrf.mxu0
      %v3920 = vadd.f32 %v3631, %v3919
      %v3921 = vpop.f32.mrf.mxu0
      %v3922 = vpop.f32.mrf.mxu0
      %v3923 = vadd.f32 %v3634, %v3922
      %v3924 = vpop.f32.mrf.mxu0
      %3925 = vmatprep.mubr.bf16.mxu0 0
      %3926 = vmatmul.mubr.bf16.gmra.mxu0 %v1760
      %v3927 = vpop.f32.mrf.mxu0
      %v3928 = vadd.f32 %v3639, %v3927
      %v3929 = vpop.f32.mrf.mxu0
      %v3930 = vpop.f32.mrf.mxu0
      %v3931 = vadd.f32 %v3642, %v3930
      %v3932 = vpop.f32.mrf.mxu0
      %3933 = vmatprep.mubr.bf16.mxu0 0
      %3934 = vmatmul.mubr.bf16.gmra.mxu0 %v1769
      %v3935 = vpop.f32.mrf.mxu0
      %v3936 = vadd.f32 %v3647, %v3935
      %v3937 = vpop.f32.mrf.mxu0
      %v3938 = vpop.f32.mrf.mxu0
      %v3939 = vadd.f32 %v3650, %v3938
      %v3940 = vpop.f32.mrf.mxu0
      %3941 = vmatprep.mubr.bf16.mxu0 0
      %3942 = vmatmul.mubr.bf16.gmra.mxu0 %v1778
      %v3943 = vpop.f32.mrf.mxu0
      %v3944 = vadd.f32 %v3655, %v3943
      %v3945 = vpop.f32.mrf.mxu0
      %v3946 = vpop.f32.mrf.mxu0
      %v3947 = vadd.f32 %v3658, %v3946
      %v3948 = vpop.f32.mrf.mxu0
      %3949 = vmatprep.mubr.bf16.mxu0 0
      %3950 = vmatmul.mubr.bf16.gmra.mxu0 %v1787
      %v3951 = vpop.f32.mrf.mxu0
      %v3952 = vadd.f32 %v3663, %v3951
      %v3953 = vpop.f32.mrf.mxu0
      %v3954 = vpop.f32.mrf.mxu0
      %v3955 = vadd.f32 %v3666, %v3954
      %v3956 = vpop.f32.mrf.mxu0
      %3957 = vmatprep.mubr.bf16.mxu0 0
      %3958 = vmatmul.mubr.bf16.gmra.mxu0 %v1796
      %v3959 = vpop.f32.mrf.mxu0
      %v3960 = vadd.f32 %v3671, %v3959
      %v3961 = vpop.f32.mrf.mxu0
      %v3962 = vpop.f32.mrf.mxu0
      %v3963 = vadd.f32 %v3674, %v3962
      %v3964 = vpop.f32.mrf.mxu0
      %3965 = vmatprep.mubr.bf16.mxu0 0
      %3966 = vmatmul.mubr.bf16.gmra.mxu0 %v1805
      %v3967 = vpop.f32.mrf.mxu0
      %v3968 = vadd.f32 %v3679, %v3967
      %v3969 = vpop.f32.mrf.mxu0
      %v3970 = vpop.f32.mrf.mxu0
      %v3971 = vadd.f32 %v3682, %v3970
      %v3972 = vpop.f32.mrf.mxu0
      %3973 = vmatprep.mubr.bf16.mxu0 0
      %3974 = vmatmul.mubr.bf16.gmra.mxu0 %v1814
      %v3975 = vpop.f32.mrf.mxu0
      %v3976 = vadd.f32 %v3687, %v3975
      %v3977 = vpop.f32.mrf.mxu0
      %v3978 = vpop.f32.mrf.mxu0
      %v3979 = vadd.f32 %v3690, %v3978
      %v3980 = vpop.f32.mrf.mxu0
      %3981 = vmatprep.mubr.bf16.mxu0 0
      %3982 = vmatmul.mubr.bf16.gmra.mxu0 %v1823
      %v3983 = vpop.f32.mrf.mxu0
      %v3984 = vadd.f32 %v3695, %v3983
      %v3985 = vpop.f32.mrf.mxu0
      %v3986 = vpop.f32.mrf.mxu0
      %v3987 = vadd.f32 %v3698, %v3986
      %v3988 = vpop.f32.mrf.mxu0
      %3989 = vmatprep.mubr.bf16.mxu0 0
      %3990 = vmatmul.mubr.bf16.gmra.mxu0 %v1832
      %v3991 = vpop.f32.mrf.mxu0
      %v3992 = vadd.f32 %v3703, %v3991
      %v3993 = vpop.f32.mrf.mxu0
      %v3994 = vpop.f32.mrf.mxu0
      %v3995 = vadd.f32 %v3706, %v3994
      %v3996 = vpop.f32.mrf.mxu0
      %3997 = vdwg.mxu0
      %v3998 = vmax.f32 %v3744, 0.0
      %v3999 = vmax.f32 %v3747, 0.0
      %v4000 = vmax.f32 %v3752, 0.0
      %v4001 = vmax.f32 %v3755, 0.0
      %v4002 = vmax.f32 %v3760, 0.0
      %v4003 = vmax.f32 %v3763, 0.0
      %v4004 = vmax.f32 %v3768, 0.0
      %v4005 = vmax.f32 %v3771, 0.0
      %v4006 = vmax.f32 %v3776, 0.0
      %v4007 = vmax.f32 %v3779, 0.0
      %v4008 = vmax.f32 %v3784, 0.0
      %v4009 = vmax.f32 %v3787, 0.0
      %v4010 = vmax.f32 %v3792, 0.0
      %v4011 = vmax.f32 %v3795, 0.0
      %v4012 = vmax.f32 %v3800, 0.0
      %v4013 = vmax.f32 %v3803, 0.0
      %v4014 = vmax.f32 %v3808, 0.0
      %v4015 = vmax.f32 %v3811, 0.0
      %v4016 = vmax.f32 %v3816, 0.0
      %v4017 = vmax.f32 %v3819, 0.0
      %v4018 = vmax.f32 %v3824, 0.0
      %v4019 = vmax.f32 %v3827, 0.0
      %v4020 = vmax.f32 %v3832, 0.0
      %v4021 = vmax.f32 %v3835, 0.0
      %v4022 = vmax.f32 %v3840, 0.0
      %v4023 = vmax.f32 %v3843, 0.0
      %v4024 = vmax.f32 %v3848, 0.0
      %v4025 = vmax.f32 %v3851, 0.0
      %v4026 = vmax.f32 %v3856, 0.0
      %v4027 = vmax.f32 %v3859, 0.0
      %v4028 = vmax.f32 %v3864, 0.0
      %v4029 = vmax.f32 %v3867, 0.0
      %v4030 = vmax.f32 %v3872, 0.0
      %v4031 = vmax.f32 %v3875, 0.0
      %v4032 = vmax.f32 %v3880, 0.0
      %v4033 = vmax.f32 %v3883, 0.0
      %v4034 = vmax.f32 %v3888, 0.0
      %v4035 = vmax.f32 %v3891, 0.0
      %v4036 = vmax.f32 %v3896, 0.0
      %v4037 = vmax.f32 %v3899, 0.0
      %v4038 = vmax.f32 %v3904, 0.0
      %v4039 = vmax.f32 %v3907, 0.0
      %v4040 = vmax.f32 %v3912, 0.0
      %v4041 = vmax.f32 %v3915, 0.0
      %v4042 = vmax.f32 %v3920, 0.0
      %v4043 = vmax.f32 %v3923, 0.0
      %v4044 = vmax.f32 %v3928, 0.0
      %v4045 = vmax.f32 %v3931, 0.0
      %v4046 = vmax.f32 %v3936, 0.0
      %v4047 = vmax.f32 %v3939, 0.0
      %v4048 = vmax.f32 %v3944, 0.0
      %v4049 = vmax.f32 %v3947, 0.0
      %v4050 = vmax.f32 %v3952, 0.0
      %v4051 = vmax.f32 %v3955, 0.0
      %v4052 = vmax.f32 %v3960, 0.0
      %v4053 = vmax.f32 %v3963, 0.0
      %v4054 = vmax.f32 %v3968, 0.0
      %v4055 = vmax.f32 %v3971, 0.0
      %v4056 = vmax.f32 %v3976, 0.0
      %v4057 = vmax.f32 %v3979, 0.0
      %v4058 = vmax.f32 %v3984, 0.0
      %v4059 = vmax.f32 %v3987, 0.0
      %v4060 = vmax.f32 %v3992, 0.0
      %v4061 = vmax.f32 %v3995, 0.0
      %v4062 = vpack.c.bf16 %v3999, %v3998
      %v4063 = vpack.c.bf16 %v4001, %v4000
      %v4064 = vpack.c.bf16 %v4003, %v4002
      %v4065 = vpack.c.bf16 %v4005, %v4004
      %v4066 = vpack.c.bf16 %v4007, %v4006
      %v4067 = vpack.c.bf16 %v4009, %v4008
      %v4068 = vpack.c.bf16 %v4011, %v4010
      %v4069 = vpack.c.bf16 %v4013, %v4012
      %v4070 = vpack.c.bf16 %v4015, %v4014
      %v4071 = vpack.c.bf16 %v4017, %v4016
      %v4072 = vpack.c.bf16 %v4019, %v4018
      %v4073 = vpack.c.bf16 %v4021, %v4020
      %v4074 = vpack.c.bf16 %v4023, %v4022
      %v4075 = vpack.c.bf16 %v4025, %v4024
      %v4076 = vpack.c.bf16 %v4027, %v4026
      %v4077 = vpack.c.bf16 %v4029, %v4028
      %v4078 = vpack.c.bf16 %v4031, %v4030
      %v4079 = vpack.c.bf16 %v4033, %v4032
      %v4080 = vpack.c.bf16 %v4035, %v4034
      %v4081 = vpack.c.bf16 %v4037, %v4036
      %v4082 = vpack.c.bf16 %v4039, %v4038
      %v4083 = vpack.c.bf16 %v4041, %v4040
      %v4084 = vpack.c.bf16 %v4043, %v4042
      %v4085 = vpack.c.bf16 %v4045, %v4044
      %v4086 = vpack.c.bf16 %v4047, %v4046
      %v4087 = vpack.c.bf16 %v4049, %v4048
      %v4088 = vpack.c.bf16 %v4051, %v4050
      %v4089 = vpack.c.bf16 %v4053, %v4052
      %v4090 = vpack.c.bf16 %v4055, %v4054
      %v4091 = vpack.c.bf16 %v4057, %v4056
      %v4092 = vpack.c.bf16 %v4059, %v4058
      %v4093 = vpack.c.bf16 %v4061, %v4060
      %v4126 = vunpack.c.l.b16 %v4062
      %v4127 = vunpack.c.h.b16 %v4062
      %v4128 = vunpack.c.l.b16 %v4063
      %v4129 = vunpack.c.h.b16 %v4063
      %v4130 = vunpack.c.l.b16 %v4064
      %v4131 = vunpack.c.h.b16 %v4064
      %v4132 = vunpack.c.l.b16 %v4065
      %v4133 = vunpack.c.h.b16 %v4065
      %v4134 = vunpack.c.l.b16 %v4066
      %v4135 = vunpack.c.h.b16 %v4066
      %v4136 = vunpack.c.l.b16 %v4067
      %v4137 = vunpack.c.h.b16 %v4067
      %v4138 = vunpack.c.l.b16 %v4068
      %v4139 = vunpack.c.h.b16 %v4068
      %v4140 = vunpack.c.l.b16 %v4069
      %v4141 = vunpack.c.h.b16 %v4069
      %v4142 = vunpack.c.l.b16 %v4070
      %v4143 = vunpack.c.h.b16 %v4070
      %v4144 = vunpack.c.l.b16 %v4071
      %v4145 = vunpack.c.h.b16 %v4071
      %v4146 = vunpack.c.l.b16 %v4072
      %v4147 = vunpack.c.h.b16 %v4072
      %v4148 = vunpack.c.l.b16 %v4073
      %v4149 = vunpack.c.h.b16 %v4073
      %v4150 = vunpack.c.l.b16 %v4074
      %v4151 = vunpack.c.h.b16 %v4074
      %v4152 = vunpack.c.l.b16 %v4075
      %v4153 = vunpack.c.h.b16 %v4075
      %v4154 = vunpack.c.l.b16 %v4076
      %v4155 = vunpack.c.h.b16 %v4076
      %v4156 = vunpack.c.l.b16 %v4077
      %v4157 = vunpack.c.h.b16 %v4077
      %v4158 = vunpack.c.l.b16 %v4078
      %v4159 = vunpack.c.h.b16 %v4078
      %v4160 = vunpack.c.l.b16 %v4079
      %v4161 = vunpack.c.h.b16 %v4079
      %v4162 = vunpack.c.l.b16 %v4080
      %v4163 = vunpack.c.h.b16 %v4080
      %v4164 = vunpack.c.l.b16 %v4081
      %v4165 = vunpack.c.h.b16 %v4081
      %v4166 = vunpack.c.l.b16 %v4082
      %v4167 = vunpack.c.h.b16 %v4082
      %v4168 = vunpack.c.l.b16 %v4083
      %v4169 = vunpack.c.h.b16 %v4083
      %v4170 = vunpack.c.l.b16 %v4084
      %v4171 = vunpack.c.h.b16 %v4084
      %v4172 = vunpack.c.l.b16 %v4085
      %v4173 = vunpack.c.h.b16 %v4085
      %v4174 = vunpack.c.l.b16 %v4086
      %v4175 = vunpack.c.h.b16 %v4086
      %v4176 = vunpack.c.l.b16 %v4087
      %v4177 = vunpack.c.h.b16 %v4087
      %v4178 = vunpack.c.l.b16 %v4088
      %v4179 = vunpack.c.h.b16 %v4088
      %v4180 = vunpack.c.l.b16 %v4089
      %v4181 = vunpack.c.h.b16 %v4089
      %v4182 = vunpack.c.l.b16 %v4090
      %v4183 = vunpack.c.h.b16 %v4090
      %v4184 = vunpack.c.l.b16 %v4091
      %v4185 = vunpack.c.h.b16 %v4091
      %v4186 = vunpack.c.l.b16 %v4092
      %v4187 = vunpack.c.h.b16 %v4092
      %v4188 = vunpack.c.l.b16 %v4093
      %v4189 = vunpack.c.h.b16 %v4093
      %v4190 = vpack.c.b16 %v4126, %v4126
      %v4191 = vpack.c.b16 %v4127, %v4127
      %v4192 = vpack.c.b16 %v4128, %v4128
      %v4193 = vpack.c.b16 %v4129, %v4129
      %v4194 = vpack.c.b16 %v4130, %v4130
      %v4195 = vpack.c.b16 %v4131, %v4131
      %v4196 = vpack.c.b16 %v4132, %v4132
      %v4197 = vpack.c.b16 %v4133, %v4133
      %v4198 = vpack.c.b16 %v4134, %v4134
      %v4199 = vpack.c.b16 %v4135, %v4135
      %v4200 = vpack.c.b16 %v4136, %v4136
      %v4201 = vpack.c.b16 %v4137, %v4137
      %v4202 = vpack.c.b16 %v4138, %v4138
      %v4203 = vpack.c.b16 %v4139, %v4139
      %v4204 = vpack.c.b16 %v4140, %v4140
      %v4205 = vpack.c.b16 %v4141, %v4141
      %v4206 = vpack.c.b16 %v4142, %v4142
      %v4207 = vpack.c.b16 %v4143, %v4143
      %v4208 = vpack.c.b16 %v4144, %v4144
      %v4209 = vpack.c.b16 %v4145, %v4145
      %v4210 = vpack.c.b16 %v4146, %v4146
      %v4211 = vpack.c.b16 %v4147, %v4147
      %v4212 = vpack.c.b16 %v4148, %v4148
      %v4213 = vpack.c.b16 %v4149, %v4149
      %v4214 = vpack.c.b16 %v4150, %v4150
      %v4215 = vpack.c.b16 %v4151, %v4151
      %v4216 = vpack.c.b16 %v4152, %v4152
      %v4217 = vpack.c.b16 %v4153, %v4153
      %v4218 = vpack.c.b16 %v4154, %v4154
      %v4219 = vpack.c.b16 %v4155, %v4155
      %v4220 = vpack.c.b16 %v4156, %v4156
      %v4221 = vpack.c.b16 %v4157, %v4157
      %v4222 = vpack.c.b16 %v4158, %v4158
      %v4223 = vpack.c.b16 %v4159, %v4159
      %v4224 = vpack.c.b16 %v4160, %v4160
      %v4225 = vpack.c.b16 %v4161, %v4161
      %v4226 = vpack.c.b16 %v4162, %v4162
      %v4227 = vpack.c.b16 %v4163, %v4163
      %v4228 = vpack.c.b16 %v4164, %v4164
      %v4229 = vpack.c.b16 %v4165, %v4165
      %v4230 = vpack.c.b16 %v4166, %v4166
      %v4231 = vpack.c.b16 %v4167, %v4167
      %v4232 = vpack.c.b16 %v4168, %v4168
      %v4233 = vpack.c.b16 %v4169, %v4169
      %v4234 = vpack.c.b16 %v4170, %v4170
      %v4235 = vpack.c.b16 %v4171, %v4171
      %v4236 = vpack.c.b16 %v4172, %v4172
      %v4237 = vpack.c.b16 %v4173, %v4173
      %v4238 = vpack.c.b16 %v4174, %v4174
      %v4239 = vpack.c.b16 %v4175, %v4175
      %v4240 = vpack.c.b16 %v4176, %v4176
      %v4241 = vpack.c.b16 %v4177, %v4177
      %v4242 = vpack.c.b16 %v4178, %v4178
      %v4243 = vpack.c.b16 %v4179, %v4179
      %v4244 = vpack.c.b16 %v4180, %v4180
      %v4245 = vpack.c.b16 %v4181, %v4181
      %v4246 = vpack.c.b16 %v4182, %v4182
      %v4247 = vpack.c.b16 %v4183, %v4183
      %v4248 = vpack.c.b16 %v4184, %v4184
      %v4249 = vpack.c.b16 %v4185, %v4185
      %v4250 = vpack.c.b16 %v4186, %v4186
      %v4251 = vpack.c.b16 %v4187, %v4187
      %v4252 = vpack.c.b16 %v4188, %v4188
      %v4253 = vpack.c.b16 %v4189, %v4189
      %4318 = vst [vmem:[%s175] sm:$0xf] %v4190
      %4319 = vst [vmem:[%s175 + $0x4] sm:$0xf] %v4191
      %4320 = vst [vmem:[%s175 + $0x8] sm:$0xf] %v4192
      %4321 = vst [vmem:[%s175 + $0xc] sm:$0xf] %v4193
      %4322 = vst [vmem:[%s175 + $0x10] sm:$0xf] %v4194
      %4323 = vst [vmem:[%s175 + $0x14] sm:$0xf] %v4195
      %4324 = vst [vmem:[%s175 + $0x18] sm:$0xf] %v4196
      %4325 = vst [vmem:[%s175 + $0x1c] sm:$0xf] %v4197
      %4326 = vst [vmem:[%s175 + $0x20] sm:$0xf] %v4198
      %4327 = vst [vmem:[%s175 + $0x24] sm:$0xf] %v4199
      %4328 = vst [vmem:[%s175 + $0x28] sm:$0xf] %v4200
      %4329 = vst [vmem:[%s175 + $0x2c] sm:$0xf] %v4201
      %4330 = vst [vmem:[%s175 + $0x30] sm:$0xf] %v4202
      %4331 = vst [vmem:[%s175 + $0x34] sm:$0xf] %v4203
      %4332 = vst [vmem:[%s175 + $0x38] sm:$0xf] %v4204
      %4333 = vst [vmem:[%s175 + $0x3c] sm:$0xf] %v4205
      %4334 = vst [vmem:[%s175 + $0x40] sm:$0xf] %v4206
      %4335 = vst [vmem:[%s175 + $0x44] sm:$0xf] %v4207
      %4336 = vst [vmem:[%s175 + $0x48] sm:$0xf] %v4208
      %4337 = vst [vmem:[%s175 + $0x4c] sm:$0xf] %v4209
      %4338 = vst [vmem:[%s175 + $0x50] sm:$0xf] %v4210
      %4339 = vst [vmem:[%s175 + $0x54] sm:$0xf] %v4211
      %4340 = vst [vmem:[%s175 + $0x58] sm:$0xf] %v4212
      %4341 = vst [vmem:[%s175 + $0x5c] sm:$0xf] %v4213
      %4342 = vst [vmem:[%s175 + $0x60] sm:$0xf] %v4214
      %4343 = vst [vmem:[%s175 + $0x64] sm:$0xf] %v4215
      %4344 = vst [vmem:[%s175 + $0x68] sm:$0xf] %v4216
      %4345 = vst [vmem:[%s175 + $0x6c] sm:$0xf] %v4217
      %4346 = vst [vmem:[%s175 + $0x70] sm:$0xf] %v4218
      %4347 = vst [vmem:[%s175 + $0x74] sm:$0xf] %v4219
      %4348 = vst [vmem:[%s175 + $0x78] sm:$0xf] %v4220
      %4349 = vst [vmem:[%s175 + $0x7c] sm:$0xf] %v4221
      %4350 = vst [vmem:[%s175 + $0x80] sm:$0xf] %v4222
      %4351 = vst [vmem:[%s175 + $0x84] sm:$0xf] %v4223
      %4352 = vst [vmem:[%s175 + $0x88] sm:$0xf] %v4224
      %4353 = vst [vmem:[%s175 + $0x8c] sm:$0xf] %v4225
      %4354 = vst [vmem:[%s175 + $0x90] sm:$0xf] %v4226
      %4355 = vst [vmem:[%s175 + $0x94] sm:$0xf] %v4227
      %4356 = vst [vmem:[%s175 + $0x98] sm:$0xf] %v4228
      %4357 = vst [vmem:[%s175 + $0x9c] sm:$0xf] %v4229
      %4358 = vst [vmem:[%s175 + $0xa0] sm:$0xf] %v4230
      %4359 = vst [vmem:[%s175 + $0xa4] sm:$0xf] %v4231
      %4360 = vst [vmem:[%s175 + $0xa8] sm:$0xf] %v4232
      %4361 = vst [vmem:[%s175 + $0xac] sm:$0xf] %v4233
      %4362 = vst [vmem:[%s175 + $0xb0] sm:$0xf] %v4234
      %4363 = vst [vmem:[%s175 + $0xb4] sm:$0xf] %v4235
      %4364 = vst [vmem:[%s175 + $0xb8] sm:$0xf] %v4236
      %4365 = vst [vmem:[%s175 + $0xbc] sm:$0xf] %v4237
      %4366 = vst [vmem:[%s175 + $0xc0] sm:$0xf] %v4238
      %4367 = vst [vmem:[%s175 + $0xc4] sm:$0xf] %v4239
      %4368 = vst [vmem:[%s175 + $0xc8] sm:$0xf] %v4240
      %4369 = vst [vmem:[%s175 + $0xcc] sm:$0xf] %v4241
      %4370 = vst [vmem:[%s175 + $0xd0] sm:$0xf] %v4242
      %4371 = vst [vmem:[%s175 + $0xd4] sm:$0xf] %v4243
      %4372 = vst [vmem:[%s175 + $0xd8] sm:$0xf] %v4244
      %4373 = vst [vmem:[%s175 + $0xdc] sm:$0xf] %v4245
      %4374 = vst [vmem:[%s175 + $0xe0] sm:$0xf] %v4246
      %4375 = vst [vmem:[%s175 + $0xe4] sm:$0xf] %v4247
      %4376 = vst [vmem:[%s175 + $0xe8] sm:$0xf] %v4248
      %4377 = vst [vmem:[%s175 + $0xec] sm:$0xf] %v4249
      %4378 = vst [vmem:[%s175 + $0xf0] sm:$0xf] %v4250
      %4379 = vst [vmem:[%s175 + $0xf4] sm:$0xf] %v4251
      %4380 = vst [vmem:[%s175 + $0xf8] sm:$0xf] %v4252
      %4381 = vst [vmem:[%s175 + $0xfc] sm:$0xf] %v4253
      %s4382 = smul.u32 64, %s14
      %p4383 = scmp.lt.s32.totalorder %s4382, 255
      %s4384 = scalar_select %p4383, %s4382, 255
      %s4385 = smul.addr %s4384, 4
      %s4386 = scalar_lea.vmem %s3, %s4385
      // Predicated region
      $region33: #{fcos_forward.15} parent=31 // pred_check
        %p4387 = pneg %p100
      $region34: #{fcos_forward.15} parent=31 // pred_check_branch
        %4389 = sbr.rel (%p4387) target = $region36
      $region35: #{fcos_forward.15} parent=31 // pred_region
        %s4390 = smul.u32 64, %s14
      $region36: #{fcos_forward.15} parent=31 // pred_fallthru
        _
    $region32: #{fcos_forward.15} parent=5 // pred_fallthru
      _
    %p4391 = scmp.le.s32.totalorder 2, %s9
    // Predicated region
    $region37: #{fcos_forward.15} parent=5 // pred_check
      %p4392 = pneg %p4391
    $region38: #{fcos_forward.15} parent=5 // pred_check_branch
      %4394 = sbr.rel (%p4392) target = $region40
    $region39: #{fcos_forward.15} parent=5 // pred_region
      %s4395 = ssub.s32 %s9, 2
      // Predicated region
      $region41: #{fcos_forward.15} parent=39 // pred_check
        %p4396 = pneg %p106
      $region42: #{fcos_forward.15} parent=39 // pred_check_branch
        %4398 = sbr.rel (%p4396) target = $region44
      $region43: #{fcos_forward.15} parent=39 // pred_region
        %s4399 = smul.u32 64, %s15
        %p4400 = scmp.lt.s32.totalorder %s4399, 255
        %s4401 = scalar_select %p4400, %s4399, 255
        %s4402 = smul.addr %s4401, 4
        %s4403 = scalar_lea.vmem %s3, %s4402
      $region44: #{fcos_forward.15} parent=39 // pred_fallthru
        _
    $region40: #{fcos_forward.15} parent=5 // pred_fallthru
      _
  $region6: #{fcos_forward.15} parent=0 // loop_footer
    %s13 = sadd.s32 1, %s9
  $region7: #{fcos_forward.15} parent=0 // loop_footer_branch
    %8 = sbr.rel target = $region3
  $region8: #{fcos_forward.15} parent=0 // loop_exit
    _

// kernel: fcos_forward.16
$region0: #{fcos_forward.16}
  #allocation0 [shape = 'u32[]', space=smem, size = 0x4, offset = 0x4, fixed_abs, tag = 'smem constant byte address 0x4 - core index']
  #allocation1 [shape = 'u32[144,128]{1,0:T(1,128)}', space=vmem, size = 0x12000, scoped, tag = 'internal scratch']
  %s0 = inlined_call_operand.vmem [shape: bf16[512,1152], index: 0, kind: input, shape index: {}]
  %s1 = inlined_call_operand.vmem [shape: bf16[1152,128], index: 1, kind: input, shape index: {}]
  %s2 = inlined_call_operand.vmem [shape: f32[1,128], index: 2, kind: input, shape index: {}]
  %s3 = inlined_call_operand.vmem [shape: bf16[512,128], index: 3, kind: output, shape index: {}]
  %s4 = sld [smem:[#allocation0]]
  $region45: #{fcos_forward.16} parent=0
    _
  %s6 = ssub.s32 1, %s4
  %s7 = scalar_select 0, %s6, %s4
  loop: start=0, step=1, limit=4
  $region2: #{fcos_forward.16} parent=0 // loop_pre_header
    _
  $region3: #{fcos_forward.16} parent=0 // loop_header
    %s9 = sphi 0, %s13
    %p10 = scmp.ge.s32.totalorder %s9, 4
    %s19 = sphi 0, %s21
    %s22 = sphi 0, %s19
    %s23 = sphi 0, %s22
    %s39 = sphi 0, %s23
    %s43 = sphi 0, %s43
    %s45 = sphi 0, %s43
    %s46 = sphi 0, %s45
    %s60 = sphi 0, %s46
    %s64 = sphi 0, %s64
    %s66 = sphi 0, %s64
    %s67 = sphi 0, %s66
    %s81 = sphi 0, %s67
    %s87 = sphi 0, %s89
    %s90 = sphi 0, %s87
    %s91 = sphi 0, %s90
    %s107 = sphi 0, %s91
  $region4: #{fcos_forward.16} parent=0 // loop_header_branch
    %12 = sbr.rel (%p10) target = $region8
  $region5: #{fcos_forward.16} parent=0 // loop_body
    %s14 = ssub.s32 %s9, 1
    %s15 = ssub.s32 %s9, 2
    %s16 = sadd.s32 %s9, 1
    %s17 = ssub.s32 %s9, %s16
    %p18 = scmp.eq.s32.totalorder %s17, 0
    %s20 = sadd.s32 %s19, 1
    %s21 = scalar_select %p18, %s19, %s20
    %p24 = pneg %p18
    %p25 = scmp.eq.s32.totalorder %s9, 1
    %p26 = por %p24, %p25
    %p27 = scmp.ne.s32.totalorder %s19, %s22
    %p28 = scmp.eq.s32.totalorder %s9, 0
    %p29 = por %p27, %p28
    %p30 = scmp.ne.s32.totalorder %s19, %s22
    %p31 = scmp.eq.s32.totalorder %s14, 1
    %p32 = por %p30, %p31
    %p33 = scmp.ne.s32.totalorder %s22, %s23
    %p34 = scmp.eq.s32.totalorder %s14, 0
    %p35 = por %p33, %p34
    %p36 = scmp.ne.s32.totalorder %s22, %s23
    %p37 = scmp.eq.s32.totalorder %s15, 1
    %p38 = por %p36, %p37
    %p40 = scmp.ne.s32.totalorder %s23, %s39
    %p41 = scmp.eq.s32.totalorder %s15, 0
    %p42 = por %p40, %p41
    %s44 = sadd.s32 %s43, 1
    %p47 = scmp.eq.s32.totalorder %s9, 1
    %p48 = scmp.ne.s32.totalorder %s43, %s45
    %p49 = scmp.eq.s32.totalorder %s9, 0
    %p50 = por %p48, %p49
    %p51 = scmp.ne.s32.totalorder %s43, %s45
    %p52 = scmp.eq.s32.totalorder %s14, 1
    %p53 = por %p51, %p52
    %p54 = scmp.ne.s32.totalorder %s45, %s46
    %p55 = scmp.eq.s32.totalorder %s14, 0
    %p56 = por %p54, %p55
    %p57 = scmp.ne.s32.totalorder %s45, %s46
    %p58 = scmp.eq.s32.totalorder %s15, 1
    %p59 = por %p57, %p58
    %p61 = scmp.ne.s32.totalorder %s46, %s60
    %p62 = scmp.eq.s32.totalorder %s15, 0
    %p63 = por %p61, %p62
    %s65 = sadd.s32 %s64, 1
    %p68 = scmp.eq.s32.totalorder %s9, 1
    %p69 = scmp.ne.s32.totalorder %s64, %s66
    %p70 = scmp.eq.s32.totalorder %s9, 0
    %p71 = por %p69, %p70
    %p72 = scmp.ne.s32.totalorder %s64, %s66
    %p73 = scmp.eq.s32.totalorder %s14, 1
    %p74 = por %p72, %p73
    %p75 = scmp.ne.s32.totalorder %s66, %s67
    %p76 = scmp.eq.s32.totalorder %s14, 0
    %p77 = por %p75, %p76
    %p78 = scmp.ne.s32.totalorder %s66, %s67
    %p79 = scmp.eq.s32.totalorder %s15, 1
    %p80 = por %p78, %p79
    %p82 = scmp.ne.s32.totalorder %s67, %s81
    %p83 = scmp.eq.s32.totalorder %s15, 0
    %p84 = por %p82, %p83
    %s85 = ssub.s32 %s9, %s16
    %p86 = scmp.eq.s32.totalorder %s85, 0
    %s88 = sadd.s32 %s87, 1
    %s89 = scalar_select %p86, %s87, %s88
    %p92 = pneg %p86
    %p93 = scmp.eq.s32.totalorder %s9, 1
    %p94 = por %p92, %p93
    %p95 = scmp.ne.s32.totalorder %s87, %s90
    %p96 = scmp.eq.s32.totalorder %s9, 0
    %p97 = por %p95, %p96
    %p98 = scmp.ne.s32.totalorder %s87, %s90
    %p99 = scmp.eq.s32.totalorder %s14, 1
    %p100 = por %p98, %p99
    %p101 = scmp.ne.s32.totalorder %s90, %s91
    %p102 = scmp.eq.s32.totalorder %s14, 0
    %p103 = por %p101, %p102
    %p104 = scmp.ne.s32.totalorder %s90, %s91
    %p105 = scmp.eq.s32.totalorder %s15, 1
    %p106 = por %p104, %p105
    %p108 = scmp.ne.s32.totalorder %s91, %s107
    %p109 = scmp.eq.s32.totalorder %s15, 0
    %p110 = por %p108, %p109
    %p111 = scmp.le.s32.totalorder 1, %s9
    %p112 = scmp.lt.s32.totalorder %s9, 3
    %p113 = pnand %p111, %p112
    %p114 = pneg %p113
    // Predicated region
    $region9: #{fcos_forward.16} parent=5 // pred_check
      _
    $region10: #{fcos_forward.16} parent=5 // pred_check_branch
      %116 = sbr.rel (%p113) target = $region12
    $region11: #{fcos_forward.16} parent=5 // pred_region
      %s117 = ssub.s32 %s9, 1
      // Predicated region
      $region13: #{fcos_forward.16} parent=11 // pred_check
        %p118 = pneg %p56
      $region14: #{fcos_forward.16} parent=11 // pred_check_branch
        %120 = sbr.rel (%p118) target = $region16
      $region15: #{fcos_forward.16} parent=11 // pred_region
        _
      $region16: #{fcos_forward.16} parent=11 // pred_fallthru
        _
      // Predicated region
      $region17: #{fcos_forward.16} parent=11 // pred_check
        %p121 = pneg %p77
      $region18: #{fcos_forward.16} parent=11 // pred_check_branch
        %123 = sbr.rel (%p121) target = $region20
      $region19: #{fcos_forward.16} parent=11 // pred_region
        _
      $region20: #{fcos_forward.16} parent=11 // pred_fallthru
        _
    $region12: #{fcos_forward.16} parent=5 // pred_fallthru
      _
    %p124 = scmp.lt.s32.totalorder %s9, 2
    // Predicated region
    $region21: #{fcos_forward.16} parent=5 // pred_check
      %p125 = pneg %p124
    $region22: #{fcos_forward.16} parent=5 // pred_check_branch
      %127 = sbr.rel (%p125) target = $region24
    $region23: #{fcos_forward.16} parent=5 // pred_region
      // Predicated region
      $region25: #{fcos_forward.16} parent=23 // pred_check
        %p128 = pneg %p29
      $region26: #{fcos_forward.16} parent=23 // pred_check_branch
        %130 = sbr.rel (%p128) target = $region28
      $region27: #{fcos_forward.16} parent=23 // pred_region
        %s131 = smul.u32 32, %s9
        %p132 = scmp.lt.s32.totalorder %s131, 63
        %s133 = scalar_select %p132, %s131, 63
        %s134 = smul.addr %s133, 9
        %s135 = smul.addr %s134, 4
        %s136 = scalar_lea.vmem %s0, %s135
        %s137 = smul.u32 32, %s9
      $region28: #{fcos_forward.16} parent=23 // pred_fallthru
        _
    $region24: #{fcos_forward.16} parent=5 // pred_fallthru
      _
    %p138 = scmp.le.s32.totalorder 1, %s9
    %p139 = scmp.lt.s32.totalorder %s9, 3
    %p140 = pnand %p138, %p139
    %p141 = pneg %p140
    // Predicated region
    $region29: #{fcos_forward.16} parent=5 // pred_check
      _
    $region30: #{fcos_forward.16} parent=5 // pred_check_branch
      %143 = sbr.rel (%p140) target = $region32
    $region31: #{fcos_forward.16} parent=5 // pred_region
      %s144 = ssub.s32 %s9, 1
      %s145 = smul.u32 32, %s14
      %p146 = scmp.lt.s32.totalorder %s145, 63
      %s147 = scalar_select %p146, %s145, 63
      %s148 = smul.addr %s147, 9
      %s149 = smul.addr %s148, 4
      %s150 = scalar_lea.vmem %s0, %s149
      %p151 = pneg %p35
      %p152 = pneg %p32
      %p153 = pneg %p56
      %p154 = pneg %p53
      %p155 = pneg %p77
      %p156 = pneg %p74
      %p157 = pneg %p103
      %p158 = pneg %p100
      %s159 = smul.u32 32, %s14
      %p160 = scmp.lt.s32.totalorder %s159, 63
      %s161 = scalar_select %p160, %s159, 63
      %s162 = smul.addr %s161, 4
      %s163 = scalar_lea.vmem %s3, %s162
      %s164 = smul.u32 32, %s14
      %p165 = scmp.lt.s32.totalorder %s164, 63
      %s166 = scalar_select %p165, %s164, 63
      %s167 = smul.addr %s166, 9
      %s168 = smul.addr %s167, 4
      %s169 = scalar_lea.vmem %s0, %s168
      %s170 = smul.u32 32, %s14
      %s171 = smul.u32 32, %s14
      %p172 = scmp.lt.s32.totalorder %s171, 63
      %s173 = scalar_select %p172, %s171, 63
      %s174 = smul.addr %s173, 4
      %s175 = scalar_lea.vmem %s3, %s174
      %s176 = smul.u32 32, %s14
      %v178 = vld [vmem:[%s169] sm:$0xff]
      %v179 = vld [vmem:[%s169 + $0x8] sm:$0xff]
      %v180 = vld [vmem:[%s169 + $0x10] sm:$0xff]
      %v181 = vld [vmem:[%s169 + $0x18] sm:$0xff]
      %v182 = vld [vmem:[%s169 + $0x20] sm:$0xf]
      %v183 = vld [vmem:[%s169 + $0x24] sm:$0xff]
      %v184 = vld [vmem:[%s169 + $0x2c] sm:$0xff]
      %v185 = vld [vmem:[%s169 + $0x34] sm:$0xff]
      %v186 = vld [vmem:[%s169 + $0x3c] sm:$0xff]
      %v187 = vld [vmem:[%s169 + $0x44] sm:$0xf]
      %v188 = vld [vmem:[%s169 + $0x48] sm:$0xff]
      %v189 = vld [vmem:[%s169 + $0x50] sm:$0xff]
      %v190 = vld [vmem:[%s169 + $0x58] sm:$0xff]
      %v191 = vld [vmem:[%s169 + $0x60] sm:$0xff]
      %v192 = vld [vmem:[%s169 + $0x68] sm:$0xf]
      %v193 = vld [vmem:[%s169 + $0x6c] sm:$0xff]
      %v194 = vld [vmem:[%s169 + $0x74] sm:$0xff]
      %v195 = vld [vmem:[%s169 + $0x7c] sm:$0xff]
      %v196 = vld [vmem:[%s169 + $0x84] sm:$0xff]
      %v197 = vld [vmem:[%s169 + $0x8c] sm:$0xf]
      %v198 = vld [vmem:[%s169 + $0x90] sm:$0xff]
      %v199 = vld [vmem:[%s169 + $0x98] sm:$0xff]
      %v200 = vld [vmem:[%s169 + $0xa0] sm:$0xff]
      %v201 = vld [vmem:[%s169 + $0xa8] sm:$0xff]
      %v202 = vld [vmem:[%s169 + $0xb0] sm:$0xf]
      %v203 = vld [vmem:[%s169 + $0xb4] sm:$0xff]
      %v204 = vld [vmem:[%s169 + $0xbc] sm:$0xff]
      %v205 = vld [vmem:[%s169 + $0xc4] sm:$0xff]
      %v206 = vld [vmem:[%s169 + $0xcc] sm:$0xff]
      %v207 = vld [vmem:[%s169 + $0xd4] sm:$0xf]
      %v208 = vld [vmem:[%s169 + $0xd8] sm:$0xff]
      %v209 = vld [vmem:[%s169 + $0xe0] sm:$0xff]
      %v210 = vld [vmem:[%s169 + $0xe8] sm:$0xff]
      %v211 = vld [vmem:[%s169 + $0xf0] sm:$0xff]
      %v212 = vld [vmem:[%s169 + $0xf8] sm:$0xf]
      %v213 = vld [vmem:[%s169 + $0xfc] sm:$0xff]
      %v214 = vld [vmem:[%s169 + $0x104] sm:$0xff]
      %v215 = vld [vmem:[%s169 + $0x10c] sm:$0xff]
      %v216 = vld [vmem:[%s169 + $0x114] sm:$0xff]
      %v217 = vld [vmem:[%s169 + $0x11c] sm:$0xf]
      %v218 = vld [vmem:[%s169 + $0x120] sm:$0xff]
      %v219 = vld [vmem:[%s169 + $0x128] sm:$0xff]
      %v220 = vld [vmem:[%s169 + $0x130] sm:$0xff]
      %v221 = vld [vmem:[%s169 + $0x138] sm:$0xff]
      %v222 = vld [vmem:[%s169 + $0x140] sm:$0xf]
      %v223 = vld [vmem:[%s169 + $0x144] sm:$0xff]
      %v224 = vld [vmem:[%s169 + $0x14c] sm:$0xff]
      %v225 = vld [vmem:[%s169 + $0x154] sm:$0xff]
      %v226 = vld [vmem:[%s169 + $0x15c] sm:$0xff]
      %v227 = vld [vmem:[%s169 + $0x164] sm:$0xf]
      %v228 = vld [vmem:[%s169 + $0x168] sm:$0xff]
      %v229 = vld [vmem:[%s169 + $0x170] sm:$0xff]
      %v230 = vld [vmem:[%s169 + $0x178] sm:$0xff]
      %v231 = vld [vmem:[%s169 + $0x180] sm:$0xff]
      %v232 = vld [vmem:[%s169 + $0x188] sm:$0xf]
      %v233 = vld [vmem:[%s169 + $0x18c] sm:$0xff]
      %v234 = vld [vmem:[%s169 + $0x194] sm:$0xff]
      %v235 = vld [vmem:[%s169 + $0x19c] sm:$0xff]
      %v236 = vld [vmem:[%s169 + $0x1a4] sm:$0xff]
      %v237 = vld [vmem:[%s169 + $0x1ac] sm:$0xf]
      %v238 = vld [vmem:[%s169 + $0x1b0] sm:$0xff]
      %v239 = vld [vmem:[%s169 + $0x1b8] sm:$0xff]
      %v240 = vld [vmem:[%s169 + $0x1c0] sm:$0xff]
      %v241 = vld [vmem:[%s169 + $0x1c8] sm:$0xff]
      %v242 = vld [vmem:[%s169 + $0x1d0] sm:$0xf]
      %v243 = vld [vmem:[%s169 + $0x1d4] sm:$0xff]
      %v244 = vld [vmem:[%s169 + $0x1dc] sm:$0xff]
      %v245 = vld [vmem:[%s169 + $0x1e4] sm:$0xff]
      %v246 = vld [vmem:[%s169 + $0x1ec] sm:$0xff]
      %v247 = vld [vmem:[%s169 + $0x1f4] sm:$0xf]
      %v248 = vld [vmem:[%s169 + $0x1f8] sm:$0xff]
      %v249 = vld [vmem:[%s169 + $0x200] sm:$0xff]
      %v250 = vld [vmem:[%s169 + $0x208] sm:$0xff]
      %v251 = vld [vmem:[%s169 + $0x210] sm:$0xff]
      %v252 = vld [vmem:[%s169 + $0x218] sm:$0xf]
      %v253 = vld [vmem:[%s169 + $0x21c] sm:$0xff]
      %v254 = vld [vmem:[%s169 + $0x224] sm:$0xff]
      %v255 = vld [vmem:[%s169 + $0x22c] sm:$0xff]
      %v256 = vld [vmem:[%s169 + $0x234] sm:$0xff]
      %v257 = vld [vmem:[%s169 + $0x23c] sm:$0xf]
      %v258 = vld [vmem:[%s169 + $0x240] sm:$0xff]
      %v259 = vld [vmem:[%s169 + $0x248] sm:$0xff]
      %v260 = vld [vmem:[%s169 + $0x250] sm:$0xff]
      %v261 = vld [vmem:[%s169 + $0x258] sm:$0xff]
      %v262 = vld [vmem:[%s169 + $0x260] sm:$0xf]
      %v263 = vld [vmem:[%s169 + $0x264] sm:$0xff]
      %v264 = vld [vmem:[%s169 + $0x26c] sm:$0xff]
      %v265 = vld [vmem:[%s169 + $0x274] sm:$0xff]
      %v266 = vld [vmem:[%s169 + $0x27c] sm:$0xff]
      %v267 = vld [vmem:[%s169 + $0x284] sm:$0xf]
      %v268 = vld [vmem:[%s169 + $0x288] sm:$0xff]
      %v269 = vld [vmem:[%s169 + $0x290] sm:$0xff]
      %v270 = vld [vmem:[%s169 + $0x298] sm:$0xff]
      %v271 = vld [vmem:[%s169 + $0x2a0] sm:$0xff]
      %v272 = vld [vmem:[%s169 + $0x2a8] sm:$0xf]
      %v273 = vld [vmem:[%s169 + $0x2ac] sm:$0xff]
      %v274 = vld [vmem:[%s169 + $0x2b4] sm:$0xff]
      %v275 = vld [vmem:[%s169 + $0x2bc] sm:$0xff]
      %v276 = vld [vmem:[%s169 + $0x2c4] sm:$0xff]
      %v277 = vld [vmem:[%s169 + $0x2cc] sm:$0xf]
      %v278 = vld [vmem:[%s169 + $0x2d0] sm:$0xff]
      %v279 = vld [vmem:[%s169 + $0x2d8] sm:$0xff]
      %v280 = vld [vmem:[%s169 + $0x2e0] sm:$0xff]
      %v281 = vld [vmem:[%s169 + $0x2e8] sm:$0xff]
      %v282 = vld [vmem:[%s169 + $0x2f0] sm:$0xf]
      %v283 = vld [vmem:[%s169 + $0x2f4] sm:$0xff]
      %v284 = vld [vmem:[%s169 + $0x2fc] sm:$0xff]
      %v285 = vld [vmem:[%s169 + $0x304] sm:$0xff]
      %v286 = vld [vmem:[%s169 + $0x30c] sm:$0xff]
      %v287 = vld [vmem:[%s169 + $0x314] sm:$0xf]
      %v288 = vld [vmem:[%s169 + $0x318] sm:$0xff]
      %v289 = vld [vmem:[%s169 + $0x320] sm:$0xff]
      %v290 = vld [vmem:[%s169 + $0x328] sm:$0xff]
      %v291 = vld [vmem:[%s169 + $0x330] sm:$0xff]
      %v292 = vld [vmem:[%s169 + $0x338] sm:$0xf]
      %v293 = vld [vmem:[%s169 + $0x33c] sm:$0xff]
      %v294 = vld [vmem:[%s169 + $0x344] sm:$0xff]
      %v295 = vld [vmem:[%s169 + $0x34c] sm:$0xff]
      %v296 = vld [vmem:[%s169 + $0x354] sm:$0xff]
      %v297 = vld [vmem:[%s169 + $0x35c] sm:$0xf]
      %v298 = vld [vmem:[%s169 + $0x360] sm:$0xff]
      %v299 = vld [vmem:[%s169 + $0x368] sm:$0xff]
      %v300 = vld [vmem:[%s169 + $0x370] sm:$0xff]
      %v301 = vld [vmem:[%s169 + $0x378] sm:$0xff]
      %v302 = vld [vmem:[%s169 + $0x380] sm:$0xf]
      %v303 = vld [vmem:[%s169 + $0x384] sm:$0xff]
      %v304 = vld [vmem:[%s169 + $0x38c] sm:$0xff]
      %v305 = vld [vmem:[%s169 + $0x394] sm:$0xff]
      %v306 = vld [vmem:[%s169 + $0x39c] sm:$0xff]
      %v307 = vld [vmem:[%s169 + $0x3a4] sm:$0xf]
      %v308 = vld [vmem:[%s169 + $0x3a8] sm:$0xff]
      %v309 = vld [vmem:[%s169 + $0x3b0] sm:$0xff]
      %v310 = vld [vmem:[%s169 + $0x3b8] sm:$0xff]
      %v311 = vld [vmem:[%s169 + $0x3c0] sm:$0xff]
      %v312 = vld [vmem:[%s169 + $0x3c8] sm:$0xf]
      %v313 = vld [vmem:[%s169 + $0x3cc] sm:$0xff]
      %v314 = vld [vmem:[%s169 + $0x3d4] sm:$0xff]
      %v315 = vld [vmem:[%s169 + $0x3dc] sm:$0xff]
      %v316 = vld [vmem:[%s169 + $0x3e4] sm:$0xff]
      %v317 = vld [vmem:[%s169 + $0x3ec] sm:$0xf]
      %v318 = vld [vmem:[%s169 + $0x3f0] sm:$0xff]
      %v319 = vld [vmem:[%s169 + $0x3f8] sm:$0xff]
      %v320 = vld [vmem:[%s169 + $0x400] sm:$0xff]
      %v321 = vld [vmem:[%s169 + $0x408] sm:$0xff]
      %v322 = vld [vmem:[%s169 + $0x410] sm:$0xf]
      %v323 = vld [vmem:[%s169 + $0x414] sm:$0xff]
      %v324 = vld [vmem:[%s169 + $0x41c] sm:$0xff]
      %v325 = vld [vmem:[%s169 + $0x424] sm:$0xff]
      %v326 = vld [vmem:[%s169 + $0x42c] sm:$0xff]
      %v327 = vld [vmem:[%s169 + $0x434] sm:$0xf]
      %v328 = vld [vmem:[%s169 + $0x438] sm:$0xff]
      %v329 = vld [vmem:[%s169 + $0x440] sm:$0xff]
      %v330 = vld [vmem:[%s169 + $0x448] sm:$0xff]
      %v331 = vld [vmem:[%s169 + $0x450] sm:$0xff]
      %v332 = vld [vmem:[%s169 + $0x458] sm:$0xf]
      %v333 = vld [vmem:[%s169 + $0x45c] sm:$0xff]
      %v334 = vld [vmem:[%s169 + $0x464] sm:$0xff]
      %v335 = vld [vmem:[%s169 + $0x46c] sm:$0xff]
      %v336 = vld [vmem:[%s169 + $0x474] sm:$0xff]
      %v337 = vld [vmem:[%s169 + $0x47c] sm:$0xf]
      %v338 = vld [vmem:[%s1] sm:$0xf]
      %v339 = vld [vmem:[%s1 + $0x4] sm:$0xf]
      %v340 = vld [vmem:[%s1 + $0x8] sm:$0xf]
      %v341 = vld [vmem:[%s1 + $0xc] sm:$0xf]
      %v342 = vld [vmem:[%s1 + $0x10] sm:$0xf]
      %v343 = vld [vmem:[%s1 + $0x14] sm:$0xf]
      %v344 = vld [vmem:[%s1 + $0x18] sm:$0xf]
      %v345 = vld [vmem:[%s1 + $0x1c] sm:$0xf]
      %v346 = vld [vmem:[%s1 + $0x20] sm:$0xf]
      %v347 = vld [vmem:[%s1 + $0x24] sm:$0xf]
      %v348 = vld [vmem:[%s1 + $0x28] sm:$0xf]
      %v349 = vld [vmem:[%s1 + $0x2c] sm:$0xf]
      %v350 = vld [vmem:[%s1 + $0x30] sm:$0xf]
      %v351 = vld [vmem:[%s1 + $0x34] sm:$0xf]
      %v352 = vld [vmem:[%s1 + $0x38] sm:$0xf]
      %v353 = vld [vmem:[%s1 + $0x3c] sm:$0xf]
      %v354 = vld [vmem:[%s1 + $0x40] sm:$0xf]
      %v355 = vld [vmem:[%s1 + $0x44] sm:$0xf]
      %v356 = vld [vmem:[%s1 + $0x48] sm:$0xf]
      %v357 = vld [vmem:[%s1 + $0x4c] sm:$0xf]
      %v358 = vld [vmem:[%s1 + $0x50] sm:$0xf]
      %v359 = vld [vmem:[%s1 + $0x54] sm:$0xf]
      %v360 = vld [vmem:[%s1 + $0x58] sm:$0xf]
      %v361 = vld [vmem:[%s1 + $0x5c] sm:$0xf]
      %v362 = vld [vmem:[%s1 + $0x60] sm:$0xf]
      %v363 = vld [vmem:[%s1 + $0x64] sm:$0xf]
      %v364 = vld [vmem:[%s1 + $0x68] sm:$0xf]
      %v365 = vld [vmem:[%s1 + $0x6c] sm:$0xf]
      %v366 = vld [vmem:[%s1 + $0x70] sm:$0xf]
      %v367 = vld [vmem:[%s1 + $0x74] sm:$0xf]
      %v368 = vld [vmem:[%s1 + $0x78] sm:$0xf]
      %v369 = vld [vmem:[%s1 + $0x7c] sm:$0xf]
      %v370 = vld [vmem:[%s1 + $0x80] sm:$0xf]
      %v371 = vld [vmem:[%s1 + $0x84] sm:$0xf]
      %v372 = vld [vmem:[%s1 + $0x88] sm:$0xf]
      %v373 = vld [vmem:[%s1 + $0x8c] sm:$0xf]
      %v374 = vld [vmem:[%s1 + $0x90] sm:$0xf]
      %v375 = vld [vmem:[%s1 + $0x94] sm:$0xf]
      %v376 = vld [vmem:[%s1 + $0x98] sm:$0xf]
      %v377 = vld [vmem:[%s1 + $0x9c] sm:$0xf]
      %v378 = vld [vmem:[%s1 + $0xa0] sm:$0xf]
      %v379 = vld [vmem:[%s1 + $0xa4] sm:$0xf]
      %v380 = vld [vmem:[%s1 + $0xa8] sm:$0xf]
      %v381 = vld [vmem:[%s1 + $0xac] sm:$0xf]
      %v382 = vld [vmem:[%s1 + $0xb0] sm:$0xf]
      %v383 = vld [vmem:[%s1 + $0xb4] sm:$0xf]
      %v384 = vld [vmem:[%s1 + $0xb8] sm:$0xf]
      %v385 = vld [vmem:[%s1 + $0xbc] sm:$0xf]
      %v386 = vld [vmem:[%s1 + $0xc0] sm:$0xf]
      %v387 = vld [vmem:[%s1 + $0xc4] sm:$0xf]
      %v388 = vld [vmem:[%s1 + $0xc8] sm:$0xf]
      %v389 = vld [vmem:[%s1 + $0xcc] sm:$0xf]
      %v390 = vld [vmem:[%s1 + $0xd0] sm:$0xf]
      %v391 = vld [vmem:[%s1 + $0xd4] sm:$0xf]
      %v392 = vld [vmem:[%s1 + $0xd8] sm:$0xf]
      %v393 = vld [vmem:[%s1 + $0xdc] sm:$0xf]
      %v394 = vld [vmem:[%s1 + $0xe0] sm:$0xf]
      %v395 = vld [vmem:[%s1 + $0xe4] sm:$0xf]
      %v396 = vld [vmem:[%s1 + $0xe8] sm:$0xf]
      %v397 = vld [vmem:[%s1 + $0xec] sm:$0xf]
      %v398 = vld [vmem:[%s1 + $0xf0] sm:$0xf]
      %v399 = vld [vmem:[%s1 + $0xf4] sm:$0xf]
      %v400 = vld [vmem:[%s1 + $0xf8] sm:$0xf]
      %v401 = vld [vmem:[%s1 + $0xfc] sm:$0xf]
      %v402 = vld [vmem:[%s1 + $0x100] sm:$0xf]
      %v403 = vld [vmem:[%s1 + $0x104] sm:$0xf]
      %v404 = vld [vmem:[%s1 + $0x108] sm:$0xf]
      %v405 = vld [vmem:[%s1 + $0x10c] sm:$0xf]
      %v406 = vld [vmem:[%s1 + $0x110] sm:$0xf]
      %v407 = vld [vmem:[%s1 + $0x114] sm:$0xf]
      %v408 = vld [vmem:[%s1 + $0x118] sm:$0xf]
      %v409 = vld [vmem:[%s1 + $0x11c] sm:$0xf]
      %v410 = vld [vmem:[%s1 + $0x120] sm:$0xf]
      %v411 = vld [vmem:[%s1 + $0x124] sm:$0xf]
      %v412 = vld [vmem:[%s1 + $0x128] sm:$0xf]
      %v413 = vld [vmem:[%s1 + $0x12c] sm:$0xf]
      %v414 = vld [vmem:[%s1 + $0x130] sm:$0xf]
      %v415 = vld [vmem:[%s1 + $0x134] sm:$0xf]
      %v416 = vld [vmem:[%s1 + $0x138] sm:$0xf]
      %v417 = vld [vmem:[%s1 + $0x13c] sm:$0xf]
      %v418 = vld [vmem:[%s1 + $0x140] sm:$0xf]
      %v419 = vld [vmem:[%s1 + $0x144] sm:$0xf]
      %v420 = vld [vmem:[%s1 + $0x148] sm:$0xf]
      %v421 = vld [vmem:[%s1 + $0x14c] sm:$0xf]
      %v422 = vld [vmem:[%s1 + $0x150] sm:$0xf]
      %v423 = vld [vmem:[%s1 + $0x154] sm:$0xf]
      %v424 = vld [vmem:[%s1 + $0x158] sm:$0xf]
      %v425 = vld [vmem:[%s1 + $0x15c] sm:$0xf]
      %v426 = vld [vmem:[%s1 + $0x160] sm:$0xf]
      %v427 = vld [vmem:[%s1 + $0x164] sm:$0xf]
      %v428 = vld [vmem:[%s1 + $0x168] sm:$0xf]
      %v429 = vld [vmem:[%s1 + $0x16c] sm:$0xf]
      %v430 = vld [vmem:[%s1 + $0x170] sm:$0xf]
      %v431 = vld [vmem:[%s1 + $0x174] sm:$0xf]
      %v432 = vld [vmem:[%s1 + $0x178] sm:$0xf]
      %v433 = vld [vmem:[%s1 + $0x17c] sm:$0xf]
      %v434 = vld [vmem:[%s1 + $0x180] sm:$0xf]
      %v435 = vld [vmem:[%s1 + $0x184] sm:$0xf]
      %v436 = vld [vmem:[%s1 + $0x188] sm:$0xf]
      %v437 = vld [vmem:[%s1 + $0x18c] sm:$0xf]
      %v438 = vld [vmem:[%s1 + $0x190] sm:$0xf]
      %v439 = vld [vmem:[%s1 + $0x194] sm:$0xf]
      %v440 = vld [vmem:[%s1 + $0x198] sm:$0xf]
      %v441 = vld [vmem:[%s1 + $0x19c] sm:$0xf]
      %v442 = vld [vmem:[%s1 + $0x1a0] sm:$0xf]
      %v443 = vld [vmem:[%s1 + $0x1a4] sm:$0xf]
      %v444 = vld [vmem:[%s1 + $0x1a8] sm:$0xf]
      %v445 = vld [vmem:[%s1 + $0x1ac] sm:$0xf]
      %v446 = vld [vmem:[%s1 + $0x1b0] sm:$0xf]
      %v447 = vld [vmem:[%s1 + $0x1b4] sm:$0xf]
      %v448 = vld [vmem:[%s1 + $0x1b8] sm:$0xf]
      %v449 = vld [vmem:[%s1 + $0x1bc] sm:$0xf]
      %v450 = vld [vmem:[%s1 + $0x1c0] sm:$0xf]
      %v451 = vld [vmem:[%s1 + $0x1c4] sm:$0xf]
      %v452 = vld [vmem:[%s1 + $0x1c8] sm:$0xf]
      %v453 = vld [vmem:[%s1 + $0x1cc] sm:$0xf]
      %v454 = vld [vmem:[%s1 + $0x1d0] sm:$0xf]
      %v455 = vld [vmem:[%s1 + $0x1d4] sm:$0xf]
      %v456 = vld [vmem:[%s1 + $0x1d8] sm:$0xf]
      %v457 = vld [vmem:[%s1 + $0x1dc] sm:$0xf]
      %v458 = vld [vmem:[%s1 + $0x1e0] sm:$0xf]
      %v459 = vld [vmem:[%s1 + $0x1e4] sm:$0xf]
      %v460 = vld [vmem:[%s1 + $0x1e8] sm:$0xf]
      %v461 = vld [vmem:[%s1 + $0x1ec] sm:$0xf]
      %v462 = vld [vmem:[%s1 + $0x1f0] sm:$0xf]
      %v463 = vld [vmem:[%s1 + $0x1f4] sm:$0xf]
      %v464 = vld [vmem:[%s1 + $0x1f8] sm:$0xf]
      %v465 = vld [vmem:[%s1 + $0x1fc] sm:$0xf]
      %v466 = vld [vmem:[%s1 + $0x200] sm:$0xf]
      %v467 = vld [vmem:[%s1 + $0x204] sm:$0xf]
      %v468 = vld [vmem:[%s1 + $0x208] sm:$0xf]
      %v469 = vld [vmem:[%s1 + $0x20c] sm:$0xf]
      %v470 = vld [vmem:[%s1 + $0x210] sm:$0xf]
      %v471 = vld [vmem:[%s1 + $0x214] sm:$0xf]
      %v472 = vld [vmem:[%s1 + $0x218] sm:$0xf]
      %v473 = vld [vmem:[%s1 + $0x21c] sm:$0xf]
      %v474 = vld [vmem:[%s1 + $0x220] sm:$0xf]
      %v475 = vld [vmem:[%s1 + $0x224] sm:$0xf]
      %v476 = vld [vmem:[%s1 + $0x228] sm:$0xf]
      %v477 = vld [vmem:[%s1 + $0x22c] sm:$0xf]
      %v478 = vld [vmem:[%s1 + $0x230] sm:$0xf]
      %v479 = vld [vmem:[%s1 + $0x234] sm:$0xf]
      %v480 = vld [vmem:[%s1 + $0x238] sm:$0xf]
      %v481 = vld [vmem:[%s1 + $0x23c] sm:$0xf]
      %v482 = vld [vmem:[%s2] sm:$0x1]
      %v484 = vlaneseq
      %v485 = vshrl.u32 %v484, 7
      %v486 = vsub.s32 0, %v485
      %v487 = vrot.slane %v482, %v486
      %v649 = vunpack.c.l.b16 %v178
      %v650 = vunpack.c.h.b16 %v178
      %v651 = vunpack.c.l.b16 %v179
      %v652 = vunpack.c.h.b16 %v179
      %v653 = vunpack.c.l.b16 %v180
      %v654 = vunpack.c.h.b16 %v180
      %v655 = vunpack.c.l.b16 %v181
      %v656 = vunpack.c.h.b16 %v181
      %v657 = vunpack.c.l.b16 %v182
      %v658 = vunpack.c.l.b16 %v183
      %v659 = vunpack.c.h.b16 %v183
      %v660 = vunpack.c.l.b16 %v184
      %v661 = vunpack.c.h.b16 %v184
      %v662 = vunpack.c.l.b16 %v185
      %v663 = vunpack.c.h.b16 %v185
      %v664 = vunpack.c.l.b16 %v186
      %v665 = vunpack.c.h.b16 %v186
      %v666 = vunpack.c.l.b16 %v187
      %v667 = vunpack.c.l.b16 %v188
      %v668 = vunpack.c.h.b16 %v188
      %v669 = vunpack.c.l.b16 %v189
      %v670 = vunpack.c.h.b16 %v189
      %v671 = vunpack.c.l.b16 %v190
      %v672 = vunpack.c.h.b16 %v190
      %v673 = vunpack.c.l.b16 %v191
      %v674 = vunpack.c.h.b16 %v191
      %v675 = vunpack.c.l.b16 %v192
      %v676 = vunpack.c.l.b16 %v193
      %v677 = vunpack.c.h.b16 %v193
      %v678 = vunpack.c.l.b16 %v194
      %v679 = vunpack.c.h.b16 %v194
      %v680 = vunpack.c.l.b16 %v195
      %v681 = vunpack.c.h.b16 %v195
      %v682 = vunpack.c.l.b16 %v196
      %v683 = vunpack.c.h.b16 %v196
      %v684 = vunpack.c.l.b16 %v197
      %v685 = vunpack.c.l.b16 %v198
      %v686 = vunpack.c.h.b16 %v198
      %v687 = vunpack.c.l.b16 %v199
      %v688 = vunpack.c.h.b16 %v199
      %v689 = vunpack.c.l.b16 %v200
      %v690 = vunpack.c.h.b16 %v200
      %v691 = vunpack.c.l.b16 %v201
      %v692 = vunpack.c.h.b16 %v201
      %v693 = vunpack.c.l.b16 %v202
      %v694 = vunpack.c.l.b16 %v203
      %v695 = vunpack.c.h.b16 %v203
      %v696 = vunpack.c.l.b16 %v204
      %v697 = vunpack.c.h.b16 %v204
      %v698 = vunpack.c.l.b16 %v205
      %v699 = vunpack.c.h.b16 %v205
      %v700 = vunpack.c.l.b16 %v206
      %v701 = vunpack.c.h.b16 %v206
      %v702 = vunpack.c.l.b16 %v207
      %v703 = vunpack.c.l.b16 %v208
      %v704 = vunpack.c.h.b16 %v208
      %v705 = vunpack.c.l.b16 %v209
      %v706 = vunpack.c.h.b16 %v209
      %v707 = vunpack.c.l.b16 %v210
      %v708 = vunpack.c.h.b16 %v210
      %v709 = vunpack.c.l.b16 %v211
      %v710 = vunpack.c.h.b16 %v211
      %v711 = vunpack.c.l.b16 %v212
      %v712 = vunpack.c.l.b16 %v213
      %v713 = vunpack.c.h.b16 %v213
      %v714 = vunpack.c.l.b16 %v214
      %v715 = vunpack.c.h.b16 %v214
      %v716 = vunpack.c.l.b16 %v215
      %v717 = vunpack.c.h.b16 %v215
      %v718 = vunpack.c.l.b16 %v216
      %v719 = vunpack.c.h.b16 %v216
      %v720 = vunpack.c.l.b16 %v217
      %v721 = vunpack.c.l.b16 %v218
      %v722 = vunpack.c.h.b16 %v218
      %v723 = vunpack.c.l.b16 %v219
      %v724 = vunpack.c.h.b16 %v219
      %v725 = vunpack.c.l.b16 %v220
      %v726 = vunpack.c.h.b16 %v220
      %v727 = vunpack.c.l.b16 %v221
      %v728 = vunpack.c.h.b16 %v221
      %v729 = vunpack.c.l.b16 %v222
      %v730 = vunpack.c.l.b16 %v223
      %v731 = vunpack.c.h.b16 %v223
      %v732 = vunpack.c.l.b16 %v224
      %v733 = vunpack.c.h.b16 %v224
      %v734 = vunpack.c.l.b16 %v225
      %v735 = vunpack.c.h.b16 %v225
      %v736 = vunpack.c.l.b16 %v226
      %v737 = vunpack.c.h.b16 %v226
      %v738 = vunpack.c.l.b16 %v227
      %v739 = vunpack.c.l.b16 %v228
      %v740 = vunpack.c.h.b16 %v228
      %v741 = vunpack.c.l.b16 %v229
      %v742 = vunpack.c.h.b16 %v229
      %v743 = vunpack.c.l.b16 %v230
      %v744 = vunpack.c.h.b16 %v230
      %v745 = vunpack.c.l.b16 %v231
      %v746 = vunpack.c.h.b16 %v231
      %v747 = vunpack.c.l.b16 %v232
      %v748 = vunpack.c.l.b16 %v233
      %v749 = vunpack.c.h.b16 %v233
      %v750 = vunpack.c.l.b16 %v234
      %v751 = vunpack.c.h.b16 %v234
      %v752 = vunpack.c.l.b16 %v235
      %v753 = vunpack.c.h.b16 %v235
      %v754 = vunpack.c.l.b16 %v236
      %v755 = vunpack.c.h.b16 %v236
      %v756 = vunpack.c.l.b16 %v237
      %v757 = vunpack.c.l.b16 %v238
      %v758 = vunpack.c.h.b16 %v238
      %v759 = vunpack.c.l.b16 %v239
      %v760 = vunpack.c.h.b16 %v239
      %v761 = vunpack.c.l.b16 %v240
      %v762 = vunpack.c.h.b16 %v240
      %v763 = vunpack.c.l.b16 %v241
      %v764 = vunpack.c.h.b16 %v241
      %v765 = vunpack.c.l.b16 %v242
      %v766 = vunpack.c.l.b16 %v243
      %v767 = vunpack.c.h.b16 %v243
      %v768 = vunpack.c.l.b16 %v244
      %v769 = vunpack.c.h.b16 %v244
      %v770 = vunpack.c.l.b16 %v245
      %v771 = vunpack.c.h.b16 %v245
      %v772 = vunpack.c.l.b16 %v246
      %v773 = vunpack.c.h.b16 %v246
      %v774 = vunpack.c.l.b16 %v247
      %v775 = vunpack.c.l.b16 %v248
      %v776 = vunpack.c.h.b16 %v248
      %v777 = vunpack.c.l.b16 %v249
      %v778 = vunpack.c.h.b16 %v249
      %v779 = vunpack.c.l.b16 %v250
      %v780 = vunpack.c.h.b16 %v250
      %v781 = vunpack.c.l.b16 %v251
      %v782 = vunpack.c.h.b16 %v251
      %v783 = vunpack.c.l.b16 %v252
      %v784 = vunpack.c.l.b16 %v253
      %v785 = vunpack.c.h.b16 %v253
      %v786 = vunpack.c.l.b16 %v254
      %v787 = vunpack.c.h.b16 %v254
      %v788 = vunpack.c.l.b16 %v255
      %v789 = vunpack.c.h.b16 %v255
      %v790 = vunpack.c.l.b16 %v256
      %v791 = vunpack.c.h.b16 %v256
      %v792 = vunpack.c.l.b16 %v257
      %v793 = vunpack.c.l.b16 %v258
      %v794 = vunpack.c.h.b16 %v258
      %v795 = vunpack.c.l.b16 %v259
      %v796 = vunpack.c.h.b16 %v259
      %v797 = vunpack.c.l.b16 %v260
      %v798 = vunpack.c.h.b16 %v260
      %v799 = vunpack.c.l.b16 %v261
      %v800 = vunpack.c.h.b16 %v261
      %v801 = vunpack.c.l.b16 %v262
      %v802 = vunpack.c.l.b16 %v263
      %v803 = vunpack.c.h.b16 %v263
      %v804 = vunpack.c.l.b16 %v264
      %v805 = vunpack.c.h.b16 %v264
      %v806 = vunpack.c.l.b16 %v265
      %v807 = vunpack.c.h.b16 %v265
      %v808 = vunpack.c.l.b16 %v266
      %v809 = vunpack.c.h.b16 %v266
      %v810 = vunpack.c.l.b16 %v267
      %v811 = vunpack.c.l.b16 %v268
      %v812 = vunpack.c.h.b16 %v268
      %v813 = vunpack.c.l.b16 %v269
      %v814 = vunpack.c.h.b16 %v269
      %v815 = vunpack.c.l.b16 %v270
      %v816 = vunpack.c.h.b16 %v270
      %v817 = vunpack.c.l.b16 %v271
      %v818 = vunpack.c.h.b16 %v271
      %v819 = vunpack.c.l.b16 %v272
      %v820 = vunpack.c.l.b16 %v273
      %v821 = vunpack.c.h.b16 %v273
      %v822 = vunpack.c.l.b16 %v274
      %v823 = vunpack.c.h.b16 %v274
      %v824 = vunpack.c.l.b16 %v275
      %v825 = vunpack.c.h.b16 %v275
      %v826 = vunpack.c.l.b16 %v276
      %v827 = vunpack.c.h.b16 %v276
      %v828 = vunpack.c.l.b16 %v277
      %v829 = vunpack.c.l.b16 %v278
      %v830 = vunpack.c.h.b16 %v278
      %v831 = vunpack.c.l.b16 %v279
      %v832 = vunpack.c.h.b16 %v279
      %v833 = vunpack.c.l.b16 %v280
      %v834 = vunpack.c.h.b16 %v280
      %v835 = vunpack.c.l.b16 %v281
      %v836 = vunpack.c.h.b16 %v281
      %v837 = vunpack.c.l.b16 %v282
      %v838 = vunpack.c.l.b16 %v283
      %v839 = vunpack.c.h.b16 %v283
      %v840 = vunpack.c.l.b16 %v284
      %v841 = vunpack.c.h.b16 %v284
      %v842 = vunpack.c.l.b16 %v285
      %v843 = vunpack.c.h.b16 %v285
      %v844 = vunpack.c.l.b16 %v286
      %v845 = vunpack.c.h.b16 %v286
      %v846 = vunpack.c.l.b16 %v287
      %v847 = vunpack.c.l.b16 %v288
      %v848 = vunpack.c.h.b16 %v288
      %v849 = vunpack.c.l.b16 %v289
      %v850 = vunpack.c.h.b16 %v289
      %v851 = vunpack.c.l.b16 %v290
      %v852 = vunpack.c.h.b16 %v290
      %v853 = vunpack.c.l.b16 %v291
      %v854 = vunpack.c.h.b16 %v291
      %v855 = vunpack.c.l.b16 %v292
      %v856 = vunpack.c.l.b16 %v293
      %v857 = vunpack.c.h.b16 %v293
      %v858 = vunpack.c.l.b16 %v294
      %v859 = vunpack.c.h.b16 %v294
      %v860 = vunpack.c.l.b16 %v295
      %v861 = vunpack.c.h.b16 %v295
      %v862 = vunpack.c.l.b16 %v296
      %v863 = vunpack.c.h.b16 %v296
      %v864 = vunpack.c.l.b16 %v297
      %v865 = vunpack.c.l.b16 %v298
      %v866 = vunpack.c.h.b16 %v298
      %v867 = vunpack.c.l.b16 %v299
      %v868 = vunpack.c.h.b16 %v299
      %v869 = vunpack.c.l.b16 %v300
      %v870 = vunpack.c.h.b16 %v300
      %v871 = vunpack.c.l.b16 %v301
      %v872 = vunpack.c.h.b16 %v301
      %v873 = vunpack.c.l.b16 %v302
      %v874 = vunpack.c.l.b16 %v303
      %v875 = vunpack.c.h.b16 %v303
      %v876 = vunpack.c.l.b16 %v304
      %v877 = vunpack.c.h.b16 %v304
      %v878 = vunpack.c.l.b16 %v305
      %v879 = vunpack.c.h.b16 %v305
      %v880 = vunpack.c.l.b16 %v306
      %v881 = vunpack.c.h.b16 %v306
      %v882 = vunpack.c.l.b16 %v307
      %v883 = vunpack.c.l.b16 %v308
      %v884 = vunpack.c.h.b16 %v308
      %v885 = vunpack.c.l.b16 %v309
      %v886 = vunpack.c.h.b16 %v309
      %v887 = vunpack.c.l.b16 %v310
      %v888 = vunpack.c.h.b16 %v310
      %v889 = vunpack.c.l.b16 %v311
      %v890 = vunpack.c.h.b16 %v311
      %v891 = vunpack.c.l.b16 %v312
      %v892 = vunpack.c.l.b16 %v313
      %v893 = vunpack.c.h.b16 %v313
      %v894 = vunpack.c.l.b16 %v314
      %v895 = vunpack.c.h.b16 %v314
      %v896 = vunpack.c.l.b16 %v315
      %v897 = vunpack.c.h.b16 %v315
      %v898 = vunpack.c.l.b16 %v316
      %v899 = vunpack.c.h.b16 %v316
      %v900 = vunpack.c.l.b16 %v317
      %v901 = vunpack.c.l.b16 %v318
      %v902 = vunpack.c.h.b16 %v318
      %v903 = vunpack.c.l.b16 %v319
      %v904 = vunpack.c.h.b16 %v319
      %v905 = vunpack.c.l.b16 %v320
      %v906 = vunpack.c.h.b16 %v320
      %v907 = vunpack.c.l.b16 %v321
      %v908 = vunpack.c.h.b16 %v321
      %v909 = vunpack.c.l.b16 %v322
      %v910 = vunpack.c.l.b16 %v323
      %v911 = vunpack.c.h.b16 %v323
      %v912 = vunpack.c.l.b16 %v324
      %v913 = vunpack.c.h.b16 %v324
      %v914 = vunpack.c.l.b16 %v325
      %v915 = vunpack.c.h.b16 %v325
      %v916 = vunpack.c.l.b16 %v326
      %v917 = vunpack.c.h.b16 %v326
      %v918 = vunpack.c.l.b16 %v327
      %v919 = vunpack.c.l.b16 %v328
      %v920 = vunpack.c.h.b16 %v328
      %v921 = vunpack.c.l.b16 %v329
      %v922 = vunpack.c.h.b16 %v329
      %v923 = vunpack.c.l.b16 %v330
      %v924 = vunpack.c.h.b16 %v330
      %v925 = vunpack.c.l.b16 %v331
      %v926 = vunpack.c.h.b16 %v331
      %v927 = vunpack.c.l.b16 %v332
      %v928 = vunpack.c.l.b16 %v333
      %v929 = vunpack.c.h.b16 %v333
      %v930 = vunpack.c.l.b16 %v334
      %v931 = vunpack.c.h.b16 %v334
      %v932 = vunpack.c.l.b16 %v335
      %v933 = vunpack.c.h.b16 %v335
      %v934 = vunpack.c.l.b16 %v336
      %v935 = vunpack.c.h.b16 %v336
      %v936 = vunpack.c.l.b16 %v337
      %v937 = vpack.c.b16 %v658, %v649
      %v938 = vpack.c.b16 %v659, %v650
      %v939 = vpack.c.b16 %v660, %v651
      %v940 = vpack.c.b16 %v661, %v652
      %v941 = vpack.c.b16 %v662, %v653
      %v942 = vpack.c.b16 %v663, %v654
      %v943 = vpack.c.b16 %v664, %v655
      %v944 = vpack.c.b16 %v665, %v656
      %v945 = vpack.c.b16 %v666, %v657
      %v946 = vpack.c.b16 %v676, %v667
      %v947 = vpack.c.b16 %v677, %v668
      %v948 = vpack.c.b16 %v678, %v669
      %v949 = vpack.c.b16 %v679, %v670
      %v950 = vpack.c.b16 %v680, %v671
      %v951 = vpack.c.b16 %v681, %v672
      %v952 = vpack.c.b16 %v682, %v673
      %v953 = vpack.c.b16 %v683, %v674
      %v954 = vpack.c.b16 %v684, %v675
      %v955 = vpack.c.b16 %v694, %v685
      %v956 = vpack.c.b16 %v695, %v686
      %v957 = vpack.c.b16 %v696, %v687
      %v958 = vpack.c.b16 %v697, %v688
      %v959 = vpack.c.b16 %v698, %v689
      %v960 = vpack.c.b16 %v699, %v690
      %v961 = vpack.c.b16 %v700, %v691
      %v962 = vpack.c.b16 %v701, %v692
      %v963 = vpack.c.b16 %v702, %v693
      %v964 = vpack.c.b16 %v712, %v703
      %v965 = vpack.c.b16 %v713, %v704
      %v966 = vpack.c.b16 %v714, %v705
      %v967 = vpack.c.b16 %v715, %v706
      %v968 = vpack.c.b16 %v716, %v707
      %v969 = vpack.c.b16 %v717, %v708
      %v970 = vpack.c.b16 %v718, %v709
      %v971 = vpack.c.b16 %v719, %v710
      %v972 = vpack.c.b16 %v720, %v711
      %v973 = vpack.c.b16 %v730, %v721
      %v974 = vpack.c.b16 %v731, %v722
      %v975 = vpack.c.b16 %v732, %v723
      %v976 = vpack.c.b16 %v733, %v724
      %v977 = vpack.c.b16 %v734, %v725
      %v978 = vpack.c.b16 %v735, %v726
      %v979 = vpack.c.b16 %v736, %v727
      %v980 = vpack.c.b16 %v737, %v728
      %v981 = vpack.c.b16 %v738, %v729
      %v982 = vpack.c.b16 %v748, %v739
      %v983 = vpack.c.b16 %v749, %v740
      %v984 = vpack.c.b16 %v750, %v741
      %v985 = vpack.c.b16 %v751, %v742
      %v986 = vpack.c.b16 %v752, %v743
      %v987 = vpack.c.b16 %v753, %v744
      %v988 = vpack.c.b16 %v754, %v745
      %v989 = vpack.c.b16 %v755, %v746
      %v990 = vpack.c.b16 %v756, %v747
      %v991 = vpack.c.b16 %v766, %v757
      %v992 = vpack.c.b16 %v767, %v758
      %v993 = vpack.c.b16 %v768, %v759
      %v994 = vpack.c.b16 %v769, %v760
      %v995 = vpack.c.b16 %v770, %v761
      %v996 = vpack.c.b16 %v771, %v762
      %v997 = vpack.c.b16 %v772, %v763
      %v998 = vpack.c.b16 %v773, %v764
      %v999 = vpack.c.b16 %v774, %v765
      %v1000 = vpack.c.b16 %v784, %v775
      %v1001 = vpack.c.b16 %v785, %v776
      %v1002 = vpack.c.b16 %v786, %v777
      %v1003 = vpack.c.b16 %v787, %v778
      %v1004 = vpack.c.b16 %v788, %v779
      %v1005 = vpack.c.b16 %v789, %v780
      %v1006 = vpack.c.b16 %v790, %v781
      %v1007 = vpack.c.b16 %v791, %v782
      %v1008 = vpack.c.b16 %v792, %v783
      %v1009 = vpack.c.b16 %v802, %v793
      %v1010 = vpack.c.b16 %v803, %v794
      %v1011 = vpack.c.b16 %v804, %v795
      %v1012 = vpack.c.b16 %v805, %v796
      %v1013 = vpack.c.b16 %v806, %v797
      %v1014 = vpack.c.b16 %v807, %v798
      %v1015 = vpack.c.b16 %v808, %v799
      %v1016 = vpack.c.b16 %v809, %v800
      %v1017 = vpack.c.b16 %v810, %v801
      %v1018 = vpack.c.b16 %v820, %v811
      %v1019 = vpack.c.b16 %v821, %v812
      %v1020 = vpack.c.b16 %v822, %v813
      %v1021 = vpack.c.b16 %v823, %v814
      %v1022 = vpack.c.b16 %v824, %v815
      %v1023 = vpack.c.b16 %v825, %v816
      %v1024 = vpack.c.b16 %v826, %v817
      %v1025 = vpack.c.b16 %v827, %v818
      %v1026 = vpack.c.b16 %v828, %v819
      %v1027 = vpack.c.b16 %v838, %v829
      %v1028 = vpack.c.b16 %v839, %v830
      %v1029 = vpack.c.b16 %v840, %v831
      %v1030 = vpack.c.b16 %v841, %v832
      %v1031 = vpack.c.b16 %v842, %v833
      %v1032 = vpack.c.b16 %v843, %v834
      %v1033 = vpack.c.b16 %v844, %v835
      %v1034 = vpack.c.b16 %v845, %v836
      %v1035 = vpack.c.b16 %v846, %v837
      %v1036 = vpack.c.b16 %v856, %v847
      %v1037 = vpack.c.b16 %v857, %v848
      %v1038 = vpack.c.b16 %v858, %v849
      %v1039 = vpack.c.b16 %v859, %v850
      %v1040 = vpack.c.b16 %v860, %v851
      %v1041 = vpack.c.b16 %v861, %v852
      %v1042 = vpack.c.b16 %v862, %v853
      %v1043 = vpack.c.b16 %v863, %v854
      %v1044 = vpack.c.b16 %v864, %v855
      %v1045 = vpack.c.b16 %v874, %v865
      %v1046 = vpack.c.b16 %v875, %v866
      %v1047 = vpack.c.b16 %v876, %v867
      %v1048 = vpack.c.b16 %v877, %v868
      %v1049 = vpack.c.b16 %v878, %v869
      %v1050 = vpack.c.b16 %v879, %v870
      %v1051 = vpack.c.b16 %v880, %v871
      %v1052 = vpack.c.b16 %v881, %v872
      %v1053 = vpack.c.b16 %v882, %v873
      %v1054 = vpack.c.b16 %v892, %v883
      %v1055 = vpack.c.b16 %v893, %v884
      %v1056 = vpack.c.b16 %v894, %v885
      %v1057 = vpack.c.b16 %v895, %v886
      %v1058 = vpack.c.b16 %v896, %v887
      %v1059 = vpack.c.b16 %v897, %v888
      %v1060 = vpack.c.b16 %v898, %v889
      %v1061 = vpack.c.b16 %v899, %v890
      %v1062 = vpack.c.b16 %v900, %v891
      %v1063 = vpack.c.b16 %v910, %v901
      %v1064 = vpack.c.b16 %v911, %v902
      %v1065 = vpack.c.b16 %v912, %v903
      %v1066 = vpack.c.b16 %v913, %v904
      %v1067 = vpack.c.b16 %v914, %v905
      %v1068 = vpack.c.b16 %v915, %v906
      %v1069 = vpack.c.b16 %v916, %v907
      %v1070 = vpack.c.b16 %v917, %v908
      %v1071 = vpack.c.b16 %v918, %v909
      %v1072 = vpack.c.b16 %v928, %v919
      %v1073 = vpack.c.b16 %v929, %v920
      %v1074 = vpack.c.b16 %v930, %v921
      %v1075 = vpack.c.b16 %v931, %v922
      %v1076 = vpack.c.b16 %v932, %v923
      %v1077 = vpack.c.b16 %v933, %v924
      %v1078 = vpack.c.b16 %v934, %v925
      %v1079 = vpack.c.b16 %v935, %v926
      %v1080 = vpack.c.b16 %v936, %v927
      %v1369 = vunpack.c.l.b16 %v338
      %v1370 = vunpack.c.l.b16 %v339
      %v1371 = vunpack.c.l.b16 %v340
      %v1372 = vunpack.c.l.b16 %v341
      %v1373 = vunpack.c.l.b16 %v342
      %v1374 = vunpack.c.l.b16 %v343
      %v1375 = vunpack.c.l.b16 %v344
      %v1376 = vunpack.c.l.b16 %v345
      %v1377 = vunpack.c.l.b16 %v346
      %v1378 = vunpack.c.l.b16 %v347
      %v1379 = vunpack.c.l.b16 %v348
      %v1380 = vunpack.c.l.b16 %v349
      %v1381 = vunpack.c.l.b16 %v350
      %v1382 = vunpack.c.l.b16 %v351
      %v1383 = vunpack.c.l.b16 %v352
      %v1384 = vunpack.c.l.b16 %v353
      %v1385 = vunpack.c.l.b16 %v354
      %v1386 = vunpack.c.l.b16 %v355
      %v1387 = vunpack.c.l.b16 %v356
      %v1388 = vunpack.c.l.b16 %v357
      %v1389 = vunpack.c.l.b16 %v358
      %v1390 = vunpack.c.l.b16 %v359
      %v1391 = vunpack.c.l.b16 %v360
      %v1392 = vunpack.c.l.b16 %v361
      %v1393 = vunpack.c.l.b16 %v362
      %v1394 = vunpack.c.l.b16 %v363
      %v1395 = vunpack.c.l.b16 %v364
      %v1396 = vunpack.c.l.b16 %v365
      %v1397 = vunpack.c.l.b16 %v366
      %v1398 = vunpack.c.l.b16 %v367
      %v1399 = vunpack.c.l.b16 %v368
      %v1400 = vunpack.c.l.b16 %v369
      %v1401 = vunpack.c.l.b16 %v370
      %v1402 = vunpack.c.l.b16 %v371
      %v1403 = vunpack.c.l.b16 %v372
      %v1404 = vunpack.c.l.b16 %v373
      %v1405 = vunpack.c.l.b16 %v374
      %v1406 = vunpack.c.l.b16 %v375
      %v1407 = vunpack.c.l.b16 %v376
      %v1408 = vunpack.c.l.b16 %v377
      %v1409 = vunpack.c.l.b16 %v378
      %v1410 = vunpack.c.l.b16 %v379
      %v1411 = vunpack.c.l.b16 %v380
      %v1412 = vunpack.c.l.b16 %v381
      %v1413 = vunpack.c.l.b16 %v382
      %v1414 = vunpack.c.l.b16 %v383
      %v1415 = vunpack.c.l.b16 %v384
      %v1416 = vunpack.c.l.b16 %v385
      %v1417 = vunpack.c.l.b16 %v386
      %v1418 = vunpack.c.l.b16 %v387
      %v1419 = vunpack.c.l.b16 %v388
      %v1420 = vunpack.c.l.b16 %v389
      %v1421 = vunpack.c.l.b16 %v390
      %v1422 = vunpack.c.l.b16 %v391
      %v1423 = vunpack.c.l.b16 %v392
      %v1424 = vunpack.c.l.b16 %v393
      %v1425 = vunpack.c.l.b16 %v394
      %v1426 = vunpack.c.l.b16 %v395
      %v1427 = vunpack.c.l.b16 %v396
      %v1428 = vunpack.c.l.b16 %v397
      %v1429 = vunpack.c.l.b16 %v398
      %v1430 = vunpack.c.l.b16 %v399
      %v1431 = vunpack.c.l.b16 %v400
      %v1432 = vunpack.c.l.b16 %v401
      %v1433 = vunpack.c.l.b16 %v402
      %v1434 = vunpack.c.l.b16 %v403
      %v1435 = vunpack.c.l.b16 %v404
      %v1436 = vunpack.c.l.b16 %v405
      %v1437 = vunpack.c.l.b16 %v406
      %v1438 = vunpack.c.l.b16 %v407
      %v1439 = vunpack.c.l.b16 %v408
      %v1440 = vunpack.c.l.b16 %v409
      %v1441 = vunpack.c.l.b16 %v410
      %v1442 = vunpack.c.l.b16 %v411
      %v1443 = vunpack.c.l.b16 %v412
      %v1444 = vunpack.c.l.b16 %v413
      %v1445 = vunpack.c.l.b16 %v414
      %v1446 = vunpack.c.l.b16 %v415
      %v1447 = vunpack.c.l.b16 %v416
      %v1448 = vunpack.c.l.b16 %v417
      %v1449 = vunpack.c.l.b16 %v418
      %v1450 = vunpack.c.l.b16 %v419
      %v1451 = vunpack.c.l.b16 %v420
      %v1452 = vunpack.c.l.b16 %v421
      %v1453 = vunpack.c.l.b16 %v422
      %v1454 = vunpack.c.l.b16 %v423
      %v1455 = vunpack.c.l.b16 %v424
      %v1456 = vunpack.c.l.b16 %v425
      %v1457 = vunpack.c.l.b16 %v426
      %v1458 = vunpack.c.l.b16 %v427
      %v1459 = vunpack.c.l.b16 %v428
      %v1460 = vunpack.c.l.b16 %v429
      %v1461 = vunpack.c.l.b16 %v430
      %v1462 = vunpack.c.l.b16 %v431
      %v1463 = vunpack.c.l.b16 %v432
      %v1464 = vunpack.c.l.b16 %v433
      %v1465 = vunpack.c.l.b16 %v434
      %v1466 = vunpack.c.l.b16 %v435
      %v1467 = vunpack.c.l.b16 %v436
      %v1468 = vunpack.c.l.b16 %v437
      %v1469 = vunpack.c.l.b16 %v438
      %v1470 = vunpack.c.l.b16 %v439
      %v1471 = vunpack.c.l.b16 %v440
      %v1472 = vunpack.c.l.b16 %v441
      %v1473 = vunpack.c.l.b16 %v442
      %v1474 = vunpack.c.l.b16 %v443
      %v1475 = vunpack.c.l.b16 %v444
      %v1476 = vunpack.c.l.b16 %v445
      %v1477 = vunpack.c.l.b16 %v446
      %v1478 = vunpack.c.l.b16 %v447
      %v1479 = vunpack.c.l.b16 %v448
      %v1480 = vunpack.c.l.b16 %v449
      %v1481 = vunpack.c.l.b16 %v450
      %v1482 = vunpack.c.l.b16 %v451
      %v1483 = vunpack.c.l.b16 %v452
      %v1484 = vunpack.c.l.b16 %v453
      %v1485 = vunpack.c.l.b16 %v454
      %v1486 = vunpack.c.l.b16 %v455
      %v1487 = vunpack.c.l.b16 %v456
      %v1488 = vunpack.c.l.b16 %v457
      %v1489 = vunpack.c.l.b16 %v458
      %v1490 = vunpack.c.l.b16 %v459
      %v1491 = vunpack.c.l.b16 %v460
      %v1492 = vunpack.c.l.b16 %v461
      %v1493 = vunpack.c.l.b16 %v462
      %v1494 = vunpack.c.l.b16 %v463
      %v1495 = vunpack.c.l.b16 %v464
      %v1496 = vunpack.c.l.b16 %v465
      %v1497 = vunpack.c.l.b16 %v466
      %v1498 = vunpack.c.l.b16 %v467
      %v1499 = vunpack.c.l.b16 %v468
      %v1500 = vunpack.c.l.b16 %v469
      %v1501 = vunpack.c.l.b16 %v470
      %v1502 = vunpack.c.l.b16 %v471
      %v1503 = vunpack.c.l.b16 %v472
      %v1504 = vunpack.c.l.b16 %v473
      %v1505 = vunpack.c.l.b16 %v474
      %v1506 = vunpack.c.l.b16 %v475
      %v1507 = vunpack.c.l.b16 %v476
      %v1508 = vunpack.c.l.b16 %v477
      %v1509 = vunpack.c.l.b16 %v478
      %v1510 = vunpack.c.l.b16 %v479
      %v1511 = vunpack.c.l.b16 %v480
      %v1512 = vunpack.c.l.b16 %v481
      %v1513 = vpack.c.b16 %v1370, %v1369
      %v1514 = vpack.c.b16 %v1372, %v1371
      %v1515 = vpack.c.b16 %v1374, %v1373
      %v1516 = vpack.c.b16 %v1376, %v1375
      %v1517 = vpack.c.b16 %v1378, %v1377
      %v1518 = vpack.c.b16 %v1380, %v1379
      %v1519 = vpack.c.b16 %v1382, %v1381
      %v1520 = vpack.c.b16 %v1384, %v1383
      %v1521 = vpack.c.b16 %v1386, %v1385
      %v1522 = vpack.c.b16 %v1388, %v1387
      %v1523 = vpack.c.b16 %v1390, %v1389
      %v1524 = vpack.c.b16 %v1392, %v1391
      %v1525 = vpack.c.b16 %v1394, %v1393
      %v1526 = vpack.c.b16 %v1396, %v1395
      %v1527 = vpack.c.b16 %v1398, %v1397
      %v1528 = vpack.c.b16 %v1400, %v1399
      %v1529 = vpack.c.b16 %v1402, %v1401
      %v1530 = vpack.c.b16 %v1404, %v1403
      %v1531 = vpack.c.b16 %v1406, %v1405
      %v1532 = vpack.c.b16 %v1408, %v1407
      %v1533 = vpack.c.b16 %v1410, %v1409
      %v1534 = vpack.c.b16 %v1412, %v1411
      %v1535 = vpack.c.b16 %v1414, %v1413
      %v1536 = vpack.c.b16 %v1416, %v1415
      %v1537 = vpack.c.b16 %v1418, %v1417
      %v1538 = vpack.c.b16 %v1420, %v1419
      %v1539 = vpack.c.b16 %v1422, %v1421
      %v1540 = vpack.c.b16 %v1424, %v1423
      %v1541 = vpack.c.b16 %v1426, %v1425
      %v1542 = vpack.c.b16 %v1428, %v1427
      %v1543 = vpack.c.b16 %v1430, %v1429
      %v1544 = vpack.c.b16 %v1432, %v1431
      %v1545 = vpack.c.b16 %v1434, %v1433
      %v1546 = vpack.c.b16 %v1436, %v1435
      %v1547 = vpack.c.b16 %v1438, %v1437
      %v1548 = vpack.c.b16 %v1440, %v1439
      %v1549 = vpack.c.b16 %v1442, %v1441
      %v1550 = vpack.c.b16 %v1444, %v1443
      %v1551 = vpack.c.b16 %v1446, %v1445
      %v1552 = vpack.c.b16 %v1448, %v1447
      %v1553 = vpack.c.b16 %v1450, %v1449
      %v1554 = vpack.c.b16 %v1452, %v1451
      %v1555 = vpack.c.b16 %v1454, %v1453
      %v1556 = vpack.c.b16 %v1456, %v1455
      %v1557 = vpack.c.b16 %v1458, %v1457
      %v1558 = vpack.c.b16 %v1460, %v1459
      %v1559 = vpack.c.b16 %v1462, %v1461
      %v1560 = vpack.c.b16 %v1464, %v1463
      %v1561 = vpack.c.b16 %v1466, %v1465
      %v1562 = vpack.c.b16 %v1468, %v1467
      %v1563 = vpack.c.b16 %v1470, %v1469
      %v1564 = vpack.c.b16 %v1472, %v1471
      %v1565 = vpack.c.b16 %v1474, %v1473
      %v1566 = vpack.c.b16 %v1476, %v1475
      %v1567 = vpack.c.b16 %v1478, %v1477
      %v1568 = vpack.c.b16 %v1480, %v1479
      %v1569 = vpack.c.b16 %v1482, %v1481
      %v1570 = vpack.c.b16 %v1484, %v1483
      %v1571 = vpack.c.b16 %v1486, %v1485
      %v1572 = vpack.c.b16 %v1488, %v1487
      %v1573 = vpack.c.b16 %v1490, %v1489
      %v1574 = vpack.c.b16 %v1492, %v1491
      %v1575 = vpack.c.b16 %v1494, %v1493
      %v1576 = vpack.c.b16 %v1496, %v1495
      %v1577 = vpack.c.b16 %v1498, %v1497
      %v1578 = vpack.c.b16 %v1500, %v1499
      %v1579 = vpack.c.b16 %v1502, %v1501
      %v1580 = vpack.c.b16 %v1504, %v1503
      %v1581 = vpack.c.b16 %v1506, %v1505
      %v1582 = vpack.c.b16 %v1508, %v1507
      %v1583 = vpack.c.b16 %v1510, %v1509
      %v1584 = vpack.c.b16 %v1512, %v1511
      %1657 = vmatprep.subr.bf16.mxu0 0
      %1658 = vmatpush1.bf16.msra.mxu0 %v1520
      %1659 = vmatprep.subr.bf16.mxu0 0
      %1660 = vmatpush1.bf16.msra.mxu0 %v1519
      %1661 = vmatprep.subr.bf16.mxu0 0
      %1662 = vmatpush1.bf16.msra.mxu0 %v1518
      %1663 = vmatprep.subr.bf16.mxu0 0
      %1664 = vmatpush1.bf16.msra.mxu0 %v1517
      %1665 = vmatprep.subr.bf16.mxu0 0
      %1666 = vmatpush1.bf16.msra.mxu0 %v1516
      %1667 = vmatprep.subr.bf16.mxu0 0
      %1668 = vmatpush1.bf16.msra.mxu0 %v1515
      %1669 = vmatprep.subr.bf16.mxu0 0
      %1670 = vmatpush1.bf16.msra.mxu0 %v1514
      %1671 = vmatprep.subr.bf16.mxu0 0
      %1672 = vmatpush1.bf16.msra.mxu0 %v1513
      %1673 = vmatprep.subr.bf16.mxu0 0
      %1674 = vmatpush2.bf16.msra.mxu0 %v1528
      %1675 = vmatprep.subr.bf16.mxu0 0
      %1676 = vmatpush2.bf16.msra.mxu0 %v1527
      %1677 = vmatprep.subr.bf16.mxu0 0
      %1678 = vmatpush2.bf16.msra.mxu0 %v1526
      %1679 = vmatprep.subr.bf16.mxu0 0
      %1680 = vmatpush2.bf16.msra.mxu0 %v1525
      %1681 = vmatprep.subr.bf16.mxu0 0
      %1682 = vmatpush2.bf16.msra.mxu0 %v1524
      %1683 = vmatprep.subr.bf16.mxu0 0
      %1684 = vmatpush2.bf16.msra.mxu0 %v1523
      %1685 = vmatprep.subr.bf16.mxu0 0
      %1686 = vmatpush2.bf16.msra.mxu0 %v1522
      %1687 = vmatprep.subr.bf16.mxu0 0
      %1688 = vmatpush2.bf16.msra.mxu0 %v1521
      %1689 = vmatprep.mubr.bf16.mxu0 %v938
      %1690 = vmatmul.mubr.bf16.gmra.mxu0 %v937
      %v1691 = vpop.f32.mrf.mxu0
      %v1692 = vadd.f32 %v487, %v1691
      %v1693 = vpop.f32.mrf.mxu0
      %v1694 = vpop.f32.mrf.mxu0
      %v1695 = vadd.f32 %v487, %v1694
      %v1696 = vpop.f32.mrf.mxu0
      %1697 = vmatprep.mubr.bf16.mxu0 %v947
      %1698 = vmatmul.mubr.bf16.gmra.mxu0 %v946
      %v1699 = vpop.f32.mrf.mxu0
      %v1700 = vadd.f32 %v487, %v1699
      %v1701 = vpop.f32.mrf.mxu0
      %v1702 = vpop.f32.mrf.mxu0
      %v1703 = vadd.f32 %v487, %v1702
      %v1704 = vpop.f32.mrf.mxu0
      %1705 = vmatprep.mubr.bf16.mxu0 %v956
      %1706 = vmatmul.mubr.bf16.gmra.mxu0 %v955
      %v1707 = vpop.f32.mrf.mxu0
      %v1708 = vadd.f32 %v487, %v1707
      %v1709 = vpop.f32.mrf.mxu0
      %v1710 = vpop.f32.mrf.mxu0
      %v1711 = vadd.f32 %v487, %v1710
      %v1712 = vpop.f32.mrf.mxu0
      %1713 = vmatprep.mubr.bf16.mxu0 %v965
      %1714 = vmatmul.mubr.bf16.gmra.mxu0 %v964
      %v1715 = vpop.f32.mrf.mxu0
      %v1716 = vadd.f32 %v487, %v1715
      %v1717 = vpop.f32.mrf.mxu0
      %v1718 = vpop.f32.mrf.mxu0
      %v1719 = vadd.f32 %v487, %v1718
      %v1720 = vpop.f32.mrf.mxu0
      %1721 = vmatprep.mubr.bf16.mxu0 %v974
      %1722 = vmatmul.mubr.bf16.gmra.mxu0 %v973
      %v1723 = vpop.f32.mrf.mxu0
      %v1724 = vadd.f32 %v487, %v1723
      %v1725 = vpop.f32.mrf.mxu0
      %v1726 = vpop.f32.mrf.mxu0
      %v1727 = vadd.f32 %v487, %v1726
      %v1728 = vpop.f32.mrf.mxu0
      %1729 = vmatprep.mubr.bf16.mxu0 %v983
      %1730 = vmatmul.mubr.bf16.gmra.mxu0 %v982
      %v1731 = vpop.f32.mrf.mxu0
      %v1732 = vadd.f32 %v487, %v1731
      %v1733 = vpop.f32.mrf.mxu0
      %v1734 = vpop.f32.mrf.mxu0
      %v1735 = vadd.f32 %v487, %v1734
      %v1736 = vpop.f32.mrf.mxu0
      %1737 = vmatprep.mubr.bf16.mxu0 %v992
      %1738 = vmatmul.mubr.bf16.gmra.mxu0 %v991
      %v1739 = vpop.f32.mrf.mxu0
      %v1740 = vadd.f32 %v487, %v1739
      %v1741 = vpop.f32.mrf.mxu0
      %v1742 = vpop.f32.mrf.mxu0
      %v1743 = vadd.f32 %v487, %v1742
      %v1744 = vpop.f32.mrf.mxu0
      %1745 = vmatprep.mubr.bf16.mxu0 %v1001
      %1746 = vmatmul.mubr.bf16.gmra.mxu0 %v1000
      %v1747 = vpop.f32.mrf.mxu0
      %v1748 = vadd.f32 %v487, %v1747
      %v1749 = vpop.f32.mrf.mxu0
      %v1750 = vpop.f32.mrf.mxu0
      %v1751 = vadd.f32 %v487, %v1750
      %v1752 = vpop.f32.mrf.mxu0
      %1753 = vmatprep.mubr.bf16.mxu0 %v1010
      %1754 = vmatmul.mubr.bf16.gmra.mxu0 %v1009
      %v1755 = vpop.f32.mrf.mxu0
      %v1756 = vadd.f32 %v487, %v1755
      %v1757 = vpop.f32.mrf.mxu0
      %v1758 = vpop.f32.mrf.mxu0
      %v1759 = vadd.f32 %v487, %v1758
      %v1760 = vpop.f32.mrf.mxu0
      %1761 = vmatprep.mubr.bf16.mxu0 %v1019
      %1762 = vmatmul.mubr.bf16.gmra.mxu0 %v1018
      %v1763 = vpop.f32.mrf.mxu0
      %v1764 = vadd.f32 %v487, %v1763
      %v1765 = vpop.f32.mrf.mxu0
      %v1766 = vpop.f32.mrf.mxu0
      %v1767 = vadd.f32 %v487, %v1766
      %v1768 = vpop.f32.mrf.mxu0
      %1769 = vmatprep.mubr.bf16.mxu0 %v1028
      %1770 = vmatmul.mubr.bf16.gmra.mxu0 %v1027
      %v1771 = vpop.f32.mrf.mxu0
      %v1772 = vadd.f32 %v487, %v1771
      %v1773 = vpop.f32.mrf.mxu0
      %v1774 = vpop.f32.mrf.mxu0
      %v1775 = vadd.f32 %v487, %v1774
      %v1776 = vpop.f32.mrf.mxu0
      %1777 = vmatprep.mubr.bf16.mxu0 %v1037
      %1778 = vmatmul.mubr.bf16.gmra.mxu0 %v1036
      %v1779 = vpop.f32.mrf.mxu0
      %v1780 = vadd.f32 %v487, %v1779
      %v1781 = vpop.f32.mrf.mxu0
      %v1782 = vpop.f32.mrf.mxu0
      %v1783 = vadd.f32 %v487, %v1782
      %v1784 = vpop.f32.mrf.mxu0
      %1785 = vmatprep.mubr.bf16.mxu0 %v1046
      %1786 = vmatmul.mubr.bf16.gmra.mxu0 %v1045
      %v1787 = vpop.f32.mrf.mxu0
      %v1788 = vadd.f32 %v487, %v1787
      %v1789 = vpop.f32.mrf.mxu0
      %v1790 = vpop.f32.mrf.mxu0
      %v1791 = vadd.f32 %v487, %v1790
      %v1792 = vpop.f32.mrf.mxu0
      %1793 = vmatprep.mubr.bf16.mxu0 %v1055
      %1794 = vmatmul.mubr.bf16.gmra.mxu0 %v1054
      %v1795 = vpop.f32.mrf.mxu0
      %v1796 = vadd.f32 %v487, %v1795
      %v1797 = vpop.f32.mrf.mxu0
      %v1798 = vpop.f32.mrf.mxu0
      %v1799 = vadd.f32 %v487, %v1798
      %v1800 = vpop.f32.mrf.mxu0
      %1801 = vmatprep.mubr.bf16.mxu0 %v1064
      %1802 = vmatmul.mubr.bf16.gmra.mxu0 %v1063
      %v1803 = vpop.f32.mrf.mxu0
      %v1804 = vadd.f32 %v487, %v1803
      %v1805 = vpop.f32.mrf.mxu0
      %v1806 = vpop.f32.mrf.mxu0
      %v1807 = vadd.f32 %v487, %v1806
      %v1808 = vpop.f32.mrf.mxu0
      %1809 = vmatprep.mubr.bf16.mxu0 %v1073
      %1810 = vmatmul.mubr.bf16.gmra.mxu0 %v1072
      %v1811 = vpop.f32.mrf.mxu0
      %v1812 = vadd.f32 %v487, %v1811
      %v1813 = vpop.f32.mrf.mxu0
      %v1814 = vpop.f32.mrf.mxu0
      %v1815 = vadd.f32 %v487, %v1814
      %v1816 = vpop.f32.mrf.mxu0
      %1817 = vdwg.mxu0
      %1818 = vmatprep.subr.bf16.mxu0 0
      %1819 = vmatpush1.bf16.msra.mxu0 %v1536
      %1820 = vmatprep.subr.bf16.mxu0 0
      %1821 = vmatpush1.bf16.msra.mxu0 %v1535
      %1822 = vmatprep.subr.bf16.mxu0 0
      %1823 = vmatpush1.bf16.msra.mxu0 %v1534
      %1824 = vmatprep.subr.bf16.mxu0 0
      %1825 = vmatpush1.bf16.msra.mxu0 %v1533
      %1826 = vmatprep.subr.bf16.mxu0 0
      %1827 = vmatpush1.bf16.msra.mxu0 %v1532
      %1828 = vmatprep.subr.bf16.mxu0 0
      %1829 = vmatpush1.bf16.msra.mxu0 %v1531
      %1830 = vmatprep.subr.bf16.mxu0 0
      %1831 = vmatpush1.bf16.msra.mxu0 %v1530
      %1832 = vmatprep.subr.bf16.mxu0 0
      %1833 = vmatpush1.bf16.msra.mxu0 %v1529
      %1834 = vmatprep.subr.bf16.mxu0 0
      %1835 = vmatpush2.bf16.msra.mxu0 %v1544
      %1836 = vmatprep.subr.bf16.mxu0 0
      %1837 = vmatpush2.bf16.msra.mxu0 %v1543
      %1838 = vmatprep.subr.bf16.mxu0 0
      %1839 = vmatpush2.bf16.msra.mxu0 %v1542
      %1840 = vmatprep.subr.bf16.mxu0 0
      %1841 = vmatpush2.bf16.msra.mxu0 %v1541
      %1842 = vmatprep.subr.bf16.mxu0 0
      %1843 = vmatpush2.bf16.msra.mxu0 %v1540
      %1844 = vmatprep.subr.bf16.mxu0 0
      %1845 = vmatpush2.bf16.msra.mxu0 %v1539
      %1846 = vmatprep.subr.bf16.mxu0 0
      %1847 = vmatpush2.bf16.msra.mxu0 %v1538
      %1848 = vmatprep.subr.bf16.mxu0 0
      %1849 = vmatpush2.bf16.msra.mxu0 %v1537
      %1850 = vmatprep.mubr.bf16.mxu0 %v940
      %1851 = vmatmul.mubr.bf16.gmra.mxu0 %v939
      %v1852 = vpop.f32.mrf.mxu0
      %v1853 = vadd.f32 %v1692, %v1852
      %v1854 = vpop.f32.mrf.mxu0
      %v1855 = vpop.f32.mrf.mxu0
      %v1856 = vadd.f32 %v1695, %v1855
      %v1857 = vpop.f32.mrf.mxu0
      %1858 = vmatprep.mubr.bf16.mxu0 %v949
      %1859 = vmatmul.mubr.bf16.gmra.mxu0 %v948
      %v1860 = vpop.f32.mrf.mxu0
      %v1861 = vadd.f32 %v1700, %v1860
      %v1862 = vpop.f32.mrf.mxu0
      %v1863 = vpop.f32.mrf.mxu0
      %v1864 = vadd.f32 %v1703, %v1863
      %v1865 = vpop.f32.mrf.mxu0
      %1866 = vmatprep.mubr.bf16.mxu0 %v958
      %1867 = vmatmul.mubr.bf16.gmra.mxu0 %v957
      %v1868 = vpop.f32.mrf.mxu0
      %v1869 = vadd.f32 %v1708, %v1868
      %v1870 = vpop.f32.mrf.mxu0
      %v1871 = vpop.f32.mrf.mxu0
      %v1872 = vadd.f32 %v1711, %v1871
      %v1873 = vpop.f32.mrf.mxu0
      %1874 = vmatprep.mubr.bf16.mxu0 %v967
      %1875 = vmatmul.mubr.bf16.gmra.mxu0 %v966
      %v1876 = vpop.f32.mrf.mxu0
      %v1877 = vadd.f32 %v1716, %v1876
      %v1878 = vpop.f32.mrf.mxu0
      %v1879 = vpop.f32.mrf.mxu0
      %v1880 = vadd.f32 %v1719, %v1879
      %v1881 = vpop.f32.mrf.mxu0
      %1882 = vmatprep.mubr.bf16.mxu0 %v976
      %1883 = vmatmul.mubr.bf16.gmra.mxu0 %v975
      %v1884 = vpop.f32.mrf.mxu0
      %v1885 = vadd.f32 %v1724, %v1884
      %v1886 = vpop.f32.mrf.mxu0
      %v1887 = vpop.f32.mrf.mxu0
      %v1888 = vadd.f32 %v1727, %v1887
      %v1889 = vpop.f32.mrf.mxu0
      %1890 = vmatprep.mubr.bf16.mxu0 %v985
      %1891 = vmatmul.mubr.bf16.gmra.mxu0 %v984
      %v1892 = vpop.f32.mrf.mxu0
      %v1893 = vadd.f32 %v1732, %v1892
      %v1894 = vpop.f32.mrf.mxu0
      %v1895 = vpop.f32.mrf.mxu0
      %v1896 = vadd.f32 %v1735, %v1895
      %v1897 = vpop.f32.mrf.mxu0
      %1898 = vmatprep.mubr.bf16.mxu0 %v994
      %1899 = vmatmul.mubr.bf16.gmra.mxu0 %v993
      %v1900 = vpop.f32.mrf.mxu0
      %v1901 = vadd.f32 %v1740, %v1900
      %v1902 = vpop.f32.mrf.mxu0
      %v1903 = vpop.f32.mrf.mxu0
      %v1904 = vadd.f32 %v1743, %v1903
      %v1905 = vpop.f32.mrf.mxu0
      %1906 = vmatprep.mubr.bf16.mxu0 %v1003
      %1907 = vmatmul.mubr.bf16.gmra.mxu0 %v1002
      %v1908 = vpop.f32.mrf.mxu0
      %v1909 = vadd.f32 %v1748, %v1908
      %v1910 = vpop.f32.mrf.mxu0
      %v1911 = vpop.f32.mrf.mxu0
      %v1912 = vadd.f32 %v1751, %v1911
      %v1913 = vpop.f32.mrf.mxu0
      %1914 = vmatprep.mubr.bf16.mxu0 %v1012
      %1915 = vmatmul.mubr.bf16.gmra.mxu0 %v1011
      %v1916 = vpop.f32.mrf.mxu0
      %v1917 = vadd.f32 %v1756, %v1916
      %v1918 = vpop.f32.mrf.mxu0
      %v1919 = vpop.f32.mrf.mxu0
      %v1920 = vadd.f32 %v1759, %v1919
      %v1921 = vpop.f32.mrf.mxu0
      %1922 = vmatprep.mubr.bf16.mxu0 %v1021
      %1923 = vmatmul.mubr.bf16.gmra.mxu0 %v1020
      %v1924 = vpop.f32.mrf.mxu0
      %v1925 = vadd.f32 %v1764, %v1924
      %v1926 = vpop.f32.mrf.mxu0
      %v1927 = vpop.f32.mrf.mxu0
      %v1928 = vadd.f32 %v1767, %v1927
      %v1929 = vpop.f32.mrf.mxu0
      %1930 = vmatprep.mubr.bf16.mxu0 %v1030
      %1931 = vmatmul.mubr.bf16.gmra.mxu0 %v1029
      %v1932 = vpop.f32.mrf.mxu0
      %v1933 = vadd.f32 %v1772, %v1932
      %v1934 = vpop.f32.mrf.mxu0
      %v1935 = vpop.f32.mrf.mxu0
      %v1936 = vadd.f32 %v1775, %v1935
      %v1937 = vpop.f32.mrf.mxu0
      %1938 = vmatprep.mubr.bf16.mxu0 %v1039
      %1939 = vmatmul.mubr.bf16.gmra.mxu0 %v1038
      %v1940 = vpop.f32.mrf.mxu0
      %v1941 = vadd.f32 %v1780, %v1940
      %v1942 = vpop.f32.mrf.mxu0
      %v1943 = vpop.f32.mrf.mxu0
      %v1944 = vadd.f32 %v1783, %v1943
      %v1945 = vpop.f32.mrf.mxu0
      %1946 = vmatprep.mubr.bf16.mxu0 %v1048
      %1947 = vmatmul.mubr.bf16.gmra.mxu0 %v1047
      %v1948 = vpop.f32.mrf.mxu0
      %v1949 = vadd.f32 %v1788, %v1948
      %v1950 = vpop.f32.mrf.mxu0
      %v1951 = vpop.f32.mrf.mxu0
      %v1952 = vadd.f32 %v1791, %v1951
      %v1953 = vpop.f32.mrf.mxu0
      %1954 = vmatprep.mubr.bf16.mxu0 %v1057
      %1955 = vmatmul.mubr.bf16.gmra.mxu0 %v1056
      %v1956 = vpop.f32.mrf.mxu0
      %v1957 = vadd.f32 %v1796, %v1956
      %v1958 = vpop.f32.mrf.mxu0
      %v1959 = vpop.f32.mrf.mxu0
      %v1960 = vadd.f32 %v1799, %v1959
      %v1961 = vpop.f32.mrf.mxu0
      %1962 = vmatprep.mubr.bf16.mxu0 %v1066
      %1963 = vmatmul.mubr.bf16.gmra.mxu0 %v1065
      %v1964 = vpop.f32.mrf.mxu0
      %v1965 = vadd.f32 %v1804, %v1964
      %v1966 = vpop.f32.mrf.mxu0
      %v1967 = vpop.f32.mrf.mxu0
      %v1968 = vadd.f32 %v1807, %v1967
      %v1969 = vpop.f32.mrf.mxu0
      %1970 = vmatprep.mubr.bf16.mxu0 %v1075
      %1971 = vmatmul.mubr.bf16.gmra.mxu0 %v1074
      %v1972 = vpop.f32.mrf.mxu0
      %v1973 = vadd.f32 %v1812, %v1972
      %v1974 = vpop.f32.mrf.mxu0
      %v1975 = vpop.f32.mrf.mxu0
      %v1976 = vadd.f32 %v1815, %v1975
      %v1977 = vpop.f32.mrf.mxu0
      %1978 = vdwg.mxu0
      %1979 = vmatprep.subr.bf16.mxu0 0
      %1980 = vmatpush1.bf16.msra.mxu0 %v1552
      %1981 = vmatprep.subr.bf16.mxu0 0
      %1982 = vmatpush1.bf16.msra.mxu0 %v1551
      %1983 = vmatprep.subr.bf16.mxu0 0
      %1984 = vmatpush1.bf16.msra.mxu0 %v1550
      %1985 = vmatprep.subr.bf16.mxu0 0
      %1986 = vmatpush1.bf16.msra.mxu0 %v1549
      %1987 = vmatprep.subr.bf16.mxu0 0
      %1988 = vmatpush1.bf16.msra.mxu0 %v1548
      %1989 = vmatprep.subr.bf16.mxu0 0
      %1990 = vmatpush1.bf16.msra.mxu0 %v1547
      %1991 = vmatprep.subr.bf16.mxu0 0
      %1992 = vmatpush1.bf16.msra.mxu0 %v1546
      %1993 = vmatprep.subr.bf16.mxu0 0
      %1994 = vmatpush1.bf16.msra.mxu0 %v1545
      %1995 = vmatprep.subr.bf16.mxu0 0
      %1996 = vmatpush2.bf16.msra.mxu0 %v1560
      %1997 = vmatprep.subr.bf16.mxu0 0
      %1998 = vmatpush2.bf16.msra.mxu0 %v1559
      %1999 = vmatprep.subr.bf16.mxu0 0
      %2000 = vmatpush2.bf16.msra.mxu0 %v1558
      %2001 = vmatprep.subr.bf16.mxu0 0
      %2002 = vmatpush2.bf16.msra.mxu0 %v1557
      %2003 = vmatprep.subr.bf16.mxu0 0
      %2004 = vmatpush2.bf16.msra.mxu0 %v1556
      %2005 = vmatprep.subr.bf16.mxu0 0
      %2006 = vmatpush2.bf16.msra.mxu0 %v1555
      %2007 = vmatprep.subr.bf16.mxu0 0
      %2008 = vmatpush2.bf16.msra.mxu0 %v1554
      %2009 = vmatprep.subr.bf16.mxu0 0
      %2010 = vmatpush2.bf16.msra.mxu0 %v1553
      %2011 = vmatprep.mubr.bf16.mxu0 %v942
      %2012 = vmatmul.mubr.bf16.gmra.mxu0 %v941
      %v2013 = vpop.f32.mrf.mxu0
      %v2014 = vadd.f32 %v1853, %v2013
      %v2015 = vpop.f32.mrf.mxu0
      %v2016 = vpop.f32.mrf.mxu0
      %v2017 = vadd.f32 %v1856, %v2016
      %v2018 = vpop.f32.mrf.mxu0
      %2019 = vmatprep.mubr.bf16.mxu0 %v951
      %2020 = vmatmul.mubr.bf16.gmra.mxu0 %v950
      %v2021 = vpop.f32.mrf.mxu0
      %v2022 = vadd.f32 %v1861, %v2021
      %v2023 = vpop.f32.mrf.mxu0
      %v2024 = vpop.f32.mrf.mxu0
      %v2025 = vadd.f32 %v1864, %v2024
      %v2026 = vpop.f32.mrf.mxu0
      %2027 = vmatprep.mubr.bf16.mxu0 %v960
      %2028 = vmatmul.mubr.bf16.gmra.mxu0 %v959
      %v2029 = vpop.f32.mrf.mxu0
      %v2030 = vadd.f32 %v1869, %v2029
      %v2031 = vpop.f32.mrf.mxu0
      %v2032 = vpop.f32.mrf.mxu0
      %v2033 = vadd.f32 %v1872, %v2032
      %v2034 = vpop.f32.mrf.mxu0
      %2035 = vmatprep.mubr.bf16.mxu0 %v969
      %2036 = vmatmul.mubr.bf16.gmra.mxu0 %v968
      %v2037 = vpop.f32.mrf.mxu0
      %v2038 = vadd.f32 %v1877, %v2037
      %v2039 = vpop.f32.mrf.mxu0
      %v2040 = vpop.f32.mrf.mxu0
      %v2041 = vadd.f32 %v1880, %v2040
      %v2042 = vpop.f32.mrf.mxu0
      %2043 = vmatprep.mubr.bf16.mxu0 %v978
      %2044 = vmatmul.mubr.bf16.gmra.mxu0 %v977
      %v2045 = vpop.f32.mrf.mxu0
      %v2046 = vadd.f32 %v1885, %v2045
      %v2047 = vpop.f32.mrf.mxu0
      %v2048 = vpop.f32.mrf.mxu0
      %v2049 = vadd.f32 %v1888, %v2048
      %v2050 = vpop.f32.mrf.mxu0
      %2051 = vmatprep.mubr.bf16.mxu0 %v987
      %2052 = vmatmul.mubr.bf16.gmra.mxu0 %v986
      %v2053 = vpop.f32.mrf.mxu0
      %v2054 = vadd.f32 %v1893, %v2053
      %v2055 = vpop.f32.mrf.mxu0
      %v2056 = vpop.f32.mrf.mxu0
      %v2057 = vadd.f32 %v1896, %v2056
      %v2058 = vpop.f32.mrf.mxu0
      %2059 = vmatprep.mubr.bf16.mxu0 %v996
      %2060 = vmatmul.mubr.bf16.gmra.mxu0 %v995
      %v2061 = vpop.f32.mrf.mxu0
      %v2062 = vadd.f32 %v1901, %v2061
      %v2063 = vpop.f32.mrf.mxu0
      %v2064 = vpop.f32.mrf.mxu0
      %v2065 = vadd.f32 %v1904, %v2064
      %v2066 = vpop.f32.mrf.mxu0
      %2067 = vmatprep.mubr.bf16.mxu0 %v1005
      %2068 = vmatmul.mubr.bf16.gmra.mxu0 %v1004
      %v2069 = vpop.f32.mrf.mxu0
      %v2070 = vadd.f32 %v1909, %v2069
      %v2071 = vpop.f32.mrf.mxu0
      %v2072 = vpop.f32.mrf.mxu0
      %v2073 = vadd.f32 %v1912, %v2072
      %v2074 = vpop.f32.mrf.mxu0
      %2075 = vmatprep.mubr.bf16.mxu0 %v1014
      %2076 = vmatmul.mubr.bf16.gmra.mxu0 %v1013
      %v2077 = vpop.f32.mrf.mxu0
      %v2078 = vadd.f32 %v1917, %v2077
      %v2079 = vpop.f32.mrf.mxu0
      %v2080 = vpop.f32.mrf.mxu0
      %v2081 = vadd.f32 %v1920, %v2080
      %v2082 = vpop.f32.mrf.mxu0
      %2083 = vmatprep.mubr.bf16.mxu0 %v1023
      %2084 = vmatmul.mubr.bf16.gmra.mxu0 %v1022
      %v2085 = vpop.f32.mrf.mxu0
      %v2086 = vadd.f32 %v1925, %v2085
      %v2087 = vpop.f32.mrf.mxu0
      %v2088 = vpop.f32.mrf.mxu0
      %v2089 = vadd.f32 %v1928, %v2088
      %v2090 = vpop.f32.mrf.mxu0
      %2091 = vmatprep.mubr.bf16.mxu0 %v1032
      %2092 = vmatmul.mubr.bf16.gmra.mxu0 %v1031
      %v2093 = vpop.f32.mrf.mxu0
      %v2094 = vadd.f32 %v1933, %v2093
      %v2095 = vpop.f32.mrf.mxu0
      %v2096 = vpop.f32.mrf.mxu0
      %v2097 = vadd.f32 %v1936, %v2096
      %v2098 = vpop.f32.mrf.mxu0
      %2099 = vmatprep.mubr.bf16.mxu0 %v1041
      %2100 = vmatmul.mubr.bf16.gmra.mxu0 %v1040
      %v2101 = vpop.f32.mrf.mxu0
      %v2102 = vadd.f32 %v1941, %v2101
      %v2103 = vpop.f32.mrf.mxu0
      %v2104 = vpop.f32.mrf.mxu0
      %v2105 = vadd.f32 %v1944, %v2104
      %v2106 = vpop.f32.mrf.mxu0
      %2107 = vmatprep.mubr.bf16.mxu0 %v1050
      %2108 = vmatmul.mubr.bf16.gmra.mxu0 %v1049
      %v2109 = vpop.f32.mrf.mxu0
      %v2110 = vadd.f32 %v1949, %v2109
      %v2111 = vpop.f32.mrf.mxu0
      %v2112 = vpop.f32.mrf.mxu0
      %v2113 = vadd.f32 %v1952, %v2112
      %v2114 = vpop.f32.mrf.mxu0
      %2115 = vmatprep.mubr.bf16.mxu0 %v1059
      %2116 = vmatmul.mubr.bf16.gmra.mxu0 %v1058
      %v2117 = vpop.f32.mrf.mxu0
      %v2118 = vadd.f32 %v1957, %v2117
      %v2119 = vpop.f32.mrf.mxu0
      %v2120 = vpop.f32.mrf.mxu0
      %v2121 = vadd.f32 %v1960, %v2120
      %v2122 = vpop.f32.mrf.mxu0
      %2123 = vmatprep.mubr.bf16.mxu0 %v1068
      %2124 = vmatmul.mubr.bf16.gmra.mxu0 %v1067
      %v2125 = vpop.f32.mrf.mxu0
      %v2126 = vadd.f32 %v1965, %v2125
      %v2127 = vpop.f32.mrf.mxu0
      %v2128 = vpop.f32.mrf.mxu0
      %v2129 = vadd.f32 %v1968, %v2128
      %v2130 = vpop.f32.mrf.mxu0
      %2131 = vmatprep.mubr.bf16.mxu0 %v1077
      %2132 = vmatmul.mubr.bf16.gmra.mxu0 %v1076
      %v2133 = vpop.f32.mrf.mxu0
      %v2134 = vadd.f32 %v1973, %v2133
      %v2135 = vpop.f32.mrf.mxu0
      %v2136 = vpop.f32.mrf.mxu0
      %v2137 = vadd.f32 %v1976, %v2136
      %v2138 = vpop.f32.mrf.mxu0
      %2139 = vdwg.mxu0
      %2140 = vmatprep.subr.bf16.mxu0 0
      %2141 = vmatpush1.bf16.msra.mxu0 %v1568
      %2142 = vmatprep.subr.bf16.mxu0 0
      %2143 = vmatpush1.bf16.msra.mxu0 %v1567
      %2144 = vmatprep.subr.bf16.mxu0 0
      %2145 = vmatpush1.bf16.msra.mxu0 %v1566
      %2146 = vmatprep.subr.bf16.mxu0 0
      %2147 = vmatpush1.bf16.msra.mxu0 %v1565
      %2148 = vmatprep.subr.bf16.mxu0 0
      %2149 = vmatpush1.bf16.msra.mxu0 %v1564
      %2150 = vmatprep.subr.bf16.mxu0 0
      %2151 = vmatpush1.bf16.msra.mxu0 %v1563
      %2152 = vmatprep.subr.bf16.mxu0 0
      %2153 = vmatpush1.bf16.msra.mxu0 %v1562
      %2154 = vmatprep.subr.bf16.mxu0 0
      %2155 = vmatpush1.bf16.msra.mxu0 %v1561
      %2156 = vmatprep.subr.bf16.mxu0 0
      %2157 = vmatpush2.bf16.msra.mxu0 %v1576
      %2158 = vmatprep.subr.bf16.mxu0 0
      %2159 = vmatpush2.bf16.msra.mxu0 %v1575
      %2160 = vmatprep.subr.bf16.mxu0 0
      %2161 = vmatpush2.bf16.msra.mxu0 %v1574
      %2162 = vmatprep.subr.bf16.mxu0 0
      %2163 = vmatpush2.bf16.msra.mxu0 %v1573
      %2164 = vmatprep.subr.bf16.mxu0 0
      %2165 = vmatpush2.bf16.msra.mxu0 %v1572
      %2166 = vmatprep.subr.bf16.mxu0 0
      %2167 = vmatpush2.bf16.msra.mxu0 %v1571
      %2168 = vmatprep.subr.bf16.mxu0 0
      %2169 = vmatpush2.bf16.msra.mxu0 %v1570
      %2170 = vmatprep.subr.bf16.mxu0 0
      %2171 = vmatpush2.bf16.msra.mxu0 %v1569
      %2172 = vmatprep.mubr.bf16.mxu0 %v944
      %2173 = vmatmul.mubr.bf16.gmra.mxu0 %v943
      %v2174 = vpop.f32.mrf.mxu0
      %v2175 = vadd.f32 %v2014, %v2174
      %v2176 = vpop.f32.mrf.mxu0
      %v2177 = vpop.f32.mrf.mxu0
      %v2178 = vadd.f32 %v2017, %v2177
      %v2179 = vpop.f32.mrf.mxu0
      %2180 = vmatprep.mubr.bf16.mxu0 %v953
      %2181 = vmatmul.mubr.bf16.gmra.mxu0 %v952
      %v2182 = vpop.f32.mrf.mxu0
      %v2183 = vadd.f32 %v2022, %v2182
      %v2184 = vpop.f32.mrf.mxu0
      %v2185 = vpop.f32.mrf.mxu0
      %v2186 = vadd.f32 %v2025, %v2185
      %v2187 = vpop.f32.mrf.mxu0
      %2188 = vmatprep.mubr.bf16.mxu0 %v962
      %2189 = vmatmul.mubr.bf16.gmra.mxu0 %v961
      %v2190 = vpop.f32.mrf.mxu0
      %v2191 = vadd.f32 %v2030, %v2190
      %v2192 = vpop.f32.mrf.mxu0
      %v2193 = vpop.f32.mrf.mxu0
      %v2194 = vadd.f32 %v2033, %v2193
      %v2195 = vpop.f32.mrf.mxu0
      %2196 = vmatprep.mubr.bf16.mxu0 %v971
      %2197 = vmatmul.mubr.bf16.gmra.mxu0 %v970
      %v2198 = vpop.f32.mrf.mxu0
      %v2199 = vadd.f32 %v2038, %v2198
      %v2200 = vpop.f32.mrf.mxu0
      %v2201 = vpop.f32.mrf.mxu0
      %v2202 = vadd.f32 %v2041, %v2201
      %v2203 = vpop.f32.mrf.mxu0
      %2204 = vmatprep.mubr.bf16.mxu0 %v980
      %2205 = vmatmul.mubr.bf16.gmra.mxu0 %v979
      %v2206 = vpop.f32.mrf.mxu0
      %v2207 = vadd.f32 %v2046, %v2206
      %v2208 = vpop.f32.mrf.mxu0
      %v2209 = vpop.f32.mrf.mxu0
      %v2210 = vadd.f32 %v2049, %v2209
      %v2211 = vpop.f32.mrf.mxu0
      %2212 = vmatprep.mubr.bf16.mxu0 %v989
      %2213 = vmatmul.mubr.bf16.gmra.mxu0 %v988
      %v2214 = vpop.f32.mrf.mxu0
      %v2215 = vadd.f32 %v2054, %v2214
      %v2216 = vpop.f32.mrf.mxu0
      %v2217 = vpop.f32.mrf.mxu0
      %v2218 = vadd.f32 %v2057, %v2217
      %v2219 = vpop.f32.mrf.mxu0
      %2220 = vmatprep.mubr.bf16.mxu0 %v998
      %2221 = vmatmul.mubr.bf16.gmra.mxu0 %v997
      %v2222 = vpop.f32.mrf.mxu0
      %v2223 = vadd.f32 %v2062, %v2222
      %v2224 = vpop.f32.mrf.mxu0
      %v2225 = vpop.f32.mrf.mxu0
      %v2226 = vadd.f32 %v2065, %v2225
      %v2227 = vpop.f32.mrf.mxu0
      %2228 = vmatprep.mubr.bf16.mxu0 %v1007
      %2229 = vmatmul.mubr.bf16.gmra.mxu0 %v1006
      %v2230 = vpop.f32.mrf.mxu0
      %v2231 = vadd.f32 %v2070, %v2230
      %v2232 = vpop.f32.mrf.mxu0
      %v2233 = vpop.f32.mrf.mxu0
      %v2234 = vadd.f32 %v2073, %v2233
      %v2235 = vpop.f32.mrf.mxu0
      %2236 = vmatprep.mubr.bf16.mxu0 %v1016
      %2237 = vmatmul.mubr.bf16.gmra.mxu0 %v1015
      %v2238 = vpop.f32.mrf.mxu0
      %v2239 = vadd.f32 %v2078, %v2238
      %v2240 = vpop.f32.mrf.mxu0
      %v2241 = vpop.f32.mrf.mxu0
      %v2242 = vadd.f32 %v2081, %v2241
      %v2243 = vpop.f32.mrf.mxu0
      %2244 = vmatprep.mubr.bf16.mxu0 %v1025
      %2245 = vmatmul.mubr.bf16.gmra.mxu0 %v1024
      %v2246 = vpop.f32.mrf.mxu0
      %v2247 = vadd.f32 %v2086, %v2246
      %v2248 = vpop.f32.mrf.mxu0
      %v2249 = vpop.f32.mrf.mxu0
      %v2250 = vadd.f32 %v2089, %v2249
      %v2251 = vpop.f32.mrf.mxu0
      %2252 = vmatprep.mubr.bf16.mxu0 %v1034
      %2253 = vmatmul.mubr.bf16.gmra.mxu0 %v1033
      %v2254 = vpop.f32.mrf.mxu0
      %v2255 = vadd.f32 %v2094, %v2254
      %v2256 = vpop.f32.mrf.mxu0
      %v2257 = vpop.f32.mrf.mxu0
      %v2258 = vadd.f32 %v2097, %v2257
      %v2259 = vpop.f32.mrf.mxu0
      %2260 = vmatprep.mubr.bf16.mxu0 %v1043
      %2261 = vmatmul.mubr.bf16.gmra.mxu0 %v1042
      %v2262 = vpop.f32.mrf.mxu0
      %v2263 = vadd.f32 %v2102, %v2262
      %v2264 = vpop.f32.mrf.mxu0
      %v2265 = vpop.f32.mrf.mxu0
      %v2266 = vadd.f32 %v2105, %v2265
      %v2267 = vpop.f32.mrf.mxu0
      %2268 = vmatprep.mubr.bf16.mxu0 %v1052
      %2269 = vmatmul.mubr.bf16.gmra.mxu0 %v1051
      %v2270 = vpop.f32.mrf.mxu0
      %v2271 = vadd.f32 %v2110, %v2270
      %v2272 = vpop.f32.mrf.mxu0
      %v2273 = vpop.f32.mrf.mxu0
      %v2274 = vadd.f32 %v2113, %v2273
      %v2275 = vpop.f32.mrf.mxu0
      %2276 = vmatprep.mubr.bf16.mxu0 %v1061
      %2277 = vmatmul.mubr.bf16.gmra.mxu0 %v1060
      %v2278 = vpop.f32.mrf.mxu0
      %v2279 = vadd.f32 %v2118, %v2278
      %v2280 = vpop.f32.mrf.mxu0
      %v2281 = vpop.f32.mrf.mxu0
      %v2282 = vadd.f32 %v2121, %v2281
      %v2283 = vpop.f32.mrf.mxu0
      %2284 = vmatprep.mubr.bf16.mxu0 %v1070
      %2285 = vmatmul.mubr.bf16.gmra.mxu0 %v1069
      %v2286 = vpop.f32.mrf.mxu0
      %v2287 = vadd.f32 %v2126, %v2286
      %v2288 = vpop.f32.mrf.mxu0
      %v2289 = vpop.f32.mrf.mxu0
      %v2290 = vadd.f32 %v2129, %v2289
      %v2291 = vpop.f32.mrf.mxu0
      %2292 = vmatprep.mubr.bf16.mxu0 %v1079
      %2293 = vmatmul.mubr.bf16.gmra.mxu0 %v1078
      %v2294 = vpop.f32.mrf.mxu0
      %v2295 = vadd.f32 %v2134, %v2294
      %v2296 = vpop.f32.mrf.mxu0
      %v2297 = vpop.f32.mrf.mxu0
      %v2298 = vadd.f32 %v2137, %v2297
      %v2299 = vpop.f32.mrf.mxu0
      %2300 = vdwg.mxu0
      %2301 = vmatprep.subr.bf16.mxu0 0
      %2302 = vmatpush1.bf16.msra.mxu0 %v1584
      %2303 = vmatprep.subr.bf16.mxu0 0
      %2304 = vmatpush1.bf16.msra.mxu0 %v1583
      %2305 = vmatprep.subr.bf16.mxu0 0
      %2306 = vmatpush1.bf16.msra.mxu0 %v1582
      %2307 = vmatprep.subr.bf16.mxu0 0
      %2308 = vmatpush1.bf16.msra.mxu0 %v1581
      %2309 = vmatprep.subr.bf16.mxu0 0
      %2310 = vmatpush1.bf16.msra.mxu0 %v1580
      %2311 = vmatprep.subr.bf16.mxu0 0
      %2312 = vmatpush1.bf16.msra.mxu0 %v1579
      %2313 = vmatprep.subr.bf16.mxu0 0
      %2314 = vmatpush1.bf16.msra.mxu0 %v1578
      %2315 = vmatprep.subr.bf16.mxu0 0
      %2316 = vmatpush1.bf16.msra.mxu0 %v1577
      %2317 = vmatprep.subr.bf16.mxu0 0
      %2318 = vmatpush2.bf16.msra.mxu0 0
      %2319 = vmatprep.subr.bf16.mxu0 0
      %2320 = vmatpush2.bf16.msra.mxu0 0
      %2321 = vmatprep.subr.bf16.mxu0 0
      %2322 = vmatpush2.bf16.msra.mxu0 0
      %2323 = vmatprep.subr.bf16.mxu0 0
      %2324 = vmatpush2.bf16.msra.mxu0 0
      %2325 = vmatprep.subr.bf16.mxu0 0
      %2326 = vmatpush2.bf16.msra.mxu0 0
      %2327 = vmatprep.subr.bf16.mxu0 0
      %2328 = vmatpush2.bf16.msra.mxu0 0
      %2329 = vmatprep.subr.bf16.mxu0 0
      %2330 = vmatpush2.bf16.msra.mxu0 0
      %2331 = vmatprep.subr.bf16.mxu0 0
      %2332 = vmatpush2.bf16.msra.mxu0 0
      %2333 = vmatprep.mubr.bf16.mxu0 0
      %2334 = vmatmul.mubr.bf16.gmra.mxu0 %v945
      %v2335 = vpop.f32.mrf.mxu0
      %v2336 = vadd.f32 %v2175, %v2335
      %v2337 = vpop.f32.mrf.mxu0
      %v2338 = vpop.f32.mrf.mxu0
      %v2339 = vadd.f32 %v2178, %v2338
      %v2340 = vpop.f32.mrf.mxu0
      %2341 = vmatprep.mubr.bf16.mxu0 0
      %2342 = vmatmul.mubr.bf16.gmra.mxu0 %v954
      %v2343 = vpop.f32.mrf.mxu0
      %v2344 = vadd.f32 %v2183, %v2343
      %v2345 = vpop.f32.mrf.mxu0
      %v2346 = vpop.f32.mrf.mxu0
      %v2347 = vadd.f32 %v2186, %v2346
      %v2348 = vpop.f32.mrf.mxu0
      %2349 = vmatprep.mubr.bf16.mxu0 0
      %2350 = vmatmul.mubr.bf16.gmra.mxu0 %v963
      %v2351 = vpop.f32.mrf.mxu0
      %v2352 = vadd.f32 %v2191, %v2351
      %v2353 = vpop.f32.mrf.mxu0
      %v2354 = vpop.f32.mrf.mxu0
      %v2355 = vadd.f32 %v2194, %v2354
      %v2356 = vpop.f32.mrf.mxu0
      %2357 = vmatprep.mubr.bf16.mxu0 0
      %2358 = vmatmul.mubr.bf16.gmra.mxu0 %v972
      %v2359 = vpop.f32.mrf.mxu0
      %v2360 = vadd.f32 %v2199, %v2359
      %v2361 = vpop.f32.mrf.mxu0
      %v2362 = vpop.f32.mrf.mxu0
      %v2363 = vadd.f32 %v2202, %v2362
      %v2364 = vpop.f32.mrf.mxu0
      %2365 = vmatprep.mubr.bf16.mxu0 0
      %2366 = vmatmul.mubr.bf16.gmra.mxu0 %v981
      %v2367 = vpop.f32.mrf.mxu0
      %v2368 = vadd.f32 %v2207, %v2367
      %v2369 = vpop.f32.mrf.mxu0
      %v2370 = vpop.f32.mrf.mxu0
      %v2371 = vadd.f32 %v2210, %v2370
      %v2372 = vpop.f32.mrf.mxu0
      %2373 = vmatprep.mubr.bf16.mxu0 0
      %2374 = vmatmul.mubr.bf16.gmra.mxu0 %v990
      %v2375 = vpop.f32.mrf.mxu0
      %v2376 = vadd.f32 %v2215, %v2375
      %v2377 = vpop.f32.mrf.mxu0
      %v2378 = vpop.f32.mrf.mxu0
      %v2379 = vadd.f32 %v2218, %v2378
      %v2380 = vpop.f32.mrf.mxu0
      %2381 = vmatprep.mubr.bf16.mxu0 0
      %2382 = vmatmul.mubr.bf16.gmra.mxu0 %v999
      %v2383 = vpop.f32.mrf.mxu0
      %v2384 = vadd.f32 %v2223, %v2383
      %v2385 = vpop.f32.mrf.mxu0
      %v2386 = vpop.f32.mrf.mxu0
      %v2387 = vadd.f32 %v2226, %v2386
      %v2388 = vpop.f32.mrf.mxu0
      %2389 = vmatprep.mubr.bf16.mxu0 0
      %2390 = vmatmul.mubr.bf16.gmra.mxu0 %v1008
      %v2391 = vpop.f32.mrf.mxu0
      %v2392 = vadd.f32 %v2231, %v2391
      %v2393 = vpop.f32.mrf.mxu0
      %v2394 = vpop.f32.mrf.mxu0
      %v2395 = vadd.f32 %v2234, %v2394
      %v2396 = vpop.f32.mrf.mxu0
      %2397 = vmatprep.mubr.bf16.mxu0 0
      %2398 = vmatmul.mubr.bf16.gmra.mxu0 %v1017
      %v2399 = vpop.f32.mrf.mxu0
      %v2400 = vadd.f32 %v2239, %v2399
      %v2401 = vpop.f32.mrf.mxu0
      %v2402 = vpop.f32.mrf.mxu0
      %v2403 = vadd.f32 %v2242, %v2402
      %v2404 = vpop.f32.mrf.mxu0
      %2405 = vmatprep.mubr.bf16.mxu0 0
      %2406 = vmatmul.mubr.bf16.gmra.mxu0 %v1026
      %v2407 = vpop.f32.mrf.mxu0
      %v2408 = vadd.f32 %v2247, %v2407
      %v2409 = vpop.f32.mrf.mxu0
      %v2410 = vpop.f32.mrf.mxu0
      %v2411 = vadd.f32 %v2250, %v2410
      %v2412 = vpop.f32.mrf.mxu0
      %2413 = vmatprep.mubr.bf16.mxu0 0
      %2414 = vmatmul.mubr.bf16.gmra.mxu0 %v1035
      %v2415 = vpop.f32.mrf.mxu0
      %v2416 = vadd.f32 %v2255, %v2415
      %v2417 = vpop.f32.mrf.mxu0
      %v2418 = vpop.f32.mrf.mxu0
      %v2419 = vadd.f32 %v2258, %v2418
      %v2420 = vpop.f32.mrf.mxu0
      %2421 = vmatprep.mubr.bf16.mxu0 0
      %2422 = vmatmul.mubr.bf16.gmra.mxu0 %v1044
      %v2423 = vpop.f32.mrf.mxu0
      %v2424 = vadd.f32 %v2263, %v2423
      %v2425 = vpop.f32.mrf.mxu0
      %v2426 = vpop.f32.mrf.mxu0
      %v2427 = vadd.f32 %v2266, %v2426
      %v2428 = vpop.f32.mrf.mxu0
      %2429 = vmatprep.mubr.bf16.mxu0 0
      %2430 = vmatmul.mubr.bf16.gmra.mxu0 %v1053
      %v2431 = vpop.f32.mrf.mxu0
      %v2432 = vadd.f32 %v2271, %v2431
      %v2433 = vpop.f32.mrf.mxu0
      %v2434 = vpop.f32.mrf.mxu0
      %v2435 = vadd.f32 %v2274, %v2434
      %v2436 = vpop.f32.mrf.mxu0
      %2437 = vmatprep.mubr.bf16.mxu0 0
      %2438 = vmatmul.mubr.bf16.gmra.mxu0 %v1062
      %v2439 = vpop.f32.mrf.mxu0
      %v2440 = vadd.f32 %v2279, %v2439
      %v2441 = vpop.f32.mrf.mxu0
      %v2442 = vpop.f32.mrf.mxu0
      %v2443 = vadd.f32 %v2282, %v2442
      %v2444 = vpop.f32.mrf.mxu0
      %2445 = vmatprep.mubr.bf16.mxu0 0
      %2446 = vmatmul.mubr.bf16.gmra.mxu0 %v1071
      %v2447 = vpop.f32.mrf.mxu0
      %v2448 = vadd.f32 %v2287, %v2447
      %v2449 = vpop.f32.mrf.mxu0
      %v2450 = vpop.f32.mrf.mxu0
      %v2451 = vadd.f32 %v2290, %v2450
      %v2452 = vpop.f32.mrf.mxu0
      %2453 = vmatprep.mubr.bf16.mxu0 0
      %2454 = vmatmul.mubr.bf16.gmra.mxu0 %v1080
      %v2455 = vpop.f32.mrf.mxu0
      %v2456 = vadd.f32 %v2295, %v2455
      %v2457 = vpop.f32.mrf.mxu0
      %v2458 = vpop.f32.mrf.mxu0
      %v2459 = vadd.f32 %v2298, %v2458
      %v2460 = vpop.f32.mrf.mxu0
      %2461 = vdwg.mxu0
      %v2462 = vmax.f32 %v2336, 0.0
      %v2463 = vmax.f32 %v2339, 0.0
      %v2464 = vmax.f32 %v2344, 0.0
      %v2465 = vmax.f32 %v2347, 0.0
      %v2466 = vmax.f32 %v2352, 0.0
      %v2467 = vmax.f32 %v2355, 0.0
      %v2468 = vmax.f32 %v2360, 0.0
      %v2469 = vmax.f32 %v2363, 0.0
      %v2470 = vmax.f32 %v2368, 0.0
      %v2471 = vmax.f32 %v2371, 0.0
      %v2472 = vmax.f32 %v2376, 0.0
      %v2473 = vmax.f32 %v2379, 0.0
      %v2474 = vmax.f32 %v2384, 0.0
      %v2475 = vmax.f32 %v2387, 0.0
      %v2476 = vmax.f32 %v2392, 0.0
      %v2477 = vmax.f32 %v2395, 0.0
      %v2478 = vmax.f32 %v2400, 0.0
      %v2479 = vmax.f32 %v2403, 0.0
      %v2480 = vmax.f32 %v2408, 0.0
      %v2481 = vmax.f32 %v2411, 0.0
      %v2482 = vmax.f32 %v2416, 0.0
      %v2483 = vmax.f32 %v2419, 0.0
      %v2484 = vmax.f32 %v2424, 0.0
      %v2485 = vmax.f32 %v2427, 0.0
      %v2486 = vmax.f32 %v2432, 0.0
      %v2487 = vmax.f32 %v2435, 0.0
      %v2488 = vmax.f32 %v2440, 0.0
      %v2489 = vmax.f32 %v2443, 0.0
      %v2490 = vmax.f32 %v2448, 0.0
      %v2491 = vmax.f32 %v2451, 0.0
      %v2492 = vmax.f32 %v2456, 0.0
      %v2493 = vmax.f32 %v2459, 0.0
      %v2494 = vpack.c.bf16 %v2463, %v2462
      %v2495 = vpack.c.bf16 %v2465, %v2464
      %v2496 = vpack.c.bf16 %v2467, %v2466
      %v2497 = vpack.c.bf16 %v2469, %v2468
      %v2498 = vpack.c.bf16 %v2471, %v2470
      %v2499 = vpack.c.bf16 %v2473, %v2472
      %v2500 = vpack.c.bf16 %v2475, %v2474
      %v2501 = vpack.c.bf16 %v2477, %v2476
      %v2502 = vpack.c.bf16 %v2479, %v2478
      %v2503 = vpack.c.bf16 %v2481, %v2480
      %v2504 = vpack.c.bf16 %v2483, %v2482
      %v2505 = vpack.c.bf16 %v2485, %v2484
      %v2506 = vpack.c.bf16 %v2487, %v2486
      %v2507 = vpack.c.bf16 %v2489, %v2488
      %v2508 = vpack.c.bf16 %v2491, %v2490
      %v2509 = vpack.c.bf16 %v2493, %v2492
      %v2526 = vunpack.c.l.b16 %v2494
      %v2527 = vunpack.c.h.b16 %v2494
      %v2528 = vunpack.c.l.b16 %v2495
      %v2529 = vunpack.c.h.b16 %v2495
      %v2530 = vunpack.c.l.b16 %v2496
      %v2531 = vunpack.c.h.b16 %v2496
      %v2532 = vunpack.c.l.b16 %v2497
      %v2533 = vunpack.c.h.b16 %v2497
      %v2534 = vunpack.c.l.b16 %v2498
      %v2535 = vunpack.c.h.b16 %v2498
      %v2536 = vunpack.c.l.b16 %v2499
      %v2537 = vunpack.c.h.b16 %v2499
      %v2538 = vunpack.c.l.b16 %v2500
      %v2539 = vunpack.c.h.b16 %v2500
      %v2540 = vunpack.c.l.b16 %v2501
      %v2541 = vunpack.c.h.b16 %v2501
      %v2542 = vunpack.c.l.b16 %v2502
      %v2543 = vunpack.c.h.b16 %v2502
      %v2544 = vunpack.c.l.b16 %v2503
      %v2545 = vunpack.c.h.b16 %v2503
      %v2546 = vunpack.c.l.b16 %v2504
      %v2547 = vunpack.c.h.b16 %v2504
      %v2548 = vunpack.c.l.b16 %v2505
      %v2549 = vunpack.c.h.b16 %v2505
      %v2550 = vunpack.c.l.b16 %v2506
      %v2551 = vunpack.c.h.b16 %v2506
      %v2552 = vunpack.c.l.b16 %v2507
      %v2553 = vunpack.c.h.b16 %v2507
      %v2554 = vunpack.c.l.b16 %v2508
      %v2555 = vunpack.c.h.b16 %v2508
      %v2556 = vunpack.c.l.b16 %v2509
      %v2557 = vunpack.c.h.b16 %v2509
      %v2558 = vpack.c.b16 %v2526, %v2526
      %v2559 = vpack.c.b16 %v2527, %v2527
      %v2560 = vpack.c.b16 %v2528, %v2528
      %v2561 = vpack.c.b16 %v2529, %v2529
      %v2562 = vpack.c.b16 %v2530, %v2530
      %v2563 = vpack.c.b16 %v2531, %v2531
      %v2564 = vpack.c.b16 %v2532, %v2532
      %v2565 = vpack.c.b16 %v2533, %v2533
      %v2566 = vpack.c.b16 %v2534, %v2534
      %v2567 = vpack.c.b16 %v2535, %v2535
      %v2568 = vpack.c.b16 %v2536, %v2536
      %v2569 = vpack.c.b16 %v2537, %v2537
      %v2570 = vpack.c.b16 %v2538, %v2538
      %v2571 = vpack.c.b16 %v2539, %v2539
      %v2572 = vpack.c.b16 %v2540, %v2540
      %v2573 = vpack.c.b16 %v2541, %v2541
      %v2574 = vpack.c.b16 %v2542, %v2542
      %v2575 = vpack.c.b16 %v2543, %v2543
      %v2576 = vpack.c.b16 %v2544, %v2544
      %v2577 = vpack.c.b16 %v2545, %v2545
      %v2578 = vpack.c.b16 %v2546, %v2546
      %v2579 = vpack.c.b16 %v2547, %v2547
      %v2580 = vpack.c.b16 %v2548, %v2548
      %v2581 = vpack.c.b16 %v2549, %v2549
      %v2582 = vpack.c.b16 %v2550, %v2550
      %v2583 = vpack.c.b16 %v2551, %v2551
      %v2584 = vpack.c.b16 %v2552, %v2552
      %v2585 = vpack.c.b16 %v2553, %v2553
      %v2586 = vpack.c.b16 %v2554, %v2554
      %v2587 = vpack.c.b16 %v2555, %v2555
      %v2588 = vpack.c.b16 %v2556, %v2556
      %v2589 = vpack.c.b16 %v2557, %v2557
      %2622 = vst [vmem:[%s175] sm:$0xf] %v2558
      %2623 = vst [vmem:[%s175 + $0x4] sm:$0xf] %v2559
      %2624 = vst [vmem:[%s175 + $0x8] sm:$0xf] %v2560
      %2625 = vst [vmem:[%s175 + $0xc] sm:$0xf] %v2561
      %2626 = vst [vmem:[%s175 + $0x10] sm:$0xf] %v2562
      %2627 = vst [vmem:[%s175 + $0x14] sm:$0xf] %v2563
      %2628 = vst [vmem:[%s175 + $0x18] sm:$0xf] %v2564
      %2629 = vst [vmem:[%s175 + $0x1c] sm:$0xf] %v2565
      %2630 = vst [vmem:[%s175 + $0x20] sm:$0xf] %v2566
      %2631 = vst [vmem:[%s175 + $0x24] sm:$0xf] %v2567
      %2632 = vst [vmem:[%s175 + $0x28] sm:$0xf] %v2568
      %2633 = vst [vmem:[%s175 + $0x2c] sm:$0xf] %v2569
      %2634 = vst [vmem:[%s175 + $0x30] sm:$0xf] %v2570
      %2635 = vst [vmem:[%s175 + $0x34] sm:$0xf] %v2571
      %2636 = vst [vmem:[%s175 + $0x38] sm:$0xf] %v2572
      %2637 = vst [vmem:[%s175 + $0x3c] sm:$0xf] %v2573
      %2638 = vst [vmem:[%s175 + $0x40] sm:$0xf] %v2574
      %2639 = vst [vmem:[%s175 + $0x44] sm:$0xf] %v2575
      %2640 = vst [vmem:[%s175 + $0x48] sm:$0xf] %v2576
      %2641 = vst [vmem:[%s175 + $0x4c] sm:$0xf] %v2577
      %2642 = vst [vmem:[%s175 + $0x50] sm:$0xf] %v2578
      %2643 = vst [vmem:[%s175 + $0x54] sm:$0xf] %v2579
      %2644 = vst [vmem:[%s175 + $0x58] sm:$0xf] %v2580
      %2645 = vst [vmem:[%s175 + $0x5c] sm:$0xf] %v2581
      %2646 = vst [vmem:[%s175 + $0x60] sm:$0xf] %v2582
      %2647 = vst [vmem:[%s175 + $0x64] sm:$0xf] %v2583
      %2648 = vst [vmem:[%s175 + $0x68] sm:$0xf] %v2584
      %2649 = vst [vmem:[%s175 + $0x6c] sm:$0xf] %v2585
      %2650 = vst [vmem:[%s175 + $0x70] sm:$0xf] %v2586
      %2651 = vst [vmem:[%s175 + $0x74] sm:$0xf] %v2587
      %2652 = vst [vmem:[%s175 + $0x78] sm:$0xf] %v2588
      %2653 = vst [vmem:[%s175 + $0x7c] sm:$0xf] %v2589
      %s2654 = smul.u32 32, %s14
      %p2655 = scmp.lt.s32.totalorder %s2654, 63
      %s2656 = scalar_select %p2655, %s2654, 63
      %s2657 = smul.addr %s2656, 4
      %s2658 = scalar_lea.vmem %s3, %s2657
      // Predicated region
      $region33: #{fcos_forward.16} parent=31 // pred_check
        %p2659 = pneg %p100
      $region34: #{fcos_forward.16} parent=31 // pred_check_branch
        %2661 = sbr.rel (%p2659) target = $region36
      $region35: #{fcos_forward.16} parent=31 // pred_region
        %s2662 = smul.u32 32, %s14
      $region36: #{fcos_forward.16} parent=31 // pred_fallthru
        _
    $region32: #{fcos_forward.16} parent=5 // pred_fallthru
      _
    %p2663 = scmp.le.s32.totalorder 2, %s9
    // Predicated region
    $region37: #{fcos_forward.16} parent=5 // pred_check
      %p2664 = pneg %p2663
    $region38: #{fcos_forward.16} parent=5 // pred_check_branch
      %2666 = sbr.rel (%p2664) target = $region40
    $region39: #{fcos_forward.16} parent=5 // pred_region
      %s2667 = ssub.s32 %s9, 2
      // Predicated region
      $region41: #{fcos_forward.16} parent=39 // pred_check
        %p2668 = pneg %p106
      $region42: #{fcos_forward.16} parent=39 // pred_check_branch
        %2670 = sbr.rel (%p2668) target = $region44
      $region43: #{fcos_forward.16} parent=39 // pred_region
        %s2671 = smul.u32 32, %s15
        %p2672 = scmp.lt.s32.totalorder %s2671, 63
        %s2673 = scalar_select %p2672, %s2671, 63
        %s2674 = smul.addr %s2673, 4
        %s2675 = scalar_lea.vmem %s3, %s2674
      $region44: #{fcos_forward.16} parent=39 // pred_fallthru
        _
    $region40: #{fcos_forward.16} parent=5 // pred_fallthru
      _
  $region6: #{fcos_forward.16} parent=0 // loop_footer
    %s13 = sadd.s32 1, %s9
  $region7: #{fcos_forward.16} parent=0 // loop_footer_branch
    %8 = sbr.rel target = $region3
  $region8: #{fcos_forward.16} parent=0 // loop_exit
    _

// kernel: fcos_forward.17
$region0: #{fcos_forward.17}
  #allocation0 [shape = 'u32[]', space=smem, size = 0x4, offset = 0x4, fixed_abs, tag = 'smem constant byte address 0x4 - core index']
  #allocation1 [shape = 'u32[144,128]{1,0:T(1,128)}', space=vmem, size = 0x12000, scoped, tag = 'internal scratch']
  %s0 = inlined_call_operand.vmem [shape: bf16[128,1152], index: 0, kind: input, shape index: {}]
  %s1 = inlined_call_operand.vmem [shape: bf16[1152,128], index: 1, kind: input, shape index: {}]
  %s2 = inlined_call_operand.vmem [shape: f32[1,128], index: 2, kind: input, shape index: {}]
  %s3 = inlined_call_operand.vmem [shape: bf16[128,128], index: 3, kind: output, shape index: {}]
  %s4 = sld [smem:[#allocation0]]
  $region22: #{fcos_forward.17} parent=0
    _
  %s6 = ssub.s32 1, %s4
  %s7 = scalar_select 0, %s6, %s4
  // Predicated region
  $region2: #{fcos_forward.17} parent=0 // pred_check
    _
  $region3: #{fcos_forward.17} parent=0 // pred_check_branch
    %9 = sbr.rel (0) target = $region5
  $region4: #{fcos_forward.17} parent=0 // pred_region
    _
  $region5: #{fcos_forward.17} parent=0 // pred_fallthru
    _
  // Predicated region
  $region6: #{fcos_forward.17} parent=0 // pred_check
    _
  $region7: #{fcos_forward.17} parent=0 // pred_check_branch
    %11 = sbr.rel (0) target = $region9
  $region8: #{fcos_forward.17} parent=0 // pred_region
    _
  $region9: #{fcos_forward.17} parent=0 // pred_fallthru
    _
  // Predicated region
  $region10: #{fcos_forward.17} parent=0 // pred_check
    _
  $region11: #{fcos_forward.17} parent=0 // pred_check_branch
    %13 = sbr.rel (0) target = $region13
  $region12: #{fcos_forward.17} parent=0 // pred_region
    _
  $region13: #{fcos_forward.17} parent=0 // pred_fallthru
    _
  %v15 = vld [vmem:[%s0] sm:$0xff]
  %v16 = vld [vmem:[%s0 + $0x8] sm:$0xff]
  %v17 = vld [vmem:[%s0 + $0x10] sm:$0xff]
  %v18 = vld [vmem:[%s0 + $0x18] sm:$0xff]
  %v19 = vld [vmem:[%s0 + $0x20] sm:$0xf]
  %v20 = vld [vmem:[%s0 + $0x24] sm:$0xff]
  %v21 = vld [vmem:[%s0 + $0x2c] sm:$0xff]
  %v22 = vld [vmem:[%s0 + $0x34] sm:$0xff]
  %v23 = vld [vmem:[%s0 + $0x3c] sm:$0xff]
  %v24 = vld [vmem:[%s0 + $0x44] sm:$0xf]
  %v25 = vld [vmem:[%s0 + $0x48] sm:$0xff]
  %v26 = vld [vmem:[%s0 + $0x50] sm:$0xff]
  %v27 = vld [vmem:[%s0 + $0x58] sm:$0xff]
  %v28 = vld [vmem:[%s0 + $0x60] sm:$0xff]
  %v29 = vld [vmem:[%s0 + $0x68] sm:$0xf]
  %v30 = vld [vmem:[%s0 + $0x6c] sm:$0xff]
  %v31 = vld [vmem:[%s0 + $0x74] sm:$0xff]
  %v32 = vld [vmem:[%s0 + $0x7c] sm:$0xff]
  %v33 = vld [vmem:[%s0 + $0x84] sm:$0xff]
  %v34 = vld [vmem:[%s0 + $0x8c] sm:$0xf]
  %v35 = vld [vmem:[%s0 + $0x90] sm:$0xff]
  %v36 = vld [vmem:[%s0 + $0x98] sm:$0xff]
  %v37 = vld [vmem:[%s0 + $0xa0] sm:$0xff]
  %v38 = vld [vmem:[%s0 + $0xa8] sm:$0xff]
  %v39 = vld [vmem:[%s0 + $0xb0] sm:$0xf]
  %v40 = vld [vmem:[%s0 + $0xb4] sm:$0xff]
  %v41 = vld [vmem:[%s0 + $0xbc] sm:$0xff]
  %v42 = vld [vmem:[%s0 + $0xc4] sm:$0xff]
  %v43 = vld [vmem:[%s0 + $0xcc] sm:$0xff]
  %v44 = vld [vmem:[%s0 + $0xd4] sm:$0xf]
  %v45 = vld [vmem:[%s0 + $0xd8] sm:$0xff]
  %v46 = vld [vmem:[%s0 + $0xe0] sm:$0xff]
  %v47 = vld [vmem:[%s0 + $0xe8] sm:$0xff]
  %v48 = vld [vmem:[%s0 + $0xf0] sm:$0xff]
  %v49 = vld [vmem:[%s0 + $0xf8] sm:$0xf]
  %v50 = vld [vmem:[%s0 + $0xfc] sm:$0xff]
  %v51 = vld [vmem:[%s0 + $0x104] sm:$0xff]
  %v52 = vld [vmem:[%s0 + $0x10c] sm:$0xff]
  %v53 = vld [vmem:[%s0 + $0x114] sm:$0xff]
  %v54 = vld [vmem:[%s0 + $0x11c] sm:$0xf]
  %v55 = vld [vmem:[%s0 + $0x120] sm:$0xff]
  %v56 = vld [vmem:[%s0 + $0x128] sm:$0xff]
  %v57 = vld [vmem:[%s0 + $0x130] sm:$0xff]
  %v58 = vld [vmem:[%s0 + $0x138] sm:$0xff]
  %v59 = vld [vmem:[%s0 + $0x140] sm:$0xf]
  %v60 = vld [vmem:[%s0 + $0x144] sm:$0xff]
  %v61 = vld [vmem:[%s0 + $0x14c] sm:$0xff]
  %v62 = vld [vmem:[%s0 + $0x154] sm:$0xff]
  %v63 = vld [vmem:[%s0 + $0x15c] sm:$0xff]
  %v64 = vld [vmem:[%s0 + $0x164] sm:$0xf]
  %v65 = vld [vmem:[%s0 + $0x168] sm:$0xff]
  %v66 = vld [vmem:[%s0 + $0x170] sm:$0xff]
  %v67 = vld [vmem:[%s0 + $0x178] sm:$0xff]
  %v68 = vld [vmem:[%s0 + $0x180] sm:$0xff]
  %v69 = vld [vmem:[%s0 + $0x188] sm:$0xf]
  %v70 = vld [vmem:[%s0 + $0x18c] sm:$0xff]
  %v71 = vld [vmem:[%s0 + $0x194] sm:$0xff]
  %v72 = vld [vmem:[%s0 + $0x19c] sm:$0xff]
  %v73 = vld [vmem:[%s0 + $0x1a4] sm:$0xff]
  %v74 = vld [vmem:[%s0 + $0x1ac] sm:$0xf]
  %v75 = vld [vmem:[%s0 + $0x1b0] sm:$0xff]
  %v76 = vld [vmem:[%s0 + $0x1b8] sm:$0xff]
  %v77 = vld [vmem:[%s0 + $0x1c0] sm:$0xff]
  %v78 = vld [vmem:[%s0 + $0x1c8] sm:$0xff]
  %v79 = vld [vmem:[%s0 + $0x1d0] sm:$0xf]
  %v80 = vld [vmem:[%s0 + $0x1d4] sm:$0xff]
  %v81 = vld [vmem:[%s0 + $0x1dc] sm:$0xff]
  %v82 = vld [vmem:[%s0 + $0x1e4] sm:$0xff]
  %v83 = vld [vmem:[%s0 + $0x1ec] sm:$0xff]
  %v84 = vld [vmem:[%s0 + $0x1f4] sm:$0xf]
  %v85 = vld [vmem:[%s0 + $0x1f8] sm:$0xff]
  %v86 = vld [vmem:[%s0 + $0x200] sm:$0xff]
  %v87 = vld [vmem:[%s0 + $0x208] sm:$0xff]
  %v88 = vld [vmem:[%s0 + $0x210] sm:$0xff]
  %v89 = vld [vmem:[%s0 + $0x218] sm:$0xf]
  %v90 = vld [vmem:[%s0 + $0x21c] sm:$0xff]
  %v91 = vld [vmem:[%s0 + $0x224] sm:$0xff]
  %v92 = vld [vmem:[%s0 + $0x22c] sm:$0xff]
  %v93 = vld [vmem:[%s0 + $0x234] sm:$0xff]
  %v94 = vld [vmem:[%s0 + $0x23c] sm:$0xf]
  %v95 = vld [vmem:[%s1] sm:$0xf]
  %v96 = vld [vmem:[%s1 + $0x4] sm:$0xf]
  %v97 = vld [vmem:[%s1 + $0x8] sm:$0xf]
  %v98 = vld [vmem:[%s1 + $0xc] sm:$0xf]
  %v99 = vld [vmem:[%s1 + $0x10] sm:$0xf]
  %v100 = vld [vmem:[%s1 + $0x14] sm:$0xf]
  %v101 = vld [vmem:[%s1 + $0x18] sm:$0xf]
  %v102 = vld [vmem:[%s1 + $0x1c] sm:$0xf]
  %v103 = vld [vmem:[%s1 + $0x20] sm:$0xf]
  %v104 = vld [vmem:[%s1 + $0x24] sm:$0xf]
  %v105 = vld [vmem:[%s1 + $0x28] sm:$0xf]
  %v106 = vld [vmem:[%s1 + $0x2c] sm:$0xf]
  %v107 = vld [vmem:[%s1 + $0x30] sm:$0xf]
  %v108 = vld [vmem:[%s1 + $0x34] sm:$0xf]
  %v109 = vld [vmem:[%s1 + $0x38] sm:$0xf]
  %v110 = vld [vmem:[%s1 + $0x3c] sm:$0xf]
  %v111 = vld [vmem:[%s1 + $0x40] sm:$0xf]
  %v112 = vld [vmem:[%s1 + $0x44] sm:$0xf]
  %v113 = vld [vmem:[%s1 + $0x48] sm:$0xf]
  %v114 = vld [vmem:[%s1 + $0x4c] sm:$0xf]
  %v115 = vld [vmem:[%s1 + $0x50] sm:$0xf]
  %v116 = vld [vmem:[%s1 + $0x54] sm:$0xf]
  %v117 = vld [vmem:[%s1 + $0x58] sm:$0xf]
  %v118 = vld [vmem:[%s1 + $0x5c] sm:$0xf]
  %v119 = vld [vmem:[%s1 + $0x60] sm:$0xf]
  %v120 = vld [vmem:[%s1 + $0x64] sm:$0xf]
  %v121 = vld [vmem:[%s1 + $0x68] sm:$0xf]
  %v122 = vld [vmem:[%s1 + $0x6c] sm:$0xf]
  %v123 = vld [vmem:[%s1 + $0x70] sm:$0xf]
  %v124 = vld [vmem:[%s1 + $0x74] sm:$0xf]
  %v125 = vld [vmem:[%s1 + $0x78] sm:$0xf]
  %v126 = vld [vmem:[%s1 + $0x7c] sm:$0xf]
  %v127 = vld [vmem:[%s1 + $0x80] sm:$0xf]
  %v128 = vld [vmem:[%s1 + $0x84] sm:$0xf]
  %v129 = vld [vmem:[%s1 + $0x88] sm:$0xf]
  %v130 = vld [vmem:[%s1 + $0x8c] sm:$0xf]
  %v131 = vld [vmem:[%s1 + $0x90] sm:$0xf]
  %v132 = vld [vmem:[%s1 + $0x94] sm:$0xf]
  %v133 = vld [vmem:[%s1 + $0x98] sm:$0xf]
  %v134 = vld [vmem:[%s1 + $0x9c] sm:$0xf]
  %v135 = vld [vmem:[%s1 + $0xa0] sm:$0xf]
  %v136 = vld [vmem:[%s1 + $0xa4] sm:$0xf]
  %v137 = vld [vmem:[%s1 + $0xa8] sm:$0xf]
  %v138 = vld [vmem:[%s1 + $0xac] sm:$0xf]
  %v139 = vld [vmem:[%s1 + $0xb0] sm:$0xf]
  %v140 = vld [vmem:[%s1 + $0xb4] sm:$0xf]
  %v141 = vld [vmem:[%s1 + $0xb8] sm:$0xf]
  %v142 = vld [vmem:[%s1 + $0xbc] sm:$0xf]
  %v143 = vld [vmem:[%s1 + $0xc0] sm:$0xf]
  %v144 = vld [vmem:[%s1 + $0xc4] sm:$0xf]
  %v145 = vld [vmem:[%s1 + $0xc8] sm:$0xf]
  %v146 = vld [vmem:[%s1 + $0xcc] sm:$0xf]
  %v147 = vld [vmem:[%s1 + $0xd0] sm:$0xf]
  %v148 = vld [vmem:[%s1 + $0xd4] sm:$0xf]
  %v149 = vld [vmem:[%s1 + $0xd8] sm:$0xf]
  %v150 = vld [vmem:[%s1 + $0xdc] sm:$0xf]
  %v151 = vld [vmem:[%s1 + $0xe0] sm:$0xf]
  %v152 = vld [vmem:[%s1 + $0xe4] sm:$0xf]
  %v153 = vld [vmem:[%s1 + $0xe8] sm:$0xf]
  %v154 = vld [vmem:[%s1 + $0xec] sm:$0xf]
  %v155 = vld [vmem:[%s1 + $0xf0] sm:$0xf]
  %v156 = vld [vmem:[%s1 + $0xf4] sm:$0xf]
  %v157 = vld [vmem:[%s1 + $0xf8] sm:$0xf]
  %v158 = vld [vmem:[%s1 + $0xfc] sm:$0xf]
  %v159 = vld [vmem:[%s1 + $0x100] sm:$0xf]
  %v160 = vld [vmem:[%s1 + $0x104] sm:$0xf]
  %v161 = vld [vmem:[%s1 + $0x108] sm:$0xf]
  %v162 = vld [vmem:[%s1 + $0x10c] sm:$0xf]
  %v163 = vld [vmem:[%s1 + $0x110] sm:$0xf]
  %v164 = vld [vmem:[%s1 + $0x114] sm:$0xf]
  %v165 = vld [vmem:[%s1 + $0x118] sm:$0xf]
  %v166 = vld [vmem:[%s1 + $0x11c] sm:$0xf]
  %v167 = vld [vmem:[%s1 + $0x120] sm:$0xf]
  %v168 = vld [vmem:[%s1 + $0x124] sm:$0xf]
  %v169 = vld [vmem:[%s1 + $0x128] sm:$0xf]
  %v170 = vld [vmem:[%s1 + $0x12c] sm:$0xf]
  %v171 = vld [vmem:[%s1 + $0x130] sm:$0xf]
  %v172 = vld [vmem:[%s1 + $0x134] sm:$0xf]
  %v173 = vld [vmem:[%s1 + $0x138] sm:$0xf]
  %v174 = vld [vmem:[%s1 + $0x13c] sm:$0xf]
  %v175 = vld [vmem:[%s1 + $0x140] sm:$0xf]
  %v176 = vld [vmem:[%s1 + $0x144] sm:$0xf]
  %v177 = vld [vmem:[%s1 + $0x148] sm:$0xf]
  %v178 = vld [vmem:[%s1 + $0x14c] sm:$0xf]
  %v179 = vld [vmem:[%s1 + $0x150] sm:$0xf]
  %v180 = vld [vmem:[%s1 + $0x154] sm:$0xf]
  %v181 = vld [vmem:[%s1 + $0x158] sm:$0xf]
  %v182 = vld [vmem:[%s1 + $0x15c] sm:$0xf]
  %v183 = vld [vmem:[%s1 + $0x160] sm:$0xf]
  %v184 = vld [vmem:[%s1 + $0x164] sm:$0xf]
  %v185 = vld [vmem:[%s1 + $0x168] sm:$0xf]
  %v186 = vld [vmem:[%s1 + $0x16c] sm:$0xf]
  %v187 = vld [vmem:[%s1 + $0x170] sm:$0xf]
  %v188 = vld [vmem:[%s1 + $0x174] sm:$0xf]
  %v189 = vld [vmem:[%s1 + $0x178] sm:$0xf]
  %v190 = vld [vmem:[%s1 + $0x17c] sm:$0xf]
  %v191 = vld [vmem:[%s1 + $0x180] sm:$0xf]
  %v192 = vld [vmem:[%s1 + $0x184] sm:$0xf]
  %v193 = vld [vmem:[%s1 + $0x188] sm:$0xf]
  %v194 = vld [vmem:[%s1 + $0x18c] sm:$0xf]
  %v195 = vld [vmem:[%s1 + $0x190] sm:$0xf]
  %v196 = vld [vmem:[%s1 + $0x194] sm:$0xf]
  %v197 = vld [vmem:[%s1 + $0x198] sm:$0xf]
  %v198 = vld [vmem:[%s1 + $0x19c] sm:$0xf]
  %v199 = vld [vmem:[%s1 + $0x1a0] sm:$0xf]
  %v200 = vld [vmem:[%s1 + $0x1a4] sm:$0xf]
  %v201 = vld [vmem:[%s1 + $0x1a8] sm:$0xf]
  %v202 = vld [vmem:[%s1 + $0x1ac] sm:$0xf]
  %v203 = vld [vmem:[%s1 + $0x1b0] sm:$0xf]
  %v204 = vld [vmem:[%s1 + $0x1b4] sm:$0xf]
  %v205 = vld [vmem:[%s1 + $0x1b8] sm:$0xf]
  %v206 = vld [vmem:[%s1 + $0x1bc] sm:$0xf]
  %v207 = vld [vmem:[%s1 + $0x1c0] sm:$0xf]
  %v208 = vld [vmem:[%s1 + $0x1c4] sm:$0xf]
  %v209 = vld [vmem:[%s1 + $0x1c8] sm:$0xf]
  %v210 = vld [vmem:[%s1 + $0x1cc] sm:$0xf]
  %v211 = vld [vmem:[%s1 + $0x1d0] sm:$0xf]
  %v212 = vld [vmem:[%s1 + $0x1d4] sm:$0xf]
  %v213 = vld [vmem:[%s1 + $0x1d8] sm:$0xf]
  %v214 = vld [vmem:[%s1 + $0x1dc] sm:$0xf]
  %v215 = vld [vmem:[%s1 + $0x1e0] sm:$0xf]
  %v216 = vld [vmem:[%s1 + $0x1e4] sm:$0xf]
  %v217 = vld [vmem:[%s1 + $0x1e8] sm:$0xf]
  %v218 = vld [vmem:[%s1 + $0x1ec] sm:$0xf]
  %v219 = vld [vmem:[%s1 + $0x1f0] sm:$0xf]
  %v220 = vld [vmem:[%s1 + $0x1f4] sm:$0xf]
  %v221 = vld [vmem:[%s1 + $0x1f8] sm:$0xf]
  %v222 = vld [vmem:[%s1 + $0x1fc] sm:$0xf]
  %v223 = vld [vmem:[%s1 + $0x200] sm:$0xf]
  %v224 = vld [vmem:[%s1 + $0x204] sm:$0xf]
  %v225 = vld [vmem:[%s1 + $0x208] sm:$0xf]
  %v226 = vld [vmem:[%s1 + $0x20c] sm:$0xf]
  %v227 = vld [vmem:[%s1 + $0x210] sm:$0xf]
  %v228 = vld [vmem:[%s1 + $0x214] sm:$0xf]
  %v229 = vld [vmem:[%s1 + $0x218] sm:$0xf]
  %v230 = vld [vmem:[%s1 + $0x21c] sm:$0xf]
  %v231 = vld [vmem:[%s1 + $0x220] sm:$0xf]
  %v232 = vld [vmem:[%s1 + $0x224] sm:$0xf]
  %v233 = vld [vmem:[%s1 + $0x228] sm:$0xf]
  %v234 = vld [vmem:[%s1 + $0x22c] sm:$0xf]
  %v235 = vld [vmem:[%s1 + $0x230] sm:$0xf]
  %v236 = vld [vmem:[%s1 + $0x234] sm:$0xf]
  %v237 = vld [vmem:[%s1 + $0x238] sm:$0xf]
  %v238 = vld [vmem:[%s1 + $0x23c] sm:$0xf]
  %v239 = vld [vmem:[%s2] sm:$0x1]
  %v241 = vlaneseq
  %v242 = vshrl.u32 %v241, 7
  %v243 = vsub.s32 0, %v242
  %v244 = vrot.slane %v239, %v243
  %v326 = vunpack.c.l.b16 %v15
  %v327 = vunpack.c.h.b16 %v15
  %v328 = vunpack.c.l.b16 %v16
  %v329 = vunpack.c.h.b16 %v16
  %v330 = vunpack.c.l.b16 %v17
  %v331 = vunpack.c.h.b16 %v17
  %v332 = vunpack.c.l.b16 %v18
  %v333 = vunpack.c.h.b16 %v18
  %v334 = vunpack.c.l.b16 %v19
  %v335 = vunpack.c.l.b16 %v20
  %v336 = vunpack.c.h.b16 %v20
  %v337 = vunpack.c.l.b16 %v21
  %v338 = vunpack.c.h.b16 %v21
  %v339 = vunpack.c.l.b16 %v22
  %v340 = vunpack.c.h.b16 %v22
  %v341 = vunpack.c.l.b16 %v23
  %v342 = vunpack.c.h.b16 %v23
  %v343 = vunpack.c.l.b16 %v24
  %v344 = vunpack.c.l.b16 %v25
  %v345 = vunpack.c.h.b16 %v25
  %v346 = vunpack.c.l.b16 %v26
  %v347 = vunpack.c.h.b16 %v26
  %v348 = vunpack.c.l.b16 %v27
  %v349 = vunpack.c.h.b16 %v27
  %v350 = vunpack.c.l.b16 %v28
  %v351 = vunpack.c.h.b16 %v28
  %v352 = vunpack.c.l.b16 %v29
  %v353 = vunpack.c.l.b16 %v30
  %v354 = vunpack.c.h.b16 %v30
  %v355 = vunpack.c.l.b16 %v31
  %v356 = vunpack.c.h.b16 %v31
  %v357 = vunpack.c.l.b16 %v32
  %v358 = vunpack.c.h.b16 %v32
  %v359 = vunpack.c.l.b16 %v33
  %v360 = vunpack.c.h.b16 %v33
  %v361 = vunpack.c.l.b16 %v34
  %v362 = vunpack.c.l.b16 %v35
  %v363 = vunpack.c.h.b16 %v35
  %v364 = vunpack.c.l.b16 %v36
  %v365 = vunpack.c.h.b16 %v36
  %v366 = vunpack.c.l.b16 %v37
  %v367 = vunpack.c.h.b16 %v37
  %v368 = vunpack.c.l.b16 %v38
  %v369 = vunpack.c.h.b16 %v38
  %v370 = vunpack.c.l.b16 %v39
  %v371 = vunpack.c.l.b16 %v40
  %v372 = vunpack.c.h.b16 %v40
  %v373 = vunpack.c.l.b16 %v41
  %v374 = vunpack.c.h.b16 %v41
  %v375 = vunpack.c.l.b16 %v42
  %v376 = vunpack.c.h.b16 %v42
  %v377 = vunpack.c.l.b16 %v43
  %v378 = vunpack.c.h.b16 %v43
  %v379 = vunpack.c.l.b16 %v44
  %v380 = vunpack.c.l.b16 %v45
  %v381 = vunpack.c.h.b16 %v45
  %v382 = vunpack.c.l.b16 %v46
  %v383 = vunpack.c.h.b16 %v46
  %v384 = vunpack.c.l.b16 %v47
  %v385 = vunpack.c.h.b16 %v47
  %v386 = vunpack.c.l.b16 %v48
  %v387 = vunpack.c.h.b16 %v48
  %v388 = vunpack.c.l.b16 %v49
  %v389 = vunpack.c.l.b16 %v50
  %v390 = vunpack.c.h.b16 %v50
  %v391 = vunpack.c.l.b16 %v51
  %v392 = vunpack.c.h.b16 %v51
  %v393 = vunpack.c.l.b16 %v52
  %v394 = vunpack.c.h.b16 %v52
  %v395 = vunpack.c.l.b16 %v53
  %v396 = vunpack.c.h.b16 %v53
  %v397 = vunpack.c.l.b16 %v54
  %v398 = vunpack.c.l.b16 %v55
  %v399 = vunpack.c.h.b16 %v55
  %v400 = vunpack.c.l.b16 %v56
  %v401 = vunpack.c.h.b16 %v56
  %v402 = vunpack.c.l.b16 %v57
  %v403 = vunpack.c.h.b16 %v57
  %v404 = vunpack.c.l.b16 %v58
  %v405 = vunpack.c.h.b16 %v58
  %v406 = vunpack.c.l.b16 %v59
  %v407 = vunpack.c.l.b16 %v60
  %v408 = vunpack.c.h.b16 %v60
  %v409 = vunpack.c.l.b16 %v61
  %v410 = vunpack.c.h.b16 %v61
  %v411 = vunpack.c.l.b16 %v62
  %v412 = vunpack.c.h.b16 %v62
  %v413 = vunpack.c.l.b16 %v63
  %v414 = vunpack.c.h.b16 %v63
  %v415 = vunpack.c.l.b16 %v64
  %v416 = vunpack.c.l.b16 %v65
  %v417 = vunpack.c.h.b16 %v65
  %v418 = vunpack.c.l.b16 %v66
  %v419 = vunpack.c.h.b16 %v66
  %v420 = vunpack.c.l.b16 %v67
  %v421 = vunpack.c.h.b16 %v67
  %v422 = vunpack.c.l.b16 %v68
  %v423 = vunpack.c.h.b16 %v68
  %v424 = vunpack.c.l.b16 %v69
  %v425 = vunpack.c.l.b16 %v70
  %v426 = vunpack.c.h.b16 %v70
  %v427 = vunpack.c.l.b16 %v71
  %v428 = vunpack.c.h.b16 %v71
  %v429 = vunpack.c.l.b16 %v72
  %v430 = vunpack.c.h.b16 %v72
  %v431 = vunpack.c.l.b16 %v73
  %v432 = vunpack.c.h.b16 %v73
  %v433 = vunpack.c.l.b16 %v74
  %v434 = vunpack.c.l.b16 %v75
  %v435 = vunpack.c.h.b16 %v75
  %v436 = vunpack.c.l.b16 %v76
  %v437 = vunpack.c.h.b16 %v76
  %v438 = vunpack.c.l.b16 %v77
  %v439 = vunpack.c.h.b16 %v77
  %v440 = vunpack.c.l.b16 %v78
  %v441 = vunpack.c.h.b16 %v78
  %v442 = vunpack.c.l.b16 %v79
  %v443 = vunpack.c.l.b16 %v80
  %v444 = vunpack.c.h.b16 %v80
  %v445 = vunpack.c.l.b16 %v81
  %v446 = vunpack.c.h.b16 %v81
  %v447 = vunpack.c.l.b16 %v82
  %v448 = vunpack.c.h.b16 %v82
  %v449 = vunpack.c.l.b16 %v83
  %v450 = vunpack.c.h.b16 %v83
  %v451 = vunpack.c.l.b16 %v84
  %v452 = vunpack.c.l.b16 %v85
  %v453 = vunpack.c.h.b16 %v85
  %v454 = vunpack.c.l.b16 %v86
  %v455 = vunpack.c.h.b16 %v86
  %v456 = vunpack.c.l.b16 %v87
  %v457 = vunpack.c.h.b16 %v87
  %v458 = vunpack.c.l.b16 %v88
  %v459 = vunpack.c.h.b16 %v88
  %v460 = vunpack.c.l.b16 %v89
  %v461 = vunpack.c.l.b16 %v90
  %v462 = vunpack.c.h.b16 %v90
  %v463 = vunpack.c.l.b16 %v91
  %v464 = vunpack.c.h.b16 %v91
  %v465 = vunpack.c.l.b16 %v92
  %v466 = vunpack.c.h.b16 %v92
  %v467 = vunpack.c.l.b16 %v93
  %v468 = vunpack.c.h.b16 %v93
  %v469 = vunpack.c.l.b16 %v94
  %v470 = vpack.c.b16 %v335, %v326
  %v471 = vpack.c.b16 %v336, %v327
  %v472 = vpack.c.b16 %v337, %v328
  %v473 = vpack.c.b16 %v338, %v329
  %v474 = vpack.c.b16 %v339, %v330
  %v475 = vpack.c.b16 %v340, %v331
  %v476 = vpack.c.b16 %v341, %v332
  %v477 = vpack.c.b16 %v342, %v333
  %v478 = vpack.c.b16 %v343, %v334
  %v479 = vpack.c.b16 %v353, %v344
  %v480 = vpack.c.b16 %v354, %v345
  %v481 = vpack.c.b16 %v355, %v346
  %v482 = vpack.c.b16 %v356, %v347
  %v483 = vpack.c.b16 %v357, %v348
  %v484 = vpack.c.b16 %v358, %v349
  %v485 = vpack.c.b16 %v359, %v350
  %v486 = vpack.c.b16 %v360, %v351
  %v487 = vpack.c.b16 %v361, %v352
  %v488 = vpack.c.b16 %v371, %v362
  %v489 = vpack.c.b16 %v372, %v363
  %v490 = vpack.c.b16 %v373, %v364
  %v491 = vpack.c.b16 %v374, %v365
  %v492 = vpack.c.b16 %v375, %v366
  %v493 = vpack.c.b16 %v376, %v367
  %v494 = vpack.c.b16 %v377, %v368
  %v495 = vpack.c.b16 %v378, %v369
  %v496 = vpack.c.b16 %v379, %v370
  %v497 = vpack.c.b16 %v389, %v380
  %v498 = vpack.c.b16 %v390, %v381
  %v499 = vpack.c.b16 %v391, %v382
  %v500 = vpack.c.b16 %v392, %v383
  %v501 = vpack.c.b16 %v393, %v384
  %v502 = vpack.c.b16 %v394, %v385
  %v503 = vpack.c.b16 %v395, %v386
  %v504 = vpack.c.b16 %v396, %v387
  %v505 = vpack.c.b16 %v397, %v388
  %v506 = vpack.c.b16 %v407, %v398
  %v507 = vpack.c.b16 %v408, %v399
  %v508 = vpack.c.b16 %v409, %v400
  %v509 = vpack.c.b16 %v410, %v401
  %v510 = vpack.c.b16 %v411, %v402
  %v511 = vpack.c.b16 %v412, %v403
  %v512 = vpack.c.b16 %v413, %v404
  %v513 = vpack.c.b16 %v414, %v405
  %v514 = vpack.c.b16 %v415, %v406
  %v515 = vpack.c.b16 %v425, %v416
  %v516 = vpack.c.b16 %v426, %v417
  %v517 = vpack.c.b16 %v427, %v418
  %v518 = vpack.c.b16 %v428, %v419
  %v519 = vpack.c.b16 %v429, %v420
  %v520 = vpack.c.b16 %v430, %v421
  %v521 = vpack.c.b16 %v431, %v422
  %v522 = vpack.c.b16 %v432, %v423
  %v523 = vpack.c.b16 %v433, %v424
  %v524 = vpack.c.b16 %v443, %v434
  %v525 = vpack.c.b16 %v444, %v435
  %v526 = vpack.c.b16 %v445, %v436
  %v527 = vpack.c.b16 %v446, %v437
  %v528 = vpack.c.b16 %v447, %v438
  %v529 = vpack.c.b16 %v448, %v439
  %v530 = vpack.c.b16 %v449, %v440
  %v531 = vpack.c.b16 %v450, %v441
  %v532 = vpack.c.b16 %v451, %v442
  %v533 = vpack.c.b16 %v461, %v452
  %v534 = vpack.c.b16 %v462, %v453
  %v535 = vpack.c.b16 %v463, %v454
  %v536 = vpack.c.b16 %v464, %v455
  %v537 = vpack.c.b16 %v465, %v456
  %v538 = vpack.c.b16 %v466, %v457
  %v539 = vpack.c.b16 %v467, %v458
  %v540 = vpack.c.b16 %v468, %v459
  %v541 = vpack.c.b16 %v469, %v460
  %v758 = vunpack.c.l.b16 %v95
  %v759 = vunpack.c.l.b16 %v96
  %v760 = vunpack.c.l.b16 %v97
  %v761 = vunpack.c.l.b16 %v98
  %v762 = vunpack.c.l.b16 %v99
  %v763 = vunpack.c.l.b16 %v100
  %v764 = vunpack.c.l.b16 %v101
  %v765 = vunpack.c.l.b16 %v102
  %v766 = vunpack.c.l.b16 %v103
  %v767 = vunpack.c.l.b16 %v104
  %v768 = vunpack.c.l.b16 %v105
  %v769 = vunpack.c.l.b16 %v106
  %v770 = vunpack.c.l.b16 %v107
  %v771 = vunpack.c.l.b16 %v108
  %v772 = vunpack.c.l.b16 %v109
  %v773 = vunpack.c.l.b16 %v110
  %v774 = vunpack.c.l.b16 %v111
  %v775 = vunpack.c.l.b16 %v112
  %v776 = vunpack.c.l.b16 %v113
  %v777 = vunpack.c.l.b16 %v114
  %v778 = vunpack.c.l.b16 %v115
  %v779 = vunpack.c.l.b16 %v116
  %v780 = vunpack.c.l.b16 %v117
  %v781 = vunpack.c.l.b16 %v118
  %v782 = vunpack.c.l.b16 %v119
  %v783 = vunpack.c.l.b16 %v120
  %v784 = vunpack.c.l.b16 %v121
  %v785 = vunpack.c.l.b16 %v122
  %v786 = vunpack.c.l.b16 %v123
  %v787 = vunpack.c.l.b16 %v124
  %v788 = vunpack.c.l.b16 %v125
  %v789 = vunpack.c.l.b16 %v126
  %v790 = vunpack.c.l.b16 %v127
  %v791 = vunpack.c.l.b16 %v128
  %v792 = vunpack.c.l.b16 %v129
  %v793 = vunpack.c.l.b16 %v130
  %v794 = vunpack.c.l.b16 %v131
  %v795 = vunpack.c.l.b16 %v132
  %v796 = vunpack.c.l.b16 %v133
  %v797 = vunpack.c.l.b16 %v134
  %v798 = vunpack.c.l.b16 %v135
  %v799 = vunpack.c.l.b16 %v136
  %v800 = vunpack.c.l.b16 %v137
  %v801 = vunpack.c.l.b16 %v138
  %v802 = vunpack.c.l.b16 %v139
  %v803 = vunpack.c.l.b16 %v140
  %v804 = vunpack.c.l.b16 %v141
  %v805 = vunpack.c.l.b16 %v142
  %v806 = vunpack.c.l.b16 %v143
  %v807 = vunpack.c.l.b16 %v144
  %v808 = vunpack.c.l.b16 %v145
  %v809 = vunpack.c.l.b16 %v146
  %v810 = vunpack.c.l.b16 %v147
  %v811 = vunpack.c.l.b16 %v148
  %v812 = vunpack.c.l.b16 %v149
  %v813 = vunpack.c.l.b16 %v150
  %v814 = vunpack.c.l.b16 %v151
  %v815 = vunpack.c.l.b16 %v152
  %v816 = vunpack.c.l.b16 %v153
  %v817 = vunpack.c.l.b16 %v154
  %v818 = vunpack.c.l.b16 %v155
  %v819 = vunpack.c.l.b16 %v156
  %v820 = vunpack.c.l.b16 %v157
  %v821 = vunpack.c.l.b16 %v158
  %v822 = vunpack.c.l.b16 %v159
  %v823 = vunpack.c.l.b16 %v160
  %v824 = vunpack.c.l.b16 %v161
  %v825 = vunpack.c.l.b16 %v162
  %v826 = vunpack.c.l.b16 %v163
  %v827 = vunpack.c.l.b16 %v164
  %v828 = vunpack.c.l.b16 %v165
  %v829 = vunpack.c.l.b16 %v166
  %v830 = vunpack.c.l.b16 %v167
  %v831 = vunpack.c.l.b16 %v168
  %v832 = vunpack.c.l.b16 %v169
  %v833 = vunpack.c.l.b16 %v170
  %v834 = vunpack.c.l.b16 %v171
  %v835 = vunpack.c.l.b16 %v172
  %v836 = vunpack.c.l.b16 %v173
  %v837 = vunpack.c.l.b16 %v174
  %v838 = vunpack.c.l.b16 %v175
  %v839 = vunpack.c.l.b16 %v176
  %v840 = vunpack.c.l.b16 %v177
  %v841 = vunpack.c.l.b16 %v178
  %v842 = vunpack.c.l.b16 %v179
  %v843 = vunpack.c.l.b16 %v180
  %v844 = vunpack.c.l.b16 %v181
  %v845 = vunpack.c.l.b16 %v182
  %v846 = vunpack.c.l.b16 %v183
  %v847 = vunpack.c.l.b16 %v184
  %v848 = vunpack.c.l.b16 %v185
  %v849 = vunpack.c.l.b16 %v186
  %v850 = vunpack.c.l.b16 %v187
  %v851 = vunpack.c.l.b16 %v188
  %v852 = vunpack.c.l.b16 %v189
  %v853 = vunpack.c.l.b16 %v190
  %v854 = vunpack.c.l.b16 %v191
  %v855 = vunpack.c.l.b16 %v192
  %v856 = vunpack.c.l.b16 %v193
  %v857 = vunpack.c.l.b16 %v194
  %v858 = vunpack.c.l.b16 %v195
  %v859 = vunpack.c.l.b16 %v196
  %v860 = vunpack.c.l.b16 %v197
  %v861 = vunpack.c.l.b16 %v198
  %v862 = vunpack.c.l.b16 %v199
  %v863 = vunpack.c.l.b16 %v200
  %v864 = vunpack.c.l.b16 %v201
  %v865 = vunpack.c.l.b16 %v202
  %v866 = vunpack.c.l.b16 %v203
  %v867 = vunpack.c.l.b16 %v204
  %v868 = vunpack.c.l.b16 %v205
  %v869 = vunpack.c.l.b16 %v206
  %v870 = vunpack.c.l.b16 %v207
  %v871 = vunpack.c.l.b16 %v208
  %v872 = vunpack.c.l.b16 %v209
  %v873 = vunpack.c.l.b16 %v210
  %v874 = vunpack.c.l.b16 %v211
  %v875 = vunpack.c.l.b16 %v212
  %v876 = vunpack.c.l.b16 %v213
  %v877 = vunpack.c.l.b16 %v214
  %v878 = vunpack.c.l.b16 %v215
  %v879 = vunpack.c.l.b16 %v216
  %v880 = vunpack.c.l.b16 %v217
  %v881 = vunpack.c.l.b16 %v218
  %v882 = vunpack.c.l.b16 %v219
  %v883 = vunpack.c.l.b16 %v220
  %v884 = vunpack.c.l.b16 %v221
  %v885 = vunpack.c.l.b16 %v222
  %v886 = vunpack.c.l.b16 %v223
  %v887 = vunpack.c.l.b16 %v224
  %v888 = vunpack.c.l.b16 %v225
  %v889 = vunpack.c.l.b16 %v226
  %v890 = vunpack.c.l.b16 %v227
  %v891 = vunpack.c.l.b16 %v228
  %v892 = vunpack.c.l.b16 %v229
  %v893 = vunpack.c.l.b16 %v230
  %v894 = vunpack.c.l.b16 %v231
  %v895 = vunpack.c.l.b16 %v232
  %v896 = vunpack.c.l.b16 %v233
  %v897 = vunpack.c.l.b16 %v234
  %v898 = vunpack.c.l.b16 %v235
  %v899 = vunpack.c.l.b16 %v236
  %v900 = vunpack.c.l.b16 %v237
  %v901 = vunpack.c.l.b16 %v238
  %v902 = vpack.c.b16 %v759, %v758
  %v903 = vpack.c.b16 %v761, %v760
  %v904 = vpack.c.b16 %v763, %v762
  %v905 = vpack.c.b16 %v765, %v764
  %v906 = vpack.c.b16 %v767, %v766
  %v907 = vpack.c.b16 %v769, %v768
  %v908 = vpack.c.b16 %v771, %v770
  %v909 = vpack.c.b16 %v773, %v772
  %v910 = vpack.c.b16 %v775, %v774
  %v911 = vpack.c.b16 %v777, %v776
  %v912 = vpack.c.b16 %v779, %v778
  %v913 = vpack.c.b16 %v781, %v780
  %v914 = vpack.c.b16 %v783, %v782
  %v915 = vpack.c.b16 %v785, %v784
  %v916 = vpack.c.b16 %v787, %v786
  %v917 = vpack.c.b16 %v789, %v788
  %v918 = vpack.c.b16 %v791, %v790
  %v919 = vpack.c.b16 %v793, %v792
  %v920 = vpack.c.b16 %v795, %v794
  %v921 = vpack.c.b16 %v797, %v796
  %v922 = vpack.c.b16 %v799, %v798
  %v923 = vpack.c.b16 %v801, %v800
  %v924 = vpack.c.b16 %v803, %v802
  %v925 = vpack.c.b16 %v805, %v804
  %v926 = vpack.c.b16 %v807, %v806
  %v927 = vpack.c.b16 %v809, %v808
  %v928 = vpack.c.b16 %v811, %v810
  %v929 = vpack.c.b16 %v813, %v812
  %v930 = vpack.c.b16 %v815, %v814
  %v931 = vpack.c.b16 %v817, %v816
  %v932 = vpack.c.b16 %v819, %v818
  %v933 = vpack.c.b16 %v821, %v820
  %v934 = vpack.c.b16 %v823, %v822
  %v935 = vpack.c.b16 %v825, %v824
  %v936 = vpack.c.b16 %v827, %v826
  %v937 = vpack.c.b16 %v829, %v828
  %v938 = vpack.c.b16 %v831, %v830
  %v939 = vpack.c.b16 %v833, %v832
  %v940 = vpack.c.b16 %v835, %v834
  %v941 = vpack.c.b16 %v837, %v836
  %v942 = vpack.c.b16 %v839, %v838
  %v943 = vpack.c.b16 %v841, %v840
  %v944 = vpack.c.b16 %v843, %v842
  %v945 = vpack.c.b16 %v845, %v844
  %v946 = vpack.c.b16 %v847, %v846
  %v947 = vpack.c.b16 %v849, %v848
  %v948 = vpack.c.b16 %v851, %v850
  %v949 = vpack.c.b16 %v853, %v852
  %v950 = vpack.c.b16 %v855, %v854
  %v951 = vpack.c.b16 %v857, %v856
  %v952 = vpack.c.b16 %v859, %v858
  %v953 = vpack.c.b16 %v861, %v860
  %v954 = vpack.c.b16 %v863, %v862
  %v955 = vpack.c.b16 %v865, %v864
  %v956 = vpack.c.b16 %v867, %v866
  %v957 = vpack.c.b16 %v869, %v868
  %v958 = vpack.c.b16 %v871, %v870
  %v959 = vpack.c.b16 %v873, %v872
  %v960 = vpack.c.b16 %v875, %v874
  %v961 = vpack.c.b16 %v877, %v876
  %v962 = vpack.c.b16 %v879, %v878
  %v963 = vpack.c.b16 %v881, %v880
  %v964 = vpack.c.b16 %v883, %v882
  %v965 = vpack.c.b16 %v885, %v884
  %v966 = vpack.c.b16 %v887, %v886
  %v967 = vpack.c.b16 %v889, %v888
  %v968 = vpack.c.b16 %v891, %v890
  %v969 = vpack.c.b16 %v893, %v892
  %v970 = vpack.c.b16 %v895, %v894
  %v971 = vpack.c.b16 %v897, %v896
  %v972 = vpack.c.b16 %v899, %v898
  %v973 = vpack.c.b16 %v901, %v900
  %1046 = vmatprep.subr.bf16.mxu0 0
  %1047 = vmatpush1.bf16.msra.mxu0 %v909
  %1048 = vmatprep.subr.bf16.mxu0 0
  %1049 = vmatpush1.bf16.msra.mxu0 %v908
  %1050 = vmatprep.subr.bf16.mxu0 0
  %1051 = vmatpush1.bf16.msra.mxu0 %v907
  %1052 = vmatprep.subr.bf16.mxu0 0
  %1053 = vmatpush1.bf16.msra.mxu0 %v906
  %1054 = vmatprep.subr.bf16.mxu0 0
  %1055 = vmatpush1.bf16.msra.mxu0 %v905
  %1056 = vmatprep.subr.bf16.mxu0 0
  %1057 = vmatpush1.bf16.msra.mxu0 %v904
  %1058 = vmatprep.subr.bf16.mxu0 0
  %1059 = vmatpush1.bf16.msra.mxu0 %v903
  %1060 = vmatprep.subr.bf16.mxu0 0
  %1061 = vmatpush1.bf16.msra.mxu0 %v902
  %1062 = vmatprep.subr.bf16.mxu0 0
  %1063 = vmatpush2.bf16.msra.mxu0 %v917
  %1064 = vmatprep.subr.bf16.mxu0 0
  %1065 = vmatpush2.bf16.msra.mxu0 %v916
  %1066 = vmatprep.subr.bf16.mxu0 0
  %1067 = vmatpush2.bf16.msra.mxu0 %v915
  %1068 = vmatprep.subr.bf16.mxu0 0
  %1069 = vmatpush2.bf16.msra.mxu0 %v914
  %1070 = vmatprep.subr.bf16.mxu0 0
  %1071 = vmatpush2.bf16.msra.mxu0 %v913
  %1072 = vmatprep.subr.bf16.mxu0 0
  %1073 = vmatpush2.bf16.msra.mxu0 %v912
  %1074 = vmatprep.subr.bf16.mxu0 0
  %1075 = vmatpush2.bf16.msra.mxu0 %v911
  %1076 = vmatprep.subr.bf16.mxu0 0
  %1077 = vmatpush2.bf16.msra.mxu0 %v910
  %1078 = vmatprep.mubr.bf16.mxu0 %v471
  %1079 = vmatmul.mubr.bf16.gmra.mxu0 %v470
  %v1080 = vpop.f32.mrf.mxu0
  %v1081 = vadd.f32 %v244, %v1080
  %v1082 = vpop.f32.mrf.mxu0
  %v1083 = vpop.f32.mrf.mxu0
  %v1084 = vadd.f32 %v244, %v1083
  %v1085 = vpop.f32.mrf.mxu0
  %1086 = vmatprep.mubr.bf16.mxu0 %v480
  %1087 = vmatmul.mubr.bf16.gmra.mxu0 %v479
  %v1088 = vpop.f32.mrf.mxu0
  %v1089 = vadd.f32 %v244, %v1088
  %v1090 = vpop.f32.mrf.mxu0
  %v1091 = vpop.f32.mrf.mxu0
  %v1092 = vadd.f32 %v244, %v1091
  %v1093 = vpop.f32.mrf.mxu0
  %1094 = vmatprep.mubr.bf16.mxu0 %v489
  %1095 = vmatmul.mubr.bf16.gmra.mxu0 %v488
  %v1096 = vpop.f32.mrf.mxu0
  %v1097 = vadd.f32 %v244, %v1096
  %v1098 = vpop.f32.mrf.mxu0
  %v1099 = vpop.f32.mrf.mxu0
  %v1100 = vadd.f32 %v244, %v1099
  %v1101 = vpop.f32.mrf.mxu0
  %1102 = vmatprep.mubr.bf16.mxu0 %v498
  %1103 = vmatmul.mubr.bf16.gmra.mxu0 %v497
  %v1104 = vpop.f32.mrf.mxu0
  %v1105 = vadd.f32 %v244, %v1104
  %v1106 = vpop.f32.mrf.mxu0
  %v1107 = vpop.f32.mrf.mxu0
  %v1108 = vadd.f32 %v244, %v1107
  %v1109 = vpop.f32.mrf.mxu0
  %1110 = vmatprep.mubr.bf16.mxu0 %v507
  %1111 = vmatmul.mubr.bf16.gmra.mxu0 %v506
  %v1112 = vpop.f32.mrf.mxu0
  %v1113 = vadd.f32 %v244, %v1112
  %v1114 = vpop.f32.mrf.mxu0
  %v1115 = vpop.f32.mrf.mxu0
  %v1116 = vadd.f32 %v244, %v1115
  %v1117 = vpop.f32.mrf.mxu0
  %1118 = vmatprep.mubr.bf16.mxu0 %v516
  %1119 = vmatmul.mubr.bf16.gmra.mxu0 %v515
  %v1120 = vpop.f32.mrf.mxu0
  %v1121 = vadd.f32 %v244, %v1120
  %v1122 = vpop.f32.mrf.mxu0
  %v1123 = vpop.f32.mrf.mxu0
  %v1124 = vadd.f32 %v244, %v1123
  %v1125 = vpop.f32.mrf.mxu0
  %1126 = vmatprep.mubr.bf16.mxu0 %v525
  %1127 = vmatmul.mubr.bf16.gmra.mxu0 %v524
  %v1128 = vpop.f32.mrf.mxu0
  %v1129 = vadd.f32 %v244, %v1128
  %v1130 = vpop.f32.mrf.mxu0
  %v1131 = vpop.f32.mrf.mxu0
  %v1132 = vadd.f32 %v244, %v1131
  %v1133 = vpop.f32.mrf.mxu0
  %1134 = vmatprep.mubr.bf16.mxu0 %v534
  %1135 = vmatmul.mubr.bf16.gmra.mxu0 %v533
  %v1136 = vpop.f32.mrf.mxu0
  %v1137 = vadd.f32 %v244, %v1136
  %v1138 = vpop.f32.mrf.mxu0
  %v1139 = vpop.f32.mrf.mxu0
  %v1140 = vadd.f32 %v244, %v1139
  %v1141 = vpop.f32.mrf.mxu0
  %1142 = vdwg.mxu0
  %1143 = vmatprep.subr.bf16.mxu0 0
  %1144 = vmatpush1.bf16.msra.mxu0 %v925
  %1145 = vmatprep.subr.bf16.mxu0 0
  %1146 = vmatpush1.bf16.msra.mxu0 %v924
  %1147 = vmatprep.subr.bf16.mxu0 0
  %1148 = vmatpush1.bf16.msra.mxu0 %v923
  %1149 = vmatprep.subr.bf16.mxu0 0
  %1150 = vmatpush1.bf16.msra.mxu0 %v922
  %1151 = vmatprep.subr.bf16.mxu0 0
  %1152 = vmatpush1.bf16.msra.mxu0 %v921
  %1153 = vmatprep.subr.bf16.mxu0 0
  %1154 = vmatpush1.bf16.msra.mxu0 %v920
  %1155 = vmatprep.subr.bf16.mxu0 0
  %1156 = vmatpush1.bf16.msra.mxu0 %v919
  %1157 = vmatprep.subr.bf16.mxu0 0
  %1158 = vmatpush1.bf16.msra.mxu0 %v918
  %1159 = vmatprep.subr.bf16.mxu0 0
  %1160 = vmatpush2.bf16.msra.mxu0 %v933
  %1161 = vmatprep.subr.bf16.mxu0 0
  %1162 = vmatpush2.bf16.msra.mxu0 %v932
  %1163 = vmatprep.subr.bf16.mxu0 0
  %1164 = vmatpush2.bf16.msra.mxu0 %v931
  %1165 = vmatprep.subr.bf16.mxu0 0
  %1166 = vmatpush2.bf16.msra.mxu0 %v930
  %1167 = vmatprep.subr.bf16.mxu0 0
  %1168 = vmatpush2.bf16.msra.mxu0 %v929
  %1169 = vmatprep.subr.bf16.mxu0 0
  %1170 = vmatpush2.bf16.msra.mxu0 %v928
  %1171 = vmatprep.subr.bf16.mxu0 0
  %1172 = vmatpush2.bf16.msra.mxu0 %v927
  %1173 = vmatprep.subr.bf16.mxu0 0
  %1174 = vmatpush2.bf16.msra.mxu0 %v926
  %1175 = vmatprep.mubr.bf16.mxu0 %v473
  %1176 = vmatmul.mubr.bf16.gmra.mxu0 %v472
  %v1177 = vpop.f32.mrf.mxu0
  %v1178 = vadd.f32 %v1081, %v1177
  %v1179 = vpop.f32.mrf.mxu0
  %v1180 = vpop.f32.mrf.mxu0
  %v1181 = vadd.f32 %v1084, %v1180
  %v1182 = vpop.f32.mrf.mxu0
  %1183 = vmatprep.mubr.bf16.mxu0 %v482
  %1184 = vmatmul.mubr.bf16.gmra.mxu0 %v481
  %v1185 = vpop.f32.mrf.mxu0
  %v1186 = vadd.f32 %v1089, %v1185
  %v1187 = vpop.f32.mrf.mxu0
  %v1188 = vpop.f32.mrf.mxu0
  %v1189 = vadd.f32 %v1092, %v1188
  %v1190 = vpop.f32.mrf.mxu0
  %1191 = vmatprep.mubr.bf16.mxu0 %v491
  %1192 = vmatmul.mubr.bf16.gmra.mxu0 %v490
  %v1193 = vpop.f32.mrf.mxu0
  %v1194 = vadd.f32 %v1097, %v1193
  %v1195 = vpop.f32.mrf.mxu0
  %v1196 = vpop.f32.mrf.mxu0
  %v1197 = vadd.f32 %v1100, %v1196
  %v1198 = vpop.f32.mrf.mxu0
  %1199 = vmatprep.mubr.bf16.mxu0 %v500
  %1200 = vmatmul.mubr.bf16.gmra.mxu0 %v499
  %v1201 = vpop.f32.mrf.mxu0
  %v1202 = vadd.f32 %v1105, %v1201
  %v1203 = vpop.f32.mrf.mxu0
  %v1204 = vpop.f32.mrf.mxu0
  %v1205 = vadd.f32 %v1108, %v1204
  %v1206 = vpop.f32.mrf.mxu0
  %1207 = vmatprep.mubr.bf16.mxu0 %v509
  %1208 = vmatmul.mubr.bf16.gmra.mxu0 %v508
  %v1209 = vpop.f32.mrf.mxu0
  %v1210 = vadd.f32 %v1113, %v1209
  %v1211 = vpop.f32.mrf.mxu0
  %v1212 = vpop.f32.mrf.mxu0
  %v1213 = vadd.f32 %v1116, %v1212
  %v1214 = vpop.f32.mrf.mxu0
  %1215 = vmatprep.mubr.bf16.mxu0 %v518
  %1216 = vmatmul.mubr.bf16.gmra.mxu0 %v517
  %v1217 = vpop.f32.mrf.mxu0
  %v1218 = vadd.f32 %v1121, %v1217
  %v1219 = vpop.f32.mrf.mxu0
  %v1220 = vpop.f32.mrf.mxu0
  %v1221 = vadd.f32 %v1124, %v1220
  %v1222 = vpop.f32.mrf.mxu0
  %1223 = vmatprep.mubr.bf16.mxu0 %v527
  %1224 = vmatmul.mubr.bf16.gmra.mxu0 %v526
  %v1225 = vpop.f32.mrf.mxu0
  %v1226 = vadd.f32 %v1129, %v1225
  %v1227 = vpop.f32.mrf.mxu0
  %v1228 = vpop.f32.mrf.mxu0
  %v1229 = vadd.f32 %v1132, %v1228
  %v1230 = vpop.f32.mrf.mxu0
  %1231 = vmatprep.mubr.bf16.mxu0 %v536
  %1232 = vmatmul.mubr.bf16.gmra.mxu0 %v535
  %v1233 = vpop.f32.mrf.mxu0
  %v1234 = vadd.f32 %v1137, %v1233
  %v1235 = vpop.f32.mrf.mxu0
  %v1236 = vpop.f32.mrf.mxu0
  %v1237 = vadd.f32 %v1140, %v1236
  %v1238 = vpop.f32.mrf.mxu0
  %1239 = vdwg.mxu0
  %1240 = vmatprep.subr.bf16.mxu0 0
  %1241 = vmatpush1.bf16.msra.mxu0 %v941
  %1242 = vmatprep.subr.bf16.mxu0 0
  %1243 = vmatpush1.bf16.msra.mxu0 %v940
  %1244 = vmatprep.subr.bf16.mxu0 0
  %1245 = vmatpush1.bf16.msra.mxu0 %v939
  %1246 = vmatprep.subr.bf16.mxu0 0
  %1247 = vmatpush1.bf16.msra.mxu0 %v938
  %1248 = vmatprep.subr.bf16.mxu0 0
  %1249 = vmatpush1.bf16.msra.mxu0 %v937
  %1250 = vmatprep.subr.bf16.mxu0 0
  %1251 = vmatpush1.bf16.msra.mxu0 %v936
  %1252 = vmatprep.subr.bf16.mxu0 0
  %1253 = vmatpush1.bf16.msra.mxu0 %v935
  %1254 = vmatprep.subr.bf16.mxu0 0
  %1255 = vmatpush1.bf16.msra.mxu0 %v934
  %1256 = vmatprep.subr.bf16.mxu0 0
  %1257 = vmatpush2.bf16.msra.mxu0 %v949
  %1258 = vmatprep.subr.bf16.mxu0 0
  %1259 = vmatpush2.bf16.msra.mxu0 %v948
  %1260 = vmatprep.subr.bf16.mxu0 0
  %1261 = vmatpush2.bf16.msra.mxu0 %v947
  %1262 = vmatprep.subr.bf16.mxu0 0
  %1263 = vmatpush2.bf16.msra.mxu0 %v946
  %1264 = vmatprep.subr.bf16.mxu0 0
  %1265 = vmatpush2.bf16.msra.mxu0 %v945
  %1266 = vmatprep.subr.bf16.mxu0 0
  %1267 = vmatpush2.bf16.msra.mxu0 %v944
  %1268 = vmatprep.subr.bf16.mxu0 0
  %1269 = vmatpush2.bf16.msra.mxu0 %v943
  %1270 = vmatprep.subr.bf16.mxu0 0
  %1271 = vmatpush2.bf16.msra.mxu0 %v942
  %1272 = vmatprep.mubr.bf16.mxu0 %v475
  %1273 = vmatmul.mubr.bf16.gmra.mxu0 %v474
  %v1274 = vpop.f32.mrf.mxu0
  %v1275 = vadd.f32 %v1178, %v1274
  %v1276 = vpop.f32.mrf.mxu0
  %v1277 = vpop.f32.mrf.mxu0
  %v1278 = vadd.f32 %v1181, %v1277
  %v1279 = vpop.f32.mrf.mxu0
  %1280 = vmatprep.mubr.bf16.mxu0 %v484
  %1281 = vmatmul.mubr.bf16.gmra.mxu0 %v483
  %v1282 = vpop.f32.mrf.mxu0
  %v1283 = vadd.f32 %v1186, %v1282
  %v1284 = vpop.f32.mrf.mxu0
  %v1285 = vpop.f32.mrf.mxu0
  %v1286 = vadd.f32 %v1189, %v1285
  %v1287 = vpop.f32.mrf.mxu0
  %1288 = vmatprep.mubr.bf16.mxu0 %v493
  %1289 = vmatmul.mubr.bf16.gmra.mxu0 %v492
  %v1290 = vpop.f32.mrf.mxu0
  %v1291 = vadd.f32 %v1194, %v1290
  %v1292 = vpop.f32.mrf.mxu0
  %v1293 = vpop.f32.mrf.mxu0
  %v1294 = vadd.f32 %v1197, %v1293
  %v1295 = vpop.f32.mrf.mxu0
  %1296 = vmatprep.mubr.bf16.mxu0 %v502
  %1297 = vmatmul.mubr.bf16.gmra.mxu0 %v501
  %v1298 = vpop.f32.mrf.mxu0
  %v1299 = vadd.f32 %v1202, %v1298
  %v1300 = vpop.f32.mrf.mxu0
  %v1301 = vpop.f32.mrf.mxu0
  %v1302 = vadd.f32 %v1205, %v1301
  %v1303 = vpop.f32.mrf.mxu0
  %1304 = vmatprep.mubr.bf16.mxu0 %v511
  %1305 = vmatmul.mubr.bf16.gmra.mxu0 %v510
  %v1306 = vpop.f32.mrf.mxu0
  %v1307 = vadd.f32 %v1210, %v1306
  %v1308 = vpop.f32.mrf.mxu0
  %v1309 = vpop.f32.mrf.mxu0
  %v1310 = vadd.f32 %v1213, %v1309
  %v1311 = vpop.f32.mrf.mxu0
  %1312 = vmatprep.mubr.bf16.mxu0 %v520
  %1313 = vmatmul.mubr.bf16.gmra.mxu0 %v519
  %v1314 = vpop.f32.mrf.mxu0
  %v1315 = vadd.f32 %v1218, %v1314
  %v1316 = vpop.f32.mrf.mxu0
  %v1317 = vpop.f32.mrf.mxu0
  %v1318 = vadd.f32 %v1221, %v1317
  %v1319 = vpop.f32.mrf.mxu0
  %1320 = vmatprep.mubr.bf16.mxu0 %v529
  %1321 = vmatmul.mubr.bf16.gmra.mxu0 %v528
  %v1322 = vpop.f32.mrf.mxu0
  %v1323 = vadd.f32 %v1226, %v1322
  %v1324 = vpop.f32.mrf.mxu0
  %v1325 = vpop.f32.mrf.mxu0
  %v1326 = vadd.f32 %v1229, %v1325
  %v1327 = vpop.f32.mrf.mxu0
  %1328 = vmatprep.mubr.bf16.mxu0 %v538
  %1329 = vmatmul.mubr.bf16.gmra.mxu0 %v537
  %v1330 = vpop.f32.mrf.mxu0
  %v1331 = vadd.f32 %v1234, %v1330
  %v1332 = vpop.f32.mrf.mxu0
  %v1333 = vpop.f32.mrf.mxu0
  %v1334 = vadd.f32 %v1237, %v1333
  %v1335 = vpop.f32.mrf.mxu0
  %1336 = vdwg.mxu0
  %1337 = vmatprep.subr.bf16.mxu0 0
  %1338 = vmatpush1.bf16.msra.mxu0 %v957
  %1339 = vmatprep.subr.bf16.mxu0 0
  %1340 = vmatpush1.bf16.msra.mxu0 %v956
  %1341 = vmatprep.subr.bf16.mxu0 0
  %1342 = vmatpush1.bf16.msra.mxu0 %v955
  %1343 = vmatprep.subr.bf16.mxu0 0
  %1344 = vmatpush1.bf16.msra.mxu0 %v954
  %1345 = vmatprep.subr.bf16.mxu0 0
  %1346 = vmatpush1.bf16.msra.mxu0 %v953
  %1347 = vmatprep.subr.bf16.mxu0 0
  %1348 = vmatpush1.bf16.msra.mxu0 %v952
  %1349 = vmatprep.subr.bf16.mxu0 0
  %1350 = vmatpush1.bf16.msra.mxu0 %v951
  %1351 = vmatprep.subr.bf16.mxu0 0
  %1352 = vmatpush1.bf16.msra.mxu0 %v950
  %1353 = vmatprep.subr.bf16.mxu0 0
  %1354 = vmatpush2.bf16.msra.mxu0 %v965
  %1355 = vmatprep.subr.bf16.mxu0 0
  %1356 = vmatpush2.bf16.msra.mxu0 %v964
  %1357 = vmatprep.subr.bf16.mxu0 0
  %1358 = vmatpush2.bf16.msra.mxu0 %v963
  %1359 = vmatprep.subr.bf16.mxu0 0
  %1360 = vmatpush2.bf16.msra.mxu0 %v962
  %1361 = vmatprep.subr.bf16.mxu0 0
  %1362 = vmatpush2.bf16.msra.mxu0 %v961
  %1363 = vmatprep.subr.bf16.mxu0 0
  %1364 = vmatpush2.bf16.msra.mxu0 %v960
  %1365 = vmatprep.subr.bf16.mxu0 0
  %1366 = vmatpush2.bf16.msra.mxu0 %v959
  %1367 = vmatprep.subr.bf16.mxu0 0
  %1368 = vmatpush2.bf16.msra.mxu0 %v958
  %1369 = vmatprep.mubr.bf16.mxu0 %v477
  %1370 = vmatmul.mubr.bf16.gmra.mxu0 %v476
  %v1371 = vpop.f32.mrf.mxu0
  %v1372 = vadd.f32 %v1275, %v1371
  %v1373 = vpop.f32.mrf.mxu0
  %v1374 = vpop.f32.mrf.mxu0
  %v1375 = vadd.f32 %v1278, %v1374
  %v1376 = vpop.f32.mrf.mxu0
  %1377 = vmatprep.mubr.bf16.mxu0 %v486
  %1378 = vmatmul.mubr.bf16.gmra.mxu0 %v485
  %v1379 = vpop.f32.mrf.mxu0
  %v1380 = vadd.f32 %v1283, %v1379
  %v1381 = vpop.f32.mrf.mxu0
  %v1382 = vpop.f32.mrf.mxu0
  %v1383 = vadd.f32 %v1286, %v1382
  %v1384 = vpop.f32.mrf.mxu0
  %1385 = vmatprep.mubr.bf16.mxu0 %v495
  %1386 = vmatmul.mubr.bf16.gmra.mxu0 %v494
  %v1387 = vpop.f32.mrf.mxu0
  %v1388 = vadd.f32 %v1291, %v1387
  %v1389 = vpop.f32.mrf.mxu0
  %v1390 = vpop.f32.mrf.mxu0
  %v1391 = vadd.f32 %v1294, %v1390
  %v1392 = vpop.f32.mrf.mxu0
  %1393 = vmatprep.mubr.bf16.mxu0 %v504
  %1394 = vmatmul.mubr.bf16.gmra.mxu0 %v503
  %v1395 = vpop.f32.mrf.mxu0
  %v1396 = vadd.f32 %v1299, %v1395
  %v1397 = vpop.f32.mrf.mxu0
  %v1398 = vpop.f32.mrf.mxu0
  %v1399 = vadd.f32 %v1302, %v1398
  %v1400 = vpop.f32.mrf.mxu0
  %1401 = vmatprep.mubr.bf16.mxu0 %v513
  %1402 = vmatmul.mubr.bf16.gmra.mxu0 %v512
  %v1403 = vpop.f32.mrf.mxu0
  %v1404 = vadd.f32 %v1307, %v1403
  %v1405 = vpop.f32.mrf.mxu0
  %v1406 = vpop.f32.mrf.mxu0
  %v1407 = vadd.f32 %v1310, %v1406
  %v1408 = vpop.f32.mrf.mxu0
  %1409 = vmatprep.mubr.bf16.mxu0 %v522
  %1410 = vmatmul.mubr.bf16.gmra.mxu0 %v521
  %v1411 = vpop.f32.mrf.mxu0
  %v1412 = vadd.f32 %v1315, %v1411
  %v1413 = vpop.f32.mrf.mxu0
  %v1414 = vpop.f32.mrf.mxu0
  %v1415 = vadd.f32 %v1318, %v1414
  %v1416 = vpop.f32.mrf.mxu0
  %1417 = vmatprep.mubr.bf16.mxu0 %v531
  %1418 = vmatmul.mubr.bf16.gmra.mxu0 %v530
  %v1419 = vpop.f32.mrf.mxu0
  %v1420 = vadd.f32 %v1323, %v1419
  %v1421 = vpop.f32.mrf.mxu0
  %v1422 = vpop.f32.mrf.mxu0
  %v1423 = vadd.f32 %v1326, %v1422
  %v1424 = vpop.f32.mrf.mxu0
  %1425 = vmatprep.mubr.bf16.mxu0 %v540
  %1426 = vmatmul.mubr.bf16.gmra.mxu0 %v539
  %v1427 = vpop.f32.mrf.mxu0
  %v1428 = vadd.f32 %v1331, %v1427
  %v1429 = vpop.f32.mrf.mxu0
  %v1430 = vpop.f32.mrf.mxu0
  %v1431 = vadd.f32 %v1334, %v1430
  %v1432 = vpop.f32.mrf.mxu0
  %1433 = vdwg.mxu0
  %1434 = vmatprep.subr.bf16.mxu0 0
  %1435 = vmatpush1.bf16.msra.mxu0 %v973
  %1436 = vmatprep.subr.bf16.mxu0 0
  %1437 = vmatpush1.bf16.msra.mxu0 %v972
  %1438 = vmatprep.subr.bf16.mxu0 0
  %1439 = vmatpush1.bf16.msra.mxu0 %v971
  %1440 = vmatprep.subr.bf16.mxu0 0
  %1441 = vmatpush1.bf16.msra.mxu0 %v970
  %1442 = vmatprep.subr.bf16.mxu0 0
  %1443 = vmatpush1.bf16.msra.mxu0 %v969
  %1444 = vmatprep.subr.bf16.mxu0 0
  %1445 = vmatpush1.bf16.msra.mxu0 %v968
  %1446 = vmatprep.subr.bf16.mxu0 0
  %1447 = vmatpush1.bf16.msra.mxu0 %v967
  %1448 = vmatprep.subr.bf16.mxu0 0
  %1449 = vmatpush1.bf16.msra.mxu0 %v966
  %1450 = vmatprep.subr.bf16.mxu0 0
  %1451 = vmatpush2.bf16.msra.mxu0 0
  %1452 = vmatprep.subr.bf16.mxu0 0
  %1453 = vmatpush2.bf16.msra.mxu0 0
  %1454 = vmatprep.subr.bf16.mxu0 0
  %1455 = vmatpush2.bf16.msra.mxu0 0
  %1456 = vmatprep.subr.bf16.mxu0 0
  %1457 = vmatpush2.bf16.msra.mxu0 0
  %1458 = vmatprep.subr.bf16.mxu0 0
  %1459 = vmatpush2.bf16.msra.mxu0 0
  %1460 = vmatprep.subr.bf16.mxu0 0
  %1461 = vmatpush2.bf16.msra.mxu0 0
  %1462 = vmatprep.subr.bf16.mxu0 0
  %1463 = vmatpush2.bf16.msra.mxu0 0
  %1464 = vmatprep.subr.bf16.mxu0 0
  %1465 = vmatpush2.bf16.msra.mxu0 0
  %1466 = vmatprep.mubr.bf16.mxu0 0
  %1467 = vmatmul.mubr.bf16.gmra.mxu0 %v478
  %v1468 = vpop.f32.mrf.mxu0
  %v1469 = vadd.f32 %v1372, %v1468
  %v1470 = vpop.f32.mrf.mxu0
  %v1471 = vpop.f32.mrf.mxu0
  %v1472 = vadd.f32 %v1375, %v1471
  %v1473 = vpop.f32.mrf.mxu0
  %1474 = vmatprep.mubr.bf16.mxu0 0
  %1475 = vmatmul.mubr.bf16.gmra.mxu0 %v487
  %v1476 = vpop.f32.mrf.mxu0
  %v1477 = vadd.f32 %v1380, %v1476
  %v1478 = vpop.f32.mrf.mxu0
  %v1479 = vpop.f32.mrf.mxu0
  %v1480 = vadd.f32 %v1383, %v1479
  %v1481 = vpop.f32.mrf.mxu0
  %1482 = vmatprep.mubr.bf16.mxu0 0
  %1483 = vmatmul.mubr.bf16.gmra.mxu0 %v496
  %v1484 = vpop.f32.mrf.mxu0
  %v1485 = vadd.f32 %v1388, %v1484
  %v1486 = vpop.f32.mrf.mxu0
  %v1487 = vpop.f32.mrf.mxu0
  %v1488 = vadd.f32 %v1391, %v1487
  %v1489 = vpop.f32.mrf.mxu0
  %1490 = vmatprep.mubr.bf16.mxu0 0
  %1491 = vmatmul.mubr.bf16.gmra.mxu0 %v505
  %v1492 = vpop.f32.mrf.mxu0
  %v1493 = vadd.f32 %v1396, %v1492
  %v1494 = vpop.f32.mrf.mxu0
  %v1495 = vpop.f32.mrf.mxu0
  %v1496 = vadd.f32 %v1399, %v1495
  %v1497 = vpop.f32.mrf.mxu0
  %1498 = vmatprep.mubr.bf16.mxu0 0
  %1499 = vmatmul.mubr.bf16.gmra.mxu0 %v514
  %v1500 = vpop.f32.mrf.mxu0
  %v1501 = vadd.f32 %v1404, %v1500
  %v1502 = vpop.f32.mrf.mxu0
  %v1503 = vpop.f32.mrf.mxu0
  %v1504 = vadd.f32 %v1407, %v1503
  %v1505 = vpop.f32.mrf.mxu0
  %1506 = vmatprep.mubr.bf16.mxu0 0
  %1507 = vmatmul.mubr.bf16.gmra.mxu0 %v523
  %v1508 = vpop.f32.mrf.mxu0
  %v1509 = vadd.f32 %v1412, %v1508
  %v1510 = vpop.f32.mrf.mxu0
  %v1511 = vpop.f32.mrf.mxu0
  %v1512 = vadd.f32 %v1415, %v1511
  %v1513 = vpop.f32.mrf.mxu0
  %1514 = vmatprep.mubr.bf16.mxu0 0
  %1515 = vmatmul.mubr.bf16.gmra.mxu0 %v532
  %v1516 = vpop.f32.mrf.mxu0
  %v1517 = vadd.f32 %v1420, %v1516
  %v1518 = vpop.f32.mrf.mxu0
  %v1519 = vpop.f32.mrf.mxu0
  %v1520 = vadd.f32 %v1423, %v1519
  %v1521 = vpop.f32.mrf.mxu0
  %1522 = vmatprep.mubr.bf16.mxu0 0
  %1523 = vmatmul.mubr.bf16.gmra.mxu0 %v541
  %v1524 = vpop.f32.mrf.mxu0
  %v1525 = vadd.f32 %v1428, %v1524
  %v1526 = vpop.f32.mrf.mxu0
  %v1527 = vpop.f32.mrf.mxu0
  %v1528 = vadd.f32 %v1431, %v1527
  %v1529 = vpop.f32.mrf.mxu0
  %1530 = vdwg.mxu0
  %v1531 = vmax.f32 %v1469, 0.0
  %v1532 = vmax.f32 %v1472, 0.0
  %v1533 = vmax.f32 %v1477, 0.0
  %v1534 = vmax.f32 %v1480, 0.0
  %v1535 = vmax.f32 %v1485, 0.0
  %v1536 = vmax.f32 %v1488, 0.0
  %v1537 = vmax.f32 %v1493, 0.0
  %v1538 = vmax.f32 %v1496, 0.0
  %v1539 = vmax.f32 %v1501, 0.0
  %v1540 = vmax.f32 %v1504, 0.0
  %v1541 = vmax.f32 %v1509, 0.0
  %v1542 = vmax.f32 %v1512, 0.0
  %v1543 = vmax.f32 %v1517, 0.0
  %v1544 = vmax.f32 %v1520, 0.0
  %v1545 = vmax.f32 %v1525, 0.0
  %v1546 = vmax.f32 %v1528, 0.0
  %v1547 = vpack.c.bf16 %v1532, %v1531
  %v1548 = vpack.c.bf16 %v1534, %v1533
  %v1549 = vpack.c.bf16 %v1536, %v1535
  %v1550 = vpack.c.bf16 %v1538, %v1537
  %v1551 = vpack.c.bf16 %v1540, %v1539
  %v1552 = vpack.c.bf16 %v1542, %v1541
  %v1553 = vpack.c.bf16 %v1544, %v1543
  %v1554 = vpack.c.bf16 %v1546, %v1545
  %v1563 = vunpack.c.l.b16 %v1547
  %v1564 = vunpack.c.h.b16 %v1547
  %v1565 = vunpack.c.l.b16 %v1548
  %v1566 = vunpack.c.h.b16 %v1548
  %v1567 = vunpack.c.l.b16 %v1549
  %v1568 = vunpack.c.h.b16 %v1549
  %v1569 = vunpack.c.l.b16 %v1550
  %v1570 = vunpack.c.h.b16 %v1550
  %v1571 = vunpack.c.l.b16 %v1551
  %v1572 = vunpack.c.h.b16 %v1551
  %v1573 = vunpack.c.l.b16 %v1552
  %v1574 = vunpack.c.h.b16 %v1552
  %v1575 = vunpack.c.l.b16 %v1553
  %v1576 = vunpack.c.h.b16 %v1553
  %v1577 = vunpack.c.l.b16 %v1554
  %v1578 = vunpack.c.h.b16 %v1554
  %v1579 = vpack.c.b16 %v1563, %v1563
  %v1580 = vpack.c.b16 %v1564, %v1564
  %v1581 = vpack.c.b16 %v1565, %v1565
  %v1582 = vpack.c.b16 %v1566, %v1566
  %v1583 = vpack.c.b16 %v1567, %v1567
  %v1584 = vpack.c.b16 %v1568, %v1568
  %v1585 = vpack.c.b16 %v1569, %v1569
  %v1586 = vpack.c.b16 %v1570, %v1570
  %v1587 = vpack.c.b16 %v1571, %v1571
  %v1588 = vpack.c.b16 %v1572, %v1572
  %v1589 = vpack.c.b16 %v1573, %v1573
  %v1590 = vpack.c.b16 %v1574, %v1574
  %v1591 = vpack.c.b16 %v1575, %v1575
  %v1592 = vpack.c.b16 %v1576, %v1576
  %v1593 = vpack.c.b16 %v1577, %v1577
  %v1594 = vpack.c.b16 %v1578, %v1578
  %1611 = vst [vmem:[%s3] sm:$0xf] %v1579
  %1612 = vst [vmem:[%s3 + $0x4] sm:$0xf] %v1580
  %1613 = vst [vmem:[%s3 + $0x8] sm:$0xf] %v1581
  %1614 = vst [vmem:[%s3 + $0xc] sm:$0xf] %v1582
  %1615 = vst [vmem:[%s3 + $0x10] sm:$0xf] %v1583
  %1616 = vst [vmem:[%s3 + $0x14] sm:$0xf] %v1584
  %1617 = vst [vmem:[%s3 + $0x18] sm:$0xf] %v1585
  %1618 = vst [vmem:[%s3 + $0x1c] sm:$0xf] %v1586
  %1619 = vst [vmem:[%s3 + $0x20] sm:$0xf] %v1587
  %1620 = vst [vmem:[%s3 + $0x24] sm:$0xf] %v1588
  %1621 = vst [vmem:[%s3 + $0x28] sm:$0xf] %v1589
  %1622 = vst [vmem:[%s3 + $0x2c] sm:$0xf] %v1590
  %1623 = vst [vmem:[%s3 + $0x30] sm:$0xf] %v1591
  %1624 = vst [vmem:[%s3 + $0x34] sm:$0xf] %v1592
  %1625 = vst [vmem:[%s3 + $0x38] sm:$0xf] %v1593
  %1626 = vst [vmem:[%s3 + $0x3c] sm:$0xf] %v1594
  // Predicated region
  $region14: #{fcos_forward.17} parent=0 // pred_check
    _
  $region15: #{fcos_forward.17} parent=0 // pred_check_branch
    %1628 = sbr.rel (0) target = $region17
  $region16: #{fcos_forward.17} parent=0 // pred_region
    _
  $region17: #{fcos_forward.17} parent=0 // pred_fallthru
    _
  // Predicated region
  $region18: #{fcos_forward.17} parent=0 // pred_check
    _
  $region19: #{fcos_forward.17} parent=0 // pred_check_branch
    %1630 = sbr.rel (0) target = $region21
  $region20: #{fcos_forward.17} parent=0 // pred_region
    _
  $region21: #{fcos_forward.17} parent=0 // pred_fallthru
    _

// kernel: fcos_forward.20
$region0: #{fcos_forward.20}
  #allocation0 [shape = 'u32[]', space=smem, size = 0x4, offset = 0x4, fixed_abs, tag = 'smem constant byte address 0x4 - core index']
  #allocation1 [shape = 'u32[144,128]{1,0:T(1,128)}', space=vmem, size = 0x12000, scoped, tag = 'internal scratch']
  %s0 = inlined_call_operand.vmem [shape: bf16[128,128], index: 0, kind: input, shape index: {}]
  %s1 = inlined_call_operand.vmem [shape: bf16[128,128], index: 1, kind: input, shape index: {}]
  %s2 = inlined_call_operand.vmem [shape: f32[1,128], index: 2, kind: input, shape index: {}]
  %s3 = inlined_call_operand.vmem [shape: bf16[128,128], index: 3, kind: output, shape index: {}]
  %s4 = sld [smem:[#allocation0]]
  $region22: #{fcos_forward.20} parent=0
    _
  %s6 = ssub.s32 1, %s4
  %s7 = scalar_select 0, %s6, %s4
  // Predicated region
  $region2: #{fcos_forward.20} parent=0 // pred_check
    _
  $region3: #{fcos_forward.20} parent=0 // pred_check_branch
    %9 = sbr.rel (0) target = $region5
  $region4: #{fcos_forward.20} parent=0 // pred_region
    _
  $region5: #{fcos_forward.20} parent=0 // pred_fallthru
    _
  // Predicated region
  $region6: #{fcos_forward.20} parent=0 // pred_check
    _
  $region7: #{fcos_forward.20} parent=0 // pred_check_branch
    %11 = sbr.rel (0) target = $region9
  $region8: #{fcos_forward.20} parent=0 // pred_region
    _
  $region9: #{fcos_forward.20} parent=0 // pred_fallthru
    _
  // Predicated region
  $region10: #{fcos_forward.20} parent=0 // pred_check
    _
  $region11: #{fcos_forward.20} parent=0 // pred_check_branch
    %13 = sbr.rel (0) target = $region13
  $region12: #{fcos_forward.20} parent=0 // pred_region
    _
  $region13: #{fcos_forward.20} parent=0 // pred_fallthru
    _
  %v15 = vld [vmem:[%s0] sm:$0xf]
  %v16 = vld [vmem:[%s0 + $0x4] sm:$0xf]
  %v17 = vld [vmem:[%s0 + $0x8] sm:$0xf]
  %v18 = vld [vmem:[%s0 + $0xc] sm:$0xf]
  %v19 = vld [vmem:[%s0 + $0x10] sm:$0xf]
  %v20 = vld [vmem:[%s0 + $0x14] sm:$0xf]
  %v21 = vld [vmem:[%s0 + $0x18] sm:$0xf]
  %v22 = vld [vmem:[%s0 + $0x1c] sm:$0xf]
  %v23 = vld [vmem:[%s0 + $0x20] sm:$0xf]
  %v24 = vld [vmem:[%s0 + $0x24] sm:$0xf]
  %v25 = vld [vmem:[%s0 + $0x28] sm:$0xf]
  %v26 = vld [vmem:[%s0 + $0x2c] sm:$0xf]
  %v27 = vld [vmem:[%s0 + $0x30] sm:$0xf]
  %v28 = vld [vmem:[%s0 + $0x34] sm:$0xf]
  %v29 = vld [vmem:[%s0 + $0x38] sm:$0xf]
  %v30 = vld [vmem:[%s0 + $0x3c] sm:$0xf]
  %v31 = vld [vmem:[%s1] sm:$0xf]
  %v32 = vld [vmem:[%s1 + $0x4] sm:$0xf]
  %v33 = vld [vmem:[%s1 + $0x8] sm:$0xf]
  %v34 = vld [vmem:[%s1 + $0xc] sm:$0xf]
  %v35 = vld [vmem:[%s1 + $0x10] sm:$0xf]
  %v36 = vld [vmem:[%s1 + $0x14] sm:$0xf]
  %v37 = vld [vmem:[%s1 + $0x18] sm:$0xf]
  %v38 = vld [vmem:[%s1 + $0x1c] sm:$0xf]
  %v39 = vld [vmem:[%s1 + $0x20] sm:$0xf]
  %v40 = vld [vmem:[%s1 + $0x24] sm:$0xf]
  %v41 = vld [vmem:[%s1 + $0x28] sm:$0xf]
  %v42 = vld [vmem:[%s1 + $0x2c] sm:$0xf]
  %v43 = vld [vmem:[%s1 + $0x30] sm:$0xf]
  %v44 = vld [vmem:[%s1 + $0x34] sm:$0xf]
  %v45 = vld [vmem:[%s1 + $0x38] sm:$0xf]
  %v46 = vld [vmem:[%s1 + $0x3c] sm:$0xf]
  %v47 = vld [vmem:[%s2] sm:$0x1]
  %v49 = vlaneseq
  %v50 = vshrl.u32 %v49, 7
  %v51 = vsub.s32 0, %v50
  %v52 = vrot.slane %v47, %v51
  %v70 = vunpack.c.l.b16 %v15
  %v71 = vunpack.c.l.b16 %v16
  %v72 = vunpack.c.l.b16 %v17
  %v73 = vunpack.c.l.b16 %v18
  %v74 = vunpack.c.l.b16 %v19
  %v75 = vunpack.c.l.b16 %v20
  %v76 = vunpack.c.l.b16 %v21
  %v77 = vunpack.c.l.b16 %v22
  %v78 = vunpack.c.l.b16 %v23
  %v79 = vunpack.c.l.b16 %v24
  %v80 = vunpack.c.l.b16 %v25
  %v81 = vunpack.c.l.b16 %v26
  %v82 = vunpack.c.l.b16 %v27
  %v83 = vunpack.c.l.b16 %v28
  %v84 = vunpack.c.l.b16 %v29
  %v85 = vunpack.c.l.b16 %v30
  %v86 = vpack.c.b16 %v71, %v70
  %v87 = vpack.c.b16 %v73, %v72
  %v88 = vpack.c.b16 %v75, %v74
  %v89 = vpack.c.b16 %v77, %v76
  %v90 = vpack.c.b16 %v79, %v78
  %v91 = vpack.c.b16 %v81, %v80
  %v92 = vpack.c.b16 %v83, %v82
  %v93 = vpack.c.b16 %v85, %v84
  %v118 = vunpack.c.l.b16 %v31
  %v119 = vunpack.c.l.b16 %v32
  %v120 = vunpack.c.l.b16 %v33
  %v121 = vunpack.c.l.b16 %v34
  %v122 = vunpack.c.l.b16 %v35
  %v123 = vunpack.c.l.b16 %v36
  %v124 = vunpack.c.l.b16 %v37
  %v125 = vunpack.c.l.b16 %v38
  %v126 = vunpack.c.l.b16 %v39
  %v127 = vunpack.c.l.b16 %v40
  %v128 = vunpack.c.l.b16 %v41
  %v129 = vunpack.c.l.b16 %v42
  %v130 = vunpack.c.l.b16 %v43
  %v131 = vunpack.c.l.b16 %v44
  %v132 = vunpack.c.l.b16 %v45
  %v133 = vunpack.c.l.b16 %v46
  %v134 = vpack.c.b16 %v119, %v118
  %v135 = vpack.c.b16 %v121, %v120
  %v136 = vpack.c.b16 %v123, %v122
  %v137 = vpack.c.b16 %v125, %v124
  %v138 = vpack.c.b16 %v127, %v126
  %v139 = vpack.c.b16 %v129, %v128
  %v140 = vpack.c.b16 %v131, %v130
  %v141 = vpack.c.b16 %v133, %v132
  %150 = vmatprep.subr.bf16.mxu0 0
  %151 = vmatpush1.bf16.msra.mxu0 %v141
  %152 = vmatprep.subr.bf16.mxu0 0
  %153 = vmatpush1.bf16.msra.mxu0 %v140
  %154 = vmatprep.subr.bf16.mxu0 0
  %155 = vmatpush1.bf16.msra.mxu0 %v139
  %156 = vmatprep.subr.bf16.mxu0 0
  %157 = vmatpush1.bf16.msra.mxu0 %v138
  %158 = vmatprep.subr.bf16.mxu0 0
  %159 = vmatpush1.bf16.msra.mxu0 %v137
  %160 = vmatprep.subr.bf16.mxu0 0
  %161 = vmatpush1.bf16.msra.mxu0 %v136
  %162 = vmatprep.subr.bf16.mxu0 0
  %163 = vmatpush1.bf16.msra.mxu0 %v135
  %164 = vmatprep.subr.bf16.mxu0 0
  %165 = vmatpush1.bf16.msra.mxu0 %v134
  %166 = vmatprep.subr.bf16.mxu0 0
  %167 = vmatpush2.bf16.msra.mxu0 0
  %168 = vmatprep.subr.bf16.mxu0 0
  %169 = vmatpush2.bf16.msra.mxu0 0
  %170 = vmatprep.subr.bf16.mxu0 0
  %171 = vmatpush2.bf16.msra.mxu0 0
  %172 = vmatprep.subr.bf16.mxu0 0
  %173 = vmatpush2.bf16.msra.mxu0 0
  %174 = vmatprep.subr.bf16.mxu0 0
  %175 = vmatpush2.bf16.msra.mxu0 0
  %176 = vmatprep.subr.bf16.mxu0 0
  %177 = vmatpush2.bf16.msra.mxu0 0
  %178 = vmatprep.subr.bf16.mxu0 0
  %179 = vmatpush2.bf16.msra.mxu0 0
  %180 = vmatprep.subr.bf16.mxu0 0
  %181 = vmatpush2.bf16.msra.mxu0 0
  %182 = vmatprep.mubr.bf16.mxu0 0
  %183 = vmatmul.mubr.bf16.gmra.mxu0 %v86
  %v184 = vpop.f32.mrf.mxu0
  %v185 = vadd.f32 %v52, %v184
  %v186 = vpop.f32.mrf.mxu0
  %v187 = vpop.f32.mrf.mxu0
  %v188 = vadd.f32 %v52, %v187
  %v189 = vpop.f32.mrf.mxu0
  %190 = vmatprep.mubr.bf16.mxu0 0
  %191 = vmatmul.mubr.bf16.gmra.mxu0 %v87
  %v192 = vpop.f32.mrf.mxu0
  %v193 = vadd.f32 %v52, %v192
  %v194 = vpop.f32.mrf.mxu0
  %v195 = vpop.f32.mrf.mxu0
  %v196 = vadd.f32 %v52, %v195
  %v197 = vpop.f32.mrf.mxu0
  %198 = vmatprep.mubr.bf16.mxu0 0
  %199 = vmatmul.mubr.bf16.gmra.mxu0 %v88
  %v200 = vpop.f32.mrf.mxu0
  %v201 = vadd.f32 %v52, %v200
  %v202 = vpop.f32.mrf.mxu0
  %v203 = vpop.f32.mrf.mxu0
  %v204 = vadd.f32 %v52, %v203
  %v205 = vpop.f32.mrf.mxu0
  %206 = vmatprep.mubr.bf16.mxu0 0
  %207 = vmatmul.mubr.bf16.gmra.mxu0 %v89
  %v208 = vpop.f32.mrf.mxu0
  %v209 = vadd.f32 %v52, %v208
  %v210 = vpop.f32.mrf.mxu0
  %v211 = vpop.f32.mrf.mxu0
  %v212 = vadd.f32 %v52, %v211
  %v213 = vpop.f32.mrf.mxu0
  %214 = vmatprep.mubr.bf16.mxu0 0
  %215 = vmatmul.mubr.bf16.gmra.mxu0 %v90
  %v216 = vpop.f32.mrf.mxu0
  %v217 = vadd.f32 %v52, %v216
  %v218 = vpop.f32.mrf.mxu0
  %v219 = vpop.f32.mrf.mxu0
  %v220 = vadd.f32 %v52, %v219
  %v221 = vpop.f32.mrf.mxu0
  %222 = vmatprep.mubr.bf16.mxu0 0
  %223 = vmatmul.mubr.bf16.gmra.mxu0 %v91
  %v224 = vpop.f32.mrf.mxu0
  %v225 = vadd.f32 %v52, %v224
  %v226 = vpop.f32.mrf.mxu0
  %v227 = vpop.f32.mrf.mxu0
  %v228 = vadd.f32 %v52, %v227
  %v229 = vpop.f32.mrf.mxu0
  %230 = vmatprep.mubr.bf16.mxu0 0
  %231 = vmatmul.mubr.bf16.gmra.mxu0 %v92
  %v232 = vpop.f32.mrf.mxu0
  %v233 = vadd.f32 %v52, %v232
  %v234 = vpop.f32.mrf.mxu0
  %v235 = vpop.f32.mrf.mxu0
  %v236 = vadd.f32 %v52, %v235
  %v237 = vpop.f32.mrf.mxu0
  %238 = vmatprep.mubr.bf16.mxu0 0
  %239 = vmatmul.mubr.bf16.gmra.mxu0 %v93
  %v240 = vpop.f32.mrf.mxu0
  %v241 = vadd.f32 %v52, %v240
  %v242 = vpop.f32.mrf.mxu0
  %v243 = vpop.f32.mrf.mxu0
  %v244 = vadd.f32 %v52, %v243
  %v245 = vpop.f32.mrf.mxu0
  %246 = vdwg.mxu0
  %v247 = vpack.c.bf16 %v188, %v185
  %v248 = vpack.c.bf16 %v196, %v193
  %v249 = vpack.c.bf16 %v204, %v201
  %v250 = vpack.c.bf16 %v212, %v209
  %v251 = vpack.c.bf16 %v220, %v217
  %v252 = vpack.c.bf16 %v228, %v225
  %v253 = vpack.c.bf16 %v236, %v233
  %v254 = vpack.c.bf16 %v244, %v241
  %v263 = vunpack.c.l.b16 %v247
  %v264 = vunpack.c.h.b16 %v247
  %v265 = vunpack.c.l.b16 %v248
  %v266 = vunpack.c.h.b16 %v248
  %v267 = vunpack.c.l.b16 %v249
  %v268 = vunpack.c.h.b16 %v249
  %v269 = vunpack.c.l.b16 %v250
  %v270 = vunpack.c.h.b16 %v250
  %v271 = vunpack.c.l.b16 %v251
  %v272 = vunpack.c.h.b16 %v251
  %v273 = vunpack.c.l.b16 %v252
  %v274 = vunpack.c.h.b16 %v252
  %v275 = vunpack.c.l.b16 %v253
  %v276 = vunpack.c.h.b16 %v253
  %v277 = vunpack.c.l.b16 %v254
  %v278 = vunpack.c.h.b16 %v254
  %v279 = vpack.c.b16 %v263, %v263
  %v280 = vpack.c.b16 %v264, %v264
  %v281 = vpack.c.b16 %v265, %v265
  %v282 = vpack.c.b16 %v266, %v266
  %v283 = vpack.c.b16 %v267, %v267
  %v284 = vpack.c.b16 %v268, %v268
  %v285 = vpack.c.b16 %v269, %v269
  %v286 = vpack.c.b16 %v270, %v270
  %v287 = vpack.c.b16 %v271, %v271
  %v288 = vpack.c.b16 %v272, %v272
  %v289 = vpack.c.b16 %v273, %v273
  %v290 = vpack.c.b16 %v274, %v274
  %v291 = vpack.c.b16 %v275, %v275
  %v292 = vpack.c.b16 %v276, %v276
  %v293 = vpack.c.b16 %v277, %v277
  %v294 = vpack.c.b16 %v278, %v278
  %311 = vst [vmem:[%s3] sm:$0xf] %v279
  %312 = vst [vmem:[%s3 + $0x4] sm:$0xf] %v280
  %313 = vst [vmem:[%s3 + $0x8] sm:$0xf] %v281
  %314 = vst [vmem:[%s3 + $0xc] sm:$0xf] %v282
  %315 = vst [vmem:[%s3 + $0x10] sm:$0xf] %v283
  %316 = vst [vmem:[%s3 + $0x14] sm:$0xf] %v284
  %317 = vst [vmem:[%s3 + $0x18] sm:$0xf] %v285
  %318 = vst [vmem:[%s3 + $0x1c] sm:$0xf] %v286
  %319 = vst [vmem:[%s3 + $0x20] sm:$0xf] %v287
  %320 = vst [vmem:[%s3 + $0x24] sm:$0xf] %v288
  %321 = vst [vmem:[%s3 + $0x28] sm:$0xf] %v289
  %322 = vst [vmem:[%s3 + $0x2c] sm:$0xf] %v290
  %323 = vst [vmem:[%s3 + $0x30] sm:$0xf] %v291
  %324 = vst [vmem:[%s3 + $0x34] sm:$0xf] %v292
  %325 = vst [vmem:[%s3 + $0x38] sm:$0xf] %v293
  %326 = vst [vmem:[%s3 + $0x3c] sm:$0xf] %v294
  // Predicated region
  $region14: #{fcos_forward.20} parent=0 // pred_check
    _
  $region15: #{fcos_forward.20} parent=0 // pred_check_branch
    %328 = sbr.rel (0) target = $region17
  $region16: #{fcos_forward.20} parent=0 // pred_region
    _
  $region17: #{fcos_forward.20} parent=0 // pred_fallthru
    _
  // Predicated region
  $region18: #{fcos_forward.20} parent=0 // pred_check
    _
  $region19: #{fcos_forward.20} parent=0 // pred_check_branch
    %330 = sbr.rel (0) target = $region21
  $region20: #{fcos_forward.20} parent=0 // pred_region
    _
  $region21: #{fcos_forward.20} parent=0 // pred_fallthru
    _

// kernel: fcos_forward.25
$region0: #{fcos_forward.25}
  #allocation0 [shape = 'u32[]', space=smem, size = 0x4, offset = 0x4, fixed_abs, tag = 'smem constant byte address 0x4 - core index']
  #allocation1 [shape = 'u32[144,128]{1,0:T(1,128)}', space=vmem, size = 0x12000, scoped, tag = 'internal scratch']
  %s0 = inlined_call_operand.vmem [shape: bf16[128,1152], index: 0, kind: input, shape index: {}]
  %s1 = inlined_call_operand.vmem [shape: bf16[1152,128], index: 1, kind: input, shape index: {}]
  %s2 = inlined_call_operand.vmem [shape: f32[1,128], index: 2, kind: input, shape index: {}]
  %s3 = inlined_call_operand.vmem [shape: bf16[128,128], index: 3, kind: output, shape index: {}]
  %s4 = sld [smem:[#allocation0]]
  $region22: #{fcos_forward.25} parent=0
    _
  %s6 = ssub.s32 1, %s4
  %s7 = scalar_select 0, %s6, %s4
  // Predicated region
  $region2: #{fcos_forward.25} parent=0 // pred_check
    _
  $region3: #{fcos_forward.25} parent=0 // pred_check_branch
    %9 = sbr.rel (0) target = $region5
  $region4: #{fcos_forward.25} parent=0 // pred_region
    _
  $region5: #{fcos_forward.25} parent=0 // pred_fallthru
    _
  // Predicated region
  $region6: #{fcos_forward.25} parent=0 // pred_check
    _
  $region7: #{fcos_forward.25} parent=0 // pred_check_branch
    %11 = sbr.rel (0) target = $region9
  $region8: #{fcos_forward.25} parent=0 // pred_region
    _
  $region9: #{fcos_forward.25} parent=0 // pred_fallthru
    _
  // Predicated region
  $region10: #{fcos_forward.25} parent=0 // pred_check
    _
  $region11: #{fcos_forward.25} parent=0 // pred_check_branch
    %13 = sbr.rel (0) target = $region13
  $region12: #{fcos_forward.25} parent=0 // pred_region
    _
  $region13: #{fcos_forward.25} parent=0 // pred_fallthru
    _
  %v15 = vld [vmem:[%s0] sm:$0xff]
  %v16 = vld [vmem:[%s0 + $0x8] sm:$0xff]
  %v17 = vld [vmem:[%s0 + $0x10] sm:$0xff]
  %v18 = vld [vmem:[%s0 + $0x18] sm:$0xff]
  %v19 = vld [vmem:[%s0 + $0x20] sm:$0xf]
  %v20 = vld [vmem:[%s0 + $0x24] sm:$0xff]
  %v21 = vld [vmem:[%s0 + $0x2c] sm:$0xff]
  %v22 = vld [vmem:[%s0 + $0x34] sm:$0xff]
  %v23 = vld [vmem:[%s0 + $0x3c] sm:$0xff]
  %v24 = vld [vmem:[%s0 + $0x44] sm:$0xf]
  %v25 = vld [vmem:[%s0 + $0x48] sm:$0xff]
  %v26 = vld [vmem:[%s0 + $0x50] sm:$0xff]
  %v27 = vld [vmem:[%s0 + $0x58] sm:$0xff]
  %v28 = vld [vmem:[%s0 + $0x60] sm:$0xff]
  %v29 = vld [vmem:[%s0 + $0x68] sm:$0xf]
  %v30 = vld [vmem:[%s0 + $0x6c] sm:$0xff]
  %v31 = vld [vmem:[%s0 + $0x74] sm:$0xff]
  %v32 = vld [vmem:[%s0 + $0x7c] sm:$0xff]
  %v33 = vld [vmem:[%s0 + $0x84] sm:$0xff]
  %v34 = vld [vmem:[%s0 + $0x8c] sm:$0xf]
  %v35 = vld [vmem:[%s0 + $0x90] sm:$0xff]
  %v36 = vld [vmem:[%s0 + $0x98] sm:$0xff]
  %v37 = vld [vmem:[%s0 + $0xa0] sm:$0xff]
  %v38 = vld [vmem:[%s0 + $0xa8] sm:$0xff]
  %v39 = vld [vmem:[%s0 + $0xb0] sm:$0xf]
  %v40 = vld [vmem:[%s0 + $0xb4] sm:$0xff]
  %v41 = vld [vmem:[%s0 + $0xbc] sm:$0xff]
  %v42 = vld [vmem:[%s0 + $0xc4] sm:$0xff]
  %v43 = vld [vmem:[%s0 + $0xcc] sm:$0xff]
  %v44 = vld [vmem:[%s0 + $0xd4] sm:$0xf]
  %v45 = vld [vmem:[%s0 + $0xd8] sm:$0xff]
  %v46 = vld [vmem:[%s0 + $0xe0] sm:$0xff]
  %v47 = vld [vmem:[%s0 + $0xe8] sm:$0xff]
  %v48 = vld [vmem:[%s0 + $0xf0] sm:$0xff]
  %v49 = vld [vmem:[%s0 + $0xf8] sm:$0xf]
  %v50 = vld [vmem:[%s0 + $0xfc] sm:$0xff]
  %v51 = vld [vmem:[%s0 + $0x104] sm:$0xff]
  %v52 = vld [vmem:[%s0 + $0x10c] sm:$0xff]
  %v53 = vld [vmem:[%s0 + $0x114] sm:$0xff]
  %v54 = vld [vmem:[%s0 + $0x11c] sm:$0xf]
  %v55 = vld [vmem:[%s0 + $0x120] sm:$0xff]
  %v56 = vld [vmem:[%s0 + $0x128] sm:$0xff]
  %v57 = vld [vmem:[%s0 + $0x130] sm:$0xff]
  %v58 = vld [vmem:[%s0 + $0x138] sm:$0xff]
  %v59 = vld [vmem:[%s0 + $0x140] sm:$0xf]
  %v60 = vld [vmem:[%s0 + $0x144] sm:$0xff]
  %v61 = vld [vmem:[%s0 + $0x14c] sm:$0xff]
  %v62 = vld [vmem:[%s0 + $0x154] sm:$0xff]
  %v63 = vld [vmem:[%s0 + $0x15c] sm:$0xff]
  %v64 = vld [vmem:[%s0 + $0x164] sm:$0xf]
  %v65 = vld [vmem:[%s0 + $0x168] sm:$0xff]
  %v66 = vld [vmem:[%s0 + $0x170] sm:$0xff]
  %v67 = vld [vmem:[%s0 + $0x178] sm:$0xff]
  %v68 = vld [vmem:[%s0 + $0x180] sm:$0xff]
  %v69 = vld [vmem:[%s0 + $0x188] sm:$0xf]
  %v70 = vld [vmem:[%s0 + $0x18c] sm:$0xff]
  %v71 = vld [vmem:[%s0 + $0x194] sm:$0xff]
  %v72 = vld [vmem:[%s0 + $0x19c] sm:$0xff]
  %v73 = vld [vmem:[%s0 + $0x1a4] sm:$0xff]
  %v74 = vld [vmem:[%s0 + $0x1ac] sm:$0xf]
  %v75 = vld [vmem:[%s0 + $0x1b0] sm:$0xff]
  %v76 = vld [vmem:[%s0 + $0x1b8] sm:$0xff]
  %v77 = vld [vmem:[%s0 + $0x1c0] sm:$0xff]
  %v78 = vld [vmem:[%s0 + $0x1c8] sm:$0xff]
  %v79 = vld [vmem:[%s0 + $0x1d0] sm:$0xf]
  %v80 = vld [vmem:[%s0 + $0x1d4] sm:$0xff]
  %v81 = vld [vmem:[%s0 + $0x1dc] sm:$0xff]
  %v82 = vld [vmem:[%s0 + $0x1e4] sm:$0xff]
  %v83 = vld [vmem:[%s0 + $0x1ec] sm:$0xff]
  %v84 = vld [vmem:[%s0 + $0x1f4] sm:$0xf]
  %v85 = vld [vmem:[%s0 + $0x1f8] sm:$0xff]
  %v86 = vld [vmem:[%s0 + $0x200] sm:$0xff]
  %v87 = vld [vmem:[%s0 + $0x208] sm:$0xff]
  %v88 = vld [vmem:[%s0 + $0x210] sm:$0xff]
  %v89 = vld [vmem:[%s0 + $0x218] sm:$0xf]
  %v90 = vld [vmem:[%s0 + $0x21c] sm:$0xff]
  %v91 = vld [vmem:[%s0 + $0x224] sm:$0xff]
  %v92 = vld [vmem:[%s0 + $0x22c] sm:$0xff]
  %v93 = vld [vmem:[%s0 + $0x234] sm:$0xff]
  %v94 = vld [vmem:[%s0 + $0x23c] sm:$0xf]
  %v95 = vld [vmem:[%s1] sm:$0xf]
  %v96 = vld [vmem:[%s1 + $0x4] sm:$0xf]
  %v97 = vld [vmem:[%s1 + $0x8] sm:$0xf]
  %v98 = vld [vmem:[%s1 + $0xc] sm:$0xf]
  %v99 = vld [vmem:[%s1 + $0x10] sm:$0xf]
  %v100 = vld [vmem:[%s1 + $0x14] sm:$0xf]
  %v101 = vld [vmem:[%s1 + $0x18] sm:$0xf]
  %v102 = vld [vmem:[%s1 + $0x1c] sm:$0xf]
  %v103 = vld [vmem:[%s1 + $0x20] sm:$0xf]
  %v104 = vld [vmem:[%s1 + $0x24] sm:$0xf]
  %v105 = vld [vmem:[%s1 + $0x28] sm:$0xf]
  %v106 = vld [vmem:[%s1 + $0x2c] sm:$0xf]
  %v107 = vld [vmem:[%s1 + $0x30] sm:$0xf]
  %v108 = vld [vmem:[%s1 + $0x34] sm:$0xf]
  %v109 = vld [vmem:[%s1 + $0x38] sm:$0xf]
  %v110 = vld [vmem:[%s1 + $0x3c] sm:$0xf]
  %v111 = vld [vmem:[%s1 + $0x40] sm:$0xf]
  %v112 = vld [vmem:[%s1 + $0x44] sm:$0xf]
  %v113 = vld [vmem:[%s1 + $0x48] sm:$0xf]
  %v114 = vld [vmem:[%s1 + $0x4c] sm:$0xf]
  %v115 = vld [vmem:[%s1 + $0x50] sm:$0xf]
  %v116 = vld [vmem:[%s1 + $0x54] sm:$0xf]
  %v117 = vld [vmem:[%s1 + $0x58] sm:$0xf]
  %v118 = vld [vmem:[%s1 + $0x5c] sm:$0xf]
  %v119 = vld [vmem:[%s1 + $0x60] sm:$0xf]
  %v120 = vld [vmem:[%s1 + $0x64] sm:$0xf]
  %v121 = vld [vmem:[%s1 + $0x68] sm:$0xf]
  %v122 = vld [vmem:[%s1 + $0x6c] sm:$0xf]
  %v123 = vld [vmem:[%s1 + $0x70] sm:$0xf]
  %v124 = vld [vmem:[%s1 + $0x74] sm:$0xf]
  %v125 = vld [vmem:[%s1 + $0x78] sm:$0xf]
  %v126 = vld [vmem:[%s1 + $0x7c] sm:$0xf]
  %v127 = vld [vmem:[%s1 + $0x80] sm:$0xf]
  %v128 = vld [vmem:[%s1 + $0x84] sm:$0xf]
  %v129 = vld [vmem:[%s1 + $0x88] sm:$0xf]
  %v130 = vld [vmem:[%s1 + $0x8c] sm:$0xf]
  %v131 = vld [vmem:[%s1 + $0x90] sm:$0xf]
  %v132 = vld [vmem:[%s1 + $0x94] sm:$0xf]
  %v133 = vld [vmem:[%s1 + $0x98] sm:$0xf]
  %v134 = vld [vmem:[%s1 + $0x9c] sm:$0xf]
  %v135 = vld [vmem:[%s1 + $0xa0] sm:$0xf]
  %v136 = vld [vmem:[%s1 + $0xa4] sm:$0xf]
  %v137 = vld [vmem:[%s1 + $0xa8] sm:$0xf]
  %v138 = vld [vmem:[%s1 + $0xac] sm:$0xf]
  %v139 = vld [vmem:[%s1 + $0xb0] sm:$0xf]
  %v140 = vld [vmem:[%s1 + $0xb4] sm:$0xf]
  %v141 = vld [vmem:[%s1 + $0xb8] sm:$0xf]
  %v142 = vld [vmem:[%s1 + $0xbc] sm:$0xf]
  %v143 = vld [vmem:[%s1 + $0xc0] sm:$0xf]
  %v144 = vld [vmem:[%s1 + $0xc4] sm:$0xf]
  %v145 = vld [vmem:[%s1 + $0xc8] sm:$0xf]
  %v146 = vld [vmem:[%s1 + $0xcc] sm:$0xf]
  %v147 = vld [vmem:[%s1 + $0xd0] sm:$0xf]
  %v148 = vld [vmem:[%s1 + $0xd4] sm:$0xf]
  %v149 = vld [vmem:[%s1 + $0xd8] sm:$0xf]
  %v150 = vld [vmem:[%s1 + $0xdc] sm:$0xf]
  %v151 = vld [vmem:[%s1 + $0xe0] sm:$0xf]
  %v152 = vld [vmem:[%s1 + $0xe4] sm:$0xf]
  %v153 = vld [vmem:[%s1 + $0xe8] sm:$0xf]
  %v154 = vld [vmem:[%s1 + $0xec] sm:$0xf]
  %v155 = vld [vmem:[%s1 + $0xf0] sm:$0xf]
  %v156 = vld [vmem:[%s1 + $0xf4] sm:$0xf]
  %v157 = vld [vmem:[%s1 + $0xf8] sm:$0xf]
  %v158 = vld [vmem:[%s1 + $0xfc] sm:$0xf]
  %v159 = vld [vmem:[%s1 + $0x100] sm:$0xf]
  %v160 = vld [vmem:[%s1 + $0x104] sm:$0xf]
  %v161 = vld [vmem:[%s1 + $0x108] sm:$0xf]
  %v162 = vld [vmem:[%s1 + $0x10c] sm:$0xf]
  %v163 = vld [vmem:[%s1 + $0x110] sm:$0xf]
  %v164 = vld [vmem:[%s1 + $0x114] sm:$0xf]
  %v165 = vld [vmem:[%s1 + $0x118] sm:$0xf]
  %v166 = vld [vmem:[%s1 + $0x11c] sm:$0xf]
  %v167 = vld [vmem:[%s1 + $0x120] sm:$0xf]
  %v168 = vld [vmem:[%s1 + $0x124] sm:$0xf]
  %v169 = vld [vmem:[%s1 + $0x128] sm:$0xf]
  %v170 = vld [vmem:[%s1 + $0x12c] sm:$0xf]
  %v171 = vld [vmem:[%s1 + $0x130] sm:$0xf]
  %v172 = vld [vmem:[%s1 + $0x134] sm:$0xf]
  %v173 = vld [vmem:[%s1 + $0x138] sm:$0xf]
  %v174 = vld [vmem:[%s1 + $0x13c] sm:$0xf]
  %v175 = vld [vmem:[%s1 + $0x140] sm:$0xf]
  %v176 = vld [vmem:[%s1 + $0x144] sm:$0xf]
  %v177 = vld [vmem:[%s1 + $0x148] sm:$0xf]
  %v178 = vld [vmem:[%s1 + $0x14c] sm:$0xf]
  %v179 = vld [vmem:[%s1 + $0x150] sm:$0xf]
  %v180 = vld [vmem:[%s1 + $0x154] sm:$0xf]
  %v181 = vld [vmem:[%s1 + $0x158] sm:$0xf]
  %v182 = vld [vmem:[%s1 + $0x15c] sm:$0xf]
  %v183 = vld [vmem:[%s1 + $0x160] sm:$0xf]
  %v184 = vld [vmem:[%s1 + $0x164] sm:$0xf]
  %v185 = vld [vmem:[%s1 + $0x168] sm:$0xf]
  %v186 = vld [vmem:[%s1 + $0x16c] sm:$0xf]
  %v187 = vld [vmem:[%s1 + $0x170] sm:$0xf]
  %v188 = vld [vmem:[%s1 + $0x174] sm:$0xf]
  %v189 = vld [vmem:[%s1 + $0x178] sm:$0xf]
  %v190 = vld [vmem:[%s1 + $0x17c] sm:$0xf]
  %v191 = vld [vmem:[%s1 + $0x180] sm:$0xf]
  %v192 = vld [vmem:[%s1 + $0x184] sm:$0xf]
  %v193 = vld [vmem:[%s1 + $0x188] sm:$0xf]
  %v194 = vld [vmem:[%s1 + $0x18c] sm:$0xf]
  %v195 = vld [vmem:[%s1 + $0x190] sm:$0xf]
  %v196 = vld [vmem:[%s1 + $0x194] sm:$0xf]
  %v197 = vld [vmem:[%s1 + $0x198] sm:$0xf]
  %v198 = vld [vmem:[%s1 + $0x19c] sm:$0xf]
  %v199 = vld [vmem:[%s1 + $0x1a0] sm:$0xf]
  %v200 = vld [vmem:[%s1 + $0x1a4] sm:$0xf]
  %v201 = vld [vmem:[%s1 + $0x1a8] sm:$0xf]
  %v202 = vld [vmem:[%s1 + $0x1ac] sm:$0xf]
  %v203 = vld [vmem:[%s1 + $0x1b0] sm:$0xf]
  %v204 = vld [vmem:[%s1 + $0x1b4] sm:$0xf]
  %v205 = vld [vmem:[%s1 + $0x1b8] sm:$0xf]
  %v206 = vld [vmem:[%s1 + $0x1bc] sm:$0xf]
  %v207 = vld [vmem:[%s1 + $0x1c0] sm:$0xf]
  %v208 = vld [vmem:[%s1 + $0x1c4] sm:$0xf]
  %v209 = vld [vmem:[%s1 + $0x1c8] sm:$0xf]
  %v210 = vld [vmem:[%s1 + $0x1cc] sm:$0xf]
  %v211 = vld [vmem:[%s1 + $0x1d0] sm:$0xf]
  %v212 = vld [vmem:[%s1 + $0x1d4] sm:$0xf]
  %v213 = vld [vmem:[%s1 + $0x1d8] sm:$0xf]
  %v214 = vld [vmem:[%s1 + $0x1dc] sm:$0xf]
  %v215 = vld [vmem:[%s1 + $0x1e0] sm:$0xf]
  %v216 = vld [vmem:[%s1 + $0x1e4] sm:$0xf]
  %v217 = vld [vmem:[%s1 + $0x1e8] sm:$0xf]
  %v218 = vld [vmem:[%s1 + $0x1ec] sm:$0xf]
  %v219 = vld [vmem:[%s1 + $0x1f0] sm:$0xf]
  %v220 = vld [vmem:[%s1 + $0x1f4] sm:$0xf]
  %v221 = vld [vmem:[%s1 + $0x1f8] sm:$0xf]
  %v222 = vld [vmem:[%s1 + $0x1fc] sm:$0xf]
  %v223 = vld [vmem:[%s1 + $0x200] sm:$0xf]
  %v224 = vld [vmem:[%s1 + $0x204] sm:$0xf]
  %v225 = vld [vmem:[%s1 + $0x208] sm:$0xf]
  %v226 = vld [vmem:[%s1 + $0x20c] sm:$0xf]
  %v227 = vld [vmem:[%s1 + $0x210] sm:$0xf]
  %v228 = vld [vmem:[%s1 + $0x214] sm:$0xf]
  %v229 = vld [vmem:[%s1 + $0x218] sm:$0xf]
  %v230 = vld [vmem:[%s1 + $0x21c] sm:$0xf]
  %v231 = vld [vmem:[%s1 + $0x220] sm:$0xf]
  %v232 = vld [vmem:[%s1 + $0x224] sm:$0xf]
  %v233 = vld [vmem:[%s1 + $0x228] sm:$0xf]
  %v234 = vld [vmem:[%s1 + $0x22c] sm:$0xf]
  %v235 = vld [vmem:[%s1 + $0x230] sm:$0xf]
  %v236 = vld [vmem:[%s1 + $0x234] sm:$0xf]
  %v237 = vld [vmem:[%s1 + $0x238] sm:$0xf]
  %v238 = vld [vmem:[%s1 + $0x23c] sm:$0xf]
  %v239 = vld [vmem:[%s2] sm:$0x1]
  %v241 = vlaneseq
  %v242 = vshrl.u32 %v241, 7
  %v243 = vsub.s32 0, %v242
  %v244 = vrot.slane %v239, %v243
  %v326 = vunpack.c.l.b16 %v15
  %v327 = vunpack.c.h.b16 %v15
  %v328 = vunpack.c.l.b16 %v16
  %v329 = vunpack.c.h.b16 %v16
  %v330 = vunpack.c.l.b16 %v17
  %v331 = vunpack.c.h.b16 %v17
  %v332 = vunpack.c.l.b16 %v18
  %v333 = vunpack.c.h.b16 %v18
  %v334 = vunpack.c.l.b16 %v19
  %v335 = vunpack.c.l.b16 %v20
  %v336 = vunpack.c.h.b16 %v20
  %v337 = vunpack.c.l.b16 %v21
  %v338 = vunpack.c.h.b16 %v21
  %v339 = vunpack.c.l.b16 %v22
  %v340 = vunpack.c.h.b16 %v22
  %v341 = vunpack.c.l.b16 %v23
  %v342 = vunpack.c.h.b16 %v23
  %v343 = vunpack.c.l.b16 %v24
  %v344 = vunpack.c.l.b16 %v25
  %v345 = vunpack.c.h.b16 %v25
  %v346 = vunpack.c.l.b16 %v26
  %v347 = vunpack.c.h.b16 %v26
  %v348 = vunpack.c.l.b16 %v27
  %v349 = vunpack.c.h.b16 %v27
  %v350 = vunpack.c.l.b16 %v28
  %v351 = vunpack.c.h.b16 %v28
  %v352 = vunpack.c.l.b16 %v29
  %v353 = vunpack.c.l.b16 %v30
  %v354 = vunpack.c.h.b16 %v30
  %v355 = vunpack.c.l.b16 %v31
  %v356 = vunpack.c.h.b16 %v31
  %v357 = vunpack.c.l.b16 %v32
  %v358 = vunpack.c.h.b16 %v32
  %v359 = vunpack.c.l.b16 %v33
  %v360 = vunpack.c.h.b16 %v33
  %v361 = vunpack.c.l.b16 %v34
  %v362 = vunpack.c.l.b16 %v35
  %v363 = vunpack.c.h.b16 %v35
  %v364 = vunpack.c.l.b16 %v36
  %v365 = vunpack.c.h.b16 %v36
  %v366 = vunpack.c.l.b16 %v37
  %v367 = vunpack.c.h.b16 %v37
  %v368 = vunpack.c.l.b16 %v38
  %v369 = vunpack.c.h.b16 %v38
  %v370 = vunpack.c.l.b16 %v39
  %v371 = vunpack.c.l.b16 %v40
  %v372 = vunpack.c.h.b16 %v40
  %v373 = vunpack.c.l.b16 %v41
  %v374 = vunpack.c.h.b16 %v41
  %v375 = vunpack.c.l.b16 %v42
  %v376 = vunpack.c.h.b16 %v42
  %v377 = vunpack.c.l.b16 %v43
  %v378 = vunpack.c.h.b16 %v43
  %v379 = vunpack.c.l.b16 %v44
  %v380 = vunpack.c.l.b16 %v45
  %v381 = vunpack.c.h.b16 %v45
  %v382 = vunpack.c.l.b16 %v46
  %v383 = vunpack.c.h.b16 %v46
  %v384 = vunpack.c.l.b16 %v47
  %v385 = vunpack.c.h.b16 %v47
  %v386 = vunpack.c.l.b16 %v48
  %v387 = vunpack.c.h.b16 %v48
  %v388 = vunpack.c.l.b16 %v49
  %v389 = vunpack.c.l.b16 %v50
  %v390 = vunpack.c.h.b16 %v50
  %v391 = vunpack.c.l.b16 %v51
  %v392 = vunpack.c.h.b16 %v51
  %v393 = vunpack.c.l.b16 %v52
  %v394 = vunpack.c.h.b16 %v52
  %v395 = vunpack.c.l.b16 %v53
  %v396 = vunpack.c.h.b16 %v53
  %v397 = vunpack.c.l.b16 %v54
  %v398 = vunpack.c.l.b16 %v55
  %v399 = vunpack.c.h.b16 %v55
  %v400 = vunpack.c.l.b16 %v56
  %v401 = vunpack.c.h.b16 %v56
  %v402 = vunpack.c.l.b16 %v57
  %v403 = vunpack.c.h.b16 %v57
  %v404 = vunpack.c.l.b16 %v58
  %v405 = vunpack.c.h.b16 %v58
  %v406 = vunpack.c.l.b16 %v59
  %v407 = vunpack.c.l.b16 %v60
  %v408 = vunpack.c.h.b16 %v60
  %v409 = vunpack.c.l.b16 %v61
  %v410 = vunpack.c.h.b16 %v61
  %v411 = vunpack.c.l.b16 %v62
  %v412 = vunpack.c.h.b16 %v62
  %v413 = vunpack.c.l.b16 %v63
  %v414 = vunpack.c.h.b16 %v63
  %v415 = vunpack.c.l.b16 %v64
  %v416 = vunpack.c.l.b16 %v65
  %v417 = vunpack.c.h.b16 %v65
  %v418 = vunpack.c.l.b16 %v66
  %v419 = vunpack.c.h.b16 %v66
  %v420 = vunpack.c.l.b16 %v67
  %v421 = vunpack.c.h.b16 %v67
  %v422 = vunpack.c.l.b16 %v68
  %v423 = vunpack.c.h.b16 %v68
  %v424 = vunpack.c.l.b16 %v69
  %v425 = vunpack.c.l.b16 %v70
  %v426 = vunpack.c.h.b16 %v70
  %v427 = vunpack.c.l.b16 %v71
  %v428 = vunpack.c.h.b16 %v71
  %v429 = vunpack.c.l.b16 %v72
  %v430 = vunpack.c.h.b16 %v72
  %v431 = vunpack.c.l.b16 %v73
  %v432 = vunpack.c.h.b16 %v73
  %v433 = vunpack.c.l.b16 %v74
  %v434 = vunpack.c.l.b16 %v75
  %v435 = vunpack.c.h.b16 %v75
  %v436 = vunpack.c.l.b16 %v76
  %v437 = vunpack.c.h.b16 %v76
  %v438 = vunpack.c.l.b16 %v77
  %v439 = vunpack.c.h.b16 %v77
  %v440 = vunpack.c.l.b16 %v78
  %v441 = vunpack.c.h.b16 %v78
  %v442 = vunpack.c.l.b16 %v79
  %v443 = vunpack.c.l.b16 %v80
  %v444 = vunpack.c.h.b16 %v80
  %v445 = vunpack.c.l.b16 %v81
  %v446 = vunpack.c.h.b16 %v81
  %v447 = vunpack.c.l.b16 %v82
  %v448 = vunpack.c.h.b16 %v82
  %v449 = vunpack.c.l.b16 %v83
  %v450 = vunpack.c.h.b16 %v83
  %v451 = vunpack.c.l.b16 %v84
  %v452 = vunpack.c.l.b16 %v85
  %v453 = vunpack.c.h.b16 %v85
  %v454 = vunpack.c.l.b16 %v86
  %v455 = vunpack.c.h.b16 %v86
  %v456 = vunpack.c.l.b16 %v87
  %v457 = vunpack.c.h.b16 %v87
  %v458 = vunpack.c.l.b16 %v88
  %v459 = vunpack.c.h.b16 %v88
  %v460 = vunpack.c.l.b16 %v89
  %v461 = vunpack.c.l.b16 %v90
  %v462 = vunpack.c.h.b16 %v90
  %v463 = vunpack.c.l.b16 %v91
  %v464 = vunpack.c.h.b16 %v91
  %v465 = vunpack.c.l.b16 %v92
  %v466 = vunpack.c.h.b16 %v92
  %v467 = vunpack.c.l.b16 %v93
  %v468 = vunpack.c.h.b16 %v93
  %v469 = vunpack.c.l.b16 %v94
  %v470 = vpack.c.b16 %v335, %v326
  %v471 = vpack.c.b16 %v336, %v327
  %v472 = vpack.c.b16 %v337, %v328
  %v473 = vpack.c.b16 %v338, %v329
  %v474 = vpack.c.b16 %v339, %v330
  %v475 = vpack.c.b16 %v340, %v331
  %v476 = vpack.c.b16 %v341, %v332
  %v477 = vpack.c.b16 %v342, %v333
  %v478 = vpack.c.b16 %v343, %v334
  %v479 = vpack.c.b16 %v353, %v344
  %v480 = vpack.c.b16 %v354, %v345
  %v481 = vpack.c.b16 %v355, %v346
  %v482 = vpack.c.b16 %v356, %v347
  %v483 = vpack.c.b16 %v357, %v348
  %v484 = vpack.c.b16 %v358, %v349
  %v485 = vpack.c.b16 %v359, %v350
  %v486 = vpack.c.b16 %v360, %v351
  %v487 = vpack.c.b16 %v361, %v352
  %v488 = vpack.c.b16 %v371, %v362
  %v489 = vpack.c.b16 %v372, %v363
  %v490 = vpack.c.b16 %v373, %v364
  %v491 = vpack.c.b16 %v374, %v365
  %v492 = vpack.c.b16 %v375, %v366
  %v493 = vpack.c.b16 %v376, %v367
  %v494 = vpack.c.b16 %v377, %v368
  %v495 = vpack.c.b16 %v378, %v369
  %v496 = vpack.c.b16 %v379, %v370
  %v497 = vpack.c.b16 %v389, %v380
  %v498 = vpack.c.b16 %v390, %v381
  %v499 = vpack.c.b16 %v391, %v382
  %v500 = vpack.c.b16 %v392, %v383
  %v501 = vpack.c.b16 %v393, %v384
  %v502 = vpack.c.b16 %v394, %v385
  %v503 = vpack.c.b16 %v395, %v386
  %v504 = vpack.c.b16 %v396, %v387
  %v505 = vpack.c.b16 %v397, %v388
  %v506 = vpack.c.b16 %v407, %v398
  %v507 = vpack.c.b16 %v408, %v399
  %v508 = vpack.c.b16 %v409, %v400
  %v509 = vpack.c.b16 %v410, %v401
  %v510 = vpack.c.b16 %v411, %v402
  %v511 = vpack.c.b16 %v412, %v403
  %v512 = vpack.c.b16 %v413, %v404
  %v513 = vpack.c.b16 %v414, %v405
  %v514 = vpack.c.b16 %v415, %v406
  %v515 = vpack.c.b16 %v425, %v416
  %v516 = vpack.c.b16 %v426, %v417
  %v517 = vpack.c.b16 %v427, %v418
  %v518 = vpack.c.b16 %v428, %v419
  %v519 = vpack.c.b16 %v429, %v420
  %v520 = vpack.c.b16 %v430, %v421
  %v521 = vpack.c.b16 %v431, %v422
  %v522 = vpack.c.b16 %v432, %v423
  %v523 = vpack.c.b16 %v433, %v424
  %v524 = vpack.c.b16 %v443, %v434
  %v525 = vpack.c.b16 %v444, %v435
  %v526 = vpack.c.b16 %v445, %v436
  %v527 = vpack.c.b16 %v446, %v437
  %v528 = vpack.c.b16 %v447, %v438
  %v529 = vpack.c.b16 %v448, %v439
  %v530 = vpack.c.b16 %v449, %v440
  %v531 = vpack.c.b16 %v450, %v441
  %v532 = vpack.c.b16 %v451, %v442
  %v533 = vpack.c.b16 %v461, %v452
  %v534 = vpack.c.b16 %v462, %v453
  %v535 = vpack.c.b16 %v463, %v454
  %v536 = vpack.c.b16 %v464, %v455
  %v537 = vpack.c.b16 %v465, %v456
  %v538 = vpack.c.b16 %v466, %v457
  %v539 = vpack.c.b16 %v467, %v458
  %v540 = vpack.c.b16 %v468, %v459
  %v541 = vpack.c.b16 %v469, %v460
  %v758 = vunpack.c.l.b16 %v95
  %v759 = vunpack.c.l.b16 %v96
  %v760 = vunpack.c.l.b16 %v97
  %v761 = vunpack.c.l.b16 %v98
  %v762 = vunpack.c.l.b16 %v99
  %v763 = vunpack.c.l.b16 %v100
  %v764 = vunpack.c.l.b16 %v101
  %v765 = vunpack.c.l.b16 %v102
  %v766 = vunpack.c.l.b16 %v103
  %v767 = vunpack.c.l.b16 %v104
  %v768 = vunpack.c.l.b16 %v105
  %v769 = vunpack.c.l.b16 %v106
  %v770 = vunpack.c.l.b16 %v107
  %v771 = vunpack.c.l.b16 %v108
  %v772 = vunpack.c.l.b16 %v109
  %v773 = vunpack.c.l.b16 %v110
  %v774 = vunpack.c.l.b16 %v111
  %v775 = vunpack.c.l.b16 %v112
  %v776 = vunpack.c.l.b16 %v113
  %v777 = vunpack.c.l.b16 %v114
  %v778 = vunpack.c.l.b16 %v115
  %v779 = vunpack.c.l.b16 %v116
  %v780 = vunpack.c.l.b16 %v117
  %v781 = vunpack.c.l.b16 %v118
  %v782 = vunpack.c.l.b16 %v119
  %v783 = vunpack.c.l.b16 %v120
  %v784 = vunpack.c.l.b16 %v121
  %v785 = vunpack.c.l.b16 %v122
  %v786 = vunpack.c.l.b16 %v123
  %v787 = vunpack.c.l.b16 %v124
  %v788 = vunpack.c.l.b16 %v125
  %v789 = vunpack.c.l.b16 %v126
  %v790 = vunpack.c.l.b16 %v127
  %v791 = vunpack.c.l.b16 %v128
  %v792 = vunpack.c.l.b16 %v129
  %v793 = vunpack.c.l.b16 %v130
  %v794 = vunpack.c.l.b16 %v131
  %v795 = vunpack.c.l.b16 %v132
  %v796 = vunpack.c.l.b16 %v133
  %v797 = vunpack.c.l.b16 %v134
  %v798 = vunpack.c.l.b16 %v135
  %v799 = vunpack.c.l.b16 %v136
  %v800 = vunpack.c.l.b16 %v137
  %v801 = vunpack.c.l.b16 %v138
  %v802 = vunpack.c.l.b16 %v139
  %v803 = vunpack.c.l.b16 %v140
  %v804 = vunpack.c.l.b16 %v141
  %v805 = vunpack.c.l.b16 %v142
  %v806 = vunpack.c.l.b16 %v143
  %v807 = vunpack.c.l.b16 %v144
  %v808 = vunpack.c.l.b16 %v145
  %v809 = vunpack.c.l.b16 %v146
  %v810 = vunpack.c.l.b16 %v147
  %v811 = vunpack.c.l.b16 %v148
  %v812 = vunpack.c.l.b16 %v149
  %v813 = vunpack.c.l.b16 %v150
  %v814 = vunpack.c.l.b16 %v151
  %v815 = vunpack.c.l.b16 %v152
  %v816 = vunpack.c.l.b16 %v153
  %v817 = vunpack.c.l.b16 %v154
  %v818 = vunpack.c.l.b16 %v155
  %v819 = vunpack.c.l.b16 %v156
  %v820 = vunpack.c.l.b16 %v157
  %v821 = vunpack.c.l.b16 %v158
  %v822 = vunpack.c.l.b16 %v159
  %v823 = vunpack.c.l.b16 %v160
  %v824 = vunpack.c.l.b16 %v161
  %v825 = vunpack.c.l.b16 %v162
  %v826 = vunpack.c.l.b16 %v163
  %v827 = vunpack.c.l.b16 %v164
  %v828 = vunpack.c.l.b16 %v165
  %v829 = vunpack.c.l.b16 %v166
  %v830 = vunpack.c.l.b16 %v167
  %v831 = vunpack.c.l.b16 %v168
  %v832 = vunpack.c.l.b16 %v169
  %v833 = vunpack.c.l.b16 %v170
  %v834 = vunpack.c.l.b16 %v171
  %v835 = vunpack.c.l.b16 %v172
  %v836 = vunpack.c.l.b16 %v173
  %v837 = vunpack.c.l.b16 %v174
  %v838 = vunpack.c.l.b16 %v175
  %v839 = vunpack.c.l.b16 %v176
  %v840 = vunpack.c.l.b16 %v177
  %v841 = vunpack.c.l.b16 %v178
  %v842 = vunpack.c.l.b16 %v179
  %v843 = vunpack.c.l.b16 %v180
  %v844 = vunpack.c.l.b16 %v181
  %v845 = vunpack.c.l.b16 %v182
  %v846 = vunpack.c.l.b16 %v183
  %v847 = vunpack.c.l.b16 %v184
  %v848 = vunpack.c.l.b16 %v185
  %v849 = vunpack.c.l.b16 %v186
  %v850 = vunpack.c.l.b16 %v187
  %v851 = vunpack.c.l.b16 %v188
  %v852 = vunpack.c.l.b16 %v189
  %v853 = vunpack.c.l.b16 %v190
  %v854 = vunpack.c.l.b16 %v191
  %v855 = vunpack.c.l.b16 %v192
  %v856 = vunpack.c.l.b16 %v193
  %v857 = vunpack.c.l.b16 %v194
  %v858 = vunpack.c.l.b16 %v195
  %v859 = vunpack.c.l.b16 %v196
  %v860 = vunpack.c.l.b16 %v197
  %v861 = vunpack.c.l.b16 %v198
  %v862 = vunpack.c.l.b16 %v199
  %v863 = vunpack.c.l.b16 %v200
  %v864 = vunpack.c.l.b16 %v201
  %v865 = vunpack.c.l.b16 %v202
  %v866 = vunpack.c.l.b16 %v203
  %v867 = vunpack.c.l.b16 %v204
  %v868 = vunpack.c.l.b16 %v205
  %v869 = vunpack.c.l.b16 %v206
  %v870 = vunpack.c.l.b16 %v207
  %v871 = vunpack.c.l.b16 %v208
  %v872 = vunpack.c.l.b16 %v209
  %v873 = vunpack.c.l.b16 %v210
  %v874 = vunpack.c.l.b16 %v211
  %v875 = vunpack.c.l.b16 %v212
  %v876 = vunpack.c.l.b16 %v213
  %v877 = vunpack.c.l.b16 %v214
  %v878 = vunpack.c.l.b16 %v215
  %v879 = vunpack.c.l.b16 %v216
  %v880 = vunpack.c.l.b16 %v217
  %v881 = vunpack.c.l.b16 %v218
  %v882 = vunpack.c.l.b16 %v219
  %v883 = vunpack.c.l.b16 %v220
  %v884 = vunpack.c.l.b16 %v221
  %v885 = vunpack.c.l.b16 %v222
  %v886 = vunpack.c.l.b16 %v223
  %v887 = vunpack.c.l.b16 %v224
  %v888 = vunpack.c.l.b16 %v225
  %v889 = vunpack.c.l.b16 %v226
  %v890 = vunpack.c.l.b16 %v227
  %v891 = vunpack.c.l.b16 %v228
  %v892 = vunpack.c.l.b16 %v229
  %v893 = vunpack.c.l.b16 %v230
  %v894 = vunpack.c.l.b16 %v231
  %v895 = vunpack.c.l.b16 %v232
  %v896 = vunpack.c.l.b16 %v233
  %v897 = vunpack.c.l.b16 %v234
  %v898 = vunpack.c.l.b16 %v235
  %v899 = vunpack.c.l.b16 %v236
  %v900 = vunpack.c.l.b16 %v237
  %v901 = vunpack.c.l.b16 %v238
  %v902 = vpack.c.b16 %v759, %v758
  %v903 = vpack.c.b16 %v761, %v760
  %v904 = vpack.c.b16 %v763, %v762
  %v905 = vpack.c.b16 %v765, %v764
  %v906 = vpack.c.b16 %v767, %v766
  %v907 = vpack.c.b16 %v769, %v768
  %v908 = vpack.c.b16 %v771, %v770
  %v909 = vpack.c.b16 %v773, %v772
  %v910 = vpack.c.b16 %v775, %v774
  %v911 = vpack.c.b16 %v777, %v776
  %v912 = vpack.c.b16 %v779, %v778
  %v913 = vpack.c.b16 %v781, %v780
  %v914 = vpack.c.b16 %v783, %v782
  %v915 = vpack.c.b16 %v785, %v784
  %v916 = vpack.c.b16 %v787, %v786
  %v917 = vpack.c.b16 %v789, %v788
  %v918 = vpack.c.b16 %v791, %v790
  %v919 = vpack.c.b16 %v793, %v792
  %v920 = vpack.c.b16 %v795, %v794
  %v921 = vpack.c.b16 %v797, %v796
  %v922 = vpack.c.b16 %v799, %v798
  %v923 = vpack.c.b16 %v801, %v800
  %v924 = vpack.c.b16 %v803, %v802
  %v925 = vpack.c.b16 %v805, %v804
  %v926 = vpack.c.b16 %v807, %v806
  %v927 = vpack.c.b16 %v809, %v808
  %v928 = vpack.c.b16 %v811, %v810
  %v929 = vpack.c.b16 %v813, %v812
  %v930 = vpack.c.b16 %v815, %v814
  %v931 = vpack.c.b16 %v817, %v816
  %v932 = vpack.c.b16 %v819, %v818
  %v933 = vpack.c.b16 %v821, %v820
  %v934 = vpack.c.b16 %v823, %v822
  %v935 = vpack.c.b16 %v825, %v824
  %v936 = vpack.c.b16 %v827, %v826
  %v937 = vpack.c.b16 %v829, %v828
  %v938 = vpack.c.b16 %v831, %v830
  %v939 = vpack.c.b16 %v833, %v832
  %v940 = vpack.c.b16 %v835, %v834
  %v941 = vpack.c.b16 %v837, %v836
  %v942 = vpack.c.b16 %v839, %v838
  %v943 = vpack.c.b16 %v841, %v840
  %v944 = vpack.c.b16 %v843, %v842
  %v945 = vpack.c.b16 %v845, %v844
  %v946 = vpack.c.b16 %v847, %v846
  %v947 = vpack.c.b16 %v849, %v848
  %v948 = vpack.c.b16 %v851, %v850
  %v949 = vpack.c.b16 %v853, %v852
  %v950 = vpack.c.b16 %v855, %v854
  %v951 = vpack.c.b16 %v857, %v856
  %v952 = vpack.c.b16 %v859, %v858
  %v953 = vpack.c.b16 %v861, %v860
  %v954 = vpack.c.b16 %v863, %v862
  %v955 = vpack.c.b16 %v865, %v864
  %v956 = vpack.c.b16 %v867, %v866
  %v957 = vpack.c.b16 %v869, %v868
  %v958 = vpack.c.b16 %v871, %v870
  %v959 = vpack.c.b16 %v873, %v872
  %v960 = vpack.c.b16 %v875, %v874
  %v961 = vpack.c.b16 %v877, %v876
  %v962 = vpack.c.b16 %v879, %v878
  %v963 = vpack.c.b16 %v881, %v880
  %v964 = vpack.c.b16 %v883, %v882
  %v965 = vpack.c.b16 %v885, %v884
  %v966 = vpack.c.b16 %v887, %v886
  %v967 = vpack.c.b16 %v889, %v888
  %v968 = vpack.c.b16 %v891, %v890
  %v969 = vpack.c.b16 %v893, %v892
  %v970 = vpack.c.b16 %v895, %v894
  %v971 = vpack.c.b16 %v897, %v896
  %v972 = vpack.c.b16 %v899, %v898
  %v973 = vpack.c.b16 %v901, %v900
  %1046 = vmatprep.subr.bf16.mxu0 0
  %1047 = vmatpush1.bf16.msra.mxu0 %v909
  %1048 = vmatprep.subr.bf16.mxu0 0
  %1049 = vmatpush1.bf16.msra.mxu0 %v908
  %1050 = vmatprep.subr.bf16.mxu0 0
  %1051 = vmatpush1.bf16.msra.mxu0 %v907
  %1052 = vmatprep.subr.bf16.mxu0 0
  %1053 = vmatpush1.bf16.msra.mxu0 %v906
  %1054 = vmatprep.subr.bf16.mxu0 0
  %1055 = vmatpush1.bf16.msra.mxu0 %v905
  %1056 = vmatprep.subr.bf16.mxu0 0
  %1057 = vmatpush1.bf16.msra.mxu0 %v904
  %1058 = vmatprep.subr.bf16.mxu0 0
  %1059 = vmatpush1.bf16.msra.mxu0 %v903
  %1060 = vmatprep.subr.bf16.mxu0 0
  %1061 = vmatpush1.bf16.msra.mxu0 %v902
  %1062 = vmatprep.subr.bf16.mxu0 0
  %1063 = vmatpush2.bf16.msra.mxu0 %v917
  %1064 = vmatprep.subr.bf16.mxu0 0
  %1065 = vmatpush2.bf16.msra.mxu0 %v916
  %1066 = vmatprep.subr.bf16.mxu0 0
  %1067 = vmatpush2.bf16.msra.mxu0 %v915
  %1068 = vmatprep.subr.bf16.mxu0 0
  %1069 = vmatpush2.bf16.msra.mxu0 %v914
  %1070 = vmatprep.subr.bf16.mxu0 0
  %1071 = vmatpush2.bf16.msra.mxu0 %v913
  %1072 = vmatprep.subr.bf16.mxu0 0
  %1073 = vmatpush2.bf16.msra.mxu0 %v912
  %1074 = vmatprep.subr.bf16.mxu0 0
  %1075 = vmatpush2.bf16.msra.mxu0 %v911
  %1076 = vmatprep.subr.bf16.mxu0 0
  %1077 = vmatpush2.bf16.msra.mxu0 %v910
  %1078 = vmatprep.mubr.bf16.mxu0 %v471
  %1079 = vmatmul.mubr.bf16.gmra.mxu0 %v470
  %v1080 = vpop.f32.mrf.mxu0
  %v1081 = vadd.f32 %v244, %v1080
  %v1082 = vpop.f32.mrf.mxu0
  %v1083 = vpop.f32.mrf.mxu0
  %v1084 = vadd.f32 %v244, %v1083
  %v1085 = vpop.f32.mrf.mxu0
  %1086 = vmatprep.mubr.bf16.mxu0 %v480
  %1087 = vmatmul.mubr.bf16.gmra.mxu0 %v479
  %v1088 = vpop.f32.mrf.mxu0
  %v1089 = vadd.f32 %v244, %v1088
  %v1090 = vpop.f32.mrf.mxu0
  %v1091 = vpop.f32.mrf.mxu0
  %v1092 = vadd.f32 %v244, %v1091
  %v1093 = vpop.f32.mrf.mxu0
  %1094 = vmatprep.mubr.bf16.mxu0 %v489
  %1095 = vmatmul.mubr.bf16.gmra.mxu0 %v488
  %v1096 = vpop.f32.mrf.mxu0
  %v1097 = vadd.f32 %v244, %v1096
  %v1098 = vpop.f32.mrf.mxu0
  %v1099 = vpop.f32.mrf.mxu0
  %v1100 = vadd.f32 %v244, %v1099
  %v1101 = vpop.f32.mrf.mxu0
  %1102 = vmatprep.mubr.bf16.mxu0 %v498
  %1103 = vmatmul.mubr.bf16.gmra.mxu0 %v497
  %v1104 = vpop.f32.mrf.mxu0
  %v1105 = vadd.f32 %v244, %v1104
  %v1106 = vpop.f32.mrf.mxu0
  %v1107 = vpop.f32.mrf.mxu0
  %v1108 = vadd.f32 %v244, %v1107
  %v1109 = vpop.f32.mrf.mxu0
  %1110 = vmatprep.mubr.bf16.mxu0 %v507
  %1111 = vmatmul.mubr.bf16.gmra.mxu0 %v506
  %v1112 = vpop.f32.mrf.mxu0
  %v1113 = vadd.f32 %v244, %v1112
  %v1114 = vpop.f32.mrf.mxu0
  %v1115 = vpop.f32.mrf.mxu0
  %v1116 = vadd.f32 %v244, %v1115
  %v1117 = vpop.f32.mrf.mxu0
  %1118 = vmatprep.mubr.bf16.mxu0 %v516
  %1119 = vmatmul.mubr.bf16.gmra.mxu0 %v515
  %v1120 = vpop.f32.mrf.mxu0
  %v1121 = vadd.f32 %v244, %v1120
  %v1122 = vpop.f32.mrf.mxu0
  %v1123 = vpop.f32.mrf.mxu0
  %v1124 = vadd.f32 %v244, %v1123
  %v1125 = vpop.f32.mrf.mxu0
  %1126 = vmatprep.mubr.bf16.mxu0 %v525
  %1127 = vmatmul.mubr.bf16.gmra.mxu0 %v524
  %v1128 = vpop.f32.mrf.mxu0
  %v1129 = vadd.f32 %v244, %v1128
  %v1130 = vpop.f32.mrf.mxu0
  %v1131 = vpop.f32.mrf.mxu0
  %v1132 = vadd.f32 %v244, %v1131
  %v1133 = vpop.f32.mrf.mxu0
  %1134 = vmatprep.mubr.bf16.mxu0 %v534
  %1135 = vmatmul.mubr.bf16.gmra.mxu0 %v533
  %v1136 = vpop.f32.mrf.mxu0
  %v1137 = vadd.f32 %v244, %v1136
  %v1138 = vpop.f32.mrf.mxu0
  %v1139 = vpop.f32.mrf.mxu0
  %v1140 = vadd.f32 %v244, %v1139
  %v1141 = vpop.f32.mrf.mxu0
  %1142 = vdwg.mxu0
  %1143 = vmatprep.subr.bf16.mxu0 0
  %1144 = vmatpush1.bf16.msra.mxu0 %v925
  %1145 = vmatprep.subr.bf16.mxu0 0
  %1146 = vmatpush1.bf16.msra.mxu0 %v924
  %1147 = vmatprep.subr.bf16.mxu0 0
  %1148 = vmatpush1.bf16.msra.mxu0 %v923
  %1149 = vmatprep.subr.bf16.mxu0 0
  %1150 = vmatpush1.bf16.msra.mxu0 %v922
  %1151 = vmatprep.subr.bf16.mxu0 0
  %1152 = vmatpush1.bf16.msra.mxu0 %v921
  %1153 = vmatprep.subr.bf16.mxu0 0
  %1154 = vmatpush1.bf16.msra.mxu0 %v920
  %1155 = vmatprep.subr.bf16.mxu0 0
  %1156 = vmatpush1.bf16.msra.mxu0 %v919
  %1157 = vmatprep.subr.bf16.mxu0 0
  %1158 = vmatpush1.bf16.msra.mxu0 %v918
  %1159 = vmatprep.subr.bf16.mxu0 0
  %1160 = vmatpush2.bf16.msra.mxu0 %v933
  %1161 = vmatprep.subr.bf16.mxu0 0
  %1162 = vmatpush2.bf16.msra.mxu0 %v932
  %1163 = vmatprep.subr.bf16.mxu0 0
  %1164 = vmatpush2.bf16.msra.mxu0 %v931
  %1165 = vmatprep.subr.bf16.mxu0 0
  %1166 = vmatpush2.bf16.msra.mxu0 %v930
  %1167 = vmatprep.subr.bf16.mxu0 0
  %1168 = vmatpush2.bf16.msra.mxu0 %v929
  %1169 = vmatprep.subr.bf16.mxu0 0
  %1170 = vmatpush2.bf16.msra.mxu0 %v928
  %1171 = vmatprep.subr.bf16.mxu0 0
  %1172 = vmatpush2.bf16.msra.mxu0 %v927
  %1173 = vmatprep.subr.bf16.mxu0 0
  %1174 = vmatpush2.bf16.msra.mxu0 %v926
  %1175 = vmatprep.mubr.bf16.mxu0 %v473
  %1176 = vmatmul.mubr.bf16.gmra.mxu0 %v472
  %v1177 = vpop.f32.mrf.mxu0
  %v1178 = vadd.f32 %v1081, %v1177
  %v1179 = vpop.f32.mrf.mxu0
  %v1180 = vpop.f32.mrf.mxu0
  %v1181 = vadd.f32 %v1084, %v1180
  %v1182 = vpop.f32.mrf.mxu0
  %1183 = vmatprep.mubr.bf16.mxu0 %v482
  %1184 = vmatmul.mubr.bf16.gmra.mxu0 %v481
  %v1185 = vpop.f32.mrf.mxu0
  %v1186 = vadd.f32 %v1089, %v1185
  %v1187 = vpop.f32.mrf.mxu0
  %v1188 = vpop.f32.mrf.mxu0
  %v1189 = vadd.f32 %v1092, %v1188
  %v1190 = vpop.f32.mrf.mxu0
  %1191 = vmatprep.mubr.bf16.mxu0 %v491
  %1192 = vmatmul.mubr.bf16.gmra.mxu0 %v490
  %v1193 = vpop.f32.mrf.mxu0
  %v1194 = vadd.f32 %v1097, %v1193
  %v1195 = vpop.f32.mrf.mxu0
  %v1196 = vpop.f32.mrf.mxu0
  %v1197 = vadd.f32 %v1100, %v1196
  %v1198 = vpop.f32.mrf.mxu0
  %1199 = vmatprep.mubr.bf16.mxu0 %v500
  %1200 = vmatmul.mubr.bf16.gmra.mxu0 %v499
  %v1201 = vpop.f32.mrf.mxu0
  %v1202 = vadd.f32 %v1105, %v1201
  %v1203 = vpop.f32.mrf.mxu0
  %v1204 = vpop.f32.mrf.mxu0
  %v1205 = vadd.f32 %v1108, %v1204
  %v1206 = vpop.f32.mrf.mxu0
  %1207 = vmatprep.mubr.bf16.mxu0 %v509
  %1208 = vmatmul.mubr.bf16.gmra.mxu0 %v508
  %v1209 = vpop.f32.mrf.mxu0
  %v1210 = vadd.f32 %v1113, %v1209
  %v1211 = vpop.f32.mrf.mxu0
  %v1212 = vpop.f32.mrf.mxu0
  %v1213 = vadd.f32 %v1116, %v1212
  %v1214 = vpop.f32.mrf.mxu0
  %1215 = vmatprep.mubr.bf16.mxu0 %v518
  %1216 = vmatmul.mubr.bf16.gmra.mxu0 %v517
  %v1217 = vpop.f32.mrf.mxu0
  %v1218 = vadd.f32 %v1121, %v1217
  %v1219 = vpop.f32.mrf.mxu0
  %v1220 = vpop.f32.mrf.mxu0
  %v1221 = vadd.f32 %v1124, %v1220
  %v1222 = vpop.f32.mrf.mxu0
  %1223 = vmatprep.mubr.bf16.mxu0 %v527
  %1224 = vmatmul.mubr.bf16.gmra.mxu0 %v526
  %v1225 = vpop.f32.mrf.mxu0
  %v1226 = vadd.f32 %v1129, %v1225
  %v1227 = vpop.f32.mrf.mxu0
  %v1228 = vpop.f32.mrf.mxu0
  %v1229 = vadd.f32 %v1132, %v1228
  %v1230 = vpop.f32.mrf.mxu0
  %1231 = vmatprep.mubr.bf16.mxu0 %v536
  %1232 = vmatmul.mubr.bf16.gmra.mxu0 %v535
  %v1233 = vpop.f32.mrf.mxu0
  %v1234 = vadd.f32 %v1137, %v1233
  %v1235 = vpop.f32.mrf.mxu0
  %v1236 = vpop.f32.mrf.mxu0
  %v1237 = vadd.f32 %v1140, %v1236
  %v1238 = vpop.f32.mrf.mxu0
  %1239 = vdwg.mxu0
  %1240 = vmatprep.subr.bf16.mxu0 0
  %1241 = vmatpush1.bf16.msra.mxu0 %v941
  %1242 = vmatprep.subr.bf16.mxu0 0
  %1243 = vmatpush1.bf16.msra.mxu0 %v940
  %1244 = vmatprep.subr.bf16.mxu0 0
  %1245 = vmatpush1.bf16.msra.mxu0 %v939
  %1246 = vmatprep.subr.bf16.mxu0 0
  %1247 = vmatpush1.bf16.msra.mxu0 %v938
  %1248 = vmatprep.subr.bf16.mxu0 0
  %1249 = vmatpush1.bf16.msra.mxu0 %v937
  %1250 = vmatprep.subr.bf16.mxu0 0
  %1251 = vmatpush1.bf16.msra.mxu0 %v936
  %1252 = vmatprep.subr.bf16.mxu0 0
  %1253 = vmatpush1.bf16.msra.mxu0 %v935
  %1254 = vmatprep.subr.bf16.mxu0 0
  %1255 = vmatpush1.bf16.msra.mxu0 %v934
  %1256 = vmatprep.subr.bf16.mxu0 0
  %1257 = vmatpush2.bf16.msra.mxu0 %v949
  %1258 = vmatprep.subr.bf16.mxu0 0
  %1259 = vmatpush2.bf16.msra.mxu0 %v948
  %1260 = vmatprep.subr.bf16.mxu0 0
  %1261 = vmatpush2.bf16.msra.mxu0 %v947
  %1262 = vmatprep.subr.bf16.mxu0 0
  %1263 = vmatpush2.bf16.msra.mxu0 %v946
  %1264 = vmatprep.subr.bf16.mxu0 0
  %1265 = vmatpush2.bf16.msra.mxu0 %v945
  %1266 = vmatprep.subr.bf16.mxu0 0
  %1267 = vmatpush2.bf16.msra.mxu0 %v944
  %1268 = vmatprep.subr.bf16.mxu0 0
  %1269 = vmatpush2.bf16.msra.mxu0 %v943
  %1270 = vmatprep.subr.bf16.mxu0 0
  %1271 = vmatpush2.bf16.msra.mxu0 %v942
  %1272 = vmatprep.mubr.bf16.mxu0 %v475
  %1273 = vmatmul.mubr.bf16.gmra.mxu0 %v474
  %v1274 = vpop.f32.mrf.mxu0
  %v1275 = vadd.f32 %v1178, %v1274
  %v1276 = vpop.f32.mrf.mxu0
  %v1277 = vpop.f32.mrf.mxu0
  %v1278 = vadd.f32 %v1181, %v1277
  %v1279 = vpop.f32.mrf.mxu0
  %1280 = vmatprep.mubr.bf16.mxu0 %v484
  %1281 = vmatmul.mubr.bf16.gmra.mxu0 %v483
  %v1282 = vpop.f32.mrf.mxu0
  %v1283 = vadd.f32 %v1186, %v1282
  %v1284 = vpop.f32.mrf.mxu0
  %v1285 = vpop.f32.mrf.mxu0
  %v1286 = vadd.f32 %v1189, %v1285
  %v1287 = vpop.f32.mrf.mxu0
  %1288 = vmatprep.mubr.bf16.mxu0 %v493
  %1289 = vmatmul.mubr.bf16.gmra.mxu0 %v492
  %v1290 = vpop.f32.mrf.mxu0
  %v1291 = vadd.f32 %v1194, %v1290
  %v1292 = vpop.f32.mrf.mxu0
  %v1293 = vpop.f32.mrf.mxu0
  %v1294 = vadd.f32 %v1197, %v1293
  %v1295 = vpop.f32.mrf.mxu0
  %1296 = vmatprep.mubr.bf16.mxu0 %v502
  %1297 = vmatmul.mubr.bf16.gmra.mxu0 %v501
  %v1298 = vpop.f32.mrf.mxu0
  %v1299 = vadd.f32 %v1202, %v1298
  %v1300 = vpop.f32.mrf.mxu0
  %v1301 = vpop.f32.mrf.mxu0
  %v1302 = vadd.f32 %v1205, %v1301
  %v1303 = vpop.f32.mrf.mxu0
  %1304 = vmatprep.mubr.bf16.mxu0 %v511
  %1305 = vmatmul.mubr.bf16.gmra.mxu0 %v510
  %v1306 = vpop.f32.mrf.mxu0
  %v1307 = vadd.f32 %v1210, %v1306
  %v1308 = vpop.f32.mrf.mxu0
  %v1309 = vpop.f32.mrf.mxu0
  %v1310 = vadd.f32 %v1213, %v1309
  %v1311 = vpop.f32.mrf.mxu0
  %1312 = vmatprep.mubr.bf16.mxu0 %v520
  %1313 = vmatmul.mubr.bf16.gmra.mxu0 %v519
  %v1314 = vpop.f32.mrf.mxu0
  %v1315 = vadd.f32 %v1218, %v1314
  %v1316 = vpop.f32.mrf.mxu0
  %v1317 = vpop.f32.mrf.mxu0
  %v1318 = vadd.f32 %v1221, %v1317
  %v1319 = vpop.f32.mrf.mxu0
  %1320 = vmatprep.mubr.bf16.mxu0 %v529
  %1321 = vmatmul.mubr.bf16.gmra.mxu0 %v528
  %v1322 = vpop.f32.mrf.mxu0
  %v1323 = vadd.f32 %v1226, %v1322
  %v1324 = vpop.f32.mrf.mxu0
  %v1325 = vpop.f32.mrf.mxu0
  %v1326 = vadd.f32 %v1229, %v1325
  %v1327 = vpop.f32.mrf.mxu0
  %1328 = vmatprep.mubr.bf16.mxu0 %v538
  %1329 = vmatmul.mubr.bf16.gmra.mxu0 %v537
  %v1330 = vpop.f32.mrf.mxu0
  %v1331 = vadd.f32 %v1234, %v1330
  %v1332 = vpop.f32.mrf.mxu0
  %v1333 = vpop.f32.mrf.mxu0
  %v1334 = vadd.f32 %v1237, %v1333
  %v1335 = vpop.f32.mrf.mxu0
  %1336 = vdwg.mxu0
  %1337 = vmatprep.subr.bf16.mxu0 0
  %1338 = vmatpush1.bf16.msra.mxu0 %v957
  %1339 = vmatprep.subr.bf16.mxu0 0
  %1340 = vmatpush1.bf16.msra.mxu0 %v956
  %1341 = vmatprep.subr.bf16.mxu0 0
  %1342 = vmatpush1.bf16.msra.mxu0 %v955
  %1343 = vmatprep.subr.bf16.mxu0 0
  %1344 = vmatpush1.bf16.msra.mxu0 %v954
  %1345 = vmatprep.subr.bf16.mxu0 0
  %1346 = vmatpush1.bf16.msra.mxu0 %v953
  %1347 = vmatprep.subr.bf16.mxu0 0
  %1348 = vmatpush1.bf16.msra.mxu0 %v952
  %1349 = vmatprep.subr.bf16.mxu0 0
  %1350 = vmatpush1.bf16.msra.mxu0 %v951
  %1351 = vmatprep.subr.bf16.mxu0 0
  %1352 = vmatpush1.bf16.msra.mxu0 %v950
  %1353 = vmatprep.subr.bf16.mxu0 0
  %1354 = vmatpush2.bf16.msra.mxu0 %v965
  %1355 = vmatprep.subr.bf16.mxu0 0
  %1356 = vmatpush2.bf16.msra.mxu0 %v964
  %1357 = vmatprep.subr.bf16.mxu0 0
  %1358 = vmatpush2.bf16.msra.mxu0 %v963
  %1359 = vmatprep.subr.bf16.mxu0 0
  %1360 = vmatpush2.bf16.msra.mxu0 %v962
  %1361 = vmatprep.subr.bf16.mxu0 0
  %1362 = vmatpush2.bf16.msra.mxu0 %v961
  %1363 = vmatprep.subr.bf16.mxu0 0
  %1364 = vmatpush2.bf16.msra.mxu0 %v960
  %1365 = vmatprep.subr.bf16.mxu0 0
  %1366 = vmatpush2.bf16.msra.mxu0 %v959
  %1367 = vmatprep.subr.bf16.mxu0 0
  %1368 = vmatpush2.bf16.msra.mxu0 %v958
  %1369 = vmatprep.mubr.bf16.mxu0 %v477
  %1370 = vmatmul.mubr.bf16.gmra.mxu0 %v476
  %v1371 = vpop.f32.mrf.mxu0
  %v1372 = vadd.f32 %v1275, %v1371
  %v1373 = vpop.f32.mrf.mxu0
  %v1374 = vpop.f32.mrf.mxu0
  %v1375 = vadd.f32 %v1278, %v1374
  %v1376 = vpop.f32.mrf.mxu0
  %1377 = vmatprep.mubr.bf16.mxu0 %v486
  %1378 = vmatmul.mubr.bf16.gmra.mxu0 %v485
  %v1379 = vpop.f32.mrf.mxu0
  %v1380 = vadd.f32 %v1283, %v1379
  %v1381 = vpop.f32.mrf.mxu0
  %v1382 = vpop.f32.mrf.mxu0
  %v1383 = vadd.f32 %v1286, %v1382
  %v1384 = vpop.f32.mrf.mxu0
  %1385 = vmatprep.mubr.bf16.mxu0 %v495
  %1386 = vmatmul.mubr.bf16.gmra.mxu0 %v494
  %v1387 = vpop.f32.mrf.mxu0
  %v1388 = vadd.f32 %v1291, %v1387
  %v1389 = vpop.f32.mrf.mxu0
  %v1390 = vpop.f32.mrf.mxu0
  %v1391 = vadd.f32 %v1294, %v1390
  %v1392 = vpop.f32.mrf.mxu0
  %1393 = vmatprep.mubr.bf16.mxu0 %v504
  %1394 = vmatmul.mubr.bf16.gmra.mxu0 %v503
  %v1395 = vpop.f32.mrf.mxu0
  %v1396 = vadd.f32 %v1299, %v1395
  %v1397 = vpop.f32.mrf.mxu0
  %v1398 = vpop.f32.mrf.mxu0
  %v1399 = vadd.f32 %v1302, %v1398
  %v1400 = vpop.f32.mrf.mxu0
  %1401 = vmatprep.mubr.bf16.mxu0 %v513
  %1402 = vmatmul.mubr.bf16.gmra.mxu0 %v512
  %v1403 = vpop.f32.mrf.mxu0
  %v1404 = vadd.f32 %v1307, %v1403
  %v1405 = vpop.f32.mrf.mxu0
  %v1406 = vpop.f32.mrf.mxu0
  %v1407 = vadd.f32 %v1310, %v1406
  %v1408 = vpop.f32.mrf.mxu0
  %1409 = vmatprep.mubr.bf16.mxu0 %v522
  %1410 = vmatmul.mubr.bf16.gmra.mxu0 %v521
  %v1411 = vpop.f32.mrf.mxu0
  %v1412 = vadd.f32 %v1315, %v1411
  %v1413 = vpop.f32.mrf.mxu0
  %v1414 = vpop.f32.mrf.mxu0
  %v1415 = vadd.f32 %v1318, %v1414
  %v1416 = vpop.f32.mrf.mxu0
  %1417 = vmatprep.mubr.bf16.mxu0 %v531
  %1418 = vmatmul.mubr.bf16.gmra.mxu0 %v530
  %v1419 = vpop.f32.mrf.mxu0
  %v1420 = vadd.f32 %v1323, %v1419
  %v1421 = vpop.f32.mrf.mxu0
  %v1422 = vpop.f32.mrf.mxu0
  %v1423 = vadd.f32 %v1326, %v1422
  %v1424 = vpop.f32.mrf.mxu0
  %1425 = vmatprep.mubr.bf16.mxu0 %v540
  %1426 = vmatmul.mubr.bf16.gmra.mxu0 %v539
  %v1427 = vpop.f32.mrf.mxu0
  %v1428 = vadd.f32 %v1331, %v1427
  %v1429 = vpop.f32.mrf.mxu0
  %v1430 = vpop.f32.mrf.mxu0
  %v1431 = vadd.f32 %v1334, %v1430
  %v1432 = vpop.f32.mrf.mxu0
  %1433 = vdwg.mxu0
  %1434 = vmatprep.subr.bf16.mxu0 0
  %1435 = vmatpush1.bf16.msra.mxu0 %v973
  %1436 = vmatprep.subr.bf16.mxu0 0
  %1437 = vmatpush1.bf16.msra.mxu0 %v972
  %1438 = vmatprep.subr.bf16.mxu0 0
  %1439 = vmatpush1.bf16.msra.mxu0 %v971
  %1440 = vmatprep.subr.bf16.mxu0 0
  %1441 = vmatpush1.bf16.msra.mxu0 %v970
  %1442 = vmatprep.subr.bf16.mxu0 0
  %1443 = vmatpush1.bf16.msra.mxu0 %v969
  %1444 = vmatprep.subr.bf16.mxu0 0
  %1445 = vmatpush1.bf16.msra.mxu0 %v968
  %1446 = vmatprep.subr.bf16.mxu0 0
  %1447 = vmatpush1.bf16.msra.mxu0 %v967
  %1448 = vmatprep.subr.bf16.mxu0 0
  %1449 = vmatpush1.bf16.msra.mxu0 %v966
  %1450 = vmatprep.subr.bf16.mxu0 0
  %1451 = vmatpush2.bf16.msra.mxu0 0
  %1452 = vmatprep.subr.bf16.mxu0 0
  %1453 = vmatpush2.bf16.msra.mxu0 0
  %1454 = vmatprep.subr.bf16.mxu0 0
  %1455 = vmatpush2.bf16.msra.mxu0 0
  %1456 = vmatprep.subr.bf16.mxu0 0
  %1457 = vmatpush2.bf16.msra.mxu0 0
  %1458 = vmatprep.subr.bf16.mxu0 0
  %1459 = vmatpush2.bf16.msra.mxu0 0
  %1460 = vmatprep.subr.bf16.mxu0 0
  %1461 = vmatpush2.bf16.msra.mxu0 0
  %1462 = vmatprep.subr.bf16.mxu0 0
  %1463 = vmatpush2.bf16.msra.mxu0 0
  %1464 = vmatprep.subr.bf16.mxu0 0
  %1465 = vmatpush2.bf16.msra.mxu0 0
  %1466 = vmatprep.mubr.bf16.mxu0 0
  %1467 = vmatmul.mubr.bf16.gmra.mxu0 %v478
  %v1468 = vpop.f32.mrf.mxu0
  %v1469 = vadd.f32 %v1372, %v1468
  %v1470 = vpop.f32.mrf.mxu0
  %v1471 = vpop.f32.mrf.mxu0
  %v1472 = vadd.f32 %v1375, %v1471
  %v1473 = vpop.f32.mrf.mxu0
  %1474 = vmatprep.mubr.bf16.mxu0 0
  %1475 = vmatmul.mubr.bf16.gmra.mxu0 %v487
  %v1476 = vpop.f32.mrf.mxu0
  %v1477 = vadd.f32 %v1380, %v1476
  %v1478 = vpop.f32.mrf.mxu0
  %v1479 = vpop.f32.mrf.mxu0
  %v1480 = vadd.f32 %v1383, %v1479
  %v1481 = vpop.f32.mrf.mxu0
  %1482 = vmatprep.mubr.bf16.mxu0 0
  %1483 = vmatmul.mubr.bf16.gmra.mxu0 %v496
  %v1484 = vpop.f32.mrf.mxu0
  %v1485 = vadd.f32 %v1388, %v1484
  %v1486 = vpop.f32.mrf.mxu0
  %v1487 = vpop.f32.mrf.mxu0
  %v1488 = vadd.f32 %v1391, %v1487
  %v1489 = vpop.f32.mrf.mxu0
  %1490 = vmatprep.mubr.bf16.mxu0 0
  %1491 = vmatmul.mubr.bf16.gmra.mxu0 %v505
  %v1492 = vpop.f32.mrf.mxu0
  %v1493 = vadd.f32 %v1396, %v1492
  %v1494 = vpop.f32.mrf.mxu0
  %v1495 = vpop.f32.mrf.mxu0
  %v1496 = vadd.f32 %v1399, %v1495
  %v1497 = vpop.f32.mrf.mxu0
  %1498 = vmatprep.mubr.bf16.mxu0 0
  %1499 = vmatmul.mubr.bf16.gmra.mxu0 %v514
  %v1500 = vpop.f32.mrf.mxu0
  %v1501 = vadd.f32 %v1404, %v1500
  %v1502 = vpop.f32.mrf.mxu0
  %v1503 = vpop.f32.mrf.mxu0
  %v1504 = vadd.f32 %v1407, %v1503
  %v1505 = vpop.f32.mrf.mxu0
  %1506 = vmatprep.mubr.bf16.mxu0 0
  %1507 = vmatmul.mubr.bf16.gmra.mxu0 %v523
  %v1508 = vpop.f32.mrf.mxu0
  %v1509 = vadd.f32 %v1412, %v1508
  %v1510 = vpop.f32.mrf.mxu0
  %v1511 = vpop.f32.mrf.mxu0
  %v1512 = vadd.f32 %v1415, %v1511
  %v1513 = vpop.f32.mrf.mxu0
  %1514 = vmatprep.mubr.bf16.mxu0 0
  %1515 = vmatmul.mubr.bf16.gmra.mxu0 %v532
  %v1516 = vpop.f32.mrf.mxu0
  %v1517 = vadd.f32 %v1420, %v1516
  %v1518 = vpop.f32.mrf.mxu0
  %v1519 = vpop.f32.mrf.mxu0
  %v1520 = vadd.f32 %v1423, %v1519
  %v1521 = vpop.f32.mrf.mxu0
  %1522 = vmatprep.mubr.bf16.mxu0 0
  %1523 = vmatmul.mubr.bf16.gmra.mxu0 %v541
  %v1524 = vpop.f32.mrf.mxu0
  %v1525 = vadd.f32 %v1428, %v1524
  %v1526 = vpop.f32.mrf.mxu0
  %v1527 = vpop.f32.mrf.mxu0
  %v1528 = vadd.f32 %v1431, %v1527
  %v1529 = vpop.f32.mrf.mxu0
  %1530 = vdwg.mxu0
  %v1531 = vpack.c.bf16 %v1472, %v1469
  %v1532 = vpack.c.bf16 %v1480, %v1477
  %v1533 = vpack.c.bf16 %v1488, %v1485
  %v1534 = vpack.c.bf16 %v1496, %v1493
  %v1535 = vpack.c.bf16 %v1504, %v1501
  %v1536 = vpack.c.bf16 %v1512, %v1509
  %v1537 = vpack.c.bf16 %v1520, %v1517
  %v1538 = vpack.c.bf16 %v1528, %v1525
  %v1547 = vunpack.c.l.b16 %v1531
  %v1548 = vunpack.c.h.b16 %v1531
  %v1549 = vunpack.c.l.b16 %v1532
  %v1550 = vunpack.c.h.b16 %v1532
  %v1551 = vunpack.c.l.b16 %v1533
  %v1552 = vunpack.c.h.b16 %v1533
  %v1553 = vunpack.c.l.b16 %v1534
  %v1554 = vunpack.c.h.b16 %v1534
  %v1555 = vunpack.c.l.b16 %v1535
  %v1556 = vunpack.c.h.b16 %v1535
  %v1557 = vunpack.c.l.b16 %v1536
  %v1558 = vunpack.c.h.b16 %v1536
  %v1559 = vunpack.c.l.b16 %v1537
  %v1560 = vunpack.c.h.b16 %v1537
  %v1561 = vunpack.c.l.b16 %v1538
  %v1562 = vunpack.c.h.b16 %v1538
  %v1563 = vpack.c.b16 %v1547, %v1547
  %v1564 = vpack.c.b16 %v1548, %v1548
  %v1565 = vpack.c.b16 %v1549, %v1549
  %v1566 = vpack.c.b16 %v1550, %v1550
  %v1567 = vpack.c.b16 %v1551, %v1551
  %v1568 = vpack.c.b16 %v1552, %v1552
  %v1569 = vpack.c.b16 %v1553, %v1553
  %v1570 = vpack.c.b16 %v1554, %v1554
  %v1571 = vpack.c.b16 %v1555, %v1555
  %v1572 = vpack.c.b16 %v1556, %v1556
  %v1573 = vpack.c.b16 %v1557, %v1557
  %v1574 = vpack.c.b16 %v1558, %v1558
  %v1575 = vpack.c.b16 %v1559, %v1559
  %v1576 = vpack.c.b16 %v1560, %v1560
  %v1577 = vpack.c.b16 %v1561, %v1561
  %v1578 = vpack.c.b16 %v1562, %v1562
  %1595 = vst [vmem:[%s3] sm:$0xf] %v1563
  %1596 = vst [vmem:[%s3 + $0x4] sm:$0xf] %v1564
  %1597 = vst [vmem:[%s3 + $0x8] sm:$0xf] %v1565
  %1598 = vst [vmem:[%s3 + $0xc] sm:$0xf] %v1566
  %1599 = vst [vmem:[%s3 + $0x10] sm:$0xf] %v1567
  %1600 = vst [vmem:[%s3 + $0x14] sm:$0xf] %v1568
  %1601 = vst [vmem:[%s3 + $0x18] sm:$0xf] %v1569
  %1602 = vst [vmem:[%s3 + $0x1c] sm:$0xf] %v1570
  %1603 = vst [vmem:[%s3 + $0x20] sm:$0xf] %v1571
  %1604 = vst [vmem:[%s3 + $0x24] sm:$0xf] %v1572
  %1605 = vst [vmem:[%s3 + $0x28] sm:$0xf] %v1573
  %1606 = vst [vmem:[%s3 + $0x2c] sm:$0xf] %v1574
  %1607 = vst [vmem:[%s3 + $0x30] sm:$0xf] %v1575
  %1608 = vst [vmem:[%s3 + $0x34] sm:$0xf] %v1576
  %1609 = vst [vmem:[%s3 + $0x38] sm:$0xf] %v1577
  %1610 = vst [vmem:[%s3 + $0x3c] sm:$0xf] %v1578
  // Predicated region
  $region14: #{fcos_forward.25} parent=0 // pred_check
    _
  $region15: #{fcos_forward.25} parent=0 // pred_check_branch
    %1612 = sbr.rel (0) target = $region17
  $region16: #{fcos_forward.25} parent=0 // pred_region
    _
  $region17: #{fcos_forward.25} parent=0 // pred_fallthru
    _
  // Predicated region
  $region18: #{fcos_forward.25} parent=0 // pred_check
    _
  $region19: #{fcos_forward.25} parent=0 // pred_check_branch
    %1614 = sbr.rel (0) target = $region21
  $region20: #{fcos_forward.25} parent=0 // pred_region
    _
  $region21: #{fcos_forward.25} parent=0 // pred_fallthru
    _

// kernel: fcos_forward.28
$region0: #{fcos_forward.28}
  #allocation0 [shape = 'u32[]', space=smem, size = 0x4, offset = 0x4, fixed_abs, tag = 'smem constant byte address 0x4 - core index']
  #allocation1 [shape = 'u32[144,128]{1,0:T(1,128)}', space=vmem, size = 0x12000, scoped, tag = 'internal scratch']
  %s0 = inlined_call_operand.vmem [shape: bf16[256,1152], index: 0, kind: input, shape index: {}]
  %s1 = inlined_call_operand.vmem [shape: bf16[1152,128], index: 1, kind: input, shape index: {}]
  %s2 = inlined_call_operand.vmem [shape: f32[1,128], index: 2, kind: input, shape index: {}]
  %s3 = inlined_call_operand.vmem [shape: bf16[256,128], index: 3, kind: output, shape index: {}]
  %s4 = sld [smem:[#allocation0]]
  $region45: #{fcos_forward.28} parent=0
    _
  %s6 = ssub.s32 1, %s4
  %s7 = scalar_select 0, %s6, %s4
  loop: start=0, step=1, limit=4
  $region2: #{fcos_forward.28} parent=0 // loop_pre_header
    _
  $region3: #{fcos_forward.28} parent=0 // loop_header
    %s9 = sphi 0, %s13
    %p10 = scmp.ge.s32.totalorder %s9, 4
    %s19 = sphi 0, %s21
    %s22 = sphi 0, %s19
    %s23 = sphi 0, %s22
    %s39 = sphi 0, %s23
    %s43 = sphi 0, %s43
    %s45 = sphi 0, %s43
    %s46 = sphi 0, %s45
    %s60 = sphi 0, %s46
    %s64 = sphi 0, %s64
    %s66 = sphi 0, %s64
    %s67 = sphi 0, %s66
    %s81 = sphi 0, %s67
    %s87 = sphi 0, %s89
    %s90 = sphi 0, %s87
    %s91 = sphi 0, %s90
    %s107 = sphi 0, %s91
  $region4: #{fcos_forward.28} parent=0 // loop_header_branch
    %12 = sbr.rel (%p10) target = $region8
  $region5: #{fcos_forward.28} parent=0 // loop_body
    %s14 = ssub.s32 %s9, 1
    %s15 = ssub.s32 %s9, 2
    %s16 = sadd.s32 %s9, 1
    %s17 = ssub.s32 %s9, %s16
    %p18 = scmp.eq.s32.totalorder %s17, 0
    %s20 = sadd.s32 %s19, 1
    %s21 = scalar_select %p18, %s19, %s20
    %p24 = pneg %p18
    %p25 = scmp.eq.s32.totalorder %s9, 1
    %p26 = por %p24, %p25
    %p27 = scmp.ne.s32.totalorder %s19, %s22
    %p28 = scmp.eq.s32.totalorder %s9, 0
    %p29 = por %p27, %p28
    %p30 = scmp.ne.s32.totalorder %s19, %s22
    %p31 = scmp.eq.s32.totalorder %s14, 1
    %p32 = por %p30, %p31
    %p33 = scmp.ne.s32.totalorder %s22, %s23
    %p34 = scmp.eq.s32.totalorder %s14, 0
    %p35 = por %p33, %p34
    %p36 = scmp.ne.s32.totalorder %s22, %s23
    %p37 = scmp.eq.s32.totalorder %s15, 1
    %p38 = por %p36, %p37
    %p40 = scmp.ne.s32.totalorder %s23, %s39
    %p41 = scmp.eq.s32.totalorder %s15, 0
    %p42 = por %p40, %p41
    %s44 = sadd.s32 %s43, 1
    %p47 = scmp.eq.s32.totalorder %s9, 1
    %p48 = scmp.ne.s32.totalorder %s43, %s45
    %p49 = scmp.eq.s32.totalorder %s9, 0
    %p50 = por %p48, %p49
    %p51 = scmp.ne.s32.totalorder %s43, %s45
    %p52 = scmp.eq.s32.totalorder %s14, 1
    %p53 = por %p51, %p52
    %p54 = scmp.ne.s32.totalorder %s45, %s46
    %p55 = scmp.eq.s32.totalorder %s14, 0
    %p56 = por %p54, %p55
    %p57 = scmp.ne.s32.totalorder %s45, %s46
    %p58 = scmp.eq.s32.totalorder %s15, 1
    %p59 = por %p57, %p58
    %p61 = scmp.ne.s32.totalorder %s46, %s60
    %p62 = scmp.eq.s32.totalorder %s15, 0
    %p63 = por %p61, %p62
    %s65 = sadd.s32 %s64, 1
    %p68 = scmp.eq.s32.totalorder %s9, 1
    %p69 = scmp.ne.s32.totalorder %s64, %s66
    %p70 = scmp.eq.s32.totalorder %s9, 0
    %p71 = por %p69, %p70
    %p72 = scmp.ne.s32.totalorder %s64, %s66
    %p73 = scmp.eq.s32.totalorder %s14, 1
    %p74 = por %p72, %p73
    %p75 = scmp.ne.s32.totalorder %s66, %s67
    %p76 = scmp.eq.s32.totalorder %s14, 0
    %p77 = por %p75, %p76
    %p78 = scmp.ne.s32.totalorder %s66, %s67
    %p79 = scmp.eq.s32.totalorder %s15, 1
    %p80 = por %p78, %p79
    %p82 = scmp.ne.s32.totalorder %s67, %s81
    %p83 = scmp.eq.s32.totalorder %s15, 0
    %p84 = por %p82, %p83
    %s85 = ssub.s32 %s9, %s16
    %p86 = scmp.eq.s32.totalorder %s85, 0
    %s88 = sadd.s32 %s87, 1
    %s89 = scalar_select %p86, %s87, %s88
    %p92 = pneg %p86
    %p93 = scmp.eq.s32.totalorder %s9, 1
    %p94 = por %p92, %p93
    %p95 = scmp.ne.s32.totalorder %s87, %s90
    %p96 = scmp.eq.s32.totalorder %s9, 0
    %p97 = por %p95, %p96
    %p98 = scmp.ne.s32.totalorder %s87, %s90
    %p99 = scmp.eq.s32.totalorder %s14, 1
    %p100 = por %p98, %p99
    %p101 = scmp.ne.s32.totalorder %s90, %s91
    %p102 = scmp.eq.s32.totalorder %s14, 0
    %p103 = por %p101, %p102
    %p104 = scmp.ne.s32.totalorder %s90, %s91
    %p105 = scmp.eq.s32.totalorder %s15, 1
    %p106 = por %p104, %p105
    %p108 = scmp.ne.s32.totalorder %s91, %s107
    %p109 = scmp.eq.s32.totalorder %s15, 0
    %p110 = por %p108, %p109
    %p111 = scmp.le.s32.totalorder 1, %s9
    %p112 = scmp.lt.s32.totalorder %s9, 3
    %p113 = pnand %p111, %p112
    %p114 = pneg %p113
    // Predicated region
    $region9: #{fcos_forward.28} parent=5 // pred_check
      _
    $region10: #{fcos_forward.28} parent=5 // pred_check_branch
      %116 = sbr.rel (%p113) target = $region12
    $region11: #{fcos_forward.28} parent=5 // pred_region
      %s117 = ssub.s32 %s9, 1
      // Predicated region
      $region13: #{fcos_forward.28} parent=11 // pred_check
        %p118 = pneg %p56
      $region14: #{fcos_forward.28} parent=11 // pred_check_branch
        %120 = sbr.rel (%p118) target = $region16
      $region15: #{fcos_forward.28} parent=11 // pred_region
        _
      $region16: #{fcos_forward.28} parent=11 // pred_fallthru
        _
      // Predicated region
      $region17: #{fcos_forward.28} parent=11 // pred_check
        %p121 = pneg %p77
      $region18: #{fcos_forward.28} parent=11 // pred_check_branch
        %123 = sbr.rel (%p121) target = $region20
      $region19: #{fcos_forward.28} parent=11 // pred_region
        _
      $region20: #{fcos_forward.28} parent=11 // pred_fallthru
        _
    $region12: #{fcos_forward.28} parent=5 // pred_fallthru
      _
    %p124 = scmp.lt.s32.totalorder %s9, 2
    // Predicated region
    $region21: #{fcos_forward.28} parent=5 // pred_check
      %p125 = pneg %p124
    $region22: #{fcos_forward.28} parent=5 // pred_check_branch
      %127 = sbr.rel (%p125) target = $region24
    $region23: #{fcos_forward.28} parent=5 // pred_region
      // Predicated region
      $region25: #{fcos_forward.28} parent=23 // pred_check
        %p128 = pneg %p29
      $region26: #{fcos_forward.28} parent=23 // pred_check_branch
        %130 = sbr.rel (%p128) target = $region28
      $region27: #{fcos_forward.28} parent=23 // pred_region
        %s131 = smul.u32 16, %s9
        %p132 = scmp.lt.s32.totalorder %s131, 31
        %s133 = scalar_select %p132, %s131, 31
        %s134 = smul.addr %s133, 9
        %s135 = smul.addr %s134, 4
        %s136 = scalar_lea.vmem %s0, %s135
        %s137 = smul.u32 16, %s9
      $region28: #{fcos_forward.28} parent=23 // pred_fallthru
        _
    $region24: #{fcos_forward.28} parent=5 // pred_fallthru
      _
    %p138 = scmp.le.s32.totalorder 1, %s9
    %p139 = scmp.lt.s32.totalorder %s9, 3
    %p140 = pnand %p138, %p139
    %p141 = pneg %p140
    // Predicated region
    $region29: #{fcos_forward.28} parent=5 // pred_check
      _
    $region30: #{fcos_forward.28} parent=5 // pred_check_branch
      %143 = sbr.rel (%p140) target = $region32
    $region31: #{fcos_forward.28} parent=5 // pred_region
      %s144 = ssub.s32 %s9, 1
      %s145 = smul.u32 16, %s14
      %p146 = scmp.lt.s32.totalorder %s145, 31
      %s147 = scalar_select %p146, %s145, 31
      %s148 = smul.addr %s147, 9
      %s149 = smul.addr %s148, 4
      %s150 = scalar_lea.vmem %s0, %s149
      %p151 = pneg %p35
      %p152 = pneg %p32
      %p153 = pneg %p56
      %p154 = pneg %p53
      %p155 = pneg %p77
      %p156 = pneg %p74
      %p157 = pneg %p103
      %p158 = pneg %p100
      %s159 = smul.u32 16, %s14
      %p160 = scmp.lt.s32.totalorder %s159, 31
      %s161 = scalar_select %p160, %s159, 31
      %s162 = smul.addr %s161, 4
      %s163 = scalar_lea.vmem %s3, %s162
      %s164 = smul.u32 16, %s14
      %p165 = scmp.lt.s32.totalorder %s164, 31
      %s166 = scalar_select %p165, %s164, 31
      %s167 = smul.addr %s166, 9
      %s168 = smul.addr %s167, 4
      %s169 = scalar_lea.vmem %s0, %s168
      %s170 = smul.u32 16, %s14
      %s171 = smul.u32 16, %s14
      %p172 = scmp.lt.s32.totalorder %s171, 31
      %s173 = scalar_select %p172, %s171, 31
      %s174 = smul.addr %s173, 4
      %s175 = scalar_lea.vmem %s3, %s174
      %s176 = smul.u32 16, %s14
      %v178 = vld [vmem:[%s169] sm:$0xff]
      %v179 = vld [vmem:[%s169 + $0x8] sm:$0xff]
      %v180 = vld [vmem:[%s169 + $0x10] sm:$0xff]
      %v181 = vld [vmem:[%s169 + $0x18] sm:$0xff]
      %v182 = vld [vmem:[%s169 + $0x20] sm:$0xf]
      %v183 = vld [vmem:[%s169 + $0x24] sm:$0xff]
      %v184 = vld [vmem:[%s169 + $0x2c] sm:$0xff]
      %v185 = vld [vmem:[%s169 + $0x34] sm:$0xff]
      %v186 = vld [vmem:[%s169 + $0x3c] sm:$0xff]
      %v187 = vld [vmem:[%s169 + $0x44] sm:$0xf]
      %v188 = vld [vmem:[%s169 + $0x48] sm:$0xff]
      %v189 = vld [vmem:[%s169 + $0x50] sm:$0xff]
      %v190 = vld [vmem:[%s169 + $0x58] sm:$0xff]
      %v191 = vld [vmem:[%s169 + $0x60] sm:$0xff]
      %v192 = vld [vmem:[%s169 + $0x68] sm:$0xf]
      %v193 = vld [vmem:[%s169 + $0x6c] sm:$0xff]
      %v194 = vld [vmem:[%s169 + $0x74] sm:$0xff]
      %v195 = vld [vmem:[%s169 + $0x7c] sm:$0xff]
      %v196 = vld [vmem:[%s169 + $0x84] sm:$0xff]
      %v197 = vld [vmem:[%s169 + $0x8c] sm:$0xf]
      %v198 = vld [vmem:[%s169 + $0x90] sm:$0xff]
      %v199 = vld [vmem:[%s169 + $0x98] sm:$0xff]
      %v200 = vld [vmem:[%s169 + $0xa0] sm:$0xff]
      %v201 = vld [vmem:[%s169 + $0xa8] sm:$0xff]
      %v202 = vld [vmem:[%s169 + $0xb0] sm:$0xf]
      %v203 = vld [vmem:[%s169 + $0xb4] sm:$0xff]
      %v204 = vld [vmem:[%s169 + $0xbc] sm:$0xff]
      %v205 = vld [vmem:[%s169 + $0xc4] sm:$0xff]
      %v206 = vld [vmem:[%s169 + $0xcc] sm:$0xff]
      %v207 = vld [vmem:[%s169 + $0xd4] sm:$0xf]
      %v208 = vld [vmem:[%s169 + $0xd8] sm:$0xff]
      %v209 = vld [vmem:[%s169 + $0xe0] sm:$0xff]
      %v210 = vld [vmem:[%s169 + $0xe8] sm:$0xff]
      %v211 = vld [vmem:[%s169 + $0xf0] sm:$0xff]
      %v212 = vld [vmem:[%s169 + $0xf8] sm:$0xf]
      %v213 = vld [vmem:[%s169 + $0xfc] sm:$0xff]
      %v214 = vld [vmem:[%s169 + $0x104] sm:$0xff]
      %v215 = vld [vmem:[%s169 + $0x10c] sm:$0xff]
      %v216 = vld [vmem:[%s169 + $0x114] sm:$0xff]
      %v217 = vld [vmem:[%s169 + $0x11c] sm:$0xf]
      %v218 = vld [vmem:[%s169 + $0x120] sm:$0xff]
      %v219 = vld [vmem:[%s169 + $0x128] sm:$0xff]
      %v220 = vld [vmem:[%s169 + $0x130] sm:$0xff]
      %v221 = vld [vmem:[%s169 + $0x138] sm:$0xff]
      %v222 = vld [vmem:[%s169 + $0x140] sm:$0xf]
      %v223 = vld [vmem:[%s169 + $0x144] sm:$0xff]
      %v224 = vld [vmem:[%s169 + $0x14c] sm:$0xff]
      %v225 = vld [vmem:[%s169 + $0x154] sm:$0xff]
      %v226 = vld [vmem:[%s169 + $0x15c] sm:$0xff]
      %v227 = vld [vmem:[%s169 + $0x164] sm:$0xf]
      %v228 = vld [vmem:[%s169 + $0x168] sm:$0xff]
      %v229 = vld [vmem:[%s169 + $0x170] sm:$0xff]
      %v230 = vld [vmem:[%s169 + $0x178] sm:$0xff]
      %v231 = vld [vmem:[%s169 + $0x180] sm:$0xff]
      %v232 = vld [vmem:[%s169 + $0x188] sm:$0xf]
      %v233 = vld [vmem:[%s169 + $0x18c] sm:$0xff]
      %v234 = vld [vmem:[%s169 + $0x194] sm:$0xff]
      %v235 = vld [vmem:[%s169 + $0x19c] sm:$0xff]
      %v236 = vld [vmem:[%s169 + $0x1a4] sm:$0xff]
      %v237 = vld [vmem:[%s169 + $0x1ac] sm:$0xf]
      %v238 = vld [vmem:[%s169 + $0x1b0] sm:$0xff]
      %v239 = vld [vmem:[%s169 + $0x1b8] sm:$0xff]
      %v240 = vld [vmem:[%s169 + $0x1c0] sm:$0xff]
      %v241 = vld [vmem:[%s169 + $0x1c8] sm:$0xff]
      %v242 = vld [vmem:[%s169 + $0x1d0] sm:$0xf]
      %v243 = vld [vmem:[%s169 + $0x1d4] sm:$0xff]
      %v244 = vld [vmem:[%s169 + $0x1dc] sm:$0xff]
      %v245 = vld [vmem:[%s169 + $0x1e4] sm:$0xff]
      %v246 = vld [vmem:[%s169 + $0x1ec] sm:$0xff]
      %v247 = vld [vmem:[%s169 + $0x1f4] sm:$0xf]
      %v248 = vld [vmem:[%s169 + $0x1f8] sm:$0xff]
      %v249 = vld [vmem:[%s169 + $0x200] sm:$0xff]
      %v250 = vld [vmem:[%s169 + $0x208] sm:$0xff]
      %v251 = vld [vmem:[%s169 + $0x210] sm:$0xff]
      %v252 = vld [vmem:[%s169 + $0x218] sm:$0xf]
      %v253 = vld [vmem:[%s169 + $0x21c] sm:$0xff]
      %v254 = vld [vmem:[%s169 + $0x224] sm:$0xff]
      %v255 = vld [vmem:[%s169 + $0x22c] sm:$0xff]
      %v256 = vld [vmem:[%s169 + $0x234] sm:$0xff]
      %v257 = vld [vmem:[%s169 + $0x23c] sm:$0xf]
      %v258 = vld [vmem:[%s1] sm:$0xf]
      %v259 = vld [vmem:[%s1 + $0x4] sm:$0xf]
      %v260 = vld [vmem:[%s1 + $0x8] sm:$0xf]
      %v261 = vld [vmem:[%s1 + $0xc] sm:$0xf]
      %v262 = vld [vmem:[%s1 + $0x10] sm:$0xf]
      %v263 = vld [vmem:[%s1 + $0x14] sm:$0xf]
      %v264 = vld [vmem:[%s1 + $0x18] sm:$0xf]
      %v265 = vld [vmem:[%s1 + $0x1c] sm:$0xf]
      %v266 = vld [vmem:[%s1 + $0x20] sm:$0xf]
      %v267 = vld [vmem:[%s1 + $0x24] sm:$0xf]
      %v268 = vld [vmem:[%s1 + $0x28] sm:$0xf]
      %v269 = vld [vmem:[%s1 + $0x2c] sm:$0xf]
      %v270 = vld [vmem:[%s1 + $0x30] sm:$0xf]
      %v271 = vld [vmem:[%s1 + $0x34] sm:$0xf]
      %v272 = vld [vmem:[%s1 + $0x38] sm:$0xf]
      %v273 = vld [vmem:[%s1 + $0x3c] sm:$0xf]
      %v274 = vld [vmem:[%s1 + $0x40] sm:$0xf]
      %v275 = vld [vmem:[%s1 + $0x44] sm:$0xf]
      %v276 = vld [vmem:[%s1 + $0x48] sm:$0xf]
      %v277 = vld [vmem:[%s1 + $0x4c] sm:$0xf]
      %v278 = vld [vmem:[%s1 + $0x50] sm:$0xf]
      %v279 = vld [vmem:[%s1 + $0x54] sm:$0xf]
      %v280 = vld [vmem:[%s1 + $0x58] sm:$0xf]
      %v281 = vld [vmem:[%s1 + $0x5c] sm:$0xf]
      %v282 = vld [vmem:[%s1 + $0x60] sm:$0xf]
      %v283 = vld [vmem:[%s1 + $0x64] sm:$0xf]
      %v284 = vld [vmem:[%s1 + $0x68] sm:$0xf]
      %v285 = vld [vmem:[%s1 + $0x6c] sm:$0xf]
      %v286 = vld [vmem:[%s1 + $0x70] sm:$0xf]
      %v287 = vld [vmem:[%s1 + $0x74] sm:$0xf]
      %v288 = vld [vmem:[%s1 + $0x78] sm:$0xf]
      %v289 = vld [vmem:[%s1 + $0x7c] sm:$0xf]
      %v290 = vld [vmem:[%s1 + $0x80] sm:$0xf]
      %v291 = vld [vmem:[%s1 + $0x84] sm:$0xf]
      %v292 = vld [vmem:[%s1 + $0x88] sm:$0xf]
      %v293 = vld [vmem:[%s1 + $0x8c] sm:$0xf]
      %v294 = vld [vmem:[%s1 + $0x90] sm:$0xf]
      %v295 = vld [vmem:[%s1 + $0x94] sm:$0xf]
      %v296 = vld [vmem:[%s1 + $0x98] sm:$0xf]
      %v297 = vld [vmem:[%s1 + $0x9c] sm:$0xf]
      %v298 = vld [vmem:[%s1 + $0xa0] sm:$0xf]
      %v299 = vld [vmem:[%s1 + $0xa4] sm:$0xf]
      %v300 = vld [vmem:[%s1 + $0xa8] sm:$0xf]
      %v301 = vld [vmem:[%s1 + $0xac] sm:$0xf]
      %v302 = vld [vmem:[%s1 + $0xb0] sm:$0xf]
      %v303 = vld [vmem:[%s1 + $0xb4] sm:$0xf]
      %v304 = vld [vmem:[%s1 + $0xb8] sm:$0xf]
      %v305 = vld [vmem:[%s1 + $0xbc] sm:$0xf]
      %v306 = vld [vmem:[%s1 + $0xc0] sm:$0xf]
      %v307 = vld [vmem:[%s1 + $0xc4] sm:$0xf]
      %v308 = vld [vmem:[%s1 + $0xc8] sm:$0xf]
      %v309 = vld [vmem:[%s1 + $0xcc] sm:$0xf]
      %v310 = vld [vmem:[%s1 + $0xd0] sm:$0xf]
      %v311 = vld [vmem:[%s1 + $0xd4] sm:$0xf]
      %v312 = vld [vmem:[%s1 + $0xd8] sm:$0xf]
      %v313 = vld [vmem:[%s1 + $0xdc] sm:$0xf]
      %v314 = vld [vmem:[%s1 + $0xe0] sm:$0xf]
      %v315 = vld [vmem:[%s1 + $0xe4] sm:$0xf]
      %v316 = vld [vmem:[%s1 + $0xe8] sm:$0xf]
      %v317 = vld [vmem:[%s1 + $0xec] sm:$0xf]
      %v318 = vld [vmem:[%s1 + $0xf0] sm:$0xf]
      %v319 = vld [vmem:[%s1 + $0xf4] sm:$0xf]
      %v320 = vld [vmem:[%s1 + $0xf8] sm:$0xf]
      %v321 = vld [vmem:[%s1 + $0xfc] sm:$0xf]
      %v322 = vld [vmem:[%s1 + $0x100] sm:$0xf]
      %v323 = vld [vmem:[%s1 + $0x104] sm:$0xf]
      %v324 = vld [vmem:[%s1 + $0x108] sm:$0xf]
      %v325 = vld [vmem:[%s1 + $0x10c] sm:$0xf]
      %v326 = vld [vmem:[%s1 + $0x110] sm:$0xf]
      %v327 = vld [vmem:[%s1 + $0x114] sm:$0xf]
      %v328 = vld [vmem:[%s1 + $0x118] sm:$0xf]
      %v329 = vld [vmem:[%s1 + $0x11c] sm:$0xf]
      %v330 = vld [vmem:[%s1 + $0x120] sm:$0xf]
      %v331 = vld [vmem:[%s1 + $0x124] sm:$0xf]
      %v332 = vld [vmem:[%s1 + $0x128] sm:$0xf]
      %v333 = vld [vmem:[%s1 + $0x12c] sm:$0xf]
      %v334 = vld [vmem:[%s1 + $0x130] sm:$0xf]
      %v335 = vld [vmem:[%s1 + $0x134] sm:$0xf]
      %v336 = vld [vmem:[%s1 + $0x138] sm:$0xf]
      %v337 = vld [vmem:[%s1 + $0x13c] sm:$0xf]
      %v338 = vld [vmem:[%s1 + $0x140] sm:$0xf]
      %v339 = vld [vmem:[%s1 + $0x144] sm:$0xf]
      %v340 = vld [vmem:[%s1 + $0x148] sm:$0xf]
      %v341 = vld [vmem:[%s1 + $0x14c] sm:$0xf]
      %v342 = vld [vmem:[%s1 + $0x150] sm:$0xf]
      %v343 = vld [vmem:[%s1 + $0x154] sm:$0xf]
      %v344 = vld [vmem:[%s1 + $0x158] sm:$0xf]
      %v345 = vld [vmem:[%s1 + $0x15c] sm:$0xf]
      %v346 = vld [vmem:[%s1 + $0x160] sm:$0xf]
      %v347 = vld [vmem:[%s1 + $0x164] sm:$0xf]
      %v348 = vld [vmem:[%s1 + $0x168] sm:$0xf]
      %v349 = vld [vmem:[%s1 + $0x16c] sm:$0xf]
      %v350 = vld [vmem:[%s1 + $0x170] sm:$0xf]
      %v351 = vld [vmem:[%s1 + $0x174] sm:$0xf]
      %v352 = vld [vmem:[%s1 + $0x178] sm:$0xf]
      %v353 = vld [vmem:[%s1 + $0x17c] sm:$0xf]
      %v354 = vld [vmem:[%s1 + $0x180] sm:$0xf]
      %v355 = vld [vmem:[%s1 + $0x184] sm:$0xf]
      %v356 = vld [vmem:[%s1 + $0x188] sm:$0xf]
      %v357 = vld [vmem:[%s1 + $0x18c] sm:$0xf]
      %v358 = vld [vmem:[%s1 + $0x190] sm:$0xf]
      %v359 = vld [vmem:[%s1 + $0x194] sm:$0xf]
      %v360 = vld [vmem:[%s1 + $0x198] sm:$0xf]
      %v361 = vld [vmem:[%s1 + $0x19c] sm:$0xf]
      %v362 = vld [vmem:[%s1 + $0x1a0] sm:$0xf]
      %v363 = vld [vmem:[%s1 + $0x1a4] sm:$0xf]
      %v364 = vld [vmem:[%s1 + $0x1a8] sm:$0xf]
      %v365 = vld [vmem:[%s1 + $0x1ac] sm:$0xf]
      %v366 = vld [vmem:[%s1 + $0x1b0] sm:$0xf]
      %v367 = vld [vmem:[%s1 + $0x1b4] sm:$0xf]
      %v368 = vld [vmem:[%s1 + $0x1b8] sm:$0xf]
      %v369 = vld [vmem:[%s1 + $0x1bc] sm:$0xf]
      %v370 = vld [vmem:[%s1 + $0x1c0] sm:$0xf]
      %v371 = vld [vmem:[%s1 + $0x1c4] sm:$0xf]
      %v372 = vld [vmem:[%s1 + $0x1c8] sm:$0xf]
      %v373 = vld [vmem:[%s1 + $0x1cc] sm:$0xf]
      %v374 = vld [vmem:[%s1 + $0x1d0] sm:$0xf]
      %v375 = vld [vmem:[%s1 + $0x1d4] sm:$0xf]
      %v376 = vld [vmem:[%s1 + $0x1d8] sm:$0xf]
      %v377 = vld [vmem:[%s1 + $0x1dc] sm:$0xf]
      %v378 = vld [vmem:[%s1 + $0x1e0] sm:$0xf]
      %v379 = vld [vmem:[%s1 + $0x1e4] sm:$0xf]
      %v380 = vld [vmem:[%s1 + $0x1e8] sm:$0xf]
      %v381 = vld [vmem:[%s1 + $0x1ec] sm:$0xf]
      %v382 = vld [vmem:[%s1 + $0x1f0] sm:$0xf]
      %v383 = vld [vmem:[%s1 + $0x1f4] sm:$0xf]
      %v384 = vld [vmem:[%s1 + $0x1f8] sm:$0xf]
      %v385 = vld [vmem:[%s1 + $0x1fc] sm:$0xf]
      %v386 = vld [vmem:[%s1 + $0x200] sm:$0xf]
      %v387 = vld [vmem:[%s1 + $0x204] sm:$0xf]
      %v388 = vld [vmem:[%s1 + $0x208] sm:$0xf]
      %v389 = vld [vmem:[%s1 + $0x20c] sm:$0xf]
      %v390 = vld [vmem:[%s1 + $0x210] sm:$0xf]
      %v391 = vld [vmem:[%s1 + $0x214] sm:$0xf]
      %v392 = vld [vmem:[%s1 + $0x218] sm:$0xf]
      %v393 = vld [vmem:[%s1 + $0x21c] sm:$0xf]
      %v394 = vld [vmem:[%s1 + $0x220] sm:$0xf]
      %v395 = vld [vmem:[%s1 + $0x224] sm:$0xf]
      %v396 = vld [vmem:[%s1 + $0x228] sm:$0xf]
      %v397 = vld [vmem:[%s1 + $0x22c] sm:$0xf]
      %v398 = vld [vmem:[%s1 + $0x230] sm:$0xf]
      %v399 = vld [vmem:[%s1 + $0x234] sm:$0xf]
      %v400 = vld [vmem:[%s1 + $0x238] sm:$0xf]
      %v401 = vld [vmem:[%s1 + $0x23c] sm:$0xf]
      %v402 = vld [vmem:[%s2] sm:$0x1]
      %v404 = vlaneseq
      %v405 = vshrl.u32 %v404, 7
      %v406 = vsub.s32 0, %v405
      %v407 = vrot.slane %v402, %v406
      %v489 = vunpack.c.l.b16 %v178
      %v490 = vunpack.c.h.b16 %v178
      %v491 = vunpack.c.l.b16 %v179
      %v492 = vunpack.c.h.b16 %v179
      %v493 = vunpack.c.l.b16 %v180
      %v494 = vunpack.c.h.b16 %v180
      %v495 = vunpack.c.l.b16 %v181
      %v496 = vunpack.c.h.b16 %v181
      %v497 = vunpack.c.l.b16 %v182
      %v498 = vunpack.c.l.b16 %v183
      %v499 = vunpack.c.h.b16 %v183
      %v500 = vunpack.c.l.b16 %v184
      %v501 = vunpack.c.h.b16 %v184
      %v502 = vunpack.c.l.b16 %v185
      %v503 = vunpack.c.h.b16 %v185
      %v504 = vunpack.c.l.b16 %v186
      %v505 = vunpack.c.h.b16 %v186
      %v506 = vunpack.c.l.b16 %v187
      %v507 = vunpack.c.l.b16 %v188
      %v508 = vunpack.c.h.b16 %v188
      %v509 = vunpack.c.l.b16 %v189
      %v510 = vunpack.c.h.b16 %v189
      %v511 = vunpack.c.l.b16 %v190
      %v512 = vunpack.c.h.b16 %v190
      %v513 = vunpack.c.l.b16 %v191
      %v514 = vunpack.c.h.b16 %v191
      %v515 = vunpack.c.l.b16 %v192
      %v516 = vunpack.c.l.b16 %v193
      %v517 = vunpack.c.h.b16 %v193
      %v518 = vunpack.c.l.b16 %v194
      %v519 = vunpack.c.h.b16 %v194
      %v520 = vunpack.c.l.b16 %v195
      %v521 = vunpack.c.h.b16 %v195
      %v522 = vunpack.c.l.b16 %v196
      %v523 = vunpack.c.h.b16 %v196
      %v524 = vunpack.c.l.b16 %v197
      %v525 = vunpack.c.l.b16 %v198
      %v526 = vunpack.c.h.b16 %v198
      %v527 = vunpack.c.l.b16 %v199
      %v528 = vunpack.c.h.b16 %v199
      %v529 = vunpack.c.l.b16 %v200
      %v530 = vunpack.c.h.b16 %v200
      %v531 = vunpack.c.l.b16 %v201
      %v532 = vunpack.c.h.b16 %v201
      %v533 = vunpack.c.l.b16 %v202
      %v534 = vunpack.c.l.b16 %v203
      %v535 = vunpack.c.h.b16 %v203
      %v536 = vunpack.c.l.b16 %v204
      %v537 = vunpack.c.h.b16 %v204
      %v538 = vunpack.c.l.b16 %v205
      %v539 = vunpack.c.h.b16 %v205
      %v540 = vunpack.c.l.b16 %v206
      %v541 = vunpack.c.h.b16 %v206
      %v542 = vunpack.c.l.b16 %v207
      %v543 = vunpack.c.l.b16 %v208
      %v544 = vunpack.c.h.b16 %v208
      %v545 = vunpack.c.l.b16 %v209
      %v546 = vunpack.c.h.b16 %v209
      %v547 = vunpack.c.l.b16 %v210
      %v548 = vunpack.c.h.b16 %v210
      %v549 = vunpack.c.l.b16 %v211
      %v550 = vunpack.c.h.b16 %v211
      %v551 = vunpack.c.l.b16 %v212
      %v552 = vunpack.c.l.b16 %v213
      %v553 = vunpack.c.h.b16 %v213
      %v554 = vunpack.c.l.b16 %v214
      %v555 = vunpack.c.h.b16 %v214
      %v556 = vunpack.c.l.b16 %v215
      %v557 = vunpack.c.h.b16 %v215
      %v558 = vunpack.c.l.b16 %v216
      %v559 = vunpack.c.h.b16 %v216
      %v560 = vunpack.c.l.b16 %v217
      %v561 = vunpack.c.l.b16 %v218
      %v562 = vunpack.c.h.b16 %v218
      %v563 = vunpack.c.l.b16 %v219
      %v564 = vunpack.c.h.b16 %v219
      %v565 = vunpack.c.l.b16 %v220
      %v566 = vunpack.c.h.b16 %v220
      %v567 = vunpack.c.l.b16 %v221
      %v568 = vunpack.c.h.b16 %v221
      %v569 = vunpack.c.l.b16 %v222
      %v570 = vunpack.c.l.b16 %v223
      %v571 = vunpack.c.h.b16 %v223
      %v572 = vunpack.c.l.b16 %v224
      %v573 = vunpack.c.h.b16 %v224
      %v574 = vunpack.c.l.b16 %v225
      %v575 = vunpack.c.h.b16 %v225
      %v576 = vunpack.c.l.b16 %v226
      %v577 = vunpack.c.h.b16 %v226
      %v578 = vunpack.c.l.b16 %v227
      %v579 = vunpack.c.l.b16 %v228
      %v580 = vunpack.c.h.b16 %v228
      %v581 = vunpack.c.l.b16 %v229
      %v582 = vunpack.c.h.b16 %v229
      %v583 = vunpack.c.l.b16 %v230
      %v584 = vunpack.c.h.b16 %v230
      %v585 = vunpack.c.l.b16 %v231
      %v586 = vunpack.c.h.b16 %v231
      %v587 = vunpack.c.l.b16 %v232
      %v588 = vunpack.c.l.b16 %v233
      %v589 = vunpack.c.h.b16 %v233
      %v590 = vunpack.c.l.b16 %v234
      %v591 = vunpack.c.h.b16 %v234
      %v592 = vunpack.c.l.b16 %v235
      %v593 = vunpack.c.h.b16 %v235
      %v594 = vunpack.c.l.b16 %v236
      %v595 = vunpack.c.h.b16 %v236
      %v596 = vunpack.c.l.b16 %v237
      %v597 = vunpack.c.l.b16 %v238
      %v598 = vunpack.c.h.b16 %v238
      %v599 = vunpack.c.l.b16 %v239
      %v600 = vunpack.c.h.b16 %v239
      %v601 = vunpack.c.l.b16 %v240
      %v602 = vunpack.c.h.b16 %v240
      %v603 = vunpack.c.l.b16 %v241
      %v604 = vunpack.c.h.b16 %v241
      %v605 = vunpack.c.l.b16 %v242
      %v606 = vunpack.c.l.b16 %v243
      %v607 = vunpack.c.h.b16 %v243
      %v608 = vunpack.c.l.b16 %v244
      %v609 = vunpack.c.h.b16 %v244
      %v610 = vunpack.c.l.b16 %v245
      %v611 = vunpack.c.h.b16 %v245
      %v612 = vunpack.c.l.b16 %v246
      %v613 = vunpack.c.h.b16 %v246
      %v614 = vunpack.c.l.b16 %v247
      %v615 = vunpack.c.l.b16 %v248
      %v616 = vunpack.c.h.b16 %v248
      %v617 = vunpack.c.l.b16 %v249
      %v618 = vunpack.c.h.b16 %v249
      %v619 = vunpack.c.l.b16 %v250
      %v620 = vunpack.c.h.b16 %v250
      %v621 = vunpack.c.l.b16 %v251
      %v622 = vunpack.c.h.b16 %v251
      %v623 = vunpack.c.l.b16 %v252
      %v624 = vunpack.c.l.b16 %v253
      %v625 = vunpack.c.h.b16 %v253
      %v626 = vunpack.c.l.b16 %v254
      %v627 = vunpack.c.h.b16 %v254
      %v628 = vunpack.c.l.b16 %v255
      %v629 = vunpack.c.h.b16 %v255
      %v630 = vunpack.c.l.b16 %v256
      %v631 = vunpack.c.h.b16 %v256
      %v632 = vunpack.c.l.b16 %v257
      %v633 = vpack.c.b16 %v498, %v489
      %v634 = vpack.c.b16 %v499, %v490
      %v635 = vpack.c.b16 %v500, %v491
      %v636 = vpack.c.b16 %v501, %v492
      %v637 = vpack.c.b16 %v502, %v493
      %v638 = vpack.c.b16 %v503, %v494
      %v639 = vpack.c.b16 %v504, %v495
      %v640 = vpack.c.b16 %v505, %v496
      %v641 = vpack.c.b16 %v506, %v497
      %v642 = vpack.c.b16 %v516, %v507
      %v643 = vpack.c.b16 %v517, %v508
      %v644 = vpack.c.b16 %v518, %v509
      %v645 = vpack.c.b16 %v519, %v510
      %v646 = vpack.c.b16 %v520, %v511
      %v647 = vpack.c.b16 %v521, %v512
      %v648 = vpack.c.b16 %v522, %v513
      %v649 = vpack.c.b16 %v523, %v514
      %v650 = vpack.c.b16 %v524, %v515
      %v651 = vpack.c.b16 %v534, %v525
      %v652 = vpack.c.b16 %v535, %v526
      %v653 = vpack.c.b16 %v536, %v527
      %v654 = vpack.c.b16 %v537, %v528
      %v655 = vpack.c.b16 %v538, %v529
      %v656 = vpack.c.b16 %v539, %v530
      %v657 = vpack.c.b16 %v540, %v531
      %v658 = vpack.c.b16 %v541, %v532
      %v659 = vpack.c.b16 %v542, %v533
      %v660 = vpack.c.b16 %v552, %v543
      %v661 = vpack.c.b16 %v553, %v544
      %v662 = vpack.c.b16 %v554, %v545
      %v663 = vpack.c.b16 %v555, %v546
      %v664 = vpack.c.b16 %v556, %v547
      %v665 = vpack.c.b16 %v557, %v548
      %v666 = vpack.c.b16 %v558, %v549
      %v667 = vpack.c.b16 %v559, %v550
      %v668 = vpack.c.b16 %v560, %v551
      %v669 = vpack.c.b16 %v570, %v561
      %v670 = vpack.c.b16 %v571, %v562
      %v671 = vpack.c.b16 %v572, %v563
      %v672 = vpack.c.b16 %v573, %v564
      %v673 = vpack.c.b16 %v574, %v565
      %v674 = vpack.c.b16 %v575, %v566
      %v675 = vpack.c.b16 %v576, %v567
      %v676 = vpack.c.b16 %v577, %v568
      %v677 = vpack.c.b16 %v578, %v569
      %v678 = vpack.c.b16 %v588, %v579
      %v679 = vpack.c.b16 %v589, %v580
      %v680 = vpack.c.b16 %v590, %v581
      %v681 = vpack.c.b16 %v591, %v582
      %v682 = vpack.c.b16 %v592, %v583
      %v683 = vpack.c.b16 %v593, %v584
      %v684 = vpack.c.b16 %v594, %v585
      %v685 = vpack.c.b16 %v595, %v586
      %v686 = vpack.c.b16 %v596, %v587
      %v687 = vpack.c.b16 %v606, %v597
      %v688 = vpack.c.b16 %v607, %v598
      %v689 = vpack.c.b16 %v608, %v599
      %v690 = vpack.c.b16 %v609, %v600
      %v691 = vpack.c.b16 %v610, %v601
      %v692 = vpack.c.b16 %v611, %v602
      %v693 = vpack.c.b16 %v612, %v603
      %v694 = vpack.c.b16 %v613, %v604
      %v695 = vpack.c.b16 %v614, %v605
      %v696 = vpack.c.b16 %v624, %v615
      %v697 = vpack.c.b16 %v625, %v616
      %v698 = vpack.c.b16 %v626, %v617
      %v699 = vpack.c.b16 %v627, %v618
      %v700 = vpack.c.b16 %v628, %v619
      %v701 = vpack.c.b16 %v629, %v620
      %v702 = vpack.c.b16 %v630, %v621
      %v703 = vpack.c.b16 %v631, %v622
      %v704 = vpack.c.b16 %v632, %v623
      %v921 = vunpack.c.l.b16 %v258
      %v922 = vunpack.c.l.b16 %v259
      %v923 = vunpack.c.l.b16 %v260
      %v924 = vunpack.c.l.b16 %v261
      %v925 = vunpack.c.l.b16 %v262
      %v926 = vunpack.c.l.b16 %v263
      %v927 = vunpack.c.l.b16 %v264
      %v928 = vunpack.c.l.b16 %v265
      %v929 = vunpack.c.l.b16 %v266
      %v930 = vunpack.c.l.b16 %v267
      %v931 = vunpack.c.l.b16 %v268
      %v932 = vunpack.c.l.b16 %v269
      %v933 = vunpack.c.l.b16 %v270
      %v934 = vunpack.c.l.b16 %v271
      %v935 = vunpack.c.l.b16 %v272
      %v936 = vunpack.c.l.b16 %v273
      %v937 = vunpack.c.l.b16 %v274
      %v938 = vunpack.c.l.b16 %v275
      %v939 = vunpack.c.l.b16 %v276
      %v940 = vunpack.c.l.b16 %v277
      %v941 = vunpack.c.l.b16 %v278
      %v942 = vunpack.c.l.b16 %v279
      %v943 = vunpack.c.l.b16 %v280
      %v944 = vunpack.c.l.b16 %v281
      %v945 = vunpack.c.l.b16 %v282
      %v946 = vunpack.c.l.b16 %v283
      %v947 = vunpack.c.l.b16 %v284
      %v948 = vunpack.c.l.b16 %v285
      %v949 = vunpack.c.l.b16 %v286
      %v950 = vunpack.c.l.b16 %v287
      %v951 = vunpack.c.l.b16 %v288
      %v952 = vunpack.c.l.b16 %v289
      %v953 = vunpack.c.l.b16 %v290
      %v954 = vunpack.c.l.b16 %v291
      %v955 = vunpack.c.l.b16 %v292
      %v956 = vunpack.c.l.b16 %v293
      %v957 = vunpack.c.l.b16 %v294
      %v958 = vunpack.c.l.b16 %v295
      %v959 = vunpack.c.l.b16 %v296
      %v960 = vunpack.c.l.b16 %v297
      %v961 = vunpack.c.l.b16 %v298
      %v962 = vunpack.c.l.b16 %v299
      %v963 = vunpack.c.l.b16 %v300
      %v964 = vunpack.c.l.b16 %v301
      %v965 = vunpack.c.l.b16 %v302
      %v966 = vunpack.c.l.b16 %v303
      %v967 = vunpack.c.l.b16 %v304
      %v968 = vunpack.c.l.b16 %v305
      %v969 = vunpack.c.l.b16 %v306
      %v970 = vunpack.c.l.b16 %v307
      %v971 = vunpack.c.l.b16 %v308
      %v972 = vunpack.c.l.b16 %v309
      %v973 = vunpack.c.l.b16 %v310
      %v974 = vunpack.c.l.b16 %v311
      %v975 = vunpack.c.l.b16 %v312
      %v976 = vunpack.c.l.b16 %v313
      %v977 = vunpack.c.l.b16 %v314
      %v978 = vunpack.c.l.b16 %v315
      %v979 = vunpack.c.l.b16 %v316
      %v980 = vunpack.c.l.b16 %v317
      %v981 = vunpack.c.l.b16 %v318
      %v982 = vunpack.c.l.b16 %v319
      %v983 = vunpack.c.l.b16 %v320
      %v984 = vunpack.c.l.b16 %v321
      %v985 = vunpack.c.l.b16 %v322
      %v986 = vunpack.c.l.b16 %v323
      %v987 = vunpack.c.l.b16 %v324
      %v988 = vunpack.c.l.b16 %v325
      %v989 = vunpack.c.l.b16 %v326
      %v990 = vunpack.c.l.b16 %v327
      %v991 = vunpack.c.l.b16 %v328
      %v992 = vunpack.c.l.b16 %v329
      %v993 = vunpack.c.l.b16 %v330
      %v994 = vunpack.c.l.b16 %v331
      %v995 = vunpack.c.l.b16 %v332
      %v996 = vunpack.c.l.b16 %v333
      %v997 = vunpack.c.l.b16 %v334
      %v998 = vunpack.c.l.b16 %v335
      %v999 = vunpack.c.l.b16 %v336
      %v1000 = vunpack.c.l.b16 %v337
      %v1001 = vunpack.c.l.b16 %v338
      %v1002 = vunpack.c.l.b16 %v339
      %v1003 = vunpack.c.l.b16 %v340
      %v1004 = vunpack.c.l.b16 %v341
      %v1005 = vunpack.c.l.b16 %v342
      %v1006 = vunpack.c.l.b16 %v343
      %v1007 = vunpack.c.l.b16 %v344
      %v1008 = vunpack.c.l.b16 %v345
      %v1009 = vunpack.c.l.b16 %v346
      %v1010 = vunpack.c.l.b16 %v347
      %v1011 = vunpack.c.l.b16 %v348
      %v1012 = vunpack.c.l.b16 %v349
      %v1013 = vunpack.c.l.b16 %v350
      %v1014 = vunpack.c.l.b16 %v351
      %v1015 = vunpack.c.l.b16 %v352
      %v1016 = vunpack.c.l.b16 %v353
      %v1017 = vunpack.c.l.b16 %v354
      %v1018 = vunpack.c.l.b16 %v355
      %v1019 = vunpack.c.l.b16 %v356
      %v1020 = vunpack.c.l.b16 %v357
      %v1021 = vunpack.c.l.b16 %v358
      %v1022 = vunpack.c.l.b16 %v359
      %v1023 = vunpack.c.l.b16 %v360
      %v1024 = vunpack.c.l.b16 %v361
      %v1025 = vunpack.c.l.b16 %v362
      %v1026 = vunpack.c.l.b16 %v363
      %v1027 = vunpack.c.l.b16 %v364
      %v1028 = vunpack.c.l.b16 %v365
      %v1029 = vunpack.c.l.b16 %v366
      %v1030 = vunpack.c.l.b16 %v367
      %v1031 = vunpack.c.l.b16 %v368
      %v1032 = vunpack.c.l.b16 %v369
      %v1033 = vunpack.c.l.b16 %v370
      %v1034 = vunpack.c.l.b16 %v371
      %v1035 = vunpack.c.l.b16 %v372
      %v1036 = vunpack.c.l.b16 %v373
      %v1037 = vunpack.c.l.b16 %v374
      %v1038 = vunpack.c.l.b16 %v375
      %v1039 = vunpack.c.l.b16 %v376
      %v1040 = vunpack.c.l.b16 %v377
      %v1041 = vunpack.c.l.b16 %v378
      %v1042 = vunpack.c.l.b16 %v379
      %v1043 = vunpack.c.l.b16 %v380
      %v1044 = vunpack.c.l.b16 %v381
      %v1045 = vunpack.c.l.b16 %v382
      %v1046 = vunpack.c.l.b16 %v383
      %v1047 = vunpack.c.l.b16 %v384
      %v1048 = vunpack.c.l.b16 %v385
      %v1049 = vunpack.c.l.b16 %v386
      %v1050 = vunpack.c.l.b16 %v387
      %v1051 = vunpack.c.l.b16 %v388
      %v1052 = vunpack.c.l.b16 %v389
      %v1053 = vunpack.c.l.b16 %v390
      %v1054 = vunpack.c.l.b16 %v391
      %v1055 = vunpack.c.l.b16 %v392
      %v1056 = vunpack.c.l.b16 %v393
      %v1057 = vunpack.c.l.b16 %v394
      %v1058 = vunpack.c.l.b16 %v395
      %v1059 = vunpack.c.l.b16 %v396
      %v1060 = vunpack.c.l.b16 %v397
      %v1061 = vunpack.c.l.b16 %v398
      %v1062 = vunpack.c.l.b16 %v399
      %v1063 = vunpack.c.l.b16 %v400
      %v1064 = vunpack.c.l.b16 %v401
      %v1065 = vpack.c.b16 %v922, %v921
      %v1066 = vpack.c.b16 %v924, %v923
      %v1067 = vpack.c.b16 %v926, %v925
      %v1068 = vpack.c.b16 %v928, %v927
      %v1069 = vpack.c.b16 %v930, %v929
      %v1070 = vpack.c.b16 %v932, %v931
      %v1071 = vpack.c.b16 %v934, %v933
      %v1072 = vpack.c.b16 %v936, %v935
      %v1073 = vpack.c.b16 %v938, %v937
      %v1074 = vpack.c.b16 %v940, %v939
      %v1075 = vpack.c.b16 %v942, %v941
      %v1076 = vpack.c.b16 %v944, %v943
      %v1077 = vpack.c.b16 %v946, %v945
      %v1078 = vpack.c.b16 %v948, %v947
      %v1079 = vpack.c.b16 %v950, %v949
      %v1080 = vpack.c.b16 %v952, %v951
      %v1081 = vpack.c.b16 %v954, %v953
      %v1082 = vpack.c.b16 %v956, %v955
      %v1083 = vpack.c.b16 %v958, %v957
      %v1084 = vpack.c.b16 %v960, %v959
      %v1085 = vpack.c.b16 %v962, %v961
      %v1086 = vpack.c.b16 %v964, %v963
      %v1087 = vpack.c.b16 %v966, %v965
      %v1088 = vpack.c.b16 %v968, %v967
      %v1089 = vpack.c.b16 %v970, %v969
      %v1090 = vpack.c.b16 %v972, %v971
      %v1091 = vpack.c.b16 %v974, %v973
      %v1092 = vpack.c.b16 %v976, %v975
      %v1093 = vpack.c.b16 %v978, %v977
      %v1094 = vpack.c.b16 %v980, %v979
      %v1095 = vpack.c.b16 %v982, %v981
      %v1096 = vpack.c.b16 %v984, %v983
      %v1097 = vpack.c.b16 %v986, %v985
      %v1098 = vpack.c.b16 %v988, %v987
      %v1099 = vpack.c.b16 %v990, %v989
      %v1100 = vpack.c.b16 %v992, %v991
      %v1101 = vpack.c.b16 %v994, %v993
      %v1102 = vpack.c.b16 %v996, %v995
      %v1103 = vpack.c.b16 %v998, %v997
      %v1104 = vpack.c.b16 %v1000, %v999
      %v1105 = vpack.c.b16 %v1002, %v1001
      %v1106 = vpack.c.b16 %v1004, %v1003
      %v1107 = vpack.c.b16 %v1006, %v1005
      %v1108 = vpack.c.b16 %v1008, %v1007
      %v1109 = vpack.c.b16 %v1010, %v1009
      %v1110 = vpack.c.b16 %v1012, %v1011
      %v1111 = vpack.c.b16 %v1014, %v1013
      %v1112 = vpack.c.b16 %v1016, %v1015
      %v1113 = vpack.c.b16 %v1018, %v1017
      %v1114 = vpack.c.b16 %v1020, %v1019
      %v1115 = vpack.c.b16 %v1022, %v1021
      %v1116 = vpack.c.b16 %v1024, %v1023
      %v1117 = vpack.c.b16 %v1026, %v1025
      %v1118 = vpack.c.b16 %v1028, %v1027
      %v1119 = vpack.c.b16 %v1030, %v1029
      %v1120 = vpack.c.b16 %v1032, %v1031
      %v1121 = vpack.c.b16 %v1034, %v1033
      %v1122 = vpack.c.b16 %v1036, %v1035
      %v1123 = vpack.c.b16 %v1038, %v1037
      %v1124 = vpack.c.b16 %v1040, %v1039
      %v1125 = vpack.c.b16 %v1042, %v1041
      %v1126 = vpack.c.b16 %v1044, %v1043
      %v1127 = vpack.c.b16 %v1046, %v1045
      %v1128 = vpack.c.b16 %v1048, %v1047
      %v1129 = vpack.c.b16 %v1050, %v1049
      %v1130 = vpack.c.b16 %v1052, %v1051
      %v1131 = vpack.c.b16 %v1054, %v1053
      %v1132 = vpack.c.b16 %v1056, %v1055
      %v1133 = vpack.c.b16 %v1058, %v1057
      %v1134 = vpack.c.b16 %v1060, %v1059
      %v1135 = vpack.c.b16 %v1062, %v1061
      %v1136 = vpack.c.b16 %v1064, %v1063
      %1209 = vmatprep.subr.bf16.mxu0 0
      %1210 = vmatpush1.bf16.msra.mxu0 %v1072
      %1211 = vmatprep.subr.bf16.mxu0 0
      %1212 = vmatpush1.bf16.msra.mxu0 %v1071
      %1213 = vmatprep.subr.bf16.mxu0 0
      %1214 = vmatpush1.bf16.msra.mxu0 %v1070
      %1215 = vmatprep.subr.bf16.mxu0 0
      %1216 = vmatpush1.bf16.msra.mxu0 %v1069
      %1217 = vmatprep.subr.bf16.mxu0 0
      %1218 = vmatpush1.bf16.msra.mxu0 %v1068
      %1219 = vmatprep.subr.bf16.mxu0 0
      %1220 = vmatpush1.bf16.msra.mxu0 %v1067
      %1221 = vmatprep.subr.bf16.mxu0 0
      %1222 = vmatpush1.bf16.msra.mxu0 %v1066
      %1223 = vmatprep.subr.bf16.mxu0 0
      %1224 = vmatpush1.bf16.msra.mxu0 %v1065
      %1225 = vmatprep.subr.bf16.mxu0 0
      %1226 = vmatpush2.bf16.msra.mxu0 %v1080
      %1227 = vmatprep.subr.bf16.mxu0 0
      %1228 = vmatpush2.bf16.msra.mxu0 %v1079
      %1229 = vmatprep.subr.bf16.mxu0 0
      %1230 = vmatpush2.bf16.msra.mxu0 %v1078
      %1231 = vmatprep.subr.bf16.mxu0 0
      %1232 = vmatpush2.bf16.msra.mxu0 %v1077
      %1233 = vmatprep.subr.bf16.mxu0 0
      %1234 = vmatpush2.bf16.msra.mxu0 %v1076
      %1235 = vmatprep.subr.bf16.mxu0 0
      %1236 = vmatpush2.bf16.msra.mxu0 %v1075
      %1237 = vmatprep.subr.bf16.mxu0 0
      %1238 = vmatpush2.bf16.msra.mxu0 %v1074
      %1239 = vmatprep.subr.bf16.mxu0 0
      %1240 = vmatpush2.bf16.msra.mxu0 %v1073
      %1241 = vmatprep.mubr.bf16.mxu0 %v634
      %1242 = vmatmul.mubr.bf16.gmra.mxu0 %v633
      %v1243 = vpop.f32.mrf.mxu0
      %v1244 = vadd.f32 %v407, %v1243
      %v1245 = vpop.f32.mrf.mxu0
      %v1246 = vpop.f32.mrf.mxu0
      %v1247 = vadd.f32 %v407, %v1246
      %v1248 = vpop.f32.mrf.mxu0
      %1249 = vmatprep.mubr.bf16.mxu0 %v643
      %1250 = vmatmul.mubr.bf16.gmra.mxu0 %v642
      %v1251 = vpop.f32.mrf.mxu0
      %v1252 = vadd.f32 %v407, %v1251
      %v1253 = vpop.f32.mrf.mxu0
      %v1254 = vpop.f32.mrf.mxu0
      %v1255 = vadd.f32 %v407, %v1254
      %v1256 = vpop.f32.mrf.mxu0
      %1257 = vmatprep.mubr.bf16.mxu0 %v652
      %1258 = vmatmul.mubr.bf16.gmra.mxu0 %v651
      %v1259 = vpop.f32.mrf.mxu0
      %v1260 = vadd.f32 %v407, %v1259
      %v1261 = vpop.f32.mrf.mxu0
      %v1262 = vpop.f32.mrf.mxu0
      %v1263 = vadd.f32 %v407, %v1262
      %v1264 = vpop.f32.mrf.mxu0
      %1265 = vmatprep.mubr.bf16.mxu0 %v661
      %1266 = vmatmul.mubr.bf16.gmra.mxu0 %v660
      %v1267 = vpop.f32.mrf.mxu0
      %v1268 = vadd.f32 %v407, %v1267
      %v1269 = vpop.f32.mrf.mxu0
      %v1270 = vpop.f32.mrf.mxu0
      %v1271 = vadd.f32 %v407, %v1270
      %v1272 = vpop.f32.mrf.mxu0
      %1273 = vmatprep.mubr.bf16.mxu0 %v670
      %1274 = vmatmul.mubr.bf16.gmra.mxu0 %v669
      %v1275 = vpop.f32.mrf.mxu0
      %v1276 = vadd.f32 %v407, %v1275
      %v1277 = vpop.f32.mrf.mxu0
      %v1278 = vpop.f32.mrf.mxu0
      %v1279 = vadd.f32 %v407, %v1278
      %v1280 = vpop.f32.mrf.mxu0
      %1281 = vmatprep.mubr.bf16.mxu0 %v679
      %1282 = vmatmul.mubr.bf16.gmra.mxu0 %v678
      %v1283 = vpop.f32.mrf.mxu0
      %v1284 = vadd.f32 %v407, %v1283
      %v1285 = vpop.f32.mrf.mxu0
      %v1286 = vpop.f32.mrf.mxu0
      %v1287 = vadd.f32 %v407, %v1286
      %v1288 = vpop.f32.mrf.mxu0
      %1289 = vmatprep.mubr.bf16.mxu0 %v688
      %1290 = vmatmul.mubr.bf16.gmra.mxu0 %v687
      %v1291 = vpop.f32.mrf.mxu0
      %v1292 = vadd.f32 %v407, %v1291
      %v1293 = vpop.f32.mrf.mxu0
      %v1294 = vpop.f32.mrf.mxu0
      %v1295 = vadd.f32 %v407, %v1294
      %v1296 = vpop.f32.mrf.mxu0
      %1297 = vmatprep.mubr.bf16.mxu0 %v697
      %1298 = vmatmul.mubr.bf16.gmra.mxu0 %v696
      %v1299 = vpop.f32.mrf.mxu0
      %v1300 = vadd.f32 %v407, %v1299
      %v1301 = vpop.f32.mrf.mxu0
      %v1302 = vpop.f32.mrf.mxu0
      %v1303 = vadd.f32 %v407, %v1302
      %v1304 = vpop.f32.mrf.mxu0
      %1305 = vdwg.mxu0
      %1306 = vmatprep.subr.bf16.mxu0 0
      %1307 = vmatpush1.bf16.msra.mxu0 %v1088
      %1308 = vmatprep.subr.bf16.mxu0 0
      %1309 = vmatpush1.bf16.msra.mxu0 %v1087
      %1310 = vmatprep.subr.bf16.mxu0 0
      %1311 = vmatpush1.bf16.msra.mxu0 %v1086
      %1312 = vmatprep.subr.bf16.mxu0 0
      %1313 = vmatpush1.bf16.msra.mxu0 %v1085
      %1314 = vmatprep.subr.bf16.mxu0 0
      %1315 = vmatpush1.bf16.msra.mxu0 %v1084
      %1316 = vmatprep.subr.bf16.mxu0 0
      %1317 = vmatpush1.bf16.msra.mxu0 %v1083
      %1318 = vmatprep.subr.bf16.mxu0 0
      %1319 = vmatpush1.bf16.msra.mxu0 %v1082
      %1320 = vmatprep.subr.bf16.mxu0 0
      %1321 = vmatpush1.bf16.msra.mxu0 %v1081
      %1322 = vmatprep.subr.bf16.mxu0 0
      %1323 = vmatpush2.bf16.msra.mxu0 %v1096
      %1324 = vmatprep.subr.bf16.mxu0 0
      %1325 = vmatpush2.bf16.msra.mxu0 %v1095
      %1326 = vmatprep.subr.bf16.mxu0 0
      %1327 = vmatpush2.bf16.msra.mxu0 %v1094
      %1328 = vmatprep.subr.bf16.mxu0 0
      %1329 = vmatpush2.bf16.msra.mxu0 %v1093
      %1330 = vmatprep.subr.bf16.mxu0 0
      %1331 = vmatpush2.bf16.msra.mxu0 %v1092
      %1332 = vmatprep.subr.bf16.mxu0 0
      %1333 = vmatpush2.bf16.msra.mxu0 %v1091
      %1334 = vmatprep.subr.bf16.mxu0 0
      %1335 = vmatpush2.bf16.msra.mxu0 %v1090
      %1336 = vmatprep.subr.bf16.mxu0 0
      %1337 = vmatpush2.bf16.msra.mxu0 %v1089
      %1338 = vmatprep.mubr.bf16.mxu0 %v636
      %1339 = vmatmul.mubr.bf16.gmra.mxu0 %v635
      %v1340 = vpop.f32.mrf.mxu0
      %v1341 = vadd.f32 %v1244, %v1340
      %v1342 = vpop.f32.mrf.mxu0
      %v1343 = vpop.f32.mrf.mxu0
      %v1344 = vadd.f32 %v1247, %v1343
      %v1345 = vpop.f32.mrf.mxu0
      %1346 = vmatprep.mubr.bf16.mxu0 %v645
      %1347 = vmatmul.mubr.bf16.gmra.mxu0 %v644
      %v1348 = vpop.f32.mrf.mxu0
      %v1349 = vadd.f32 %v1252, %v1348
      %v1350 = vpop.f32.mrf.mxu0
      %v1351 = vpop.f32.mrf.mxu0
      %v1352 = vadd.f32 %v1255, %v1351
      %v1353 = vpop.f32.mrf.mxu0
      %1354 = vmatprep.mubr.bf16.mxu0 %v654
      %1355 = vmatmul.mubr.bf16.gmra.mxu0 %v653
      %v1356 = vpop.f32.mrf.mxu0
      %v1357 = vadd.f32 %v1260, %v1356
      %v1358 = vpop.f32.mrf.mxu0
      %v1359 = vpop.f32.mrf.mxu0
      %v1360 = vadd.f32 %v1263, %v1359
      %v1361 = vpop.f32.mrf.mxu0
      %1362 = vmatprep.mubr.bf16.mxu0 %v663
      %1363 = vmatmul.mubr.bf16.gmra.mxu0 %v662
      %v1364 = vpop.f32.mrf.mxu0
      %v1365 = vadd.f32 %v1268, %v1364
      %v1366 = vpop.f32.mrf.mxu0
      %v1367 = vpop.f32.mrf.mxu0
      %v1368 = vadd.f32 %v1271, %v1367
      %v1369 = vpop.f32.mrf.mxu0
      %1370 = vmatprep.mubr.bf16.mxu0 %v672
      %1371 = vmatmul.mubr.bf16.gmra.mxu0 %v671
      %v1372 = vpop.f32.mrf.mxu0
      %v1373 = vadd.f32 %v1276, %v1372
      %v1374 = vpop.f32.mrf.mxu0
      %v1375 = vpop.f32.mrf.mxu0
      %v1376 = vadd.f32 %v1279, %v1375
      %v1377 = vpop.f32.mrf.mxu0
      %1378 = vmatprep.mubr.bf16.mxu0 %v681
      %1379 = vmatmul.mubr.bf16.gmra.mxu0 %v680
      %v1380 = vpop.f32.mrf.mxu0
      %v1381 = vadd.f32 %v1284, %v1380
      %v1382 = vpop.f32.mrf.mxu0
      %v1383 = vpop.f32.mrf.mxu0
      %v1384 = vadd.f32 %v1287, %v1383
      %v1385 = vpop.f32.mrf.mxu0
      %1386 = vmatprep.mubr.bf16.mxu0 %v690
      %1387 = vmatmul.mubr.bf16.gmra.mxu0 %v689
      %v1388 = vpop.f32.mrf.mxu0
      %v1389 = vadd.f32 %v1292, %v1388
      %v1390 = vpop.f32.mrf.mxu0
      %v1391 = vpop.f32.mrf.mxu0
      %v1392 = vadd.f32 %v1295, %v1391
      %v1393 = vpop.f32.mrf.mxu0
      %1394 = vmatprep.mubr.bf16.mxu0 %v699
      %1395 = vmatmul.mubr.bf16.gmra.mxu0 %v698
      %v1396 = vpop.f32.mrf.mxu0
      %v1397 = vadd.f32 %v1300, %v1396
      %v1398 = vpop.f32.mrf.mxu0
      %v1399 = vpop.f32.mrf.mxu0
      %v1400 = vadd.f32 %v1303, %v1399
      %v1401 = vpop.f32.mrf.mxu0
      %1402 = vdwg.mxu0
      %1403 = vmatprep.subr.bf16.mxu0 0
      %1404 = vmatpush1.bf16.msra.mxu0 %v1104
      %1405 = vmatprep.subr.bf16.mxu0 0
      %1406 = vmatpush1.bf16.msra.mxu0 %v1103
      %1407 = vmatprep.subr.bf16.mxu0 0
      %1408 = vmatpush1.bf16.msra.mxu0 %v1102
      %1409 = vmatprep.subr.bf16.mxu0 0
      %1410 = vmatpush1.bf16.msra.mxu0 %v1101
      %1411 = vmatprep.subr.bf16.mxu0 0
      %1412 = vmatpush1.bf16.msra.mxu0 %v1100
      %1413 = vmatprep.subr.bf16.mxu0 0
      %1414 = vmatpush1.bf16.msra.mxu0 %v1099
      %1415 = vmatprep.subr.bf16.mxu0 0
      %1416 = vmatpush1.bf16.msra.mxu0 %v1098
      %1417 = vmatprep.subr.bf16.mxu0 0
      %1418 = vmatpush1.bf16.msra.mxu0 %v1097
      %1419 = vmatprep.subr.bf16.mxu0 0
      %1420 = vmatpush2.bf16.msra.mxu0 %v1112
      %1421 = vmatprep.subr.bf16.mxu0 0
      %1422 = vmatpush2.bf16.msra.mxu0 %v1111
      %1423 = vmatprep.subr.bf16.mxu0 0
      %1424 = vmatpush2.bf16.msra.mxu0 %v1110
      %1425 = vmatprep.subr.bf16.mxu0 0
      %1426 = vmatpush2.bf16.msra.mxu0 %v1109
      %1427 = vmatprep.subr.bf16.mxu0 0
      %1428 = vmatpush2.bf16.msra.mxu0 %v1108
      %1429 = vmatprep.subr.bf16.mxu0 0
      %1430 = vmatpush2.bf16.msra.mxu0 %v1107
      %1431 = vmatprep.subr.bf16.mxu0 0
      %1432 = vmatpush2.bf16.msra.mxu0 %v1106
      %1433 = vmatprep.subr.bf16.mxu0 0
      %1434 = vmatpush2.bf16.msra.mxu0 %v1105
      %1435 = vmatprep.mubr.bf16.mxu0 %v638
      %1436 = vmatmul.mubr.bf16.gmra.mxu0 %v637
      %v1437 = vpop.f32.mrf.mxu0
      %v1438 = vadd.f32 %v1341, %v1437
      %v1439 = vpop.f32.mrf.mxu0
      %v1440 = vpop.f32.mrf.mxu0
      %v1441 = vadd.f32 %v1344, %v1440
      %v1442 = vpop.f32.mrf.mxu0
      %1443 = vmatprep.mubr.bf16.mxu0 %v647
      %1444 = vmatmul.mubr.bf16.gmra.mxu0 %v646
      %v1445 = vpop.f32.mrf.mxu0
      %v1446 = vadd.f32 %v1349, %v1445
      %v1447 = vpop.f32.mrf.mxu0
      %v1448 = vpop.f32.mrf.mxu0
      %v1449 = vadd.f32 %v1352, %v1448
      %v1450 = vpop.f32.mrf.mxu0
      %1451 = vmatprep.mubr.bf16.mxu0 %v656
      %1452 = vmatmul.mubr.bf16.gmra.mxu0 %v655
      %v1453 = vpop.f32.mrf.mxu0
      %v1454 = vadd.f32 %v1357, %v1453
      %v1455 = vpop.f32.mrf.mxu0
      %v1456 = vpop.f32.mrf.mxu0
      %v1457 = vadd.f32 %v1360, %v1456
      %v1458 = vpop.f32.mrf.mxu0
      %1459 = vmatprep.mubr.bf16.mxu0 %v665
      %1460 = vmatmul.mubr.bf16.gmra.mxu0 %v664
      %v1461 = vpop.f32.mrf.mxu0
      %v1462 = vadd.f32 %v1365, %v1461
      %v1463 = vpop.f32.mrf.mxu0
      %v1464 = vpop.f32.mrf.mxu0
      %v1465 = vadd.f32 %v1368, %v1464
      %v1466 = vpop.f32.mrf.mxu0
      %1467 = vmatprep.mubr.bf16.mxu0 %v674
      %1468 = vmatmul.mubr.bf16.gmra.mxu0 %v673
      %v1469 = vpop.f32.mrf.mxu0
      %v1470 = vadd.f32 %v1373, %v1469
      %v1471 = vpop.f32.mrf.mxu0
      %v1472 = vpop.f32.mrf.mxu0
      %v1473 = vadd.f32 %v1376, %v1472
      %v1474 = vpop.f32.mrf.mxu0
      %1475 = vmatprep.mubr.bf16.mxu0 %v683
      %1476 = vmatmul.mubr.bf16.gmra.mxu0 %v682
      %v1477 = vpop.f32.mrf.mxu0
      %v1478 = vadd.f32 %v1381, %v1477
      %v1479 = vpop.f32.mrf.mxu0
      %v1480 = vpop.f32.mrf.mxu0
      %v1481 = vadd.f32 %v1384, %v1480
      %v1482 = vpop.f32.mrf.mxu0
      %1483 = vmatprep.mubr.bf16.mxu0 %v692
      %1484 = vmatmul.mubr.bf16.gmra.mxu0 %v691
      %v1485 = vpop.f32.mrf.mxu0
      %v1486 = vadd.f32 %v1389, %v1485
      %v1487 = vpop.f32.mrf.mxu0
      %v1488 = vpop.f32.mrf.mxu0
      %v1489 = vadd.f32 %v1392, %v1488
      %v1490 = vpop.f32.mrf.mxu0
      %1491 = vmatprep.mubr.bf16.mxu0 %v701
      %1492 = vmatmul.mubr.bf16.gmra.mxu0 %v700
      %v1493 = vpop.f32.mrf.mxu0
      %v1494 = vadd.f32 %v1397, %v1493
      %v1495 = vpop.f32.mrf.mxu0
      %v1496 = vpop.f32.mrf.mxu0
      %v1497 = vadd.f32 %v1400, %v1496
      %v1498 = vpop.f32.mrf.mxu0
      %1499 = vdwg.mxu0
      %1500 = vmatprep.subr.bf16.mxu0 0
      %1501 = vmatpush1.bf16.msra.mxu0 %v1120
      %1502 = vmatprep.subr.bf16.mxu0 0
      %1503 = vmatpush1.bf16.msra.mxu0 %v1119
      %1504 = vmatprep.subr.bf16.mxu0 0
      %1505 = vmatpush1.bf16.msra.mxu0 %v1118
      %1506 = vmatprep.subr.bf16.mxu0 0
      %1507 = vmatpush1.bf16.msra.mxu0 %v1117
      %1508 = vmatprep.subr.bf16.mxu0 0
      %1509 = vmatpush1.bf16.msra.mxu0 %v1116
      %1510 = vmatprep.subr.bf16.mxu0 0
      %1511 = vmatpush1.bf16.msra.mxu0 %v1115
      %1512 = vmatprep.subr.bf16.mxu0 0
      %1513 = vmatpush1.bf16.msra.mxu0 %v1114
      %1514 = vmatprep.subr.bf16.mxu0 0
      %1515 = vmatpush1.bf16.msra.mxu0 %v1113
      %1516 = vmatprep.subr.bf16.mxu0 0
      %1517 = vmatpush2.bf16.msra.mxu0 %v1128
      %1518 = vmatprep.subr.bf16.mxu0 0
      %1519 = vmatpush2.bf16.msra.mxu0 %v1127
      %1520 = vmatprep.subr.bf16.mxu0 0
      %1521 = vmatpush2.bf16.msra.mxu0 %v1126
      %1522 = vmatprep.subr.bf16.mxu0 0
      %1523 = vmatpush2.bf16.msra.mxu0 %v1125
      %1524 = vmatprep.subr.bf16.mxu0 0
      %1525 = vmatpush2.bf16.msra.mxu0 %v1124
      %1526 = vmatprep.subr.bf16.mxu0 0
      %1527 = vmatpush2.bf16.msra.mxu0 %v1123
      %1528 = vmatprep.subr.bf16.mxu0 0
      %1529 = vmatpush2.bf16.msra.mxu0 %v1122
      %1530 = vmatprep.subr.bf16.mxu0 0
      %1531 = vmatpush2.bf16.msra.mxu0 %v1121
      %1532 = vmatprep.mubr.bf16.mxu0 %v640
      %1533 = vmatmul.mubr.bf16.gmra.mxu0 %v639
      %v1534 = vpop.f32.mrf.mxu0
      %v1535 = vadd.f32 %v1438, %v1534
      %v1536 = vpop.f32.mrf.mxu0
      %v1537 = vpop.f32.mrf.mxu0
      %v1538 = vadd.f32 %v1441, %v1537
      %v1539 = vpop.f32.mrf.mxu0
      %1540 = vmatprep.mubr.bf16.mxu0 %v649
      %1541 = vmatmul.mubr.bf16.gmra.mxu0 %v648
      %v1542 = vpop.f32.mrf.mxu0
      %v1543 = vadd.f32 %v1446, %v1542
      %v1544 = vpop.f32.mrf.mxu0
      %v1545 = vpop.f32.mrf.mxu0
      %v1546 = vadd.f32 %v1449, %v1545
      %v1547 = vpop.f32.mrf.mxu0
      %1548 = vmatprep.mubr.bf16.mxu0 %v658
      %1549 = vmatmul.mubr.bf16.gmra.mxu0 %v657
      %v1550 = vpop.f32.mrf.mxu0
      %v1551 = vadd.f32 %v1454, %v1550
      %v1552 = vpop.f32.mrf.mxu0
      %v1553 = vpop.f32.mrf.mxu0
      %v1554 = vadd.f32 %v1457, %v1553
      %v1555 = vpop.f32.mrf.mxu0
      %1556 = vmatprep.mubr.bf16.mxu0 %v667
      %1557 = vmatmul.mubr.bf16.gmra.mxu0 %v666
      %v1558 = vpop.f32.mrf.mxu0
      %v1559 = vadd.f32 %v1462, %v1558
      %v1560 = vpop.f32.mrf.mxu0
      %v1561 = vpop.f32.mrf.mxu0
      %v1562 = vadd.f32 %v1465, %v1561
      %v1563 = vpop.f32.mrf.mxu0
      %1564 = vmatprep.mubr.bf16.mxu0 %v676
      %1565 = vmatmul.mubr.bf16.gmra.mxu0 %v675
      %v1566 = vpop.f32.mrf.mxu0
      %v1567 = vadd.f32 %v1470, %v1566
      %v1568 = vpop.f32.mrf.mxu0
      %v1569 = vpop.f32.mrf.mxu0
      %v1570 = vadd.f32 %v1473, %v1569
      %v1571 = vpop.f32.mrf.mxu0
      %1572 = vmatprep.mubr.bf16.mxu0 %v685
      %1573 = vmatmul.mubr.bf16.gmra.mxu0 %v684
      %v1574 = vpop.f32.mrf.mxu0
      %v1575 = vadd.f32 %v1478, %v1574
      %v1576 = vpop.f32.mrf.mxu0
      %v1577 = vpop.f32.mrf.mxu0
      %v1578 = vadd.f32 %v1481, %v1577
      %v1579 = vpop.f32.mrf.mxu0
      %1580 = vmatprep.mubr.bf16.mxu0 %v694
      %1581 = vmatmul.mubr.bf16.gmra.mxu0 %v693
      %v1582 = vpop.f32.mrf.mxu0
      %v1583 = vadd.f32 %v1486, %v1582
      %v1584 = vpop.f32.mrf.mxu0
      %v1585 = vpop.f32.mrf.mxu0
      %v1586 = vadd.f32 %v1489, %v1585
      %v1587 = vpop.f32.mrf.mxu0
      %1588 = vmatprep.mubr.bf16.mxu0 %v703
      %1589 = vmatmul.mubr.bf16.gmra.mxu0 %v702
      %v1590 = vpop.f32.mrf.mxu0
      %v1591 = vadd.f32 %v1494, %v1590
      %v1592 = vpop.f32.mrf.mxu0
      %v1593 = vpop.f32.mrf.mxu0
      %v1594 = vadd.f32 %v1497, %v1593
      %v1595 = vpop.f32.mrf.mxu0
      %1596 = vdwg.mxu0
      %1597 = vmatprep.subr.bf16.mxu0 0
      %1598 = vmatpush1.bf16.msra.mxu0 %v1136
      %1599 = vmatprep.subr.bf16.mxu0 0
      %1600 = vmatpush1.bf16.msra.mxu0 %v1135
      %1601 = vmatprep.subr.bf16.mxu0 0
      %1602 = vmatpush1.bf16.msra.mxu0 %v1134
      %1603 = vmatprep.subr.bf16.mxu0 0
      %1604 = vmatpush1.bf16.msra.mxu0 %v1133
      %1605 = vmatprep.subr.bf16.mxu0 0
      %1606 = vmatpush1.bf16.msra.mxu0 %v1132
      %1607 = vmatprep.subr.bf16.mxu0 0
      %1608 = vmatpush1.bf16.msra.mxu0 %v1131
      %1609 = vmatprep.subr.bf16.mxu0 0
      %1610 = vmatpush1.bf16.msra.mxu0 %v1130
      %1611 = vmatprep.subr.bf16.mxu0 0
      %1612 = vmatpush1.bf16.msra.mxu0 %v1129
      %1613 = vmatprep.subr.bf16.mxu0 0
      %1614 = vmatpush2.bf16.msra.mxu0 0
      %1615 = vmatprep.subr.bf16.mxu0 0
      %1616 = vmatpush2.bf16.msra.mxu0 0
      %1617 = vmatprep.subr.bf16.mxu0 0
      %1618 = vmatpush2.bf16.msra.mxu0 0
      %1619 = vmatprep.subr.bf16.mxu0 0
      %1620 = vmatpush2.bf16.msra.mxu0 0
      %1621 = vmatprep.subr.bf16.mxu0 0
      %1622 = vmatpush2.bf16.msra.mxu0 0
      %1623 = vmatprep.subr.bf16.mxu0 0
      %1624 = vmatpush2.bf16.msra.mxu0 0
      %1625 = vmatprep.subr.bf16.mxu0 0
      %1626 = vmatpush2.bf16.msra.mxu0 0
      %1627 = vmatprep.subr.bf16.mxu0 0
      %1628 = vmatpush2.bf16.msra.mxu0 0
      %1629 = vmatprep.mubr.bf16.mxu0 0
      %1630 = vmatmul.mubr.bf16.gmra.mxu0 %v641
      %v1631 = vpop.f32.mrf.mxu0
      %v1632 = vadd.f32 %v1535, %v1631
      %v1633 = vpop.f32.mrf.mxu0
      %v1634 = vpop.f32.mrf.mxu0
      %v1635 = vadd.f32 %v1538, %v1634
      %v1636 = vpop.f32.mrf.mxu0
      %1637 = vmatprep.mubr.bf16.mxu0 0
      %1638 = vmatmul.mubr.bf16.gmra.mxu0 %v650
      %v1639 = vpop.f32.mrf.mxu0
      %v1640 = vadd.f32 %v1543, %v1639
      %v1641 = vpop.f32.mrf.mxu0
      %v1642 = vpop.f32.mrf.mxu0
      %v1643 = vadd.f32 %v1546, %v1642
      %v1644 = vpop.f32.mrf.mxu0
      %1645 = vmatprep.mubr.bf16.mxu0 0
      %1646 = vmatmul.mubr.bf16.gmra.mxu0 %v659
      %v1647 = vpop.f32.mrf.mxu0
      %v1648 = vadd.f32 %v1551, %v1647
      %v1649 = vpop.f32.mrf.mxu0
      %v1650 = vpop.f32.mrf.mxu0
      %v1651 = vadd.f32 %v1554, %v1650
      %v1652 = vpop.f32.mrf.mxu0
      %1653 = vmatprep.mubr.bf16.mxu0 0
      %1654 = vmatmul.mubr.bf16.gmra.mxu0 %v668
      %v1655 = vpop.f32.mrf.mxu0
      %v1656 = vadd.f32 %v1559, %v1655
      %v1657 = vpop.f32.mrf.mxu0
      %v1658 = vpop.f32.mrf.mxu0
      %v1659 = vadd.f32 %v1562, %v1658
      %v1660 = vpop.f32.mrf.mxu0
      %1661 = vmatprep.mubr.bf16.mxu0 0
      %1662 = vmatmul.mubr.bf16.gmra.mxu0 %v677
      %v1663 = vpop.f32.mrf.mxu0
      %v1664 = vadd.f32 %v1567, %v1663
      %v1665 = vpop.f32.mrf.mxu0
      %v1666 = vpop.f32.mrf.mxu0
      %v1667 = vadd.f32 %v1570, %v1666
      %v1668 = vpop.f32.mrf.mxu0
      %1669 = vmatprep.mubr.bf16.mxu0 0
      %1670 = vmatmul.mubr.bf16.gmra.mxu0 %v686
      %v1671 = vpop.f32.mrf.mxu0
      %v1672 = vadd.f32 %v1575, %v1671
      %v1673 = vpop.f32.mrf.mxu0
      %v1674 = vpop.f32.mrf.mxu0
      %v1675 = vadd.f32 %v1578, %v1674
      %v1676 = vpop.f32.mrf.mxu0
      %1677 = vmatprep.mubr.bf16.mxu0 0
      %1678 = vmatmul.mubr.bf16.gmra.mxu0 %v695
      %v1679 = vpop.f32.mrf.mxu0
      %v1680 = vadd.f32 %v1583, %v1679
      %v1681 = vpop.f32.mrf.mxu0
      %v1682 = vpop.f32.mrf.mxu0
      %v1683 = vadd.f32 %v1586, %v1682
      %v1684 = vpop.f32.mrf.mxu0
      %1685 = vmatprep.mubr.bf16.mxu0 0
      %1686 = vmatmul.mubr.bf16.gmra.mxu0 %v704
      %v1687 = vpop.f32.mrf.mxu0
      %v1688 = vadd.f32 %v1591, %v1687
      %v1689 = vpop.f32.mrf.mxu0
      %v1690 = vpop.f32.mrf.mxu0
      %v1691 = vadd.f32 %v1594, %v1690
      %v1692 = vpop.f32.mrf.mxu0
      %1693 = vdwg.mxu0
      %v1694 = vmax.f32 %v1632, 0.0
      %v1695 = vmax.f32 %v1635, 0.0
      %v1696 = vmax.f32 %v1640, 0.0
      %v1697 = vmax.f32 %v1643, 0.0
      %v1698 = vmax.f32 %v1648, 0.0
      %v1699 = vmax.f32 %v1651, 0.0
      %v1700 = vmax.f32 %v1656, 0.0
      %v1701 = vmax.f32 %v1659, 0.0
      %v1702 = vmax.f32 %v1664, 0.0
      %v1703 = vmax.f32 %v1667, 0.0
      %v1704 = vmax.f32 %v1672, 0.0
      %v1705 = vmax.f32 %v1675, 0.0
      %v1706 = vmax.f32 %v1680, 0.0
      %v1707 = vmax.f32 %v1683, 0.0
      %v1708 = vmax.f32 %v1688, 0.0
      %v1709 = vmax.f32 %v1691, 0.0
      %v1710 = vpack.c.bf16 %v1695, %v1694
      %v1711 = vpack.c.bf16 %v1697, %v1696
      %v1712 = vpack.c.bf16 %v1699, %v1698
      %v1713 = vpack.c.bf16 %v1701, %v1700
      %v1714 = vpack.c.bf16 %v1703, %v1702
      %v1715 = vpack.c.bf16 %v1705, %v1704
      %v1716 = vpack.c.bf16 %v1707, %v1706
      %v1717 = vpack.c.bf16 %v1709, %v1708
      %v1726 = vunpack.c.l.b16 %v1710
      %v1727 = vunpack.c.h.b16 %v1710
      %v1728 = vunpack.c.l.b16 %v1711
      %v1729 = vunpack.c.h.b16 %v1711
      %v1730 = vunpack.c.l.b16 %v1712
      %v1731 = vunpack.c.h.b16 %v1712
      %v1732 = vunpack.c.l.b16 %v1713
      %v1733 = vunpack.c.h.b16 %v1713
      %v1734 = vunpack.c.l.b16 %v1714
      %v1735 = vunpack.c.h.b16 %v1714
      %v1736 = vunpack.c.l.b16 %v1715
      %v1737 = vunpack.c.h.b16 %v1715
      %v1738 = vunpack.c.l.b16 %v1716
      %v1739 = vunpack.c.h.b16 %v1716
      %v1740 = vunpack.c.l.b16 %v1717
      %v1741 = vunpack.c.h.b16 %v1717
      %v1742 = vpack.c.b16 %v1726, %v1726
      %v1743 = vpack.c.b16 %v1727, %v1727
      %v1744 = vpack.c.b16 %v1728, %v1728
      %v1745 = vpack.c.b16 %v1729, %v1729
      %v1746 = vpack.c.b16 %v1730, %v1730
      %v1747 = vpack.c.b16 %v1731, %v1731
      %v1748 = vpack.c.b16 %v1732, %v1732
      %v1749 = vpack.c.b16 %v1733, %v1733
      %v1750 = vpack.c.b16 %v1734, %v1734
      %v1751 = vpack.c.b16 %v1735, %v1735
      %v1752 = vpack.c.b16 %v1736, %v1736
      %v1753 = vpack.c.b16 %v1737, %v1737
      %v1754 = vpack.c.b16 %v1738, %v1738
      %v1755 = vpack.c.b16 %v1739, %v1739
      %v1756 = vpack.c.b16 %v1740, %v1740
      %v1757 = vpack.c.b16 %v1741, %v1741
      %1774 = vst [vmem:[%s175] sm:$0xf] %v1742
      %1775 = vst [vmem:[%s175 + $0x4] sm:$0xf] %v1743
      %1776 = vst [vmem:[%s175 + $0x8] sm:$0xf] %v1744
      %1777 = vst [vmem:[%s175 + $0xc] sm:$0xf] %v1745
      %1778 = vst [vmem:[%s175 + $0x10] sm:$0xf] %v1746
      %1779 = vst [vmem:[%s175 + $0x14] sm:$0xf] %v1747
      %1780 = vst [vmem:[%s175 + $0x18] sm:$0xf] %v1748
      %1781 = vst [vmem:[%s175 + $0x1c] sm:$0xf] %v1749
      %1782 = vst [vmem:[%s175 + $0x20] sm:$0xf] %v1750
      %1783 = vst [vmem:[%s175 + $0x24] sm:$0xf] %v1751
      %1784 = vst [vmem:[%s175 + $0x28] sm:$0xf] %v1752
      %1785 = vst [vmem:[%s175 + $0x2c] sm:$0xf] %v1753
      %1786 = vst [vmem:[%s175 + $0x30] sm:$0xf] %v1754
      %1787 = vst [vmem:[%s175 + $0x34] sm:$0xf] %v1755
      %1788 = vst [vmem:[%s175 + $0x38] sm:$0xf] %v1756
      %1789 = vst [vmem:[%s175 + $0x3c] sm:$0xf] %v1757
      %s1790 = smul.u32 16, %s14
      %p1791 = scmp.lt.s32.totalorder %s1790, 31
      %s1792 = scalar_select %p1791, %s1790, 31
      %s1793 = smul.addr %s1792, 4
      %s1794 = scalar_lea.vmem %s3, %s1793
      // Predicated region
      $region33: #{fcos_forward.28} parent=31 // pred_check
        %p1795 = pneg %p100
      $region34: #{fcos_forward.28} parent=31 // pred_check_branch
        %1797 = sbr.rel (%p1795) target = $region36
      $region35: #{fcos_forward.28} parent=31 // pred_region
        %s1798 = smul.u32 16, %s14
      $region36: #{fcos_forward.28} parent=31 // pred_fallthru
        _
    $region32: #{fcos_forward.28} parent=5 // pred_fallthru
      _
    %p1799 = scmp.le.s32.totalorder 2, %s9
    // Predicated region
    $region37: #{fcos_forward.28} parent=5 // pred_check
      %p1800 = pneg %p1799
    $region38: #{fcos_forward.28} parent=5 // pred_check_branch
      %1802 = sbr.rel (%p1800) target = $region40
    $region39: #{fcos_forward.28} parent=5 // pred_region
      %s1803 = ssub.s32 %s9, 2
      // Predicated region
      $region41: #{fcos_forward.28} parent=39 // pred_check
        %p1804 = pneg %p106
      $region42: #{fcos_forward.28} parent=39 // pred_check_branch
        %1806 = sbr.rel (%p1804) target = $region44
      $region43: #{fcos_forward.28} parent=39 // pred_region
        %s1807 = smul.u32 16, %s15
        %p1808 = scmp.lt.s32.totalorder %s1807, 31
        %s1809 = scalar_select %p1808, %s1807, 31
        %s1810 = smul.addr %s1809, 4
        %s1811 = scalar_lea.vmem %s3, %s1810
      $region44: #{fcos_forward.28} parent=39 // pred_fallthru
        _
    $region40: #{fcos_forward.28} parent=5 // pred_fallthru
      _
  $region6: #{fcos_forward.28} parent=0 // loop_footer
    %s13 = sadd.s32 1, %s9
  $region7: #{fcos_forward.28} parent=0 // loop_footer_branch
    %8 = sbr.rel target = $region3
  $region8: #{fcos_forward.28} parent=0 // loop_exit
    _

// kernel: fcos_forward.29
$region0: #{fcos_forward.29}
  #allocation0 [shape = 'u32[]', space=smem, size = 0x4, offset = 0x4, fixed_abs, tag = 'smem constant byte address 0x4 - core index']
  #allocation1 [shape = 'u32[144,128]{1,0:T(1,128)}', space=vmem, size = 0x12000, scoped, tag = 'internal scratch']
  %s0 = inlined_call_operand.vmem [shape: bf16[256,1152], index: 0, kind: input, shape index: {}]
  %s1 = inlined_call_operand.vmem [shape: bf16[1152,128], index: 1, kind: input, shape index: {}]
  %s2 = inlined_call_operand.vmem [shape: f32[1,128], index: 2, kind: input, shape index: {}]
  %s3 = inlined_call_operand.vmem [shape: f32[256,128], index: 3, kind: output, shape index: {}]
  %s4 = sld [smem:[#allocation0]]
  $region45: #{fcos_forward.29} parent=0
    _
  %s6 = ssub.s32 1, %s4
  %s7 = scalar_select 0, %s6, %s4
  loop: start=0, step=1, limit=4
  $region2: #{fcos_forward.29} parent=0 // loop_pre_header
    _
  $region3: #{fcos_forward.29} parent=0 // loop_header
    %s9 = sphi 0, %s13
    %p10 = scmp.ge.s32.totalorder %s9, 4
    %s19 = sphi 0, %s21
    %s22 = sphi 0, %s19
    %s23 = sphi 0, %s22
    %s39 = sphi 0, %s23
    %s43 = sphi 0, %s43
    %s45 = sphi 0, %s43
    %s46 = sphi 0, %s45
    %s60 = sphi 0, %s46
    %s64 = sphi 0, %s64
    %s66 = sphi 0, %s64
    %s67 = sphi 0, %s66
    %s81 = sphi 0, %s67
    %s87 = sphi 0, %s89
    %s90 = sphi 0, %s87
    %s91 = sphi 0, %s90
    %s107 = sphi 0, %s91
  $region4: #{fcos_forward.29} parent=0 // loop_header_branch
    %12 = sbr.rel (%p10) target = $region8
  $region5: #{fcos_forward.29} parent=0 // loop_body
    %s14 = ssub.s32 %s9, 1
    %s15 = ssub.s32 %s9, 2
    %s16 = sadd.s32 %s9, 1
    %s17 = ssub.s32 %s9, %s16
    %p18 = scmp.eq.s32.totalorder %s17, 0
    %s20 = sadd.s32 %s19, 1
    %s21 = scalar_select %p18, %s19, %s20
    %p24 = pneg %p18
    %p25 = scmp.eq.s32.totalorder %s9, 1
    %p26 = por %p24, %p25
    %p27 = scmp.ne.s32.totalorder %s19, %s22
    %p28 = scmp.eq.s32.totalorder %s9, 0
    %p29 = por %p27, %p28
    %p30 = scmp.ne.s32.totalorder %s19, %s22
    %p31 = scmp.eq.s32.totalorder %s14, 1
    %p32 = por %p30, %p31
    %p33 = scmp.ne.s32.totalorder %s22, %s23
    %p34 = scmp.eq.s32.totalorder %s14, 0
    %p35 = por %p33, %p34
    %p36 = scmp.ne.s32.totalorder %s22, %s23
    %p37 = scmp.eq.s32.totalorder %s15, 1
    %p38 = por %p36, %p37
    %p40 = scmp.ne.s32.totalorder %s23, %s39
    %p41 = scmp.eq.s32.totalorder %s15, 0
    %p42 = por %p40, %p41
    %s44 = sadd.s32 %s43, 1
    %p47 = scmp.eq.s32.totalorder %s9, 1
    %p48 = scmp.ne.s32.totalorder %s43, %s45
    %p49 = scmp.eq.s32.totalorder %s9, 0
    %p50 = por %p48, %p49
    %p51 = scmp.ne.s32.totalorder %s43, %s45
    %p52 = scmp.eq.s32.totalorder %s14, 1
    %p53 = por %p51, %p52
    %p54 = scmp.ne.s32.totalorder %s45, %s46
    %p55 = scmp.eq.s32.totalorder %s14, 0
    %p56 = por %p54, %p55
    %p57 = scmp.ne.s32.totalorder %s45, %s46
    %p58 = scmp.eq.s32.totalorder %s15, 1
    %p59 = por %p57, %p58
    %p61 = scmp.ne.s32.totalorder %s46, %s60
    %p62 = scmp.eq.s32.totalorder %s15, 0
    %p63 = por %p61, %p62
    %s65 = sadd.s32 %s64, 1
    %p68 = scmp.eq.s32.totalorder %s9, 1
    %p69 = scmp.ne.s32.totalorder %s64, %s66
    %p70 = scmp.eq.s32.totalorder %s9, 0
    %p71 = por %p69, %p70
    %p72 = scmp.ne.s32.totalorder %s64, %s66
    %p73 = scmp.eq.s32.totalorder %s14, 1
    %p74 = por %p72, %p73
    %p75 = scmp.ne.s32.totalorder %s66, %s67
    %p76 = scmp.eq.s32.totalorder %s14, 0
    %p77 = por %p75, %p76
    %p78 = scmp.ne.s32.totalorder %s66, %s67
    %p79 = scmp.eq.s32.totalorder %s15, 1
    %p80 = por %p78, %p79
    %p82 = scmp.ne.s32.totalorder %s67, %s81
    %p83 = scmp.eq.s32.totalorder %s15, 0
    %p84 = por %p82, %p83
    %s85 = ssub.s32 %s9, %s16
    %p86 = scmp.eq.s32.totalorder %s85, 0
    %s88 = sadd.s32 %s87, 1
    %s89 = scalar_select %p86, %s87, %s88
    %p92 = pneg %p86
    %p93 = scmp.eq.s32.totalorder %s9, 1
    %p94 = por %p92, %p93
    %p95 = scmp.ne.s32.totalorder %s87, %s90
    %p96 = scmp.eq.s32.totalorder %s9, 0
    %p97 = por %p95, %p96
    %p98 = scmp.ne.s32.totalorder %s87, %s90
    %p99 = scmp.eq.s32.totalorder %s14, 1
    %p100 = por %p98, %p99
    %p101 = scmp.ne.s32.totalorder %s90, %s91
    %p102 = scmp.eq.s32.totalorder %s14, 0
    %p103 = por %p101, %p102
    %p104 = scmp.ne.s32.totalorder %s90, %s91
    %p105 = scmp.eq.s32.totalorder %s15, 1
    %p106 = por %p104, %p105
    %p108 = scmp.ne.s32.totalorder %s91, %s107
    %p109 = scmp.eq.s32.totalorder %s15, 0
    %p110 = por %p108, %p109
    %p111 = scmp.le.s32.totalorder 1, %s9
    %p112 = scmp.lt.s32.totalorder %s9, 3
    %p113 = pnand %p111, %p112
    %p114 = pneg %p113
    // Predicated region
    $region9: #{fcos_forward.29} parent=5 // pred_check
      _
    $region10: #{fcos_forward.29} parent=5 // pred_check_branch
      %116 = sbr.rel (%p113) target = $region12
    $region11: #{fcos_forward.29} parent=5 // pred_region
      %s117 = ssub.s32 %s9, 1
      // Predicated region
      $region13: #{fcos_forward.29} parent=11 // pred_check
        %p118 = pneg %p56
      $region14: #{fcos_forward.29} parent=11 // pred_check_branch
        %120 = sbr.rel (%p118) target = $region16
      $region15: #{fcos_forward.29} parent=11 // pred_region
        _
      $region16: #{fcos_forward.29} parent=11 // pred_fallthru
        _
      // Predicated region
      $region17: #{fcos_forward.29} parent=11 // pred_check
        %p121 = pneg %p77
      $region18: #{fcos_forward.29} parent=11 // pred_check_branch
        %123 = sbr.rel (%p121) target = $region20
      $region19: #{fcos_forward.29} parent=11 // pred_region
        _
      $region20: #{fcos_forward.29} parent=11 // pred_fallthru
        _
    $region12: #{fcos_forward.29} parent=5 // pred_fallthru
      _
    %p124 = scmp.lt.s32.totalorder %s9, 2
    // Predicated region
    $region21: #{fcos_forward.29} parent=5 // pred_check
      %p125 = pneg %p124
    $region22: #{fcos_forward.29} parent=5 // pred_check_branch
      %127 = sbr.rel (%p125) target = $region24
    $region23: #{fcos_forward.29} parent=5 // pred_region
      // Predicated region
      $region25: #{fcos_forward.29} parent=23 // pred_check
        %p128 = pneg %p29
      $region26: #{fcos_forward.29} parent=23 // pred_check_branch
        %130 = sbr.rel (%p128) target = $region28
      $region27: #{fcos_forward.29} parent=23 // pred_region
        %s131 = smul.u32 16, %s9
        %p132 = scmp.lt.s32.totalorder %s131, 31
        %s133 = scalar_select %p132, %s131, 31
        %s134 = smul.addr %s133, 9
        %s135 = smul.addr %s134, 4
        %s136 = scalar_lea.vmem %s0, %s135
        %s137 = smul.u32 16, %s9
      $region28: #{fcos_forward.29} parent=23 // pred_fallthru
        _
    $region24: #{fcos_forward.29} parent=5 // pred_fallthru
      _
    %p138 = scmp.le.s32.totalorder 1, %s9
    %p139 = scmp.lt.s32.totalorder %s9, 3
    %p140 = pnand %p138, %p139
    %p141 = pneg %p140
    // Predicated region
    $region29: #{fcos_forward.29} parent=5 // pred_check
      _
    $region30: #{fcos_forward.29} parent=5 // pred_check_branch
      %143 = sbr.rel (%p140) target = $region32
    $region31: #{fcos_forward.29} parent=5 // pred_region
      %s144 = ssub.s32 %s9, 1
      %s145 = smul.u32 16, %s14
      %p146 = scmp.lt.s32.totalorder %s145, 31
      %s147 = scalar_select %p146, %s145, 31
      %s148 = smul.addr %s147, 9
      %s149 = smul.addr %s148, 4
      %s150 = scalar_lea.vmem %s0, %s149
      %p151 = pneg %p35
      %p152 = pneg %p32
      %p153 = pneg %p56
      %p154 = pneg %p53
      %p155 = pneg %p77
      %p156 = pneg %p74
      %p157 = pneg %p103
      %p158 = pneg %p100
      %s159 = smul.u32 16, %s14
      %p160 = scmp.lt.s32.totalorder %s159, 31
      %s161 = scalar_select %p160, %s159, 31
      %s162 = smul.addr %s161, 8
      %s163 = scalar_lea.vmem %s3, %s162
      %s164 = smul.u32 16, %s14
      %p165 = scmp.lt.s32.totalorder %s164, 31
      %s166 = scalar_select %p165, %s164, 31
      %s167 = smul.addr %s166, 9
      %s168 = smul.addr %s167, 4
      %s169 = scalar_lea.vmem %s0, %s168
      %s170 = smul.u32 16, %s14
      %s171 = smul.u32 16, %s14
      %p172 = scmp.lt.s32.totalorder %s171, 31
      %s173 = scalar_select %p172, %s171, 31
      %s174 = smul.addr %s173, 8
      %s175 = scalar_lea.vmem %s3, %s174
      %s176 = smul.u32 16, %s14
      %v178 = vld [vmem:[%s169] sm:$0xff]
      %v179 = vld [vmem:[%s169 + $0x8] sm:$0xff]
      %v180 = vld [vmem:[%s169 + $0x10] sm:$0xff]
      %v181 = vld [vmem:[%s169 + $0x18] sm:$0xff]
      %v182 = vld [vmem:[%s169 + $0x20] sm:$0xf]
      %v183 = vld [vmem:[%s169 + $0x24] sm:$0xff]
      %v184 = vld [vmem:[%s169 + $0x2c] sm:$0xff]
      %v185 = vld [vmem:[%s169 + $0x34] sm:$0xff]
      %v186 = vld [vmem:[%s169 + $0x3c] sm:$0xff]
      %v187 = vld [vmem:[%s169 + $0x44] sm:$0xf]
      %v188 = vld [vmem:[%s169 + $0x48] sm:$0xff]
      %v189 = vld [vmem:[%s169 + $0x50] sm:$0xff]
      %v190 = vld [vmem:[%s169 + $0x58] sm:$0xff]
      %v191 = vld [vmem:[%s169 + $0x60] sm:$0xff]
      %v192 = vld [vmem:[%s169 + $0x68] sm:$0xf]
      %v193 = vld [vmem:[%s169 + $0x6c] sm:$0xff]
      %v194 = vld [vmem:[%s169 + $0x74] sm:$0xff]
      %v195 = vld [vmem:[%s169 + $0x7c] sm:$0xff]
      %v196 = vld [vmem:[%s169 + $0x84] sm:$0xff]
      %v197 = vld [vmem:[%s169 + $0x8c] sm:$0xf]
      %v198 = vld [vmem:[%s169 + $0x90] sm:$0xff]
      %v199 = vld [vmem:[%s169 + $0x98] sm:$0xff]
      %v200 = vld [vmem:[%s169 + $0xa0] sm:$0xff]
      %v201 = vld [vmem:[%s169 + $0xa8] sm:$0xff]
      %v202 = vld [vmem:[%s169 + $0xb0] sm:$0xf]
      %v203 = vld [vmem:[%s169 + $0xb4] sm:$0xff]
      %v204 = vld [vmem:[%s169 + $0xbc] sm:$0xff]
      %v205 = vld [vmem:[%s169 + $0xc4] sm:$0xff]
      %v206 = vld [vmem:[%s169 + $0xcc] sm:$0xff]
      %v207 = vld [vmem:[%s169 + $0xd4] sm:$0xf]
      %v208 = vld [vmem:[%s169 + $0xd8] sm:$0xff]
      %v209 = vld [vmem:[%s169 + $0xe0] sm:$0xff]
      %v210 = vld [vmem:[%s169 + $0xe8] sm:$0xff]
      %v211 = vld [vmem:[%s169 + $0xf0] sm:$0xff]
      %v212 = vld [vmem:[%s169 + $0xf8] sm:$0xf]
      %v213 = vld [vmem:[%s169 + $0xfc] sm:$0xff]
      %v214 = vld [vmem:[%s169 + $0x104] sm:$0xff]
      %v215 = vld [vmem:[%s169 + $0x10c] sm:$0xff]
      %v216 = vld [vmem:[%s169 + $0x114] sm:$0xff]
      %v217 = vld [vmem:[%s169 + $0x11c] sm:$0xf]
      %v218 = vld [vmem:[%s169 + $0x120] sm:$0xff]
      %v219 = vld [vmem:[%s169 + $0x128] sm:$0xff]
      %v220 = vld [vmem:[%s169 + $0x130] sm:$0xff]
      %v221 = vld [vmem:[%s169 + $0x138] sm:$0xff]
      %v222 = vld [vmem:[%s169 + $0x140] sm:$0xf]
      %v223 = vld [vmem:[%s169 + $0x144] sm:$0xff]
      %v224 = vld [vmem:[%s169 + $0x14c] sm:$0xff]
      %v225 = vld [vmem:[%s169 + $0x154] sm:$0xff]
      %v226 = vld [vmem:[%s169 + $0x15c] sm:$0xff]
      %v227 = vld [vmem:[%s169 + $0x164] sm:$0xf]
      %v228 = vld [vmem:[%s169 + $0x168] sm:$0xff]
      %v229 = vld [vmem:[%s169 + $0x170] sm:$0xff]
      %v230 = vld [vmem:[%s169 + $0x178] sm:$0xff]
      %v231 = vld [vmem:[%s169 + $0x180] sm:$0xff]
      %v232 = vld [vmem:[%s169 + $0x188] sm:$0xf]
      %v233 = vld [vmem:[%s169 + $0x18c] sm:$0xff]
      %v234 = vld [vmem:[%s169 + $0x194] sm:$0xff]
      %v235 = vld [vmem:[%s169 + $0x19c] sm:$0xff]
      %v236 = vld [vmem:[%s169 + $0x1a4] sm:$0xff]
      %v237 = vld [vmem:[%s169 + $0x1ac] sm:$0xf]
      %v238 = vld [vmem:[%s169 + $0x1b0] sm:$0xff]
      %v239 = vld [vmem:[%s169 + $0x1b8] sm:$0xff]
      %v240 = vld [vmem:[%s169 + $0x1c0] sm:$0xff]
      %v241 = vld [vmem:[%s169 + $0x1c8] sm:$0xff]
      %v242 = vld [vmem:[%s169 + $0x1d0] sm:$0xf]
      %v243 = vld [vmem:[%s169 + $0x1d4] sm:$0xff]
      %v244 = vld [vmem:[%s169 + $0x1dc] sm:$0xff]
      %v245 = vld [vmem:[%s169 + $0x1e4] sm:$0xff]
      %v246 = vld [vmem:[%s169 + $0x1ec] sm:$0xff]
      %v247 = vld [vmem:[%s169 + $0x1f4] sm:$0xf]
      %v248 = vld [vmem:[%s169 + $0x1f8] sm:$0xff]
      %v249 = vld [vmem:[%s169 + $0x200] sm:$0xff]
      %v250 = vld [vmem:[%s169 + $0x208] sm:$0xff]
      %v251 = vld [vmem:[%s169 + $0x210] sm:$0xff]
      %v252 = vld [vmem:[%s169 + $0x218] sm:$0xf]
      %v253 = vld [vmem:[%s169 + $0x21c] sm:$0xff]
      %v254 = vld [vmem:[%s169 + $0x224] sm:$0xff]
      %v255 = vld [vmem:[%s169 + $0x22c] sm:$0xff]
      %v256 = vld [vmem:[%s169 + $0x234] sm:$0xff]
      %v257 = vld [vmem:[%s169 + $0x23c] sm:$0xf]
      %v258 = vld [vmem:[%s1] sm:$0xf]
      %v259 = vld [vmem:[%s1 + $0x4] sm:$0xf]
      %v260 = vld [vmem:[%s1 + $0x8] sm:$0xf]
      %v261 = vld [vmem:[%s1 + $0xc] sm:$0xf]
      %v262 = vld [vmem:[%s1 + $0x10] sm:$0xf]
      %v263 = vld [vmem:[%s1 + $0x14] sm:$0xf]
      %v264 = vld [vmem:[%s1 + $0x18] sm:$0xf]
      %v265 = vld [vmem:[%s1 + $0x1c] sm:$0xf]
      %v266 = vld [vmem:[%s1 + $0x20] sm:$0xf]
      %v267 = vld [vmem:[%s1 + $0x24] sm:$0xf]
      %v268 = vld [vmem:[%s1 + $0x28] sm:$0xf]
      %v269 = vld [vmem:[%s1 + $0x2c] sm:$0xf]
      %v270 = vld [vmem:[%s1 + $0x30] sm:$0xf]
      %v271 = vld [vmem:[%s1 + $0x34] sm:$0xf]
      %v272 = vld [vmem:[%s1 + $0x38] sm:$0xf]
      %v273 = vld [vmem:[%s1 + $0x3c] sm:$0xf]
      %v274 = vld [vmem:[%s1 + $0x40] sm:$0xf]
      %v275 = vld [vmem:[%s1 + $0x44] sm:$0xf]
      %v276 = vld [vmem:[%s1 + $0x48] sm:$0xf]
      %v277 = vld [vmem:[%s1 + $0x4c] sm:$0xf]
      %v278 = vld [vmem:[%s1 + $0x50] sm:$0xf]
      %v279 = vld [vmem:[%s1 + $0x54] sm:$0xf]
      %v280 = vld [vmem:[%s1 + $0x58] sm:$0xf]
      %v281 = vld [vmem:[%s1 + $0x5c] sm:$0xf]
      %v282 = vld [vmem:[%s1 + $0x60] sm:$0xf]
      %v283 = vld [vmem:[%s1 + $0x64] sm:$0xf]
      %v284 = vld [vmem:[%s1 + $0x68] sm:$0xf]
      %v285 = vld [vmem:[%s1 + $0x6c] sm:$0xf]
      %v286 = vld [vmem:[%s1 + $0x70] sm:$0xf]
      %v287 = vld [vmem:[%s1 + $0x74] sm:$0xf]
      %v288 = vld [vmem:[%s1 + $0x78] sm:$0xf]
      %v289 = vld [vmem:[%s1 + $0x7c] sm:$0xf]
      %v290 = vld [vmem:[%s1 + $0x80] sm:$0xf]
      %v291 = vld [vmem:[%s1 + $0x84] sm:$0xf]
      %v292 = vld [vmem:[%s1 + $0x88] sm:$0xf]
      %v293 = vld [vmem:[%s1 + $0x8c] sm:$0xf]
      %v294 = vld [vmem:[%s1 + $0x90] sm:$0xf]
      %v295 = vld [vmem:[%s1 + $0x94] sm:$0xf]
      %v296 = vld [vmem:[%s1 + $0x98] sm:$0xf]
      %v297 = vld [vmem:[%s1 + $0x9c] sm:$0xf]
      %v298 = vld [vmem:[%s1 + $0xa0] sm:$0xf]
      %v299 = vld [vmem:[%s1 + $0xa4] sm:$0xf]
      %v300 = vld [vmem:[%s1 + $0xa8] sm:$0xf]
      %v301 = vld [vmem:[%s1 + $0xac] sm:$0xf]
      %v302 = vld [vmem:[%s1 + $0xb0] sm:$0xf]
      %v303 = vld [vmem:[%s1 + $0xb4] sm:$0xf]
      %v304 = vld [vmem:[%s1 + $0xb8] sm:$0xf]
      %v305 = vld [vmem:[%s1 + $0xbc] sm:$0xf]
      %v306 = vld [vmem:[%s1 + $0xc0] sm:$0xf]
      %v307 = vld [vmem:[%s1 + $0xc4] sm:$0xf]
      %v308 = vld [vmem:[%s1 + $0xc8] sm:$0xf]
      %v309 = vld [vmem:[%s1 + $0xcc] sm:$0xf]
      %v310 = vld [vmem:[%s1 + $0xd0] sm:$0xf]
      %v311 = vld [vmem:[%s1 + $0xd4] sm:$0xf]
      %v312 = vld [vmem:[%s1 + $0xd8] sm:$0xf]
      %v313 = vld [vmem:[%s1 + $0xdc] sm:$0xf]
      %v314 = vld [vmem:[%s1 + $0xe0] sm:$0xf]
      %v315 = vld [vmem:[%s1 + $0xe4] sm:$0xf]
      %v316 = vld [vmem:[%s1 + $0xe8] sm:$0xf]
      %v317 = vld [vmem:[%s1 + $0xec] sm:$0xf]
      %v318 = vld [vmem:[%s1 + $0xf0] sm:$0xf]
      %v319 = vld [vmem:[%s1 + $0xf4] sm:$0xf]
      %v320 = vld [vmem:[%s1 + $0xf8] sm:$0xf]
      %v321 = vld [vmem:[%s1 + $0xfc] sm:$0xf]
      %v322 = vld [vmem:[%s1 + $0x100] sm:$0xf]
      %v323 = vld [vmem:[%s1 + $0x104] sm:$0xf]
      %v324 = vld [vmem:[%s1 + $0x108] sm:$0xf]
      %v325 = vld [vmem:[%s1 + $0x10c] sm:$0xf]
      %v326 = vld [vmem:[%s1 + $0x110] sm:$0xf]
      %v327 = vld [vmem:[%s1 + $0x114] sm:$0xf]
      %v328 = vld [vmem:[%s1 + $0x118] sm:$0xf]
      %v329 = vld [vmem:[%s1 + $0x11c] sm:$0xf]
      %v330 = vld [vmem:[%s1 + $0x120] sm:$0xf]
      %v331 = vld [vmem:[%s1 + $0x124] sm:$0xf]
      %v332 = vld [vmem:[%s1 + $0x128] sm:$0xf]
      %v333 = vld [vmem:[%s1 + $0x12c] sm:$0xf]
      %v334 = vld [vmem:[%s1 + $0x130] sm:$0xf]
      %v335 = vld [vmem:[%s1 + $0x134] sm:$0xf]
      %v336 = vld [vmem:[%s1 + $0x138] sm:$0xf]
      %v337 = vld [vmem:[%s1 + $0x13c] sm:$0xf]
      %v338 = vld [vmem:[%s1 + $0x140] sm:$0xf]
      %v339 = vld [vmem:[%s1 + $0x144] sm:$0xf]
      %v340 = vld [vmem:[%s1 + $0x148] sm:$0xf]
      %v341 = vld [vmem:[%s1 + $0x14c] sm:$0xf]
      %v342 = vld [vmem:[%s1 + $0x150] sm:$0xf]
      %v343 = vld [vmem:[%s1 + $0x154] sm:$0xf]
      %v344 = vld [vmem:[%s1 + $0x158] sm:$0xf]
      %v345 = vld [vmem:[%s1 + $0x15c] sm:$0xf]
      %v346 = vld [vmem:[%s1 + $0x160] sm:$0xf]
      %v347 = vld [vmem:[%s1 + $0x164] sm:$0xf]
      %v348 = vld [vmem:[%s1 + $0x168] sm:$0xf]
      %v349 = vld [vmem:[%s1 + $0x16c] sm:$0xf]
      %v350 = vld [vmem:[%s1 + $0x170] sm:$0xf]
      %v351 = vld [vmem:[%s1 + $0x174] sm:$0xf]
      %v352 = vld [vmem:[%s1 + $0x178] sm:$0xf]
      %v353 = vld [vmem:[%s1 + $0x17c] sm:$0xf]
      %v354 = vld [vmem:[%s1 + $0x180] sm:$0xf]
      %v355 = vld [vmem:[%s1 + $0x184] sm:$0xf]
      %v356 = vld [vmem:[%s1 + $0x188] sm:$0xf]
      %v357 = vld [vmem:[%s1 + $0x18c] sm:$0xf]
      %v358 = vld [vmem:[%s1 + $0x190] sm:$0xf]
      %v359 = vld [vmem:[%s1 + $0x194] sm:$0xf]
      %v360 = vld [vmem:[%s1 + $0x198] sm:$0xf]
      %v361 = vld [vmem:[%s1 + $0x19c] sm:$0xf]
      %v362 = vld [vmem:[%s1 + $0x1a0] sm:$0xf]
      %v363 = vld [vmem:[%s1 + $0x1a4] sm:$0xf]
      %v364 = vld [vmem:[%s1 + $0x1a8] sm:$0xf]
      %v365 = vld [vmem:[%s1 + $0x1ac] sm:$0xf]
      %v366 = vld [vmem:[%s1 + $0x1b0] sm:$0xf]
      %v367 = vld [vmem:[%s1 + $0x1b4] sm:$0xf]
      %v368 = vld [vmem:[%s1 + $0x1b8] sm:$0xf]
      %v369 = vld [vmem:[%s1 + $0x1bc] sm:$0xf]
      %v370 = vld [vmem:[%s1 + $0x1c0] sm:$0xf]
      %v371 = vld [vmem:[%s1 + $0x1c4] sm:$0xf]
      %v372 = vld [vmem:[%s1 + $0x1c8] sm:$0xf]
      %v373 = vld [vmem:[%s1 + $0x1cc] sm:$0xf]
      %v374 = vld [vmem:[%s1 + $0x1d0] sm:$0xf]
      %v375 = vld [vmem:[%s1 + $0x1d4] sm:$0xf]
      %v376 = vld [vmem:[%s1 + $0x1d8] sm:$0xf]
      %v377 = vld [vmem:[%s1 + $0x1dc] sm:$0xf]
      %v378 = vld [vmem:[%s1 + $0x1e0] sm:$0xf]
      %v379 = vld [vmem:[%s1 + $0x1e4] sm:$0xf]
      %v380 = vld [vmem:[%s1 + $0x1e8] sm:$0xf]
      %v381 = vld [vmem:[%s1 + $0x1ec] sm:$0xf]
      %v382 = vld [vmem:[%s1 + $0x1f0] sm:$0xf]
      %v383 = vld [vmem:[%s1 + $0x1f4] sm:$0xf]
      %v384 = vld [vmem:[%s1 + $0x1f8] sm:$0xf]
      %v385 = vld [vmem:[%s1 + $0x1fc] sm:$0xf]
      %v386 = vld [vmem:[%s1 + $0x200] sm:$0xf]
      %v387 = vld [vmem:[%s1 + $0x204] sm:$0xf]
      %v388 = vld [vmem:[%s1 + $0x208] sm:$0xf]
      %v389 = vld [vmem:[%s1 + $0x20c] sm:$0xf]
      %v390 = vld [vmem:[%s1 + $0x210] sm:$0xf]
      %v391 = vld [vmem:[%s1 + $0x214] sm:$0xf]
      %v392 = vld [vmem:[%s1 + $0x218] sm:$0xf]
      %v393 = vld [vmem:[%s1 + $0x21c] sm:$0xf]
      %v394 = vld [vmem:[%s1 + $0x220] sm:$0xf]
      %v395 = vld [vmem:[%s1 + $0x224] sm:$0xf]
      %v396 = vld [vmem:[%s1 + $0x228] sm:$0xf]
      %v397 = vld [vmem:[%s1 + $0x22c] sm:$0xf]
      %v398 = vld [vmem:[%s1 + $0x230] sm:$0xf]
      %v399 = vld [vmem:[%s1 + $0x234] sm:$0xf]
      %v400 = vld [vmem:[%s1 + $0x238] sm:$0xf]
      %v401 = vld [vmem:[%s1 + $0x23c] sm:$0xf]
      %v402 = vld [vmem:[%s2] sm:$0x1]
      %v404 = vlaneseq
      %v405 = vshrl.u32 %v404, 7
      %v406 = vsub.s32 0, %v405
      %v407 = vrot.slane %v402, %v406
      %v489 = vunpack.c.l.b16 %v178
      %v490 = vunpack.c.h.b16 %v178
      %v491 = vunpack.c.l.b16 %v179
      %v492 = vunpack.c.h.b16 %v179
      %v493 = vunpack.c.l.b16 %v180
      %v494 = vunpack.c.h.b16 %v180
      %v495 = vunpack.c.l.b16 %v181
      %v496 = vunpack.c.h.b16 %v181
      %v497 = vunpack.c.l.b16 %v182
      %v498 = vunpack.c.l.b16 %v183
      %v499 = vunpack.c.h.b16 %v183
      %v500 = vunpack.c.l.b16 %v184
      %v501 = vunpack.c.h.b16 %v184
      %v502 = vunpack.c.l.b16 %v185
      %v503 = vunpack.c.h.b16 %v185
      %v504 = vunpack.c.l.b16 %v186
      %v505 = vunpack.c.h.b16 %v186
      %v506 = vunpack.c.l.b16 %v187
      %v507 = vunpack.c.l.b16 %v188
      %v508 = vunpack.c.h.b16 %v188
      %v509 = vunpack.c.l.b16 %v189
      %v510 = vunpack.c.h.b16 %v189
      %v511 = vunpack.c.l.b16 %v190
      %v512 = vunpack.c.h.b16 %v190
      %v513 = vunpack.c.l.b16 %v191
      %v514 = vunpack.c.h.b16 %v191
      %v515 = vunpack.c.l.b16 %v192
      %v516 = vunpack.c.l.b16 %v193
      %v517 = vunpack.c.h.b16 %v193
      %v518 = vunpack.c.l.b16 %v194
      %v519 = vunpack.c.h.b16 %v194
      %v520 = vunpack.c.l.b16 %v195
      %v521 = vunpack.c.h.b16 %v195
      %v522 = vunpack.c.l.b16 %v196
      %v523 = vunpack.c.h.b16 %v196
      %v524 = vunpack.c.l.b16 %v197
      %v525 = vunpack.c.l.b16 %v198
      %v526 = vunpack.c.h.b16 %v198
      %v527 = vunpack.c.l.b16 %v199
      %v528 = vunpack.c.h.b16 %v199
      %v529 = vunpack.c.l.b16 %v200
      %v530 = vunpack.c.h.b16 %v200
      %v531 = vunpack.c.l.b16 %v201
      %v532 = vunpack.c.h.b16 %v201
      %v533 = vunpack.c.l.b16 %v202
      %v534 = vunpack.c.l.b16 %v203
      %v535 = vunpack.c.h.b16 %v203
      %v536 = vunpack.c.l.b16 %v204
      %v537 = vunpack.c.h.b16 %v204
      %v538 = vunpack.c.l.b16 %v205
      %v539 = vunpack.c.h.b16 %v205
      %v540 = vunpack.c.l.b16 %v206
      %v541 = vunpack.c.h.b16 %v206
      %v542 = vunpack.c.l.b16 %v207
      %v543 = vunpack.c.l.b16 %v208
      %v544 = vunpack.c.h.b16 %v208
      %v545 = vunpack.c.l.b16 %v209
      %v546 = vunpack.c.h.b16 %v209
      %v547 = vunpack.c.l.b16 %v210
      %v548 = vunpack.c.h.b16 %v210
      %v549 = vunpack.c.l.b16 %v211
      %v550 = vunpack.c.h.b16 %v211
      %v551 = vunpack.c.l.b16 %v212
      %v552 = vunpack.c.l.b16 %v213
      %v553 = vunpack.c.h.b16 %v213
      %v554 = vunpack.c.l.b16 %v214
      %v555 = vunpack.c.h.b16 %v214
      %v556 = vunpack.c.l.b16 %v215
      %v557 = vunpack.c.h.b16 %v215
      %v558 = vunpack.c.l.b16 %v216
      %v559 = vunpack.c.h.b16 %v216
      %v560 = vunpack.c.l.b16 %v217
      %v561 = vunpack.c.l.b16 %v218
      %v562 = vunpack.c.h.b16 %v218
      %v563 = vunpack.c.l.b16 %v219
      %v564 = vunpack.c.h.b16 %v219
      %v565 = vunpack.c.l.b16 %v220
      %v566 = vunpack.c.h.b16 %v220
      %v567 = vunpack.c.l.b16 %v221
      %v568 = vunpack.c.h.b16 %v221
      %v569 = vunpack.c.l.b16 %v222
      %v570 = vunpack.c.l.b16 %v223
      %v571 = vunpack.c.h.b16 %v223
      %v572 = vunpack.c.l.b16 %v224
      %v573 = vunpack.c.h.b16 %v224
      %v574 = vunpack.c.l.b16 %v225
      %v575 = vunpack.c.h.b16 %v225
      %v576 = vunpack.c.l.b16 %v226
      %v577 = vunpack.c.h.b16 %v226
      %v578 = vunpack.c.l.b16 %v227
      %v579 = vunpack.c.l.b16 %v228
      %v580 = vunpack.c.h.b16 %v228
      %v581 = vunpack.c.l.b16 %v229
      %v582 = vunpack.c.h.b16 %v229
      %v583 = vunpack.c.l.b16 %v230
      %v584 = vunpack.c.h.b16 %v230
      %v585 = vunpack.c.l.b16 %v231
      %v586 = vunpack.c.h.b16 %v231
      %v587 = vunpack.c.l.b16 %v232
      %v588 = vunpack.c.l.b16 %v233
      %v589 = vunpack.c.h.b16 %v233
      %v590 = vunpack.c.l.b16 %v234
      %v591 = vunpack.c.h.b16 %v234
      %v592 = vunpack.c.l.b16 %v235
      %v593 = vunpack.c.h.b16 %v235
      %v594 = vunpack.c.l.b16 %v236
      %v595 = vunpack.c.h.b16 %v236
      %v596 = vunpack.c.l.b16 %v237
      %v597 = vunpack.c.l.b16 %v238
      %v598 = vunpack.c.h.b16 %v238
      %v599 = vunpack.c.l.b16 %v239
      %v600 = vunpack.c.h.b16 %v239
      %v601 = vunpack.c.l.b16 %v240
      %v602 = vunpack.c.h.b16 %v240
      %v603 = vunpack.c.l.b16 %v241
      %v604 = vunpack.c.h.b16 %v241
      %v605 = vunpack.c.l.b16 %v242
      %v606 = vunpack.c.l.b16 %v243
      %v607 = vunpack.c.h.b16 %v243
      %v608 = vunpack.c.l.b16 %v244
      %v609 = vunpack.c.h.b16 %v244
      %v610 = vunpack.c.l.b16 %v245
      %v611 = vunpack.c.h.b16 %v245
      %v612 = vunpack.c.l.b16 %v246
      %v613 = vunpack.c.h.b16 %v246
      %v614 = vunpack.c.l.b16 %v247
      %v615 = vunpack.c.l.b16 %v248
      %v616 = vunpack.c.h.b16 %v248
      %v617 = vunpack.c.l.b16 %v249
      %v618 = vunpack.c.h.b16 %v249
      %v619 = vunpack.c.l.b16 %v250
      %v620 = vunpack.c.h.b16 %v250
      %v621 = vunpack.c.l.b16 %v251
      %v622 = vunpack.c.h.b16 %v251
      %v623 = vunpack.c.l.b16 %v252
      %v624 = vunpack.c.l.b16 %v253
      %v625 = vunpack.c.h.b16 %v253
      %v626 = vunpack.c.l.b16 %v254
      %v627 = vunpack.c.h.b16 %v254
      %v628 = vunpack.c.l.b16 %v255
      %v629 = vunpack.c.h.b16 %v255
      %v630 = vunpack.c.l.b16 %v256
      %v631 = vunpack.c.h.b16 %v256
      %v632 = vunpack.c.l.b16 %v257
      %v633 = vpack.c.b16 %v498, %v489
      %v634 = vpack.c.b16 %v499, %v490
      %v635 = vpack.c.b16 %v500, %v491
      %v636 = vpack.c.b16 %v501, %v492
      %v637 = vpack.c.b16 %v502, %v493
      %v638 = vpack.c.b16 %v503, %v494
      %v639 = vpack.c.b16 %v504, %v495
      %v640 = vpack.c.b16 %v505, %v496
      %v641 = vpack.c.b16 %v506, %v497
      %v642 = vpack.c.b16 %v516, %v507
      %v643 = vpack.c.b16 %v517, %v508
      %v644 = vpack.c.b16 %v518, %v509
      %v645 = vpack.c.b16 %v519, %v510
      %v646 = vpack.c.b16 %v520, %v511
      %v647 = vpack.c.b16 %v521, %v512
      %v648 = vpack.c.b16 %v522, %v513
      %v649 = vpack.c.b16 %v523, %v514
      %v650 = vpack.c.b16 %v524, %v515
      %v651 = vpack.c.b16 %v534, %v525
      %v652 = vpack.c.b16 %v535, %v526
      %v653 = vpack.c.b16 %v536, %v527
      %v654 = vpack.c.b16 %v537, %v528
      %v655 = vpack.c.b16 %v538, %v529
      %v656 = vpack.c.b16 %v539, %v530
      %v657 = vpack.c.b16 %v540, %v531
      %v658 = vpack.c.b16 %v541, %v532
      %v659 = vpack.c.b16 %v542, %v533
      %v660 = vpack.c.b16 %v552, %v543
      %v661 = vpack.c.b16 %v553, %v544
      %v662 = vpack.c.b16 %v554, %v545
      %v663 = vpack.c.b16 %v555, %v546
      %v664 = vpack.c.b16 %v556, %v547
      %v665 = vpack.c.b16 %v557, %v548
      %v666 = vpack.c.b16 %v558, %v549
      %v667 = vpack.c.b16 %v559, %v550
      %v668 = vpack.c.b16 %v560, %v551
      %v669 = vpack.c.b16 %v570, %v561
      %v670 = vpack.c.b16 %v571, %v562
      %v671 = vpack.c.b16 %v572, %v563
      %v672 = vpack.c.b16 %v573, %v564
      %v673 = vpack.c.b16 %v574, %v565
      %v674 = vpack.c.b16 %v575, %v566
      %v675 = vpack.c.b16 %v576, %v567
      %v676 = vpack.c.b16 %v577, %v568
      %v677 = vpack.c.b16 %v578, %v569
      %v678 = vpack.c.b16 %v588, %v579
      %v679 = vpack.c.b16 %v589, %v580
      %v680 = vpack.c.b16 %v590, %v581
      %v681 = vpack.c.b16 %v591, %v582
      %v682 = vpack.c.b16 %v592, %v583
      %v683 = vpack.c.b16 %v593, %v584
      %v684 = vpack.c.b16 %v594, %v585
      %v685 = vpack.c.b16 %v595, %v586
      %v686 = vpack.c.b16 %v596, %v587
      %v687 = vpack.c.b16 %v606, %v597
      %v688 = vpack.c.b16 %v607, %v598
      %v689 = vpack.c.b16 %v608, %v599
      %v690 = vpack.c.b16 %v609, %v600
      %v691 = vpack.c.b16 %v610, %v601
      %v692 = vpack.c.b16 %v611, %v602
      %v693 = vpack.c.b16 %v612, %v603
      %v694 = vpack.c.b16 %v613, %v604
      %v695 = vpack.c.b16 %v614, %v605
      %v696 = vpack.c.b16 %v624, %v615
      %v697 = vpack.c.b16 %v625, %v616
      %v698 = vpack.c.b16 %v626, %v617
      %v699 = vpack.c.b16 %v627, %v618
      %v700 = vpack.c.b16 %v628, %v619
      %v701 = vpack.c.b16 %v629, %v620
      %v702 = vpack.c.b16 %v630, %v621
      %v703 = vpack.c.b16 %v631, %v622
      %v704 = vpack.c.b16 %v632, %v623
      %v921 = vunpack.c.l.b16 %v258
      %v922 = vunpack.c.l.b16 %v259
      %v923 = vunpack.c.l.b16 %v260
      %v924 = vunpack.c.l.b16 %v261
      %v925 = vunpack.c.l.b16 %v262
      %v926 = vunpack.c.l.b16 %v263
      %v927 = vunpack.c.l.b16 %v264
      %v928 = vunpack.c.l.b16 %v265
      %v929 = vunpack.c.l.b16 %v266
      %v930 = vunpack.c.l.b16 %v267
      %v931 = vunpack.c.l.b16 %v268
      %v932 = vunpack.c.l.b16 %v269
      %v933 = vunpack.c.l.b16 %v270
      %v934 = vunpack.c.l.b16 %v271
      %v935 = vunpack.c.l.b16 %v272
      %v936 = vunpack.c.l.b16 %v273
      %v937 = vunpack.c.l.b16 %v274
      %v938 = vunpack.c.l.b16 %v275
      %v939 = vunpack.c.l.b16 %v276
      %v940 = vunpack.c.l.b16 %v277
      %v941 = vunpack.c.l.b16 %v278
      %v942 = vunpack.c.l.b16 %v279
      %v943 = vunpack.c.l.b16 %v280
      %v944 = vunpack.c.l.b16 %v281
      %v945 = vunpack.c.l.b16 %v282
      %v946 = vunpack.c.l.b16 %v283
      %v947 = vunpack.c.l.b16 %v284
      %v948 = vunpack.c.l.b16 %v285
      %v949 = vunpack.c.l.b16 %v286
      %v950 = vunpack.c.l.b16 %v287
      %v951 = vunpack.c.l.b16 %v288
      %v952 = vunpack.c.l.b16 %v289
      %v953 = vunpack.c.l.b16 %v290
      %v954 = vunpack.c.l.b16 %v291
      %v955 = vunpack.c.l.b16 %v292
      %v956 = vunpack.c.l.b16 %v293
      %v957 = vunpack.c.l.b16 %v294
      %v958 = vunpack.c.l.b16 %v295
      %v959 = vunpack.c.l.b16 %v296
      %v960 = vunpack.c.l.b16 %v297
      %v961 = vunpack.c.l.b16 %v298
      %v962 = vunpack.c.l.b16 %v299
      %v963 = vunpack.c.l.b16 %v300
      %v964 = vunpack.c.l.b16 %v301
      %v965 = vunpack.c.l.b16 %v302
      %v966 = vunpack.c.l.b16 %v303
      %v967 = vunpack.c.l.b16 %v304
      %v968 = vunpack.c.l.b16 %v305
      %v969 = vunpack.c.l.b16 %v306
      %v970 = vunpack.c.l.b16 %v307
      %v971 = vunpack.c.l.b16 %v308
      %v972 = vunpack.c.l.b16 %v309
      %v973 = vunpack.c.l.b16 %v310
      %v974 = vunpack.c.l.b16 %v311
      %v975 = vunpack.c.l.b16 %v312
      %v976 = vunpack.c.l.b16 %v313
      %v977 = vunpack.c.l.b16 %v314
      %v978 = vunpack.c.l.b16 %v315
      %v979 = vunpack.c.l.b16 %v316
      %v980 = vunpack.c.l.b16 %v317
      %v981 = vunpack.c.l.b16 %v318
      %v982 = vunpack.c.l.b16 %v319
      %v983 = vunpack.c.l.b16 %v320
      %v984 = vunpack.c.l.b16 %v321
      %v985 = vunpack.c.l.b16 %v322
      %v986 = vunpack.c.l.b16 %v323
      %v987 = vunpack.c.l.b16 %v324
      %v988 = vunpack.c.l.b16 %v325
      %v989 = vunpack.c.l.b16 %v326
      %v990 = vunpack.c.l.b16 %v327
      %v991 = vunpack.c.l.b16 %v328
      %v992 = vunpack.c.l.b16 %v329
      %v993 = vunpack.c.l.b16 %v330
      %v994 = vunpack.c.l.b16 %v331
      %v995 = vunpack.c.l.b16 %v332
      %v996 = vunpack.c.l.b16 %v333
      %v997 = vunpack.c.l.b16 %v334
      %v998 = vunpack.c.l.b16 %v335
      %v999 = vunpack.c.l.b16 %v336
      %v1000 = vunpack.c.l.b16 %v337
      %v1001 = vunpack.c.l.b16 %v338
      %v1002 = vunpack.c.l.b16 %v339
      %v1003 = vunpack.c.l.b16 %v340
      %v1004 = vunpack.c.l.b16 %v341
      %v1005 = vunpack.c.l.b16 %v342
      %v1006 = vunpack.c.l.b16 %v343
      %v1007 = vunpack.c.l.b16 %v344
      %v1008 = vunpack.c.l.b16 %v345
      %v1009 = vunpack.c.l.b16 %v346
      %v1010 = vunpack.c.l.b16 %v347
      %v1011 = vunpack.c.l.b16 %v348
      %v1012 = vunpack.c.l.b16 %v349
      %v1013 = vunpack.c.l.b16 %v350
      %v1014 = vunpack.c.l.b16 %v351
      %v1015 = vunpack.c.l.b16 %v352
      %v1016 = vunpack.c.l.b16 %v353
      %v1017 = vunpack.c.l.b16 %v354
      %v1018 = vunpack.c.l.b16 %v355
      %v1019 = vunpack.c.l.b16 %v356
      %v1020 = vunpack.c.l.b16 %v357
      %v1021 = vunpack.c.l.b16 %v358
      %v1022 = vunpack.c.l.b16 %v359
      %v1023 = vunpack.c.l.b16 %v360
      %v1024 = vunpack.c.l.b16 %v361
      %v1025 = vunpack.c.l.b16 %v362
      %v1026 = vunpack.c.l.b16 %v363
      %v1027 = vunpack.c.l.b16 %v364
      %v1028 = vunpack.c.l.b16 %v365
      %v1029 = vunpack.c.l.b16 %v366
      %v1030 = vunpack.c.l.b16 %v367
      %v1031 = vunpack.c.l.b16 %v368
      %v1032 = vunpack.c.l.b16 %v369
      %v1033 = vunpack.c.l.b16 %v370
      %v1034 = vunpack.c.l.b16 %v371
      %v1035 = vunpack.c.l.b16 %v372
      %v1036 = vunpack.c.l.b16 %v373
      %v1037 = vunpack.c.l.b16 %v374
      %v1038 = vunpack.c.l.b16 %v375
      %v1039 = vunpack.c.l.b16 %v376
      %v1040 = vunpack.c.l.b16 %v377
      %v1041 = vunpack.c.l.b16 %v378
      %v1042 = vunpack.c.l.b16 %v379
      %v1043 = vunpack.c.l.b16 %v380
      %v1044 = vunpack.c.l.b16 %v381
      %v1045 = vunpack.c.l.b16 %v382
      %v1046 = vunpack.c.l.b16 %v383
      %v1047 = vunpack.c.l.b16 %v384
      %v1048 = vunpack.c.l.b16 %v385
      %v1049 = vunpack.c.l.b16 %v386
      %v1050 = vunpack.c.l.b16 %v387
      %v1051 = vunpack.c.l.b16 %v388
      %v1052 = vunpack.c.l.b16 %v389
      %v1053 = vunpack.c.l.b16 %v390
      %v1054 = vunpack.c.l.b16 %v391
      %v1055 = vunpack.c.l.b16 %v392
      %v1056 = vunpack.c.l.b16 %v393
      %v1057 = vunpack.c.l.b16 %v394
      %v1058 = vunpack.c.l.b16 %v395
      %v1059 = vunpack.c.l.b16 %v396
      %v1060 = vunpack.c.l.b16 %v397
      %v1061 = vunpack.c.l.b16 %v398
      %v1062 = vunpack.c.l.b16 %v399
      %v1063 = vunpack.c.l.b16 %v400
      %v1064 = vunpack.c.l.b16 %v401
      %v1065 = vpack.c.b16 %v922, %v921
      %v1066 = vpack.c.b16 %v924, %v923
      %v1067 = vpack.c.b16 %v926, %v925
      %v1068 = vpack.c.b16 %v928, %v927
      %v1069 = vpack.c.b16 %v930, %v929
      %v1070 = vpack.c.b16 %v932, %v931
      %v1071 = vpack.c.b16 %v934, %v933
      %v1072 = vpack.c.b16 %v936, %v935
      %v1073 = vpack.c.b16 %v938, %v937
      %v1074 = vpack.c.b16 %v940, %v939
      %v1075 = vpack.c.b16 %v942, %v941
      %v1076 = vpack.c.b16 %v944, %v943
      %v1077 = vpack.c.b16 %v946, %v945
      %v1078 = vpack.c.b16 %v948, %v947
      %v1079 = vpack.c.b16 %v950, %v949
      %v1080 = vpack.c.b16 %v952, %v951
      %v1081 = vpack.c.b16 %v954, %v953
      %v1082 = vpack.c.b16 %v956, %v955
      %v1083 = vpack.c.b16 %v958, %v957
      %v1084 = vpack.c.b16 %v960, %v959
      %v1085 = vpack.c.b16 %v962, %v961
      %v1086 = vpack.c.b16 %v964, %v963
      %v1087 = vpack.c.b16 %v966, %v965
      %v1088 = vpack.c.b16 %v968, %v967
      %v1089 = vpack.c.b16 %v970, %v969
      %v1090 = vpack.c.b16 %v972, %v971
      %v1091 = vpack.c.b16 %v974, %v973
      %v1092 = vpack.c.b16 %v976, %v975
      %v1093 = vpack.c.b16 %v978, %v977
      %v1094 = vpack.c.b16 %v980, %v979
      %v1095 = vpack.c.b16 %v982, %v981
      %v1096 = vpack.c.b16 %v984, %v983
      %v1097 = vpack.c.b16 %v986, %v985
      %v1098 = vpack.c.b16 %v988, %v987
      %v1099 = vpack.c.b16 %v990, %v989
      %v1100 = vpack.c.b16 %v992, %v991
      %v1101 = vpack.c.b16 %v994, %v993
      %v1102 = vpack.c.b16 %v996, %v995
      %v1103 = vpack.c.b16 %v998, %v997
      %v1104 = vpack.c.b16 %v1000, %v999
      %v1105 = vpack.c.b16 %v1002, %v1001
      %v1106 = vpack.c.b16 %v1004, %v1003
      %v1107 = vpack.c.b16 %v1006, %v1005
      %v1108 = vpack.c.b16 %v1008, %v1007
      %v1109 = vpack.c.b16 %v1010, %v1009
      %v1110 = vpack.c.b16 %v1012, %v1011
      %v1111 = vpack.c.b16 %v1014, %v1013
      %v1112 = vpack.c.b16 %v1016, %v1015
      %v1113 = vpack.c.b16 %v1018, %v1017
      %v1114 = vpack.c.b16 %v1020, %v1019
      %v1115 = vpack.c.b16 %v1022, %v1021
      %v1116 = vpack.c.b16 %v1024, %v1023
      %v1117 = vpack.c.b16 %v1026, %v1025
      %v1118 = vpack.c.b16 %v1028, %v1027
      %v1119 = vpack.c.b16 %v1030, %v1029
      %v1120 = vpack.c.b16 %v1032, %v1031
      %v1121 = vpack.c.b16 %v1034, %v1033
      %v1122 = vpack.c.b16 %v1036, %v1035
      %v1123 = vpack.c.b16 %v1038, %v1037
      %v1124 = vpack.c.b16 %v1040, %v1039
      %v1125 = vpack.c.b16 %v1042, %v1041
      %v1126 = vpack.c.b16 %v1044, %v1043
      %v1127 = vpack.c.b16 %v1046, %v1045
      %v1128 = vpack.c.b16 %v1048, %v1047
      %v1129 = vpack.c.b16 %v1050, %v1049
      %v1130 = vpack.c.b16 %v1052, %v1051
      %v1131 = vpack.c.b16 %v1054, %v1053
      %v1132 = vpack.c.b16 %v1056, %v1055
      %v1133 = vpack.c.b16 %v1058, %v1057
      %v1134 = vpack.c.b16 %v1060, %v1059
      %v1135 = vpack.c.b16 %v1062, %v1061
      %v1136 = vpack.c.b16 %v1064, %v1063
      %1209 = vmatprep.subr.bf16.mxu0 0
      %1210 = vmatpush1.bf16.msra.mxu0 %v1072
      %1211 = vmatprep.subr.bf16.mxu0 0
      %1212 = vmatpush1.bf16.msra.mxu0 %v1071
      %1213 = vmatprep.subr.bf16.mxu0 0
      %1214 = vmatpush1.bf16.msra.mxu0 %v1070
      %1215 = vmatprep.subr.bf16.mxu0 0
      %1216 = vmatpush1.bf16.msra.mxu0 %v1069
      %1217 = vmatprep.subr.bf16.mxu0 0
      %1218 = vmatpush1.bf16.msra.mxu0 %v1068
      %1219 = vmatprep.subr.bf16.mxu0 0
      %1220 = vmatpush1.bf16.msra.mxu0 %v1067
      %1221 = vmatprep.subr.bf16.mxu0 0
      %1222 = vmatpush1.bf16.msra.mxu0 %v1066
      %1223 = vmatprep.subr.bf16.mxu0 0
      %1224 = vmatpush1.bf16.msra.mxu0 %v1065
      %1225 = vmatprep.subr.bf16.mxu0 0
      %1226 = vmatpush2.bf16.msra.mxu0 %v1080
      %1227 = vmatprep.subr.bf16.mxu0 0
      %1228 = vmatpush2.bf16.msra.mxu0 %v1079
      %1229 = vmatprep.subr.bf16.mxu0 0
      %1230 = vmatpush2.bf16.msra.mxu0 %v1078
      %1231 = vmatprep.subr.bf16.mxu0 0
      %1232 = vmatpush2.bf16.msra.mxu0 %v1077
      %1233 = vmatprep.subr.bf16.mxu0 0
      %1234 = vmatpush2.bf16.msra.mxu0 %v1076
      %1235 = vmatprep.subr.bf16.mxu0 0
      %1236 = vmatpush2.bf16.msra.mxu0 %v1075
      %1237 = vmatprep.subr.bf16.mxu0 0
      %1238 = vmatpush2.bf16.msra.mxu0 %v1074
      %1239 = vmatprep.subr.bf16.mxu0 0
      %1240 = vmatpush2.bf16.msra.mxu0 %v1073
      %1241 = vmatprep.mubr.bf16.mxu0 %v634
      %1242 = vmatmul.mubr.bf16.gmra.mxu0 %v633
      %v1243 = vpop.f32.mrf.mxu0
      %v1244 = vadd.f32 %v407, %v1243
      %v1245 = vpop.f32.mrf.mxu0
      %v1246 = vpop.f32.mrf.mxu0
      %v1247 = vadd.f32 %v407, %v1246
      %v1248 = vpop.f32.mrf.mxu0
      %1249 = vmatprep.mubr.bf16.mxu0 %v643
      %1250 = vmatmul.mubr.bf16.gmra.mxu0 %v642
      %v1251 = vpop.f32.mrf.mxu0
      %v1252 = vadd.f32 %v407, %v1251
      %v1253 = vpop.f32.mrf.mxu0
      %v1254 = vpop.f32.mrf.mxu0
      %v1255 = vadd.f32 %v407, %v1254
      %v1256 = vpop.f32.mrf.mxu0
      %1257 = vmatprep.mubr.bf16.mxu0 %v652
      %1258 = vmatmul.mubr.bf16.gmra.mxu0 %v651
      %v1259 = vpop.f32.mrf.mxu0
      %v1260 = vadd.f32 %v407, %v1259
      %v1261 = vpop.f32.mrf.mxu0
      %v1262 = vpop.f32.mrf.mxu0
      %v1263 = vadd.f32 %v407, %v1262
      %v1264 = vpop.f32.mrf.mxu0
      %1265 = vmatprep.mubr.bf16.mxu0 %v661
      %1266 = vmatmul.mubr.bf16.gmra.mxu0 %v660
      %v1267 = vpop.f32.mrf.mxu0
      %v1268 = vadd.f32 %v407, %v1267
      %v1269 = vpop.f32.mrf.mxu0
      %v1270 = vpop.f32.mrf.mxu0
      %v1271 = vadd.f32 %v407, %v1270
      %v1272 = vpop.f32.mrf.mxu0
      %1273 = vmatprep.mubr.bf16.mxu0 %v670
      %1274 = vmatmul.mubr.bf16.gmra.mxu0 %v669
      %v1275 = vpop.f32.mrf.mxu0
      %v1276 = vadd.f32 %v407, %v1275
      %v1277 = vpop.f32.mrf.mxu0
      %v1278 = vpop.f32.mrf.mxu0
      %v1279 = vadd.f32 %v407, %v1278
      %v1280 = vpop.f32.mrf.mxu0
      %1281 = vmatprep.mubr.bf16.mxu0 %v679
      %1282 = vmatmul.mubr.bf16.gmra.mxu0 %v678
      %v1283 = vpop.f32.mrf.mxu0
      %v1284 = vadd.f32 %v407, %v1283
      %v1285 = vpop.f32.mrf.mxu0
      %v1286 = vpop.f32.mrf.mxu0
      %v1287 = vadd.f32 %v407, %v1286
      %v1288 = vpop.f32.mrf.mxu0
      %1289 = vmatprep.mubr.bf16.mxu0 %v688
      %1290 = vmatmul.mubr.bf16.gmra.mxu0 %v687
      %v1291 = vpop.f32.mrf.mxu0
      %v1292 = vadd.f32 %v407, %v1291
      %v1293 = vpop.f32.mrf.mxu0
      %v1294 = vpop.f32.mrf.mxu0
      %v1295 = vadd.f32 %v407, %v1294
      %v1296 = vpop.f32.mrf.mxu0
      %1297 = vmatprep.mubr.bf16.mxu0 %v697
      %1298 = vmatmul.mubr.bf16.gmra.mxu0 %v696
      %v1299 = vpop.f32.mrf.mxu0
      %v1300 = vadd.f32 %v407, %v1299
      %v1301 = vpop.f32.mrf.mxu0
      %v1302 = vpop.f32.mrf.mxu0
      %v1303 = vadd.f32 %v407, %v1302
      %v1304 = vpop.f32.mrf.mxu0
      %1305 = vdwg.mxu0
      %1306 = vmatprep.subr.bf16.mxu0 0
      %1307 = vmatpush1.bf16.msra.mxu0 %v1088
      %1308 = vmatprep.subr.bf16.mxu0 0
      %1309 = vmatpush1.bf16.msra.mxu0 %v1087
      %1310 = vmatprep.subr.bf16.mxu0 0
      %1311 = vmatpush1.bf16.msra.mxu0 %v1086
      %1312 = vmatprep.subr.bf16.mxu0 0
      %1313 = vmatpush1.bf16.msra.mxu0 %v1085
      %1314 = vmatprep.subr.bf16.mxu0 0
      %1315 = vmatpush1.bf16.msra.mxu0 %v1084
      %1316 = vmatprep.subr.bf16.mxu0 0
      %1317 = vmatpush1.bf16.msra.mxu0 %v1083
      %1318 = vmatprep.subr.bf16.mxu0 0
      %1319 = vmatpush1.bf16.msra.mxu0 %v1082
      %1320 = vmatprep.subr.bf16.mxu0 0
      %1321 = vmatpush1.bf16.msra.mxu0 %v1081
      %1322 = vmatprep.subr.bf16.mxu0 0
      %1323 = vmatpush2.bf16.msra.mxu0 %v1096
      %1324 = vmatprep.subr.bf16.mxu0 0
      %1325 = vmatpush2.bf16.msra.mxu0 %v1095
      %1326 = vmatprep.subr.bf16.mxu0 0
      %1327 = vmatpush2.bf16.msra.mxu0 %v1094
      %1328 = vmatprep.subr.bf16.mxu0 0
      %1329 = vmatpush2.bf16.msra.mxu0 %v1093
      %1330 = vmatprep.subr.bf16.mxu0 0
      %1331 = vmatpush2.bf16.msra.mxu0 %v1092
      %1332 = vmatprep.subr.bf16.mxu0 0
      %1333 = vmatpush2.bf16.msra.mxu0 %v1091
      %1334 = vmatprep.subr.bf16.mxu0 0
      %1335 = vmatpush2.bf16.msra.mxu0 %v1090
      %1336 = vmatprep.subr.bf16.mxu0 0
      %1337 = vmatpush2.bf16.msra.mxu0 %v1089
      %1338 = vmatprep.mubr.bf16.mxu0 %v636
      %1339 = vmatmul.mubr.bf16.gmra.mxu0 %v635
      %v1340 = vpop.f32.mrf.mxu0
      %v1341 = vadd.f32 %v1244, %v1340
      %v1342 = vpop.f32.mrf.mxu0
      %v1343 = vpop.f32.mrf.mxu0
      %v1344 = vadd.f32 %v1247, %v1343
      %v1345 = vpop.f32.mrf.mxu0
      %1346 = vmatprep.mubr.bf16.mxu0 %v645
      %1347 = vmatmul.mubr.bf16.gmra.mxu0 %v644
      %v1348 = vpop.f32.mrf.mxu0
      %v1349 = vadd.f32 %v1252, %v1348
      %v1350 = vpop.f32.mrf.mxu0
      %v1351 = vpop.f32.mrf.mxu0
      %v1352 = vadd.f32 %v1255, %v1351
      %v1353 = vpop.f32.mrf.mxu0
      %1354 = vmatprep.mubr.bf16.mxu0 %v654
      %1355 = vmatmul.mubr.bf16.gmra.mxu0 %v653
      %v1356 = vpop.f32.mrf.mxu0
      %v1357 = vadd.f32 %v1260, %v1356
      %v1358 = vpop.f32.mrf.mxu0
      %v1359 = vpop.f32.mrf.mxu0
      %v1360 = vadd.f32 %v1263, %v1359
      %v1361 = vpop.f32.mrf.mxu0
      %1362 = vmatprep.mubr.bf16.mxu0 %v663
      %1363 = vmatmul.mubr.bf16.gmra.mxu0 %v662
      %v1364 = vpop.f32.mrf.mxu0
      %v1365 = vadd.f32 %v1268, %v1364
      %v1366 = vpop.f32.mrf.mxu0
      %v1367 = vpop.f32.mrf.mxu0
      %v1368 = vadd.f32 %v1271, %v1367
      %v1369 = vpop.f32.mrf.mxu0
      %1370 = vmatprep.mubr.bf16.mxu0 %v672
      %1371 = vmatmul.mubr.bf16.gmra.mxu0 %v671
      %v1372 = vpop.f32.mrf.mxu0
      %v1373 = vadd.f32 %v1276, %v1372
      %v1374 = vpop.f32.mrf.mxu0
      %v1375 = vpop.f32.mrf.mxu0
      %v1376 = vadd.f32 %v1279, %v1375
      %v1377 = vpop.f32.mrf.mxu0
      %1378 = vmatprep.mubr.bf16.mxu0 %v681
      %1379 = vmatmul.mubr.bf16.gmra.mxu0 %v680
      %v1380 = vpop.f32.mrf.mxu0
      %v1381 = vadd.f32 %v1284, %v1380
      %v1382 = vpop.f32.mrf.mxu0
      %v1383 = vpop.f32.mrf.mxu0
      %v1384 = vadd.f32 %v1287, %v1383
      %v1385 = vpop.f32.mrf.mxu0
      %1386 = vmatprep.mubr.bf16.mxu0 %v690
      %1387 = vmatmul.mubr.bf16.gmra.mxu0 %v689
      %v1388 = vpop.f32.mrf.mxu0
      %v1389 = vadd.f32 %v1292, %v1388
      %v1390 = vpop.f32.mrf.mxu0
      %v1391 = vpop.f32.mrf.mxu0
      %v1392 = vadd.f32 %v1295, %v1391
      %v1393 = vpop.f32.mrf.mxu0
      %1394 = vmatprep.mubr.bf16.mxu0 %v699
      %1395 = vmatmul.mubr.bf16.gmra.mxu0 %v698
      %v1396 = vpop.f32.mrf.mxu0
      %v1397 = vadd.f32 %v1300, %v1396
      %v1398 = vpop.f32.mrf.mxu0
      %v1399 = vpop.f32.mrf.mxu0
      %v1400 = vadd.f32 %v1303, %v1399
      %v1401 = vpop.f32.mrf.mxu0
      %1402 = vdwg.mxu0
      %1403 = vmatprep.subr.bf16.mxu0 0
      %1404 = vmatpush1.bf16.msra.mxu0 %v1104
      %1405 = vmatprep.subr.bf16.mxu0 0
      %1406 = vmatpush1.bf16.msra.mxu0 %v1103
      %1407 = vmatprep.subr.bf16.mxu0 0
      %1408 = vmatpush1.bf16.msra.mxu0 %v1102
      %1409 = vmatprep.subr.bf16.mxu0 0
      %1410 = vmatpush1.bf16.msra.mxu0 %v1101
      %1411 = vmatprep.subr.bf16.mxu0 0
      %1412 = vmatpush1.bf16.msra.mxu0 %v1100
      %1413 = vmatprep.subr.bf16.mxu0 0
      %1414 = vmatpush1.bf16.msra.mxu0 %v1099
      %1415 = vmatprep.subr.bf16.mxu0 0
      %1416 = vmatpush1.bf16.msra.mxu0 %v1098
      %1417 = vmatprep.subr.bf16.mxu0 0
      %1418 = vmatpush1.bf16.msra.mxu0 %v1097
      %1419 = vmatprep.subr.bf16.mxu0 0
      %1420 = vmatpush2.bf16.msra.mxu0 %v1112
      %1421 = vmatprep.subr.bf16.mxu0 0
      %1422 = vmatpush2.bf16.msra.mxu0 %v1111
      %1423 = vmatprep.subr.bf16.mxu0 0
      %1424 = vmatpush2.bf16.msra.mxu0 %v1110
      %1425 = vmatprep.subr.bf16.mxu0 0
      %1426 = vmatpush2.bf16.msra.mxu0 %v1109
      %1427 = vmatprep.subr.bf16.mxu0 0
      %1428 = vmatpush2.bf16.msra.mxu0 %v1108
      %1429 = vmatprep.subr.bf16.mxu0 0
      %1430 = vmatpush2.bf16.msra.mxu0 %v1107
      %1431 = vmatprep.subr.bf16.mxu0 0
      %1432 = vmatpush2.bf16.msra.mxu0 %v1106
      %1433 = vmatprep.subr.bf16.mxu0 0
      %1434 = vmatpush2.bf16.msra.mxu0 %v1105
      %1435 = vmatprep.mubr.bf16.mxu0 %v638
      %1436 = vmatmul.mubr.bf16.gmra.mxu0 %v637
      %v1437 = vpop.f32.mrf.mxu0
      %v1438 = vadd.f32 %v1341, %v1437
      %v1439 = vpop.f32.mrf.mxu0
      %v1440 = vpop.f32.mrf.mxu0
      %v1441 = vadd.f32 %v1344, %v1440
      %v1442 = vpop.f32.mrf.mxu0
      %1443 = vmatprep.mubr.bf16.mxu0 %v647
      %1444 = vmatmul.mubr.bf16.gmra.mxu0 %v646
      %v1445 = vpop.f32.mrf.mxu0
      %v1446 = vadd.f32 %v1349, %v1445
      %v1447 = vpop.f32.mrf.mxu0
      %v1448 = vpop.f32.mrf.mxu0
      %v1449 = vadd.f32 %v1352, %v1448
      %v1450 = vpop.f32.mrf.mxu0
      %1451 = vmatprep.mubr.bf16.mxu0 %v656
      %1452 = vmatmul.mubr.bf16.gmra.mxu0 %v655
      %v1453 = vpop.f32.mrf.mxu0
      %v1454 = vadd.f32 %v1357, %v1453
      %v1455 = vpop.f32.mrf.mxu0
      %v1456 = vpop.f32.mrf.mxu0
      %v1457 = vadd.f32 %v1360, %v1456
      %v1458 = vpop.f32.mrf.mxu0
      %1459 = vmatprep.mubr.bf16.mxu0 %v665
      %1460 = vmatmul.mubr.bf16.gmra.mxu0 %v664
      %v1461 = vpop.f32.mrf.mxu0
      %v1462 = vadd.f32 %v1365, %v1461
      %v1463 = vpop.f32.mrf.mxu0
      %v1464 = vpop.f32.mrf.mxu0
      %v1465 = vadd.f32 %v1368, %v1464
      %v1466 = vpop.f32.mrf.mxu0
      %1467 = vmatprep.mubr.bf16.mxu0 %v674
      %1468 = vmatmul.mubr.bf16.gmra.mxu0 %v673
      %v1469 = vpop.f32.mrf.mxu0
      %v1470 = vadd.f32 %v1373, %v1469
      %v1471 = vpop.f32.mrf.mxu0
      %v1472 = vpop.f32.mrf.mxu0
      %v1473 = vadd.f32 %v1376, %v1472
      %v1474 = vpop.f32.mrf.mxu0
      %1475 = vmatprep.mubr.bf16.mxu0 %v683
      %1476 = vmatmul.mubr.bf16.gmra.mxu0 %v682
      %v1477 = vpop.f32.mrf.mxu0
      %v1478 = vadd.f32 %v1381, %v1477
      %v1479 = vpop.f32.mrf.mxu0
      %v1480 = vpop.f32.mrf.mxu0
      %v1481 = vadd.f32 %v1384, %v1480
      %v1482 = vpop.f32.mrf.mxu0
      %1483 = vmatprep.mubr.bf16.mxu0 %v692
      %1484 = vmatmul.mubr.bf16.gmra.mxu0 %v691
      %v1485 = vpop.f32.mrf.mxu0
      %v1486 = vadd.f32 %v1389, %v1485
      %v1487 = vpop.f32.mrf.mxu0
      %v1488 = vpop.f32.mrf.mxu0
      %v1489 = vadd.f32 %v1392, %v1488
      %v1490 = vpop.f32.mrf.mxu0
      %1491 = vmatprep.mubr.bf16.mxu0 %v701
      %1492 = vmatmul.mubr.bf16.gmra.mxu0 %v700
      %v1493 = vpop.f32.mrf.mxu0
      %v1494 = vadd.f32 %v1397, %v1493
      %v1495 = vpop.f32.mrf.mxu0
      %v1496 = vpop.f32.mrf.mxu0
      %v1497 = vadd.f32 %v1400, %v1496
      %v1498 = vpop.f32.mrf.mxu0
      %1499 = vdwg.mxu0
      %1500 = vmatprep.subr.bf16.mxu0 0
      %1501 = vmatpush1.bf16.msra.mxu0 %v1120
      %1502 = vmatprep.subr.bf16.mxu0 0
      %1503 = vmatpush1.bf16.msra.mxu0 %v1119
      %1504 = vmatprep.subr.bf16.mxu0 0
      %1505 = vmatpush1.bf16.msra.mxu0 %v1118
      %1506 = vmatprep.subr.bf16.mxu0 0
      %1507 = vmatpush1.bf16.msra.mxu0 %v1117
      %1508 = vmatprep.subr.bf16.mxu0 0
      %1509 = vmatpush1.bf16.msra.mxu0 %v1116
      %1510 = vmatprep.subr.bf16.mxu0 0
      %1511 = vmatpush1.bf16.msra.mxu0 %v1115
      %1512 = vmatprep.subr.bf16.mxu0 0
      %1513 = vmatpush1.bf16.msra.mxu0 %v1114
      %1514 = vmatprep.subr.bf16.mxu0 0
      %1515 = vmatpush1.bf16.msra.mxu0 %v1113
      %1516 = vmatprep.subr.bf16.mxu0 0
      %1517 = vmatpush2.bf16.msra.mxu0 %v1128
      %1518 = vmatprep.subr.bf16.mxu0 0
      %1519 = vmatpush2.bf16.msra.mxu0 %v1127
      %1520 = vmatprep.subr.bf16.mxu0 0
      %1521 = vmatpush2.bf16.msra.mxu0 %v1126
      %1522 = vmatprep.subr.bf16.mxu0 0
      %1523 = vmatpush2.bf16.msra.mxu0 %v1125
      %1524 = vmatprep.subr.bf16.mxu0 0
      %1525 = vmatpush2.bf16.msra.mxu0 %v1124
      %1526 = vmatprep.subr.bf16.mxu0 0
      %1527 = vmatpush2.bf16.msra.mxu0 %v1123
      %1528 = vmatprep.subr.bf16.mxu0 0
      %1529 = vmatpush2.bf16.msra.mxu0 %v1122
      %1530 = vmatprep.subr.bf16.mxu0 0
      %1531 = vmatpush2.bf16.msra.mxu0 %v1121
      %1532 = vmatprep.mubr.bf16.mxu0 %v640
      %1533 = vmatmul.mubr.bf16.gmra.mxu0 %v639
      %v1534 = vpop.f32.mrf.mxu0
      %v1535 = vadd.f32 %v1438, %v1534
      %v1536 = vpop.f32.mrf.mxu0
      %v1537 = vpop.f32.mrf.mxu0
      %v1538 = vadd.f32 %v1441, %v1537
      %v1539 = vpop.f32.mrf.mxu0
      %1540 = vmatprep.mubr.bf16.mxu0 %v649
      %1541 = vmatmul.mubr.bf16.gmra.mxu0 %v648
      %v1542 = vpop.f32.mrf.mxu0
      %v1543 = vadd.f32 %v1446, %v1542
      %v1544 = vpop.f32.mrf.mxu0
      %v1545 = vpop.f32.mrf.mxu0
      %v1546 = vadd.f32 %v1449, %v1545
      %v1547 = vpop.f32.mrf.mxu0
      %1548 = vmatprep.mubr.bf16.mxu0 %v658
      %1549 = vmatmul.mubr.bf16.gmra.mxu0 %v657
      %v1550 = vpop.f32.mrf.mxu0
      %v1551 = vadd.f32 %v1454, %v1550
      %v1552 = vpop.f32.mrf.mxu0
      %v1553 = vpop.f32.mrf.mxu0
      %v1554 = vadd.f32 %v1457, %v1553
      %v1555 = vpop.f32.mrf.mxu0
      %1556 = vmatprep.mubr.bf16.mxu0 %v667
      %1557 = vmatmul.mubr.bf16.gmra.mxu0 %v666
      %v1558 = vpop.f32.mrf.mxu0
      %v1559 = vadd.f32 %v1462, %v1558
      %v1560 = vpop.f32.mrf.mxu0
      %v1561 = vpop.f32.mrf.mxu0
      %v1562 = vadd.f32 %v1465, %v1561
      %v1563 = vpop.f32.mrf.mxu0
      %1564 = vmatprep.mubr.bf16.mxu0 %v676
      %1565 = vmatmul.mubr.bf16.gmra.mxu0 %v675
      %v1566 = vpop.f32.mrf.mxu0
      %v1567 = vadd.f32 %v1470, %v1566
      %v1568 = vpop.f32.mrf.mxu0
      %v1569 = vpop.f32.mrf.mxu0
      %v1570 = vadd.f32 %v1473, %v1569
      %v1571 = vpop.f32.mrf.mxu0
      %1572 = vmatprep.mubr.bf16.mxu0 %v685
      %1573 = vmatmul.mubr.bf16.gmra.mxu0 %v684
      %v1574 = vpop.f32.mrf.mxu0
      %v1575 = vadd.f32 %v1478, %v1574
      %v1576 = vpop.f32.mrf.mxu0
      %v1577 = vpop.f32.mrf.mxu0
      %v1578 = vadd.f32 %v1481, %v1577
      %v1579 = vpop.f32.mrf.mxu0
      %1580 = vmatprep.mubr.bf16.mxu0 %v694
      %1581 = vmatmul.mubr.bf16.gmra.mxu0 %v693
      %v1582 = vpop.f32.mrf.mxu0
      %v1583 = vadd.f32 %v1486, %v1582
      %v1584 = vpop.f32.mrf.mxu0
      %v1585 = vpop.f32.mrf.mxu0
      %v1586 = vadd.f32 %v1489, %v1585
      %v1587 = vpop.f32.mrf.mxu0
      %1588 = vmatprep.mubr.bf16.mxu0 %v703
      %1589 = vmatmul.mubr.bf16.gmra.mxu0 %v702
      %v1590 = vpop.f32.mrf.mxu0
      %v1591 = vadd.f32 %v1494, %v1590
      %v1592 = vpop.f32.mrf.mxu0
      %v1593 = vpop.f32.mrf.mxu0
      %v1594 = vadd.f32 %v1497, %v1593
      %v1595 = vpop.f32.mrf.mxu0
      %1596 = vdwg.mxu0
      %1597 = vmatprep.subr.bf16.mxu0 0
      %1598 = vmatpush1.bf16.msra.mxu0 %v1136
      %1599 = vmatprep.subr.bf16.mxu0 0
      %1600 = vmatpush1.bf16.msra.mxu0 %v1135
      %1601 = vmatprep.subr.bf16.mxu0 0
      %1602 = vmatpush1.bf16.msra.mxu0 %v1134
      %1603 = vmatprep.subr.bf16.mxu0 0
      %1604 = vmatpush1.bf16.msra.mxu0 %v1133
      %1605 = vmatprep.subr.bf16.mxu0 0
      %1606 = vmatpush1.bf16.msra.mxu0 %v1132
      %1607 = vmatprep.subr.bf16.mxu0 0
      %1608 = vmatpush1.bf16.msra.mxu0 %v1131
      %1609 = vmatprep.subr.bf16.mxu0 0
      %1610 = vmatpush1.bf16.msra.mxu0 %v1130
      %1611 = vmatprep.subr.bf16.mxu0 0
      %1612 = vmatpush1.bf16.msra.mxu0 %v1129
      %1613 = vmatprep.subr.bf16.mxu0 0
      %1614 = vmatpush2.bf16.msra.mxu0 0
      %1615 = vmatprep.subr.bf16.mxu0 0
      %1616 = vmatpush2.bf16.msra.mxu0 0
      %1617 = vmatprep.subr.bf16.mxu0 0
      %1618 = vmatpush2.bf16.msra.mxu0 0
      %1619 = vmatprep.subr.bf16.mxu0 0
      %1620 = vmatpush2.bf16.msra.mxu0 0
      %1621 = vmatprep.subr.bf16.mxu0 0
      %1622 = vmatpush2.bf16.msra.mxu0 0
      %1623 = vmatprep.subr.bf16.mxu0 0
      %1624 = vmatpush2.bf16.msra.mxu0 0
      %1625 = vmatprep.subr.bf16.mxu0 0
      %1626 = vmatpush2.bf16.msra.mxu0 0
      %1627 = vmatprep.subr.bf16.mxu0 0
      %1628 = vmatpush2.bf16.msra.mxu0 0
      %1629 = vmatprep.mubr.bf16.mxu0 0
      %1630 = vmatmul.mubr.bf16.gmra.mxu0 %v641
      %v1631 = vpop.f32.mrf.mxu0
      %v1632 = vadd.f32 %v1535, %v1631
      %v1633 = vpop.f32.mrf.mxu0
      %v1634 = vpop.f32.mrf.mxu0
      %v1635 = vadd.f32 %v1538, %v1634
      %v1636 = vpop.f32.mrf.mxu0
      %1637 = vmatprep.mubr.bf16.mxu0 0
      %1638 = vmatmul.mubr.bf16.gmra.mxu0 %v650
      %v1639 = vpop.f32.mrf.mxu0
      %v1640 = vadd.f32 %v1543, %v1639
      %v1641 = vpop.f32.mrf.mxu0
      %v1642 = vpop.f32.mrf.mxu0
      %v1643 = vadd.f32 %v1546, %v1642
      %v1644 = vpop.f32.mrf.mxu0
      %1645 = vmatprep.mubr.bf16.mxu0 0
      %1646 = vmatmul.mubr.bf16.gmra.mxu0 %v659
      %v1647 = vpop.f32.mrf.mxu0
      %v1648 = vadd.f32 %v1551, %v1647
      %v1649 = vpop.f32.mrf.mxu0
      %v1650 = vpop.f32.mrf.mxu0
      %v1651 = vadd.f32 %v1554, %v1650
      %v1652 = vpop.f32.mrf.mxu0
      %1653 = vmatprep.mubr.bf16.mxu0 0
      %1654 = vmatmul.mubr.bf16.gmra.mxu0 %v668
      %v1655 = vpop.f32.mrf.mxu0
      %v1656 = vadd.f32 %v1559, %v1655
      %v1657 = vpop.f32.mrf.mxu0
      %v1658 = vpop.f32.mrf.mxu0
      %v1659 = vadd.f32 %v1562, %v1658
      %v1660 = vpop.f32.mrf.mxu0
      %1661 = vmatprep.mubr.bf16.mxu0 0
      %1662 = vmatmul.mubr.bf16.gmra.mxu0 %v677
      %v1663 = vpop.f32.mrf.mxu0
      %v1664 = vadd.f32 %v1567, %v1663
      %v1665 = vpop.f32.mrf.mxu0
      %v1666 = vpop.f32.mrf.mxu0
      %v1667 = vadd.f32 %v1570, %v1666
      %v1668 = vpop.f32.mrf.mxu0
      %1669 = vmatprep.mubr.bf16.mxu0 0
      %1670 = vmatmul.mubr.bf16.gmra.mxu0 %v686
      %v1671 = vpop.f32.mrf.mxu0
      %v1672 = vadd.f32 %v1575, %v1671
      %v1673 = vpop.f32.mrf.mxu0
      %v1674 = vpop.f32.mrf.mxu0
      %v1675 = vadd.f32 %v1578, %v1674
      %v1676 = vpop.f32.mrf.mxu0
      %1677 = vmatprep.mubr.bf16.mxu0 0
      %1678 = vmatmul.mubr.bf16.gmra.mxu0 %v695
      %v1679 = vpop.f32.mrf.mxu0
      %v1680 = vadd.f32 %v1583, %v1679
      %v1681 = vpop.f32.mrf.mxu0
      %v1682 = vpop.f32.mrf.mxu0
      %v1683 = vadd.f32 %v1586, %v1682
      %v1684 = vpop.f32.mrf.mxu0
      %1685 = vmatprep.mubr.bf16.mxu0 0
      %1686 = vmatmul.mubr.bf16.gmra.mxu0 %v704
      %v1687 = vpop.f32.mrf.mxu0
      %v1688 = vadd.f32 %v1591, %v1687
      %v1689 = vpop.f32.mrf.mxu0
      %v1690 = vpop.f32.mrf.mxu0
      %v1691 = vadd.f32 %v1594, %v1690
      %v1692 = vpop.f32.mrf.mxu0
      %1693 = vdwg.mxu0
      %1694 = vst [vmem:[%s175] sm:$0xff] %v1632
      %1695 = vst [vmem:[%s175 + $0x8] sm:$0xff] %v1635
      %1696 = vst [vmem:[%s175 + $0x10] sm:$0xff] %v1640
      %1697 = vst [vmem:[%s175 + $0x18] sm:$0xff] %v1643
      %1698 = vst [vmem:[%s175 + $0x20] sm:$0xff] %v1648
      %1699 = vst [vmem:[%s175 + $0x28] sm:$0xff] %v1651
      %1700 = vst [vmem:[%s175 + $0x30] sm:$0xff] %v1656
      %1701 = vst [vmem:[%s175 + $0x38] sm:$0xff] %v1659
      %1702 = vst [vmem:[%s175 + $0x40] sm:$0xff] %v1664
      %1703 = vst [vmem:[%s175 + $0x48] sm:$0xff] %v1667
      %1704 = vst [vmem:[%s175 + $0x50] sm:$0xff] %v1672
      %1705 = vst [vmem:[%s175 + $0x58] sm:$0xff] %v1675
      %1706 = vst [vmem:[%s175 + $0x60] sm:$0xff] %v1680
      %1707 = vst [vmem:[%s175 + $0x68] sm:$0xff] %v1683
      %1708 = vst [vmem:[%s175 + $0x70] sm:$0xff] %v1688
      %1709 = vst [vmem:[%s175 + $0x78] sm:$0xff] %v1691
      %s1710 = smul.u32 16, %s14
      %p1711 = scmp.lt.s32.totalorder %s1710, 31
      %s1712 = scalar_select %p1711, %s1710, 31
      %s1713 = smul.addr %s1712, 8
      %s1714 = scalar_lea.vmem %s3, %s1713
      // Predicated region
      $region33: #{fcos_forward.29} parent=31 // pred_check
        %p1715 = pneg %p100
      $region34: #{fcos_forward.29} parent=31 // pred_check_branch
        %1717 = sbr.rel (%p1715) target = $region36
      $region35: #{fcos_forward.29} parent=31 // pred_region
        %s1718 = smul.u32 16, %s14
      $region36: #{fcos_forward.29} parent=31 // pred_fallthru
        _
    $region32: #{fcos_forward.29} parent=5 // pred_fallthru
      _
    %p1719 = scmp.le.s32.totalorder 2, %s9
    // Predicated region
    $region37: #{fcos_forward.29} parent=5 // pred_check
      %p1720 = pneg %p1719
    $region38: #{fcos_forward.29} parent=5 // pred_check_branch
      %1722 = sbr.rel (%p1720) target = $region40
    $region39: #{fcos_forward.29} parent=5 // pred_region
      %s1723 = ssub.s32 %s9, 2
      // Predicated region
      $region41: #{fcos_forward.29} parent=39 // pred_check
        %p1724 = pneg %p106
      $region42: #{fcos_forward.29} parent=39 // pred_check_branch
        %1726 = sbr.rel (%p1724) target = $region44
      $region43: #{fcos_forward.29} parent=39 // pred_region
        %s1727 = smul.u32 16, %s15
        %p1728 = scmp.lt.s32.totalorder %s1727, 31
        %s1729 = scalar_select %p1728, %s1727, 31
        %s1730 = smul.addr %s1729, 8
        %s1731 = scalar_lea.vmem %s3, %s1730
      $region44: #{fcos_forward.29} parent=39 // pred_fallthru
        _
    $region40: #{fcos_forward.29} parent=5 // pred_fallthru
      _
  $region6: #{fcos_forward.29} parent=0 // loop_footer
    %s13 = sadd.s32 1, %s9
  $region7: #{fcos_forward.29} parent=0 // loop_footer_branch
    %8 = sbr.rel target = $region3
  $region8: #{fcos_forward.29} parent=0 // loop_exit
    _

</llo_original>
